<compile_context>
chip_gen: v7x
topology: tpu7x:2x2x1
jax: 0.10.0
libtpu: 0.0.40
codegen_flags: <defaults>
</compile_context>

<pallas_src>
import functools
import math

import numpy as np
import jax
import jax.numpy as jnp
from jax import lax
from jax.experimental import pallas as pl
from jax.experimental.pallas import tpu as pltpu

_HIGHEST = lax.Precision.HIGHEST
_VMEM_LIMIT = 64 * 1024 * 1024


# ---------------------------------------------------------------------------
# small helpers
# ---------------------------------------------------------------------------
def _round_up(x, m):
    return ((x + m - 1) // m) * m


def _largest_divisor(n, cap):
    for d in range(min(n, cap), 0, -1):
        if n % d == 0:
            return d
    return 1


def _pick_hf_tile(hf, row_bytes, budget=2 << 20):
    """Largest multiple-of-8 divisor of hf whose block fits ~budget bytes; else full hf."""
    cap = min(hf, max(8, budget // max(row_bytes, 1)))
    d = cap - (cap % 8)
    while d >= 8:
        if hf % d == 0:
            return d
        d -= 8
    return hf


# ---------------------------------------------------------------------------
# fixed "bilinear" transposed-conv weights (fill_up_weights), as dense 1-D matrices
# ---------------------------------------------------------------------------
def fill_up_weights_1d(f):
    k = 2 * f
    fc = math.ceil(k / 2)                       # == f
    c = (2 * fc - 1 - fc % 2) / (2.0 * fc)
    return np.array([1.0 - abs(i / fc - c) for i in range(k)], dtype=np.float32)


@functools.lru_cache(maxsize=None)
def up_matrix(n_in, f):
    """(N_out, N_in) matrix of the 1-D transposed conv (k=2f, stride=f, pad=f//2).

    Cached so the forward never rebuilds these constants per call.
    """
    g = fill_up_weights_1d(f)
    k, pad = 2 * f, f // 2
    n_out = (n_in - 1) * f - 2 * pad + k
    u = np.zeros((n_out, n_in), dtype=np.float32)
    for y in range(n_in):
        for kk in range(k):
            p = y * f - pad + kk
            if 0 <= p < n_out:
                u[p, y] += g[kk]
    return jnp.asarray(u)


# ---------------------------------------------------------------------------
# Kernel 1: fused 1x1 proj conv (BN folded) + ReLU + W-axis transposed-conv upsample
# ---------------------------------------------------------------------------
def _proj_wup_kernel(x_ref, w_ref, b_ref, uw_ref, o_ref):
    # x_ref: (th, W, Cin); w_ref: (Cin, Cp); b_ref: (1, Cp); uw_ref: (Wf, W); o_ref: (th, Wf, Cp)
    th = x_ref.shape[0]
    for j in range(th):
        y = jnp.dot(x_ref[j], w_ref[...],
                    preferred_element_type=jnp.float32, precision=_HIGHEST)
        y = jnp.maximum(y + b_ref[...], 0.0)
        up = jnp.dot(uw_ref[...], y,
                     preferred_element_type=jnp.float32, precision=_HIGHEST)
        o_ref[j] = up.astype(o_ref.dtype)


def proj_wupsample(x, w_p, shift_p, u_w):
    """x: (N,H,W,Cin) -> relu(x @ w_p + shift_p) upsampled along W -> (N,H,Wf,Cp)."""
    n, h, w, cin = x.shape
    cp = w_p.shape[1]
    wf = u_w.shape[0]
    nh = n * h
    th = _largest_divisor(nh, 8)
    xr = x.reshape(nh, w, cin)
    out = pl.pallas_call(
        _proj_wup_kernel,
        out_shape=jax.ShapeDtypeStruct((nh, wf, cp), x.dtype),
        grid=(nh // th,),
        in_specs=[
            pl.BlockSpec((th, w, cin), lambda i: (i, 0, 0)),
            pl.BlockSpec((cin, cp), lambda i: (0, 0)),
            pl.BlockSpec((1, cp), lambda i: (0, 0)),
            pl.BlockSpec((wf, w), lambda i: (0, 0)),
        ],
        out_specs=pl.BlockSpec((th, wf, cp), lambda i: (i, 0, 0)),
        compiler_params=pltpu.CompilerParams(
            dimension_semantics=("parallel",), vmem_limit_bytes=_VMEM_LIMIT),
    )(xr, w_p, shift_p, u_w)
    return out.reshape(n, h, wf, cp)


# ---------------------------------------------------------------------------
# Kernel 2: H-axis transposed-conv upsample fused with the skip-connection add
# ---------------------------------------------------------------------------
def _hup_add_kernel(t_ref, skip_ref, uh_ref, o_ref):
    # t_ref: (1, H, Wf*Cp); skip_ref/o_ref: (1, thf, Wf*Cp); uh_ref: (thf, H)
    up = jnp.dot(uh_ref[...], t_ref[0],
                 preferred_element_type=jnp.float32, precision=_HIGHEST)
    o_ref[0] = (up + skip_ref[0]).astype(o_ref.dtype)


def hupsample_add(t, skip, u_h):
    """t: (N,H,Wf,Cp), skip: (N,Hf,Wf,Cp), u_h: (Hf,H) -> (N,Hf,Wf,Cp)."""
    n, h, wf, cp = t.shape
    hf = u_h.shape[0]
    assert skip.shape == (n, hf, wf, cp)
    wfc = wf * cp
    thf = _pick_hf_tile(hf, wfc * 4)
    tf = t.reshape(n, h, wfc)
    sk = skip.reshape(n, hf, wfc)
    out = pl.pallas_call(
        _hup_add_kernel,
        out_shape=jax.ShapeDtypeStruct((n, hf, wfc), t.dtype),
        grid=(n, hf // thf),
        in_specs=[
            pl.BlockSpec((1, h, wfc), lambda b, i: (b, 0, 0)),
            pl.BlockSpec((1, thf, wfc), lambda b, i: (b, i, 0)),
            pl.BlockSpec((thf, h), lambda b, i: (i, 0)),
        ],
        out_specs=pl.BlockSpec((1, thf, wfc), lambda b, i: (b, i, 0)),
        compiler_params=pltpu.CompilerParams(
            dimension_semantics=("parallel", "parallel"), vmem_limit_bytes=_VMEM_LIMIT),
    )(tf, sk, u_h)
    return out.reshape(n, hf, wf, cp)


# ---------------------------------------------------------------------------
# Kernel 3: 3x3 'same' conv (BN folded) + ReLU via halo row windows (no 9x im2col)
# ---------------------------------------------------------------------------
def _node_kernel(zw_ref, w_ref, b_ref, o_ref):
    # zw_ref: (1,1,th+2,Wz+2,C); w_ref: (9,C,Cp); b_ref: (1,Cp); o_ref: (1,th,Wz,Cp)
    th = o_ref.shape[1]
    wz = o_ref.shape[2]
    for j in range(th):
        acc = None
        for dy in range(3):
            row = zw_ref[0, 0, j + dy]                    # (Wz+2, C)
            for dx in range(3):
                tap = row[dx:dx + wz, :]                  # static slice of the loaded row
                part = jnp.dot(tap, w_ref[3 * dy + dx],
                               preferred_element_type=jnp.float32, precision=_HIGHEST)
                acc = part if acc is None else acc + part
        o_ref[0, j] = jnp.maximum(acc + b_ref[...], 0.0).astype(o_ref.dtype)


def conv3x3_bn_relu(z, w9_p, shift_p):
    """z: (N,Hz,Wz,C); w9_p: (9,C,Cp) BN-scale-folded; shift_p: (1,Cp) -> (N,Hz,Wz,Cp)."""
    n, hz, wz, c = z.shape
    cp = w9_p.shape[-1]
    th = _largest_divisor(hz, 8)
    nb = hz // th
    zp = jnp.pad(z, ((0, 0), (1, 1), (1, 1), (0, 0)))
    # halo row windows: each output row-block reads its th+2 input rows only (~1.25x traffic)
    idx = np.arange(nb)[:, None] * th + np.arange(th + 2)[None, :]
    zw = zp[:, idx]                                        # (N, nb, th+2, Wz+2, C)
    out = pl.pallas_call(
        _node_kernel,
        out_shape=jax.ShapeDtypeStruct((n, hz, wz, cp), z.dtype),
        grid=(n, nb),
        in_specs=[
            pl.BlockSpec((1, 1, th + 2, wz + 2, c), lambda b, i: (b, i, 0, 0, 0)),
            pl.BlockSpec((9, c, cp), lambda b, i: (0, 0, 0)),
            pl.BlockSpec((1, cp), lambda b, i: (0, 0)),
        ],
        out_specs=pl.BlockSpec((1, th, wz, cp), lambda b, i: (b, i, 0, 0)),
        compiler_params=pltpu.CompilerParams(
            dimension_semantics=("parallel", "parallel"), vmem_limit_bytes=_VMEM_LIMIT),
    )(zw, w9_p, shift_p)
    return out


# ---------------------------------------------------------------------------
# Parameter setup (mirrors IDAUp.__init__ with use_dc=False); BN scale folded, lanes padded
# ---------------------------------------------------------------------------
def init_ida_up_params(key, o, channels, up_f):
    eps = 1e-5
    o_p = _round_up(o, 128)
    # BatchNorm2d(eval): gamma=1, beta=0, running_mean=0, running_var=1.
    bn_scale = np.full((o,), 1.0 / np.sqrt(1.0 + eps), np.float32)
    bn_shift = np.zeros((o,), np.float32)
    params = {"o": o, "o_p": o_p, "levels": {}}
    for i in range(1, len(channels)):
        c = channels[i]
        f = int(up_f[i])
        key, k1, k2 = jax.random.split(key, 3)
        proj_std = math.sqrt(2.0 / (1 * 1 * o))            # 1x1 kernel, out_channels=o
        node_std = math.sqrt(2.0 / (3 * 3 * o))            # 3x3 kernel, out_channels=o
        proj_w = np.asarray(jax.random.normal(k1, (c, o), jnp.float32)) * proj_std
        node_w = np.asarray(jax.random.normal(k2, (3, 3, o, o), jnp.float32)) * node_std
        # fold BN scale into the weights; zero-pad channels to o_p (lane-dense stores)
        proj_wp = np.zeros((c, o_p), np.float32)
        proj_wp[:, :o] = proj_w * bn_scale[None, :]
        node_wp = np.zeros((3, 3, o_p, o_p), np.float32)
        node_wp[:, :, :o, :o] = node_w * bn_scale[None, None, None, :]
        proj_shift_p = np.zeros((1, o_p), np.float32)
        proj_shift_p[0, :o] = bn_shift
        node_shift_p = proj_shift_p.copy()
        params["levels"][i] = dict(
            f=f,
            # raw copies for the pure-JAX reference
            proj_w=jnp.asarray(proj_w), node_w=jnp.asarray(node_w),
            bn_scale=jnp.asarray(bn_scale), bn_shift=jnp.asarray(bn_shift),
            # kernel-ready operands (folded + padded)
            proj_wp=jnp.asarray(proj_wp),
            node_wp=jnp.asarray(node_wp.reshape(9, o_p, o_p)),
            proj_shift_p=jnp.asarray(proj_shift_p),
            node_shift_p=jnp.asarray(node_shift_p),
        )
    return params


# ---------------------------------------------------------------------------
# IDAUp forward (Pallas) and pure-JAX reference
# ---------------------------------------------------------------------------
def ida_up_forward(layers, startp, endp, params):
    layers = list(layers)
    o, o_p = params["o"], params["o_p"]
    assert layers[startp].shape[-1] == o
    # the skip chain runs with channels padded to o_p; padded lanes stay exactly zero
    skip = jnp.pad(layers[startp], ((0, 0), (0, 0), (0, 0), (0, o_p - o)))
    for i in range(startp + 1, endp):
        p = params["levels"][i - startp]
        f = p["f"]
        _, h, w, _ = layers[i].shape
        u_h = up_matrix(h, f)
        u_w = up_matrix(w, f)
        t = proj_wupsample(layers[i], p["proj_wp"], p["proj_shift_p"], u_w)  # (N,H,Wf,o_p)
        z = hupsample_add(t, skip, u_h)                                      # (N,Hf,Wf,o_p)
        skip = conv3x3_bn_relu(z, p["node_wp"], p["node_shift_p"])           # (N,Hf,Wf,o_p)
        layers[i] = skip[..., :o]
    return layers


def _ref_pointwise(x, w, scale, shift):
    y = jnp.einsum("nhwc,cd->nhwd", x, w, precision=_HIGHEST)
    return jnp.maximum(y * scale + shift, 0.0)


def _ref_conv3x3(x, w_hwio, scale, shift):
    y = lax.conv_general_dilated(x, w_hwio, (1, 1), ((1, 1), (1, 1)),
                                 dimension_numbers=("NHWC", "HWIO", "NHWC"),
                                 precision=_HIGHEST)
    return jnp.maximum(y * scale + shift, 0.0)


def _ref_up(x, f):
    c = x.shape[-1]
    g = fill_up_weights_1d(f)
    w2d = np.outer(g, g).astype(np.float32)
    k, pad = 2 * f, f // 2
    rhs = jnp.asarray(np.tile(w2d[:, :, None, None], (1, 1, 1, c)))    # (K,K,1,C)
    rhs = jnp.flip(rhs, (0, 1))
    return lax.conv_general_dilated(
        x, rhs, (1, 1), ((k - 1 - pad, k - 1 - pad),) * 2,
        lhs_dilation=(f, f),
        dimension_numbers=("NHWC", "HWIO", "NHWC"),
        feature_group_count=c, precision=_HIGHEST)


def ref_ida_up(layers, startp, endp, params):
    layers = list(layers)
    for i in range(startp + 1, endp):
        p = params["levels"][i - startp]
        y = _ref_pointwise(layers[i], p["proj_w"], p["bn_scale"], p["bn_shift"])
        up = _ref_up(y, p["f"])
        layers[i] = _ref_conv3x3(up + layers[i - 1],
                                 p["node_w"], p["bn_scale"], p["bn_shift"])
    return layers


# ---------------------------------------------------------------------------
if __name__ == "__main__":
    o = 8
    channels = [8, 16, 32]       # channels[0] == o (required by the residual add)
    up_f = [1, 2, 4]
    n = 2
    spatial = [16, 8, 4]

    key = jax.random.PRNGKey(0)
    key, kp = jax.random.split(key)
    params = init_ida_up_params(kp, o, channels, up_f)

    layers = []
    for c, s in zip(channels, spatial):
        key, kl = jax.random.split(key)
        layers.append(jax.random.normal(kl, (n, s, s, c), jnp.float32))

    out_layers = ida_up_forward(layers, 0, len(layers), params)
    out_layers = [jax.block_until_ready(l) for l in out_layers]

    ref_layers = ref_ida_up(layers, 0, len(layers), params)
    for a, b in zip(out_layers, ref_layers):
        np.testing.assert_allclose(np.asarray(a), np.asarray(b), rtol=1e-3, atol=1e-3)

    print("KERNEL_OK")
</pallas_src>

<mosaic_0001>
module attributes {stable_mosaic.version = 11 : i64} {
  func.func @_proj_wup_kernel(%arg0: i32, %arg1: memref<8x8x16xf32, #tpu.memory_space<vmem>>, %arg2: memref<16x128xf32, #tpu.memory_space<vmem>>, %arg3: memref<1x128xf32, #tpu.memory_space<vmem>>, %arg4: memref<16x8xf32, #tpu.memory_space<vmem>>, %arg5: memref<8x16x128xf32, #tpu.memory_space<vmem>>) attributes {dimension_semantics = [#tpu.dimension_semantics<parallel>], iteration_bounds = array<i64: 2>, scalar_prefetch = 0 : i64, scratch_operands = 0 : i64, tpu.core_type = #tpu.core_type<tc>, window_params = [{transform_indices = @transform_0, window_bounds = array<i64: 8, 8, 16>}, {pipeline_mode = #tpu.pipeline_mode<synchronous>, transform_indices = @transform_1, window_bounds = array<i64: 16, 128>}, {pipeline_mode = #tpu.pipeline_mode<synchronous>, transform_indices = @transform_2, window_bounds = array<i64: 1, 128>}, {pipeline_mode = #tpu.pipeline_mode<synchronous>, transform_indices = @transform_3, window_bounds = array<i64: 16, 8>}, {transform_indices = @transform_4, window_bounds = array<i64: 8, 16, 128>}]} {
    %c0 = arith.constant 0 : index
    %c0_0 = arith.constant 0 : index
    %c0_1 = arith.constant 0 : index
    %0 = vector.load %arg1[%c0, %c0_0, %c0_1] : memref<8x8x16xf32, #tpu.memory_space<vmem>>, vector<1x8x16xf32>
    %1 = vector.shape_cast %0 : vector<1x8x16xf32> to vector<8x16xf32>
    %c0_2 = arith.constant 0 : index
    %c0_3 = arith.constant 0 : index
    %2 = vector.load %arg2[%c0_2, %c0_3] : memref<16x128xf32, #tpu.memory_space<vmem>>, vector<16x128xf32>
    %cst = arith.constant dense<0.000000e+00> : vector<8x128xf32>
    %3 = tpu.matmul %1, %2, %cst {dimension_numbers = #tpu.dot_dimension_numbers<[1], [0], [0], [1], [0, 0, 1, 1], [], []>, precision = #tpu.contract_precision<fp32>} : vector<8x16xf32>, vector<16x128xf32>, vector<8x128xf32> -> vector<8x128xf32>
    %c0_4 = arith.constant 0 : index
    %c0_5 = arith.constant 0 : index
    %4 = vector.load %arg3[%c0_4, %c0_5] : memref<1x128xf32, #tpu.memory_space<vmem>>, vector<1x128xf32>
    %5 = vector.broadcast %4 : vector<1x128xf32> to vector<8x128xf32>
    %6 = arith.addf %3, %5 : vector<8x128xf32>
    %cst_6 = arith.constant 0.000000e+00 : f32
    %7 = vector.broadcast %cst_6 : f32 to vector<8x128xf32>
    %8 = arith.maximumf %6, %7 : vector<8x128xf32>
    %c0_7 = arith.constant 0 : index
    %c0_8 = arith.constant 0 : index
    %9 = vector.load %arg4[%c0_7, %c0_8] : memref<16x8xf32, #tpu.memory_space<vmem>>, vector<16x8xf32>
    %cst_9 = arith.constant dense<0.000000e+00> : vector<16x128xf32>
    %10 = tpu.matmul %9, %8, %cst_9 {dimension_numbers = #tpu.dot_dimension_numbers<[1], [0], [0], [1], [0, 0, 1, 1], [], []>, precision = #tpu.contract_precision<fp32>} : vector<16x8xf32>, vector<8x128xf32>, vector<16x128xf32> -> vector<16x128xf32>
    %c0_10 = arith.constant 0 : index
    %c0_11 = arith.constant 0 : index
    %c0_12 = arith.constant 0 : index
    %11 = vector.load %arg5[%c0_10, %c0_11, %c0_12] : memref<8x16x128xf32, #tpu.memory_space<vmem>>, vector<1x16x128xf32>
    %12 = vector.shape_cast %11 : vector<1x16x128xf32> to vector<16x128xf32>
    %13 = vector.shape_cast %10 : vector<16x128xf32> to vector<1x16x128xf32>
    tpu.vector_store %arg5[%c0_10, %c0_11, %c0_12], %13 {strides = array<i32>} : memref<8x16x128xf32, #tpu.memory_space<vmem>>, vector<1x16x128xf32>,
    %c1 = arith.constant 1 : index
    %c0_13 = arith.constant 0 : index
    %c0_14 = arith.constant 0 : index
    %14 = vector.load %arg1[%c1, %c0_13, %c0_14] : memref<8x8x16xf32, #tpu.memory_space<vmem>>, vector<1x8x16xf32>
    %15 = vector.shape_cast %14 : vector<1x8x16xf32> to vector<8x16xf32>
    %c0_15 = arith.constant 0 : index
    %c0_16 = arith.constant 0 : index
    %16 = vector.load %arg2[%c0_15, %c0_16] : memref<16x128xf32, #tpu.memory_space<vmem>>, vector<16x128xf32>
    %cst_17 = arith.constant dense<0.000000e+00> : vector<8x128xf32>
    %17 = tpu.matmul %15, %16, %cst_17 {dimension_numbers = #tpu.dot_dimension_numbers<[1], [0], [0], [1], [0, 0, 1, 1], [], []>, precision = #tpu.contract_precision<fp32>} : vector<8x16xf32>, vector<16x128xf32>, vector<8x128xf32> -> vector<8x128xf32>
    %c0_18 = arith.constant 0 : index
    %c0_19 = arith.constant 0 : index
    %18 = vector.load %arg3[%c0_18, %c0_19] : memref<1x128xf32, #tpu.memory_space<vmem>>, vector<1x128xf32>
    %19 = vector.broadcast %18 : vector<1x128xf32> to vector<8x128xf32>
    %20 = arith.addf %17, %19 : vector<8x128xf32>
    %cst_20 = arith.constant 0.000000e+00 : f32
    %21 = vector.broadcast %cst_20 : f32 to vector<8x128xf32>
    %22 = arith.maximumf %20, %21 : vector<8x128xf32>
    %c0_21 = arith.constant 0 : index
    %c0_22 = arith.constant 0 : index
    %23 = vector.load %arg4[%c0_21, %c0_22] : memref<16x8xf32, #tpu.memory_space<vmem>>, vector<16x8xf32>
    %cst_23 = arith.constant dense<0.000000e+00> : vector<16x128xf32>
    %24 = tpu.matmul %23, %22, %cst_23 {dimension_numbers = #tpu.dot_dimension_numbers<[1], [0], [0], [1], [0, 0, 1, 1], [], []>, precision = #tpu.contract_precision<fp32>} : vector<16x8xf32>, vector<8x128xf32>, vector<16x128xf32> -> vector<16x128xf32>
    %c1_24 = arith.constant 1 : index
    %c0_25 = arith.constant 0 : index
    %c0_26 = arith.constant 0 : index
    %25 = vector.load %arg5[%c1_24, %c0_25, %c0_26] : memref<8x16x128xf32, #tpu.memory_space<vmem>>, vector<1x16x128xf32>
    %26 = vector.shape_cast %25 : vector<1x16x128xf32> to vector<16x128xf32>
    %27 = vector.shape_cast %24 : vector<16x128xf32> to vector<1x16x128xf32>
    tpu.vector_store %arg5[%c1_24, %c0_25, %c0_26], %27 {strides = array<i32>} : memref<8x16x128xf32, #tpu.memory_space<vmem>>, vector<1x16x128xf32>,
    %c2 = arith.constant 2 : index
    %c0_27 = arith.constant 0 : index
    %c0_28 = arith.constant 0 : index
    %28 = vector.load %arg1[%c2, %c0_27, %c0_28] : memref<8x8x16xf32, #tpu.memory_space<vmem>>, vector<1x8x16xf32>
    %29 = vector.shape_cast %28 : vector<1x8x16xf32> to vector<8x16xf32>
    %c0_29 = arith.constant 0 : index
    %c0_30 = arith.constant 0 : index
    %30 = vector.load %arg2[%c0_29, %c0_30] : memref<16x128xf32, #tpu.memory_space<vmem>>, vector<16x128xf32>
    %cst_31 = arith.constant dense<0.000000e+00> : vector<8x128xf32>
    %31 = tpu.matmul %29, %30, %cst_31 {dimension_numbers = #tpu.dot_dimension_numbers<[1], [0], [0], [1], [0, 0, 1, 1], [], []>, precision = #tpu.contract_precision<fp32>} : vector<8x16xf32>, vector<16x128xf32>, vector<8x128xf32> -> vector<8x128xf32>
    %c0_32 = arith.constant 0 : index
    %c0_33 = arith.constant 0 : index
    %32 = vector.load %arg3[%c0_32, %c0_33] : memref<1x128xf32, #tpu.memory_space<vmem>>, vector<1x128xf32>
    %33 = vector.broadcast %32 : vector<1x128xf32> to vector<8x128xf32>
    %34 = arith.addf %31, %33 : vector<8x128xf32>
    %cst_34 = arith.constant 0.000000e+00 : f32
    %35 = vector.broadcast %cst_34 : f32 to vector<8x128xf32>
    %36 = arith.maximumf %34, %35 : vector<8x128xf32>
    %c0_35 = arith.constant 0 : index
    %c0_36 = arith.constant 0 : index
    %37 = vector.load %arg4[%c0_35, %c0_36] : memref<16x8xf32, #tpu.memory_space<vmem>>, vector<16x8xf32>
    %cst_37 = arith.constant dense<0.000000e+00> : vector<16x128xf32>
    %38 = tpu.matmul %37, %36, %cst_37 {dimension_numbers = #tpu.dot_dimension_numbers<[1], [0], [0], [1], [0, 0, 1, 1], [], []>, precision = #tpu.contract_precision<fp32>} : vector<16x8xf32>, vector<8x128xf32>, vector<16x128xf32> -> vector<16x128xf32>
    %c2_38 = arith.constant 2 : index
    %c0_39 = arith.constant 0 : index
    %c0_40 = arith.constant 0 : index
    %39 = vector.load %arg5[%c2_38, %c0_39, %c0_40] : memref<8x16x128xf32, #tpu.memory_space<vmem>>, vector<1x16x128xf32>
    %40 = vector.shape_cast %39 : vector<1x16x128xf32> to vector<16x128xf32>
    %41 = vector.shape_cast %38 : vector<16x128xf32> to vector<1x16x128xf32>
    tpu.vector_store %arg5[%c2_38, %c0_39, %c0_40], %41 {strides = array<i32>} : memref<8x16x128xf32, #tpu.memory_space<vmem>>, vector<1x16x128xf32>,
    %c3 = arith.constant 3 : index
    %c0_41 = arith.constant 0 : index
    %c0_42 = arith.constant 0 : index
    %42 = vector.load %arg1[%c3, %c0_41, %c0_42] : memref<8x8x16xf32, #tpu.memory_space<vmem>>, vector<1x8x16xf32>
    %43 = vector.shape_cast %42 : vector<1x8x16xf32> to vector<8x16xf32>
    %c0_43 = arith.constant 0 : index
    %c0_44 = arith.constant 0 : index
    %44 = vector.load %arg2[%c0_43, %c0_44] : memref<16x128xf32, #tpu.memory_space<vmem>>, vector<16x128xf32>
    %cst_45 = arith.constant dense<0.000000e+00> : vector<8x128xf32>
    %45 = tpu.matmul %43, %44, %cst_45 {dimension_numbers = #tpu.dot_dimension_numbers<[1], [0], [0], [1], [0, 0, 1, 1], [], []>, precision = #tpu.contract_precision<fp32>} : vector<8x16xf32>, vector<16x128xf32>, vector<8x128xf32> -> vector<8x128xf32>
    %c0_46 = arith.constant 0 : index
    %c0_47 = arith.constant 0 : index
    %46 = vector.load %arg3[%c0_46, %c0_47] : memref<1x128xf32, #tpu.memory_space<vmem>>, vector<1x128xf32>
    %47 = vector.broadcast %46 : vector<1x128xf32> to vector<8x128xf32>
    %48 = arith.addf %45, %47 : vector<8x128xf32>
    %cst_48 = arith.constant 0.000000e+00 : f32
    %49 = vector.broadcast %cst_48 : f32 to vector<8x128xf32>
    %50 = arith.maximumf %48, %49 : vector<8x128xf32>
    %c0_49 = arith.constant 0 : index
    %c0_50 = arith.constant 0 : index
    %51 = vector.load %arg4[%c0_49, %c0_50] : memref<16x8xf32, #tpu.memory_space<vmem>>, vector<16x8xf32>
    %cst_51 = arith.constant dense<0.000000e+00> : vector<16x128xf32>
    %52 = tpu.matmul %51, %50, %cst_51 {dimension_numbers = #tpu.dot_dimension_numbers<[1], [0], [0], [1], [0, 0, 1, 1], [], []>, precision = #tpu.contract_precision<fp32>} : vector<16x8xf32>, vector<8x128xf32>, vector<16x128xf32> -> vector<16x128xf32>
    %c3_52 = arith.constant 3 : index
    %c0_53 = arith.constant 0 : index
    %c0_54 = arith.constant 0 : index
    %53 = vector.load %arg5[%c3_52, %c0_53, %c0_54] : memref<8x16x128xf32, #tpu.memory_space<vmem>>, vector<1x16x128xf32>
    %54 = vector.shape_cast %53 : vector<1x16x128xf32> to vector<16x128xf32>
    %55 = vector.shape_cast %52 : vector<16x128xf32> to vector<1x16x128xf32>
    tpu.vector_store %arg5[%c3_52, %c0_53, %c0_54], %55 {strides = array<i32>} : memref<8x16x128xf32, #tpu.memory_space<vmem>>, vector<1x16x128xf32>,
    %c4 = arith.constant 4 : index
    %c0_55 = arith.constant 0 : index
    %c0_56 = arith.constant 0 : index
    %56 = vector.load %arg1[%c4, %c0_55, %c0_56] : memref<8x8x16xf32, #tpu.memory_space<vmem>>, vector<1x8x16xf32>
    %57 = vector.shape_cast %56 : vector<1x8x16xf32> to vector<8x16xf32>
    %c0_57 = arith.constant 0 : index
    %c0_58 = arith.constant 0 : index
    %58 = vector.load %arg2[%c0_57, %c0_58] : memref<16x128xf32, #tpu.memory_space<vmem>>, vector<16x128xf32>
    %cst_59 = arith.constant dense<0.000000e+00> : vector<8x128xf32>
    %59 = tpu.matmul %57, %58, %cst_59 {dimension_numbers = #tpu.dot_dimension_numbers<[1], [0], [0], [1], [0, 0, 1, 1], [], []>, precision = #tpu.contract_precision<fp32>} : vector<8x16xf32>, vector<16x128xf32>, vector<8x128xf32> -> vector<8x128xf32>
    %c0_60 = arith.constant 0 : index
    %c0_61 = arith.constant 0 : index
    %60 = vector.load %arg3[%c0_60, %c0_61] : memref<1x128xf32, #tpu.memory_space<vmem>>, vector<1x128xf32>
    %61 = vector.broadcast %60 : vector<1x128xf32> to vector<8x128xf32>
    %62 = arith.addf %59, %61 : vector<8x128xf32>
    %cst_62 = arith.constant 0.000000e+00 : f32
    %63 = vector.broadcast %cst_62 : f32 to vector<8x128xf32>
    %64 = arith.maximumf %62, %63 : vector<8x128xf32>
    %c0_63 = arith.constant 0 : index
    %c0_64 = arith.constant 0 : index
    %65 = vector.load %arg4[%c0_63, %c0_64] : memref<16x8xf32, #tpu.memory_space<vmem>>, vector<16x8xf32>
    %cst_65 = arith.constant dense<0.000000e+00> : vector<16x128xf32>
    %66 = tpu.matmul %65, %64, %cst_65 {dimension_numbers = #tpu.dot_dimension_numbers<[1], [0], [0], [1], [0, 0, 1, 1], [], []>, precision = #tpu.contract_precision<fp32>} : vector<16x8xf32>, vector<8x128xf32>, vector<16x128xf32> -> vector<16x128xf32>
    %c4_66 = arith.constant 4 : index
    %c0_67 = arith.constant 0 : index
    %c0_68 = arith.constant 0 : index
    %67 = vector.load %arg5[%c4_66, %c0_67, %c0_68] : memref<8x16x128xf32, #tpu.memory_space<vmem>>, vector<1x16x128xf32>
    %68 = vector.shape_cast %67 : vector<1x16x128xf32> to vector<16x128xf32>
    %69 = vector.shape_cast %66 : vector<16x128xf32> to vector<1x16x128xf32>
    tpu.vector_store %arg5[%c4_66, %c0_67, %c0_68], %69 {strides = array<i32>} : memref<8x16x128xf32, #tpu.memory_space<vmem>>, vector<1x16x128xf32>,
    %c5 = arith.constant 5 : index
    %c0_69 = arith.constant 0 : index
    %c0_70 = arith.constant 0 : index
    %70 = vector.load %arg1[%c5, %c0_69, %c0_70] : memref<8x8x16xf32, #tpu.memory_space<vmem>>, vector<1x8x16xf32>
    %71 = vector.shape_cast %70 : vector<1x8x16xf32> to vector<8x16xf32>
    %c0_71 = arith.constant 0 : index
    %c0_72 = arith.constant 0 : index
    %72 = vector.load %arg2[%c0_71, %c0_72] : memref<16x128xf32, #tpu.memory_space<vmem>>, vector<16x128xf32>
    %cst_73 = arith.constant dense<0.000000e+00> : vector<8x128xf32>
    %73 = tpu.matmul %71, %72, %cst_73 {dimension_numbers = #tpu.dot_dimension_numbers<[1], [0], [0], [1], [0, 0, 1, 1], [], []>, precision = #tpu.contract_precision<fp32>} : vector<8x16xf32>, vector<16x128xf32>, vector<8x128xf32> -> vector<8x128xf32>
    %c0_74 = arith.constant 0 : index
    %c0_75 = arith.constant 0 : index
    %74 = vector.load %arg3[%c0_74, %c0_75] : memref<1x128xf32, #tpu.memory_space<vmem>>, vector<1x128xf32>
    %75 = vector.broadcast %74 : vector<1x128xf32> to vector<8x128xf32>
    %76 = arith.addf %73, %75 : vector<8x128xf32>
    %cst_76 = arith.constant 0.000000e+00 : f32
    %77 = vector.broadcast %cst_76 : f32 to vector<8x128xf32>
    %78 = arith.maximumf %76, %77 : vector<8x128xf32>
    %c0_77 = arith.constant 0 : index
    %c0_78 = arith.constant 0 : index
    %79 = vector.load %arg4[%c0_77, %c0_78] : memref<16x8xf32, #tpu.memory_space<vmem>>, vector<16x8xf32>
    %cst_79 = arith.constant dense<0.000000e+00> : vector<16x128xf32>
    %80 = tpu.matmul %79, %78, %cst_79 {dimension_numbers = #tpu.dot_dimension_numbers<[1], [0], [0], [1], [0, 0, 1, 1], [], []>, precision = #tpu.contract_precision<fp32>} : vector<16x8xf32>, vector<8x128xf32>, vector<16x128xf32> -> vector<16x128xf32>
    %c5_80 = arith.constant 5 : index
    %c0_81 = arith.constant 0 : index
    %c0_82 = arith.constant 0 : index
    %81 = vector.load %arg5[%c5_80, %c0_81, %c0_82] : memref<8x16x128xf32, #tpu.memory_space<vmem>>, vector<1x16x128xf32>
    %82 = vector.shape_cast %81 : vector<1x16x128xf32> to vector<16x128xf32>
    %83 = vector.shape_cast %80 : vector<16x128xf32> to vector<1x16x128xf32>
    tpu.vector_store %arg5[%c5_80, %c0_81, %c0_82], %83 {strides = array<i32>} : memref<8x16x128xf32, #tpu.memory_space<vmem>>, vector<1x16x128xf32>,
    %c6 = arith.constant 6 : index
    %c0_83 = arith.constant 0 : index
    %c0_84 = arith.constant 0 : index
    %84 = vector.load %arg1[%c6, %c0_83, %c0_84] : memref<8x8x16xf32, #tpu.memory_space<vmem>>, vector<1x8x16xf32>
    %85 = vector.shape_cast %84 : vector<1x8x16xf32> to vector<8x16xf32>
    %c0_85 = arith.constant 0 : index
    %c0_86 = arith.constant 0 : index
    %86 = vector.load %arg2[%c0_85, %c0_86] : memref<16x128xf32, #tpu.memory_space<vmem>>, vector<16x128xf32>
    %cst_87 = arith.constant dense<0.000000e+00> : vector<8x128xf32>
    %87 = tpu.matmul %85, %86, %cst_87 {dimension_numbers = #tpu.dot_dimension_numbers<[1], [0], [0], [1], [0, 0, 1, 1], [], []>, precision = #tpu.contract_precision<fp32>} : vector<8x16xf32>, vector<16x128xf32>, vector<8x128xf32> -> vector<8x128xf32>
    %c0_88 = arith.constant 0 : index
    %c0_89 = arith.constant 0 : index
    %88 = vector.load %arg3[%c0_88, %c0_89] : memref<1x128xf32, #tpu.memory_space<vmem>>, vector<1x128xf32>
    %89 = vector.broadcast %88 : vector<1x128xf32> to vector<8x128xf32>
    %90 = arith.addf %87, %89 : vector<8x128xf32>
    %cst_90 = arith.constant 0.000000e+00 : f32
    %91 = vector.broadcast %cst_90 : f32 to vector<8x128xf32>
    %92 = arith.maximumf %90, %91 : vector<8x128xf32>
    %c0_91 = arith.constant 0 : index
    %c0_92 = arith.constant 0 : index
    %93 = vector.load %arg4[%c0_91, %c0_92] : memref<16x8xf32, #tpu.memory_space<vmem>>, vector<16x8xf32>
    %cst_93 = arith.constant dense<0.000000e+00> : vector<16x128xf32>
    %94 = tpu.matmul %93, %92, %cst_93 {dimension_numbers = #tpu.dot_dimension_numbers<[1], [0], [0], [1], [0, 0, 1, 1], [], []>, precision = #tpu.contract_precision<fp32>} : vector<16x8xf32>, vector<8x128xf32>, vector<16x128xf32> -> vector<16x128xf32>
    %c6_94 = arith.constant 6 : index
    %c0_95 = arith.constant 0 : index
    %c0_96 = arith.constant 0 : index
    %95 = vector.load %arg5[%c6_94, %c0_95, %c0_96] : memref<8x16x128xf32, #tpu.memory_space<vmem>>, vector<1x16x128xf32>
    %96 = vector.shape_cast %95 : vector<1x16x128xf32> to vector<16x128xf32>
    %97 = vector.shape_cast %94 : vector<16x128xf32> to vector<1x16x128xf32>
    tpu.vector_store %arg5[%c6_94, %c0_95, %c0_96], %97 {strides = array<i32>} : memref<8x16x128xf32, #tpu.memory_space<vmem>>, vector<1x16x128xf32>,
    %c7 = arith.constant 7 : index
    %c0_97 = arith.constant 0 : index
    %c0_98 = arith.constant 0 : index
    %98 = vector.load %arg1[%c7, %c0_97, %c0_98] : memref<8x8x16xf32, #tpu.memory_space<vmem>>, vector<1x8x16xf32>
    %99 = vector.shape_cast %98 : vector<1x8x16xf32> to vector<8x16xf32>
    %c0_99 = arith.constant 0 : index
    %c0_100 = arith.constant 0 : index
    %100 = vector.load %arg2[%c0_99, %c0_100] : memref<16x128xf32, #tpu.memory_space<vmem>>, vector<16x128xf32>
    %cst_101 = arith.constant dense<0.000000e+00> : vector<8x128xf32>
    %101 = tpu.matmul %99, %100, %cst_101 {dimension_numbers = #tpu.dot_dimension_numbers<[1], [0], [0], [1], [0, 0, 1, 1], [], []>, precision = #tpu.contract_precision<fp32>} : vector<8x16xf32>, vector<16x128xf32>, vector<8x128xf32> -> vector<8x128xf32>
    %c0_102 = arith.constant 0 : index
    %c0_103 = arith.constant 0 : index
    %102 = vector.load %arg3[%c0_102, %c0_103] : memref<1x128xf32, #tpu.memory_space<vmem>>, vector<1x128xf32>
    %103 = vector.broadcast %102 : vector<1x128xf32> to vector<8x128xf32>
    %104 = arith.addf %101, %103 : vector<8x128xf32>
    %cst_104 = arith.constant 0.000000e+00 : f32
    %105 = vector.broadcast %cst_104 : f32 to vector<8x128xf32>
    %106 = arith.maximumf %104, %105 : vector<8x128xf32>
    %c0_105 = arith.constant 0 : index
    %c0_106 = arith.constant 0 : index
    %107 = vector.load %arg4[%c0_105, %c0_106] : memref<16x8xf32, #tpu.memory_space<vmem>>, vector<16x8xf32>
    %cst_107 = arith.constant dense<0.000000e+00> : vector<16x128xf32>
    %108 = tpu.matmul %107, %106, %cst_107 {dimension_numbers = #tpu.dot_dimension_numbers<[1], [0], [0], [1], [0, 0, 1, 1], [], []>, precision = #tpu.contract_precision<fp32>} : vector<16x8xf32>, vector<8x128xf32>, vector<16x128xf32> -> vector<16x128xf32>
    %c7_108 = arith.constant 7 : index
    %c0_109 = arith.constant 0 : index
    %c0_110 = arith.constant 0 : index
    %109 = vector.load %arg5[%c7_108, %c0_109, %c0_110] : memref<8x16x128xf32, #tpu.memory_space<vmem>>, vector<1x16x128xf32>
    %110 = vector.shape_cast %109 : vector<1x16x128xf32> to vector<16x128xf32>
    %111 = vector.shape_cast %108 : vector<16x128xf32> to vector<1x16x128xf32>
    tpu.vector_store %arg5[%c7_108, %c0_109, %c0_110], %111 {strides = array<i32>} : memref<8x16x128xf32, #tpu.memory_space<vmem>>, vector<1x16x128xf32>,
    return
  }
  func.func @transform_0(%arg0: i32) -> (i32, i32, i32) {
    %c0_i32 = arith.constant 0 : i32
    %c0_i32_0 = arith.constant 0 : i32
    %c0_i32_1 = arith.constant 0 : i32
    return %arg0, %c0_i32, %c0_i32_0 : i32, i32, i32
  }
  func.func @transform_1(%arg0: i32) -> (i32, i32) {
    %c0_i32 = arith.constant 0 : i32
    %c0_i32_0 = arith.constant 0 : i32
    %c0_i32_1 = arith.constant 0 : i32
    return %c0_i32, %c0_i32_0 : i32, i32
  }
  func.func @transform_2(%arg0: i32) -> (i32, i32) {
    %c0_i32 = arith.constant 0 : i32
    %c0_i32_0 = arith.constant 0 : i32
    %c0_i32_1 = arith.constant 0 : i32
    return %c0_i32, %c0_i32_0 : i32, i32
  }
  func.func @transform_3(%arg0: i32) -> (i32, i32) {
    %c0_i32 = arith.constant 0 : i32
    %c0_i32_0 = arith.constant 0 : i32
    %c0_i32_1 = arith.constant 0 : i32
    return %c0_i32, %c0_i32_0 : i32, i32
  }
  func.func @transform_4(%arg0: i32) -> (i32, i32, i32) {
    %c0_i32 = arith.constant 0 : i32
    %c0_i32_0 = arith.constant 0 : i32
    %c0_i32_1 = arith.constant 0 : i32
    return %arg0, %c0_i32, %c0_i32_0 : i32, i32, i32
  }
}

</mosaic_0001>

<llo_original>
// kernel: tpu_custom_call.1
$region0: #{tpu_custom_call.1}
  #allocation0 [shape = 'u32[]', space=smem, size = 0x4, offset = 0x4, fixed_abs, tag = 'smem constant byte address 0x4 - core index']
  #allocation1 [shape = 'u32[144,128]{1,0:T(1,128)}', space=vmem, size = 0x12000, scoped, tag = 'internal scratch']
  %s0 = inlined_call_operand.hbm [shape: f32[16,8,16], index: 0, kind: input, shape index: {}]
  %s1 = inlined_call_operand.hbm [shape: f32[16,128], index: 1, kind: input, shape index: {}]
  %s2 = inlined_call_operand.hbm [shape: f32[1,128], index: 2, kind: input, shape index: {}]
  %s3 = inlined_call_operand.hbm [shape: f32[16,8], index: 3, kind: input, shape index: {}]
  %s4 = inlined_call_operand.hbm [shape: f32[16,16,128], index: 4, kind: output, shape index: {}]
  %s5 = sld [smem:[#allocation0]]
  $region65: #{tpu_custom_call.1} parent=0
    _
  %s7 = ssub.s32 1, %s5
  %s8 = scalar_select 0, %s7, %s5
  $region1: #{tpu_custom_call.1} parent=0
    #allocation2 [shape = 'u8[65536]{0}', space=vmem, size = 0x10000, scoped, tag = 'input window, operand 0']
    #allocation3 [shape = 's32[2]{0}', space=sflag, size = 0x8, scoped, tag = 'scoped memory for tpu_custom_call.1']
    #allocation4 [shape = 's32[2]{0}', space=sflag, size = 0x8, scoped, tag = 'scoped memory for tpu_custom_call.1']
    #allocation5 [shape = 'u8[8192]{0}', space=vmem, size = 0x2000, scoped, tag = 'input window, operand 1, single buffered']
    #allocation6 [shape = 's32[1]{0}', space=sflag, size = 0x4, scoped, tag = 'scoped memory for tpu_custom_call.1']
    #allocation7 [shape = 'u8[512]{0}', space=vmem, size = 0x400, scoped, tag = 'input window, operand 2, single buffered']
    #allocation8 [shape = 'u8[8192]{0}', space=vmem, size = 0x2000, scoped, tag = 'input window, operand 3, single buffered']
    #allocation9 [shape = 's32[1]{0}', space=sflag, size = 0x4, scoped, tag = 'scoped memory for tpu_custom_call.1']
    #allocation10 [shape = 'u8[131072]{0}', space=vmem, size = 0x20000, scoped, tag = 'output window, operand 0']
    %9 = vsyncpa [#allocation3], 0
    %s10 = scalar_lea.sflag [#allocation3], 1
    %11 = vsyncpa %s10, 0
    %12 = vsyncpa [#allocation6], 0
    %13 = vsyncpa [#allocation9], 0
    %14 = vsyncpa [#allocation4], 0
    %s15 = scalar_lea.sflag [#allocation4], 1
    %16 = vsyncpa %s15, 0
    loop: start=0, step=1, limit=4
    $region2: #{tpu_custom_call.1} parent=1 // loop_pre_header
      _
    $region3: #{tpu_custom_call.1} parent=1 // loop_header
      %s18 = sphi 0, %s22
      %p19 = scmp.ge.s32.totalorder %s18, 4
      %s28 = sphi 0, %s30
      %s31 = sphi 0, %s28
      %s32 = sphi 0, %s31
      %s48 = sphi 0, %s32
      %s52 = sphi 0, %s52
      %s54 = sphi 0, %s52
      %s55 = sphi 0, %s54
      %s69 = sphi 0, %s55
      %s73 = sphi 0, %s73
      %s75 = sphi 0, %s73
      %s76 = sphi 0, %s75
      %s90 = sphi 0, %s76
      %s94 = sphi 0, %s94
      %s96 = sphi 0, %s94
      %s97 = sphi 0, %s96
      %s111 = sphi 0, %s97
      %s117 = sphi 0, %s119
      %s120 = sphi 0, %s117
      %s121 = sphi 0, %s120
      %s137 = sphi 0, %s121
    $region4: #{tpu_custom_call.1} parent=1 // loop_header_branch
      %21 = sbr.rel (%p19) target = $region8
    $region5: #{tpu_custom_call.1} parent=1 // loop_body
      %s23 = ssub.s32 %s18, 1
      %s24 = ssub.s32 %s18, 2
      %s25 = sadd.s32 %s18, 1
      %s26 = ssub.s32 %s18, %s25
      %p27 = scmp.eq.s32.totalorder %s26, 0
      %s29 = sadd.s32 %s28, 1
      %s30 = scalar_select %p27, %s28, %s29
      %p33 = pneg %p27
      %p34 = scmp.eq.s32.totalorder %s18, 1
      %p35 = por %p33, %p34
      %p36 = scmp.ne.s32.totalorder %s28, %s31
      %p37 = scmp.eq.s32.totalorder %s18, 0
      %p38 = por %p36, %p37
      %p39 = scmp.ne.s32.totalorder %s28, %s31
      %p40 = scmp.eq.s32.totalorder %s23, 1
      %p41 = por %p39, %p40
      %p42 = scmp.ne.s32.totalorder %s31, %s32
      %p43 = scmp.eq.s32.totalorder %s23, 0
      %p44 = por %p42, %p43
      %p45 = scmp.ne.s32.totalorder %s31, %s32
      %p46 = scmp.eq.s32.totalorder %s24, 1
      %p47 = por %p45, %p46
      %p49 = scmp.ne.s32.totalorder %s32, %s48
      %p50 = scmp.eq.s32.totalorder %s24, 0
      %p51 = por %p49, %p50
      %s53 = sadd.s32 %s52, 1
      %p56 = scmp.eq.s32.totalorder %s18, 1
      %p57 = scmp.ne.s32.totalorder %s52, %s54
      %p58 = scmp.eq.s32.totalorder %s18, 0
      %p59 = por %p57, %p58
      %p60 = scmp.ne.s32.totalorder %s52, %s54
      %p61 = scmp.eq.s32.totalorder %s23, 1
      %p62 = por %p60, %p61
      %p63 = scmp.ne.s32.totalorder %s54, %s55
      %p64 = scmp.eq.s32.totalorder %s23, 0
      %p65 = por %p63, %p64
      %p66 = scmp.ne.s32.totalorder %s54, %s55
      %p67 = scmp.eq.s32.totalorder %s24, 1
      %p68 = por %p66, %p67
      %p70 = scmp.ne.s32.totalorder %s55, %s69
      %p71 = scmp.eq.s32.totalorder %s24, 0
      %p72 = por %p70, %p71
      %s74 = sadd.s32 %s73, 1
      %p77 = scmp.eq.s32.totalorder %s18, 1
      %p78 = scmp.ne.s32.totalorder %s73, %s75
      %p79 = scmp.eq.s32.totalorder %s18, 0
      %p80 = por %p78, %p79
      %p81 = scmp.ne.s32.totalorder %s73, %s75
      %p82 = scmp.eq.s32.totalorder %s23, 1
      %p83 = por %p81, %p82
      %p84 = scmp.ne.s32.totalorder %s75, %s76
      %p85 = scmp.eq.s32.totalorder %s23, 0
      %p86 = por %p84, %p85
      %p87 = scmp.ne.s32.totalorder %s75, %s76
      %p88 = scmp.eq.s32.totalorder %s24, 1
      %p89 = por %p87, %p88
      %p91 = scmp.ne.s32.totalorder %s76, %s90
      %p92 = scmp.eq.s32.totalorder %s24, 0
      %p93 = por %p91, %p92
      %s95 = sadd.s32 %s94, 1
      %p98 = scmp.eq.s32.totalorder %s18, 1
      %p99 = scmp.ne.s32.totalorder %s94, %s96
      %p100 = scmp.eq.s32.totalorder %s18, 0
      %p101 = por %p99, %p100
      %p102 = scmp.ne.s32.totalorder %s94, %s96
      %p103 = scmp.eq.s32.totalorder %s23, 1
      %p104 = por %p102, %p103
      %p105 = scmp.ne.s32.totalorder %s96, %s97
      %p106 = scmp.eq.s32.totalorder %s23, 0
      %p107 = por %p105, %p106
      %p108 = scmp.ne.s32.totalorder %s96, %s97
      %p109 = scmp.eq.s32.totalorder %s24, 1
      %p110 = por %p108, %p109
      %p112 = scmp.ne.s32.totalorder %s97, %s111
      %p113 = scmp.eq.s32.totalorder %s24, 0
      %p114 = por %p112, %p113
      %s115 = ssub.s32 %s18, %s25
      %p116 = scmp.eq.s32.totalorder %s115, 0
      %s118 = sadd.s32 %s117, 1
      %s119 = scalar_select %p116, %s117, %s118
      %p122 = pneg %p116
      %p123 = scmp.eq.s32.totalorder %s18, 1
      %p124 = por %p122, %p123
      %p125 = scmp.ne.s32.totalorder %s117, %s120
      %p126 = scmp.eq.s32.totalorder %s18, 0
      %p127 = por %p125, %p126
      %p128 = scmp.ne.s32.totalorder %s117, %s120
      %p129 = scmp.eq.s32.totalorder %s23, 1
      %p130 = por %p128, %p129
      %p131 = scmp.ne.s32.totalorder %s120, %s121
      %p132 = scmp.eq.s32.totalorder %s23, 0
      %p133 = por %p131, %p132
      %p134 = scmp.ne.s32.totalorder %s120, %s121
      %p135 = scmp.eq.s32.totalorder %s24, 1
      %p136 = por %p134, %p135
      %p138 = scmp.ne.s32.totalorder %s121, %s137
      %p139 = scmp.eq.s32.totalorder %s24, 0
      %p140 = por %p138, %p139
      %p141 = scmp.le.s32.totalorder 1, %s18
      %p142 = scmp.lt.s32.totalorder %s18, 3
      %p143 = pnand %p141, %p142
      %p144 = pneg %p143
      // Predicated region
      $region9: #{tpu_custom_call.1} parent=5 // pred_check
        _
      $region10: #{tpu_custom_call.1} parent=5 // pred_check_branch
        %146 = sbr.rel (%p143) target = $region12
      $region11: #{tpu_custom_call.1} parent=5 // pred_region
        %s147 = ssub.s32 %s18, 1
        // Predicated region
        $region13: #{tpu_custom_call.1} parent=11 // pred_check
          %p148 = pneg %p65
        $region14: #{tpu_custom_call.1} parent=11 // pred_check_branch
          %150 = sbr.rel (%p148) target = $region16
        $region15: #{tpu_custom_call.1} parent=11 // pred_region
          %s152 = ssub.s32 256, 256
          %153 = vsyncadd [#allocation6], %s152
          %s154 = sshll.u32 [#allocation5], 4
          %s155 = int_to_ptr.vmem [resolvable:$true] %s154
          %160 = dma.hbm_to_vmem [thread:$0]  %s1, 256, %s155, [#allocation6], 128, 128, 8
        $region16: #{tpu_custom_call.1} parent=11 // pred_fallthru
          _
        // Predicated region
        $region17: #{tpu_custom_call.1} parent=11 // pred_check
          %p161 = pneg %p86
        $region18: #{tpu_custom_call.1} parent=11 // pred_check_branch
          %163 = sbr.rel (%p161) target = $region20
        $region19: #{tpu_custom_call.1} parent=11 // pred_region
          %s165 = ssub.s32 16, 16
          %166 = vsyncadd [#allocation6], %s165
          %s168 = sshll.u32 [#allocation7], 4
          %s169 = int_to_ptr.vmem [resolvable:$true] %s168
          %171 = dma.hbm_to_vmem [thread:$0]  %s2, 16, %s169, [#allocation6]
        $region20: #{tpu_custom_call.1} parent=11 // pred_fallthru
          _
        // Predicated region
        $region21: #{tpu_custom_call.1} parent=11 // pred_check
          %p172 = pneg %p107
        $region22: #{tpu_custom_call.1} parent=11 // pred_check_branch
          %174 = sbr.rel (%p172) target = $region24
        $region23: #{tpu_custom_call.1} parent=11 // pred_region
          %s176 = ssub.s32 256, 256
          %177 = vsyncadd [#allocation9], %s176
          %s178 = sshll.u32 [#allocation8], 4
          %s179 = int_to_ptr.vmem [resolvable:$true] %s178
          %184 = dma.hbm_to_vmem [thread:$0]  %s3, 256, %s179, [#allocation9], 128, 128, 8
        $region24: #{tpu_custom_call.1} parent=11 // pred_fallthru
          _
      $region12: #{tpu_custom_call.1} parent=5 // pred_fallthru
        _
      %p185 = scmp.lt.s32.totalorder %s18, 2
      // Predicated region
      $region25: #{tpu_custom_call.1} parent=5 // pred_check
        %p186 = pneg %p185
      $region26: #{tpu_custom_call.1} parent=5 // pred_check_branch
        %188 = sbr.rel (%p186) target = $region28
      $region27: #{tpu_custom_call.1} parent=5 // pred_region
        // Predicated region
        $region29: #{tpu_custom_call.1} parent=27 // pred_check
          %p189 = pneg %p38
        $region30: #{tpu_custom_call.1} parent=27 // pred_check_branch
          %191 = sbr.rel (%p189) target = $region32
        $region31: #{tpu_custom_call.1} parent=27 // pred_region
          %s192 = sand.u32 %s28, 1
          %s193 = scalar_lea.sflag [#allocation3], %s192
          %s194 = sand.u32 %s28, 1
          %s195 = smul.addr %s194, 64
          %s196 = scalar_lea.vmem [#allocation2], %s195
          %s197 = smul.u32 8, %s18
          %s199 = ssub.s32 1024, 1024
          %200 = vsyncadd %s193, %s199
          %s201 = smul.addr %s197, 128
          %s202 = scalar_lea.hbm %s0, %s201
          %s203 = sshll.u32 %s196, 4
          %s204 = int_to_ptr.vmem [resolvable:$true] %s203
          %209 = dma.hbm_to_vmem [thread:$0]  %s202, 1024, %s204, %s193, 128, 128, 8
        $region32: #{tpu_custom_call.1} parent=27 // pred_fallthru
          _
      $region28: #{tpu_custom_call.1} parent=5 // pred_fallthru
        _
      %p210 = scmp.le.s32.totalorder 1, %s18
      %p211 = scmp.lt.s32.totalorder %s18, 3
      %p212 = pnand %p210, %p211
      %p213 = pneg %p212
      // Predicated region
      $region33: #{tpu_custom_call.1} parent=5 // pred_check
        _
      $region34: #{tpu_custom_call.1} parent=5 // pred_check_branch
        %215 = sbr.rel (%p212) target = $region36
      $region35: #{tpu_custom_call.1} parent=5 // pred_region
        %s216 = ssub.s32 %s18, 1
        %s217 = sand.u32 %s31, 1
        %s218 = scalar_lea.sflag [#allocation3], %s217
        %s219 = sand.u32 %s31, 1
        %s220 = smul.addr %s219, 64
        %s221 = scalar_lea.vmem [#allocation2], %s220
        // Predicated region
        $region37: #{tpu_custom_call.1} parent=35 // pred_check
          %p222 = pneg %p44
        $region38: #{tpu_custom_call.1} parent=35 // pred_check_branch
          %224 = sbr.rel (%p222) target = $region40
        $region39: #{tpu_custom_call.1} parent=35 // pred_region
          %225 = dma.done %s218, 1024
        $region40: #{tpu_custom_call.1} parent=35 // pred_fallthru
          _
        // Predicated region
        $region41: #{tpu_custom_call.1} parent=35 // pred_check
          %p226 = pneg %p65
        $region42: #{tpu_custom_call.1} parent=35 // pred_check_branch
          %228 = sbr.rel (%p226) target = $region44
        $region43: #{tpu_custom_call.1} parent=35 // pred_region
          %229 = dma.done [#allocation6], 256
        $region44: #{tpu_custom_call.1} parent=35 // pred_fallthru
          _
        // Predicated region
        $region45: #{tpu_custom_call.1} parent=35 // pred_check
          %p230 = pneg %p86
        $region46: #{tpu_custom_call.1} parent=35 // pred_check_branch
          %232 = sbr.rel (%p230) target = $region48
        $region47: #{tpu_custom_call.1} parent=35 // pred_region
          %233 = dma.done [#allocation6], 16
        $region48: #{tpu_custom_call.1} parent=35 // pred_fallthru
          _
        // Predicated region
        $region49: #{tpu_custom_call.1} parent=35 // pred_check
          %p234 = pneg %p107
        $region50: #{tpu_custom_call.1} parent=35 // pred_check_branch
          %236 = sbr.rel (%p234) target = $region52
        $region51: #{tpu_custom_call.1} parent=35 // pred_region
          %237 = dma.done [#allocation9], 256
        $region52: #{tpu_custom_call.1} parent=35 // pred_fallthru
          _
        %s238 = sand.u32 %s31, 1
        %s239 = scalar_lea.sflag [#allocation3], %s238
        %s240 = sand.u32 %s31, 1
        %s241 = smul.addr %s240, 64
        %s242 = scalar_lea.vmem [#allocation2], %s241
        %p243 = pneg %p44
        %p244 = pneg %p41
        %p245 = pneg %p65
        %p246 = pneg %p62
        %p247 = pneg %p86
        %p248 = pneg %p83
        %p249 = pneg %p107
        %p250 = pneg %p104
        %p251 = pneg %p133
        %p252 = pneg %p130
        %s253 = sand.u32 %s120, 1
        %s254 = scalar_lea.sflag [#allocation4], %s253
        %s255 = sand.u32 %s120, 1
        %s256 = smul.addr %s255, 128
        %s257 = scalar_lea.vmem [#allocation10], %s256
        %s258 = smul.u32 8, %s23
        %s259 = smul.u32 8, %s23
        %v260 = vld [vmem:[%s221] sm:$0xff]
        %v261 = vld [vmem:[#allocation5] sm:$0xff]
        %v262 = vld [vmem:[#allocation5 + $0x8] sm:$0xff]
        %v263 = vld [vmem:[#allocation7] sm:$0x1]
        %v265 = vlaneseq
        %v266 = vshrl.u32 %v265, 7
        %v267 = vsub.s32 0, %v266
        %v268 = vrot.slane %v263, %v267
        %vm270 = vcmask 130048
        %v272 = vsel %vm270, %v260, 0
        %274 = vmatprep.subr.mxu0 0.0
        %v275 = vand.u32 %v261, 4294901760
        %276 = vmatpush1.msra.mxu0 %v275
        %277 = vmatprep.subr.mxu0 0.0
        %v278 = vand.u32 %v262, 4294901760
        %279 = vmatpush1.msra.mxu0 %v278
        %280 = vmatprep.subr.mxu0 0.0
        %281 = vmatpush1.msra.mxu0 0.0
        %282 = vmatprep.subr.mxu0 0.0
        %283 = vmatpush1.msra.mxu0 0.0
        %284 = vmatprep.subr.mxu0 0.0
        %285 = vmatpush1.msra.mxu0 0.0
        %286 = vmatprep.subr.mxu0 0.0
        %287 = vmatpush1.msra.mxu0 0.0
        %288 = vmatprep.subr.mxu0 0.0
        %289 = vmatpush1.msra.mxu0 0.0
        %290 = vmatprep.subr.mxu0 0.0
        %291 = vmatpush1.msra.mxu0 0.0
        %292 = vmatprep.subr.mxu0 0.0
        %293 = vmatpush1.msra.mxu0 0.0
        %294 = vmatprep.subr.mxu0 0.0
        %295 = vmatpush1.msra.mxu0 0.0
        %296 = vmatprep.subr.mxu0 0.0
        %297 = vmatpush1.msra.mxu0 0.0
        %298 = vmatprep.subr.mxu0 0.0
        %299 = vmatpush1.msra.mxu0 0.0
        %300 = vmatprep.subr.mxu0 0.0
        %301 = vmatpush1.msra.mxu0 0.0
        %302 = vmatprep.subr.mxu0 0.0
        %303 = vmatpush1.msra.mxu0 0.0
        %304 = vmatprep.subr.mxu0 0.0
        %305 = vmatpush1.msra.mxu0 0.0
        %306 = vmatprep.subr.mxu0 0.0
        %307 = vmatpush1.msra.mxu0 0.0
        %308 = vmatprep.subr.mxu0 0.0
        %309 = vmatpush1.msra.mxu0 0.0
        %310 = vmatprep.subr.mxu0 0.0
        %311 = vmatpush1.msra.mxu0 0.0
        %312 = vmatprep.subr.mxu0 0.0
        %313 = vmatpush1.msra.mxu0 0.0
        %314 = vmatprep.subr.mxu0 0.0
        %315 = vmatpush1.msra.mxu0 0.0
        %316 = vmatprep.subr.mxu0 0.0
        %317 = vmatpush1.msra.mxu0 0.0
        %318 = vmatprep.subr.mxu0 0.0
        %319 = vmatpush1.msra.mxu0 0.0
        %320 = vmatprep.subr.mxu0 0.0
        %321 = vmatpush1.msra.mxu0 0.0
        %322 = vmatprep.subr.mxu0 0.0
        %323 = vmatpush1.msra.mxu0 0.0
        %324 = vmatprep.subr.mxu0 0.0
        %325 = vmatpush1.msra.mxu0 0.0
        %326 = vmatprep.subr.mxu0 0.0
        %327 = vmatpush1.msra.mxu0 0.0
        %328 = vmatprep.subr.mxu0 0.0
        %329 = vmatpush1.msra.mxu0 0.0
        %330 = vmatprep.subr.mxu0 0.0
        %331 = vmatpush1.msra.mxu0 0.0
        %332 = vmatprep.subr.mxu0 0.0
        %333 = vmatpush1.msra.mxu0 0.0
        %334 = vmatprep.subr.mxu0 0.0
        %335 = vmatpush1.msra.mxu0 0.0
        %336 = vmatprep.subr.mxu0 0.0
        %337 = vmatpush1.msra.mxu0 0.0
        %338 = vmatprep.subr.mxu0 0.0
        %339 = vmatpush1.msra.mxu0 0.0
        %340 = vmatprep.mubr.f32.mxu0 0.0
        %v341 = vand.u32 %v272, 4294901760
        %v342 = vsub.f32 %v272, %v341
        %v343 = vand.u32 %v342, 4294901760
        %v344 = vsub.f32 %v342, %v343
        %v345 = vand.u32 %v344, 4294901760
        %346 = vmatmul.mubr.f32.gmra.mrb[0].mxu0 %v345
        %v347 = vpop.f32.mrb[0].mxu0
        %v348 = vadd.f32 %v268, %v347
        %v349 = vpop.f32.mrb[0].mxu0
        %350 = vdwg.mxu0
        %351 = vmatprep.subr.mxu0 0.0
        %v352 = vand.u32 %v261, 4294901760
        %v353 = vsub.f32 %v261, %v352
        %v354 = vand.u32 %v353, 4294901760
        %v355 = vsub.f32 %v353, %v354
        %v356 = vand.u32 %v355, 4294901760
        %357 = vmatpush1.msra.mxu0 %v356
        %358 = vmatprep.subr.mxu0 0.0
        %v359 = vand.u32 %v262, 4294901760
        %v360 = vsub.f32 %v262, %v359
        %v361 = vand.u32 %v360, 4294901760
        %v362 = vsub.f32 %v360, %v361
        %v363 = vand.u32 %v362, 4294901760
        %364 = vmatpush1.msra.mxu0 %v363
        %365 = vmatprep.subr.mxu0 0.0
        %366 = vmatpush1.msra.mxu0 0.0
        %367 = vmatprep.subr.mxu0 0.0
        %368 = vmatpush1.msra.mxu0 0.0
        %369 = vmatprep.subr.mxu0 0.0
        %370 = vmatpush1.msra.mxu0 0.0
        %371 = vmatprep.subr.mxu0 0.0
        %372 = vmatpush1.msra.mxu0 0.0
        %373 = vmatprep.subr.mxu0 0.0
        %374 = vmatpush1.msra.mxu0 0.0
        %375 = vmatprep.subr.mxu0 0.0
        %376 = vmatpush1.msra.mxu0 0.0
        %377 = vmatprep.subr.mxu0 0.0
        %378 = vmatpush1.msra.mxu0 0.0
        %379 = vmatprep.subr.mxu0 0.0
        %380 = vmatpush1.msra.mxu0 0.0
        %381 = vmatprep.subr.mxu0 0.0
        %382 = vmatpush1.msra.mxu0 0.0
        %383 = vmatprep.subr.mxu0 0.0
        %384 = vmatpush1.msra.mxu0 0.0
        %385 = vmatprep.subr.mxu0 0.0
        %386 = vmatpush1.msra.mxu0 0.0
        %387 = vmatprep.subr.mxu0 0.0
        %388 = vmatpush1.msra.mxu0 0.0
        %389 = vmatprep.subr.mxu0 0.0
        %390 = vmatpush1.msra.mxu0 0.0
        %391 = vmatprep.subr.mxu0 0.0
        %392 = vmatpush1.msra.mxu0 0.0
        %393 = vmatprep.subr.mxu0 0.0
        %394 = vmatpush1.msra.mxu0 0.0
        %395 = vmatprep.subr.mxu0 0.0
        %396 = vmatpush1.msra.mxu0 0.0
        %397 = vmatprep.subr.mxu0 0.0
        %398 = vmatpush1.msra.mxu0 0.0
        %399 = vmatprep.subr.mxu0 0.0
        %400 = vmatpush1.msra.mxu0 0.0
        %401 = vmatprep.subr.mxu0 0.0
        %402 = vmatpush1.msra.mxu0 0.0
        %403 = vmatprep.subr.mxu0 0.0
        %404 = vmatpush1.msra.mxu0 0.0
        %405 = vmatprep.subr.mxu0 0.0
        %406 = vmatpush1.msra.mxu0 0.0
        %407 = vmatprep.subr.mxu0 0.0
        %408 = vmatpush1.msra.mxu0 0.0
        %409 = vmatprep.subr.mxu0 0.0
        %410 = vmatpush1.msra.mxu0 0.0
        %411 = vmatprep.subr.mxu0 0.0
        %412 = vmatpush1.msra.mxu0 0.0
        %413 = vmatprep.subr.mxu0 0.0
        %414 = vmatpush1.msra.mxu0 0.0
        %415 = vmatprep.subr.mxu0 0.0
        %416 = vmatpush1.msra.mxu0 0.0
        %417 = vmatprep.subr.mxu0 0.0
        %418 = vmatpush1.msra.mxu0 0.0
        %419 = vmatprep.subr.mxu0 0.0
        %420 = vmatpush1.msra.mxu0 0.0
        %421 = vmatprep.subr.mxu0 0.0
        %422 = vmatpush1.msra.mxu0 0.0
        %423 = vmatprep.subr.mxu0 0.0
        %424 = vmatpush1.msra.mxu0 0.0
        %425 = vmatprep.mubr.f32.mxu0 0.0
        %v426 = vand.u32 %v272, 4294901760
        %427 = vmatmul.mubr.f32.gmra.mrb[0].mxu0 %v426
        %v428 = vpop.f32.mrb[0].mxu0
        %v429 = vadd.f32 %v348, %v428
        %v430 = vpop.f32.mrb[0].mxu0
        %431 = vdwg.mxu0
        %432 = vmatprep.subr.mxu0 0.0
        %v433 = vand.u32 %v261, 4294901760
        %v434 = vsub.f32 %v261, %v433
        %435 = vmatpush1.msra.mxu0 %v434
        %436 = vmatprep.subr.mxu0 0.0
        %v437 = vand.u32 %v262, 4294901760
        %v438 = vsub.f32 %v262, %v437
        %439 = vmatpush1.msra.mxu0 %v438
        %440 = vmatprep.subr.mxu0 0.0
        %441 = vmatpush1.msra.mxu0 0.0
        %442 = vmatprep.subr.mxu0 0.0
        %443 = vmatpush1.msra.mxu0 0.0
        %444 = vmatprep.subr.mxu0 0.0
        %445 = vmatpush1.msra.mxu0 0.0
        %446 = vmatprep.subr.mxu0 0.0
        %447 = vmatpush1.msra.mxu0 0.0
        %448 = vmatprep.subr.mxu0 0.0
        %449 = vmatpush1.msra.mxu0 0.0
        %450 = vmatprep.subr.mxu0 0.0
        %451 = vmatpush1.msra.mxu0 0.0
        %452 = vmatprep.subr.mxu0 0.0
        %453 = vmatpush1.msra.mxu0 0.0
        %454 = vmatprep.subr.mxu0 0.0
        %455 = vmatpush1.msra.mxu0 0.0
        %456 = vmatprep.subr.mxu0 0.0
        %457 = vmatpush1.msra.mxu0 0.0
        %458 = vmatprep.subr.mxu0 0.0
        %459 = vmatpush1.msra.mxu0 0.0
        %460 = vmatprep.subr.mxu0 0.0
        %461 = vmatpush1.msra.mxu0 0.0
        %462 = vmatprep.subr.mxu0 0.0
        %463 = vmatpush1.msra.mxu0 0.0
        %464 = vmatprep.subr.mxu0 0.0
        %465 = vmatpush1.msra.mxu0 0.0
        %466 = vmatprep.subr.mxu0 0.0
        %467 = vmatpush1.msra.mxu0 0.0
        %468 = vmatprep.subr.mxu0 0.0
        %469 = vmatpush1.msra.mxu0 0.0
        %470 = vmatprep.subr.mxu0 0.0
        %471 = vmatpush1.msra.mxu0 0.0
        %472 = vmatprep.subr.mxu0 0.0
        %473 = vmatpush1.msra.mxu0 0.0
        %474 = vmatprep.subr.mxu0 0.0
        %475 = vmatpush1.msra.mxu0 0.0
        %476 = vmatprep.subr.mxu0 0.0
        %477 = vmatpush1.msra.mxu0 0.0
        %478 = vmatprep.subr.mxu0 0.0
        %479 = vmatpush1.msra.mxu0 0.0
        %480 = vmatprep.subr.mxu0 0.0
        %481 = vmatpush1.msra.mxu0 0.0
        %482 = vmatprep.subr.mxu0 0.0
        %483 = vmatpush1.msra.mxu0 0.0
        %484 = vmatprep.subr.mxu0 0.0
        %485 = vmatpush1.msra.mxu0 0.0
        %486 = vmatprep.subr.mxu0 0.0
        %487 = vmatpush1.msra.mxu0 0.0
        %488 = vmatprep.subr.mxu0 0.0
        %489 = vmatpush1.msra.mxu0 0.0
        %490 = vmatprep.subr.mxu0 0.0
        %491 = vmatpush1.msra.mxu0 0.0
        %492 = vmatprep.subr.mxu0 0.0
        %493 = vmatpush1.msra.mxu0 0.0
        %494 = vmatprep.subr.mxu0 0.0
        %495 = vmatpush1.msra.mxu0 0.0
        %496 = vmatprep.subr.mxu0 0.0
        %497 = vmatpush1.msra.mxu0 0.0
        %498 = vmatprep.subr.mxu0 0.0
        %499 = vmatpush1.msra.mxu0 0.0
        %500 = vmatprep.mubr.f32.mxu0 0.0
        %v501 = vand.u32 %v272, 4294901760
        %v502 = vsub.f32 %v272, %v501
        %503 = vmatmul.mubr.f32.gmra.mrb[0].mxu0 %v502
        %v504 = vpop.f32.mrb[0].mxu0
        %v505 = vadd.f32 %v429, %v504
        %v506 = vpop.f32.mrb[0].mxu0
        %507 = vdwg.mxu0
        %508 = vmatprep.subr.mxu0 0.0
        %v509 = vand.u32 %v261, 4294901760
        %510 = vmatpush1.msra.mxu0 %v509
        %511 = vmatprep.subr.mxu0 0.0
        %v512 = vand.u32 %v262, 4294901760
        %513 = vmatpush1.msra.mxu0 %v512
        %514 = vmatprep.subr.mxu0 0.0
        %515 = vmatpush1.msra.mxu0 0.0
        %516 = vmatprep.subr.mxu0 0.0
        %517 = vmatpush1.msra.mxu0 0.0
        %518 = vmatprep.subr.mxu0 0.0
        %519 = vmatpush1.msra.mxu0 0.0
        %520 = vmatprep.subr.mxu0 0.0
        %521 = vmatpush1.msra.mxu0 0.0
        %522 = vmatprep.subr.mxu0 0.0
        %523 = vmatpush1.msra.mxu0 0.0
        %524 = vmatprep.subr.mxu0 0.0
        %525 = vmatpush1.msra.mxu0 0.0
        %526 = vmatprep.subr.mxu0 0.0
        %527 = vmatpush1.msra.mxu0 0.0
        %528 = vmatprep.subr.mxu0 0.0
        %529 = vmatpush1.msra.mxu0 0.0
        %530 = vmatprep.subr.mxu0 0.0
        %531 = vmatpush1.msra.mxu0 0.0
        %532 = vmatprep.subr.mxu0 0.0
        %533 = vmatpush1.msra.mxu0 0.0
        %534 = vmatprep.subr.mxu0 0.0
        %535 = vmatpush1.msra.mxu0 0.0
        %536 = vmatprep.subr.mxu0 0.0
        %537 = vmatpush1.msra.mxu0 0.0
        %538 = vmatprep.subr.mxu0 0.0
        %539 = vmatpush1.msra.mxu0 0.0
        %540 = vmatprep.subr.mxu0 0.0
        %541 = vmatpush1.msra.mxu0 0.0
        %542 = vmatprep.subr.mxu0 0.0
        %543 = vmatpush1.msra.mxu0 0.0
        %544 = vmatprep.subr.mxu0 0.0
        %545 = vmatpush1.msra.mxu0 0.0
        %546 = vmatprep.subr.mxu0 0.0
        %547 = vmatpush1.msra.mxu0 0.0
        %548 = vmatprep.subr.mxu0 0.0
        %549 = vmatpush1.msra.mxu0 0.0
        %550 = vmatprep.subr.mxu0 0.0
        %551 = vmatpush1.msra.mxu0 0.0
        %552 = vmatprep.subr.mxu0 0.0
        %553 = vmatpush1.msra.mxu0 0.0
        %554 = vmatprep.subr.mxu0 0.0
        %555 = vmatpush1.msra.mxu0 0.0
        %556 = vmatprep.subr.mxu0 0.0
        %557 = vmatpush1.msra.mxu0 0.0
        %558 = vmatprep.subr.mxu0 0.0
        %559 = vmatpush1.msra.mxu0 0.0
        %560 = vmatprep.subr.mxu0 0.0
        %561 = vmatpush1.msra.mxu0 0.0
        %562 = vmatprep.subr.mxu0 0.0
        %563 = vmatpush1.msra.mxu0 0.0
        %564 = vmatprep.subr.mxu0 0.0
        %565 = vmatpush1.msra.mxu0 0.0
        %566 = vmatprep.subr.mxu0 0.0
        %567 = vmatpush1.msra.mxu0 0.0
        %568 = vmatprep.subr.mxu0 0.0
        %569 = vmatpush1.msra.mxu0 0.0
        %570 = vmatprep.subr.mxu0 0.0
        %571 = vmatpush1.msra.mxu0 0.0
        %572 = vmatprep.subr.mxu0 0.0
        %573 = vmatpush1.msra.mxu0 0.0
        %574 = vmatprep.mubr.f32.mxu0 0.0
        %v575 = vand.u32 %v272, 4294901760
        %v576 = vsub.f32 %v272, %v575
        %v577 = vand.u32 %v576, 4294901760
        %578 = vmatmul.mubr.f32.gmra.mrb[0].mxu0 %v577
        %v579 = vpop.f32.mrb[0].mxu0
        %v580 = vadd.f32 %v505, %v579
        %v581 = vpop.f32.mrb[0].mxu0
        %582 = vdwg.mxu0
        %583 = vmatprep.subr.mxu0 0.0
        %v584 = vand.u32 %v261, 4294901760
        %v585 = vsub.f32 %v261, %v584
        %v586 = vand.u32 %v585, 4294901760
        %587 = vmatpush1.msra.mxu0 %v586
        %588 = vmatprep.subr.mxu0 0.0
        %v589 = vand.u32 %v262, 4294901760
        %v590 = vsub.f32 %v262, %v589
        %v591 = vand.u32 %v590, 4294901760
        %592 = vmatpush1.msra.mxu0 %v591
        %593 = vmatprep.subr.mxu0 0.0
        %594 = vmatpush1.msra.mxu0 0.0
        %595 = vmatprep.subr.mxu0 0.0
        %596 = vmatpush1.msra.mxu0 0.0
        %597 = vmatprep.subr.mxu0 0.0
        %598 = vmatpush1.msra.mxu0 0.0
        %599 = vmatprep.subr.mxu0 0.0
        %600 = vmatpush1.msra.mxu0 0.0
        %601 = vmatprep.subr.mxu0 0.0
        %602 = vmatpush1.msra.mxu0 0.0
        %603 = vmatprep.subr.mxu0 0.0
        %604 = vmatpush1.msra.mxu0 0.0
        %605 = vmatprep.subr.mxu0 0.0
        %606 = vmatpush1.msra.mxu0 0.0
        %607 = vmatprep.subr.mxu0 0.0
        %608 = vmatpush1.msra.mxu0 0.0
        %609 = vmatprep.subr.mxu0 0.0
        %610 = vmatpush1.msra.mxu0 0.0
        %611 = vmatprep.subr.mxu0 0.0
        %612 = vmatpush1.msra.mxu0 0.0
        %613 = vmatprep.subr.mxu0 0.0
        %614 = vmatpush1.msra.mxu0 0.0
        %615 = vmatprep.subr.mxu0 0.0
        %616 = vmatpush1.msra.mxu0 0.0
        %617 = vmatprep.subr.mxu0 0.0
        %618 = vmatpush1.msra.mxu0 0.0
        %619 = vmatprep.subr.mxu0 0.0
        %620 = vmatpush1.msra.mxu0 0.0
        %621 = vmatprep.subr.mxu0 0.0
        %622 = vmatpush1.msra.mxu0 0.0
        %623 = vmatprep.subr.mxu0 0.0
        %624 = vmatpush1.msra.mxu0 0.0
        %625 = vmatprep.subr.mxu0 0.0
        %626 = vmatpush1.msra.mxu0 0.0
        %627 = vmatprep.subr.mxu0 0.0
        %628 = vmatpush1.msra.mxu0 0.0
        %629 = vmatprep.subr.mxu0 0.0
        %630 = vmatpush1.msra.mxu0 0.0
        %631 = vmatprep.subr.mxu0 0.0
        %632 = vmatpush1.msra.mxu0 0.0
        %633 = vmatprep.subr.mxu0 0.0
        %634 = vmatpush1.msra.mxu0 0.0
        %635 = vmatprep.subr.mxu0 0.0
        %636 = vmatpush1.msra.mxu0 0.0
        %637 = vmatprep.subr.mxu0 0.0
        %638 = vmatpush1.msra.mxu0 0.0
        %639 = vmatprep.subr.mxu0 0.0
        %640 = vmatpush1.msra.mxu0 0.0
        %641 = vmatprep.subr.mxu0 0.0
        %642 = vmatpush1.msra.mxu0 0.0
        %643 = vmatprep.subr.mxu0 0.0
        %644 = vmatpush1.msra.mxu0 0.0
        %645 = vmatprep.subr.mxu0 0.0
        %646 = vmatpush1.msra.mxu0 0.0
        %647 = vmatprep.subr.mxu0 0.0
        %648 = vmatpush1.msra.mxu0 0.0
        %649 = vmatprep.subr.mxu0 0.0
        %650 = vmatpush1.msra.mxu0 0.0
        %651 = vmatprep.subr.mxu0 0.0
        %652 = vmatpush1.msra.mxu0 0.0
        %653 = vmatprep.mubr.f32.mxu0 0.0
        %v654 = vand.u32 %v272, 4294901760
        %655 = vmatmul.mubr.f32.gmra.mrb[0].mxu0 %v654
        %v656 = vpop.f32.mrb[0].mxu0
        %v657 = vadd.f32 %v580, %v656
        %v658 = vpop.f32.mrb[0].mxu0
        %659 = vdwg.mxu0
        %660 = vmatprep.subr.mxu0 0.0
        %v661 = vand.u32 %v261, 4294901760
        %662 = vmatpush1.msra.mxu0 %v661
        %663 = vmatprep.subr.mxu0 0.0
        %v664 = vand.u32 %v262, 4294901760
        %665 = vmatpush1.msra.mxu0 %v664
        %666 = vmatprep.subr.mxu0 0.0
        %667 = vmatpush1.msra.mxu0 0.0
        %668 = vmatprep.subr.mxu0 0.0
        %669 = vmatpush1.msra.mxu0 0.0
        %670 = vmatprep.subr.mxu0 0.0
        %671 = vmatpush1.msra.mxu0 0.0
        %672 = vmatprep.subr.mxu0 0.0
        %673 = vmatpush1.msra.mxu0 0.0
        %674 = vmatprep.subr.mxu0 0.0
        %675 = vmatpush1.msra.mxu0 0.0
        %676 = vmatprep.subr.mxu0 0.0
        %677 = vmatpush1.msra.mxu0 0.0
        %678 = vmatprep.subr.mxu0 0.0
        %679 = vmatpush1.msra.mxu0 0.0
        %680 = vmatprep.subr.mxu0 0.0
        %681 = vmatpush1.msra.mxu0 0.0
        %682 = vmatprep.subr.mxu0 0.0
        %683 = vmatpush1.msra.mxu0 0.0
        %684 = vmatprep.subr.mxu0 0.0
        %685 = vmatpush1.msra.mxu0 0.0
        %686 = vmatprep.subr.mxu0 0.0
        %687 = vmatpush1.msra.mxu0 0.0
        %688 = vmatprep.subr.mxu0 0.0
        %689 = vmatpush1.msra.mxu0 0.0
        %690 = vmatprep.subr.mxu0 0.0
        %691 = vmatpush1.msra.mxu0 0.0
        %692 = vmatprep.subr.mxu0 0.0
        %693 = vmatpush1.msra.mxu0 0.0
        %694 = vmatprep.subr.mxu0 0.0
        %695 = vmatpush1.msra.mxu0 0.0
        %696 = vmatprep.subr.mxu0 0.0
        %697 = vmatpush1.msra.mxu0 0.0
        %698 = vmatprep.subr.mxu0 0.0
        %699 = vmatpush1.msra.mxu0 0.0
        %700 = vmatprep.subr.mxu0 0.0
        %701 = vmatpush1.msra.mxu0 0.0
        %702 = vmatprep.subr.mxu0 0.0
        %703 = vmatpush1.msra.mxu0 0.0
        %704 = vmatprep.subr.mxu0 0.0
        %705 = vmatpush1.msra.mxu0 0.0
        %706 = vmatprep.subr.mxu0 0.0
        %707 = vmatpush1.msra.mxu0 0.0
        %708 = vmatprep.subr.mxu0 0.0
        %709 = vmatpush1.msra.mxu0 0.0
        %710 = vmatprep.subr.mxu0 0.0
        %711 = vmatpush1.msra.mxu0 0.0
        %712 = vmatprep.subr.mxu0 0.0
        %713 = vmatpush1.msra.mxu0 0.0
        %714 = vmatprep.subr.mxu0 0.0
        %715 = vmatpush1.msra.mxu0 0.0
        %716 = vmatprep.subr.mxu0 0.0
        %717 = vmatpush1.msra.mxu0 0.0
        %718 = vmatprep.subr.mxu0 0.0
        %719 = vmatpush1.msra.mxu0 0.0
        %720 = vmatprep.subr.mxu0 0.0
        %721 = vmatpush1.msra.mxu0 0.0
        %722 = vmatprep.subr.mxu0 0.0
        %723 = vmatpush1.msra.mxu0 0.0
        %724 = vmatprep.subr.mxu0 0.0
        %725 = vmatpush1.msra.mxu0 0.0
        %726 = vmatprep.mubr.f32.mxu0 0.0
        %v727 = vand.u32 %v272, 4294901760
        %728 = vmatmul.mubr.f32.gmra.mrb[0].mxu0 %v727
        %v729 = vpop.f32.mrb[0].mxu0
        %v730 = vadd.f32 %v657, %v729
        %v731 = vpop.f32.mrb[0].mxu0
        %732 = vdwg.mxu0
        %v733 = vmax.f32 %v730, 0.0
        %v734 = vld [vmem:[#allocation8] sm:$0xff]
        %v735 = vld [vmem:[#allocation8 + $0x8] sm:$0xff]
        %vm736 = vcmask 64512
        %v738 = vsel %vm736, %v734, 0
        %v741 = vsel %vm736, %v735, 0
        %743 = vmatprep.subr.mxu0 0.0
        %v744 = vand.u32 %v733, 4294901760
        %745 = vmatpush1.msra.mxu0 %v744
        %746 = vmatprep.subr.mxu0 0.0
        %747 = vmatpush1.msra.mxu0 0.0
        %748 = vmatprep.subr.mxu0 0.0
        %749 = vmatpush1.msra.mxu0 0.0
        %750 = vmatprep.subr.mxu0 0.0
        %751 = vmatpush1.msra.mxu0 0.0
        %752 = vmatprep.subr.mxu0 0.0
        %753 = vmatpush1.msra.mxu0 0.0
        %754 = vmatprep.subr.mxu0 0.0
        %755 = vmatpush1.msra.mxu0 0.0
        %756 = vmatprep.subr.mxu0 0.0
        %757 = vmatpush1.msra.mxu0 0.0
        %758 = vmatprep.subr.mxu0 0.0
        %759 = vmatpush1.msra.mxu0 0.0
        %760 = vmatprep.subr.mxu0 0.0
        %761 = vmatpush1.msra.mxu0 0.0
        %762 = vmatprep.subr.mxu0 0.0
        %763 = vmatpush1.msra.mxu0 0.0
        %764 = vmatprep.subr.mxu0 0.0
        %765 = vmatpush1.msra.mxu0 0.0
        %766 = vmatprep.subr.mxu0 0.0
        %767 = vmatpush1.msra.mxu0 0.0
        %768 = vmatprep.subr.mxu0 0.0
        %769 = vmatpush1.msra.mxu0 0.0
        %770 = vmatprep.subr.mxu0 0.0
        %771 = vmatpush1.msra.mxu0 0.0
        %772 = vmatprep.subr.mxu0 0.0
        %773 = vmatpush1.msra.mxu0 0.0
        %774 = vmatprep.subr.mxu0 0.0
        %775 = vmatpush1.msra.mxu0 0.0
        %776 = vmatprep.subr.mxu0 0.0
        %777 = vmatpush1.msra.mxu0 0.0
        %778 = vmatprep.subr.mxu0 0.0
        %779 = vmatpush1.msra.mxu0 0.0
        %780 = vmatprep.subr.mxu0 0.0
        %781 = vmatpush1.msra.mxu0 0.0
        %782 = vmatprep.subr.mxu0 0.0
        %783 = vmatpush1.msra.mxu0 0.0
        %784 = vmatprep.subr.mxu0 0.0
        %785 = vmatpush1.msra.mxu0 0.0
        %786 = vmatprep.subr.mxu0 0.0
        %787 = vmatpush1.msra.mxu0 0.0
        %788 = vmatprep.subr.mxu0 0.0
        %789 = vmatpush1.msra.mxu0 0.0
        %790 = vmatprep.subr.mxu0 0.0
        %791 = vmatpush1.msra.mxu0 0.0
        %792 = vmatprep.subr.mxu0 0.0
        %793 = vmatpush1.msra.mxu0 0.0
        %794 = vmatprep.subr.mxu0 0.0
        %795 = vmatpush1.msra.mxu0 0.0
        %796 = vmatprep.subr.mxu0 0.0
        %797 = vmatpush1.msra.mxu0 0.0
        %798 = vmatprep.subr.mxu0 0.0
        %799 = vmatpush1.msra.mxu0 0.0
        %800 = vmatprep.subr.mxu0 0.0
        %801 = vmatpush1.msra.mxu0 0.0
        %802 = vmatprep.subr.mxu0 0.0
        %803 = vmatpush1.msra.mxu0 0.0
        %804 = vmatprep.subr.mxu0 0.0
        %805 = vmatpush1.msra.mxu0 0.0
        %806 = vmatprep.subr.mxu0 0.0
        %807 = vmatpush1.msra.mxu0 0.0
        %808 = vmatprep.mubr.f32.mxu0 0.0
        %v809 = vand.u32 %v738, 4294901760
        %v810 = vsub.f32 %v738, %v809
        %v811 = vand.u32 %v810, 4294901760
        %v812 = vsub.f32 %v810, %v811
        %v813 = vand.u32 %v812, 4294901760
        %814 = vmatmul.mubr.f32.gmra.mrb[0].mxu0 %v813
        %v815 = vpop.f32.mrb[0].mxu0
        %v816 = vadd.f32 0.0, %v815
        %v817 = vpop.f32.mrb[0].mxu0
        %818 = vmatprep.mubr.f32.mxu0 0.0
        %v819 = vand.u32 %v741, 4294901760
        %v820 = vsub.f32 %v741, %v819
        %v821 = vand.u32 %v820, 4294901760
        %v822 = vsub.f32 %v820, %v821
        %v823 = vand.u32 %v822, 4294901760
        %824 = vmatmul.mubr.f32.gmra.mrb[0].mxu0 %v823
        %v825 = vpop.f32.mrb[0].mxu0
        %v826 = vadd.f32 0.0, %v825
        %v827 = vpop.f32.mrb[0].mxu0
        %828 = vdwg.mxu0
        %829 = vmatprep.subr.mxu0 0.0
        %v830 = vand.u32 %v733, 4294901760
        %v831 = vsub.f32 %v733, %v830
        %v832 = vand.u32 %v831, 4294901760
        %v833 = vsub.f32 %v831, %v832
        %v834 = vand.u32 %v833, 4294901760
        %835 = vmatpush1.msra.mxu0 %v834
        %836 = vmatprep.subr.mxu0 0.0
        %837 = vmatpush1.msra.mxu0 0.0
        %838 = vmatprep.subr.mxu0 0.0
        %839 = vmatpush1.msra.mxu0 0.0
        %840 = vmatprep.subr.mxu0 0.0
        %841 = vmatpush1.msra.mxu0 0.0
        %842 = vmatprep.subr.mxu0 0.0
        %843 = vmatpush1.msra.mxu0 0.0
        %844 = vmatprep.subr.mxu0 0.0
        %845 = vmatpush1.msra.mxu0 0.0
        %846 = vmatprep.subr.mxu0 0.0
        %847 = vmatpush1.msra.mxu0 0.0
        %848 = vmatprep.subr.mxu0 0.0
        %849 = vmatpush1.msra.mxu0 0.0
        %850 = vmatprep.subr.mxu0 0.0
        %851 = vmatpush1.msra.mxu0 0.0
        %852 = vmatprep.subr.mxu0 0.0
        %853 = vmatpush1.msra.mxu0 0.0
        %854 = vmatprep.subr.mxu0 0.0
        %855 = vmatpush1.msra.mxu0 0.0
        %856 = vmatprep.subr.mxu0 0.0
        %857 = vmatpush1.msra.mxu0 0.0
        %858 = vmatprep.subr.mxu0 0.0
        %859 = vmatpush1.msra.mxu0 0.0
        %860 = vmatprep.subr.mxu0 0.0
        %861 = vmatpush1.msra.mxu0 0.0
        %862 = vmatprep.subr.mxu0 0.0
        %863 = vmatpush1.msra.mxu0 0.0
        %864 = vmatprep.subr.mxu0 0.0
        %865 = vmatpush1.msra.mxu0 0.0
        %866 = vmatprep.subr.mxu0 0.0
        %867 = vmatpush1.msra.mxu0 0.0
        %868 = vmatprep.subr.mxu0 0.0
        %869 = vmatpush1.msra.mxu0 0.0
        %870 = vmatprep.subr.mxu0 0.0
        %871 = vmatpush1.msra.mxu0 0.0
        %872 = vmatprep.subr.mxu0 0.0
        %873 = vmatpush1.msra.mxu0 0.0
        %874 = vmatprep.subr.mxu0 0.0
        %875 = vmatpush1.msra.mxu0 0.0
        %876 = vmatprep.subr.mxu0 0.0
        %877 = vmatpush1.msra.mxu0 0.0
        %878 = vmatprep.subr.mxu0 0.0
        %879 = vmatpush1.msra.mxu0 0.0
        %880 = vmatprep.subr.mxu0 0.0
        %881 = vmatpush1.msra.mxu0 0.0
        %882 = vmatprep.subr.mxu0 0.0
        %883 = vmatpush1.msra.mxu0 0.0
        %884 = vmatprep.subr.mxu0 0.0
        %885 = vmatpush1.msra.mxu0 0.0
        %886 = vmatprep.subr.mxu0 0.0
        %887 = vmatpush1.msra.mxu0 0.0
        %888 = vmatprep.subr.mxu0 0.0
        %889 = vmatpush1.msra.mxu0 0.0
        %890 = vmatprep.subr.mxu0 0.0
        %891 = vmatpush1.msra.mxu0 0.0
        %892 = vmatprep.subr.mxu0 0.0
        %893 = vmatpush1.msra.mxu0 0.0
        %894 = vmatprep.subr.mxu0 0.0
        %895 = vmatpush1.msra.mxu0 0.0
        %896 = vmatprep.subr.mxu0 0.0
        %897 = vmatpush1.msra.mxu0 0.0
        %898 = vmatprep.mubr.f32.mxu0 0.0
        %v899 = vand.u32 %v738, 4294901760
        %900 = vmatmul.mubr.f32.gmra.mrb[0].mxu0 %v899
        %v901 = vpop.f32.mrb[0].mxu0
        %v902 = vadd.f32 %v816, %v901
        %v903 = vpop.f32.mrb[0].mxu0
        %904 = vmatprep.mubr.f32.mxu0 0.0
        %v905 = vand.u32 %v741, 4294901760
        %906 = vmatmul.mubr.f32.gmra.mrb[0].mxu0 %v905
        %v907 = vpop.f32.mrb[0].mxu0
        %v908 = vadd.f32 %v826, %v907
        %v909 = vpop.f32.mrb[0].mxu0
        %910 = vdwg.mxu0
        %911 = vmatprep.subr.mxu0 0.0
        %v912 = vand.u32 %v733, 4294901760
        %v913 = vsub.f32 %v733, %v912
        %914 = vmatpush1.msra.mxu0 %v913
        %915 = vmatprep.subr.mxu0 0.0
        %916 = vmatpush1.msra.mxu0 0.0
        %917 = vmatprep.subr.mxu0 0.0
        %918 = vmatpush1.msra.mxu0 0.0
        %919 = vmatprep.subr.mxu0 0.0
        %920 = vmatpush1.msra.mxu0 0.0
        %921 = vmatprep.subr.mxu0 0.0
        %922 = vmatpush1.msra.mxu0 0.0
        %923 = vmatprep.subr.mxu0 0.0
        %924 = vmatpush1.msra.mxu0 0.0
        %925 = vmatprep.subr.mxu0 0.0
        %926 = vmatpush1.msra.mxu0 0.0
        %927 = vmatprep.subr.mxu0 0.0
        %928 = vmatpush1.msra.mxu0 0.0
        %929 = vmatprep.subr.mxu0 0.0
        %930 = vmatpush1.msra.mxu0 0.0
        %931 = vmatprep.subr.mxu0 0.0
        %932 = vmatpush1.msra.mxu0 0.0
        %933 = vmatprep.subr.mxu0 0.0
        %934 = vmatpush1.msra.mxu0 0.0
        %935 = vmatprep.subr.mxu0 0.0
        %936 = vmatpush1.msra.mxu0 0.0
        %937 = vmatprep.subr.mxu0 0.0
        %938 = vmatpush1.msra.mxu0 0.0
        %939 = vmatprep.subr.mxu0 0.0
        %940 = vmatpush1.msra.mxu0 0.0
        %941 = vmatprep.subr.mxu0 0.0
        %942 = vmatpush1.msra.mxu0 0.0
        %943 = vmatprep.subr.mxu0 0.0
        %944 = vmatpush1.msra.mxu0 0.0
        %945 = vmatprep.subr.mxu0 0.0
        %946 = vmatpush1.msra.mxu0 0.0
        %947 = vmatprep.subr.mxu0 0.0
        %948 = vmatpush1.msra.mxu0 0.0
        %949 = vmatprep.subr.mxu0 0.0
        %950 = vmatpush1.msra.mxu0 0.0
        %951 = vmatprep.subr.mxu0 0.0
        %952 = vmatpush1.msra.mxu0 0.0
        %953 = vmatprep.subr.mxu0 0.0
        %954 = vmatpush1.msra.mxu0 0.0
        %955 = vmatprep.subr.mxu0 0.0
        %956 = vmatpush1.msra.mxu0 0.0
        %957 = vmatprep.subr.mxu0 0.0
        %958 = vmatpush1.msra.mxu0 0.0
        %959 = vmatprep.subr.mxu0 0.0
        %960 = vmatpush1.msra.mxu0 0.0
        %961 = vmatprep.subr.mxu0 0.0
        %962 = vmatpush1.msra.mxu0 0.0
        %963 = vmatprep.subr.mxu0 0.0
        %964 = vmatpush1.msra.mxu0 0.0
        %965 = vmatprep.subr.mxu0 0.0
        %966 = vmatpush1.msra.mxu0 0.0
        %967 = vmatprep.subr.mxu0 0.0
        %968 = vmatpush1.msra.mxu0 0.0
        %969 = vmatprep.subr.mxu0 0.0
        %970 = vmatpush1.msra.mxu0 0.0
        %971 = vmatprep.subr.mxu0 0.0
        %972 = vmatpush1.msra.mxu0 0.0
        %973 = vmatprep.subr.mxu0 0.0
        %974 = vmatpush1.msra.mxu0 0.0
        %975 = vmatprep.subr.mxu0 0.0
        %976 = vmatpush1.msra.mxu0 0.0
        %977 = vmatprep.mubr.f32.mxu0 0.0
        %v978 = vand.u32 %v738, 4294901760
        %v979 = vsub.f32 %v738, %v978
        %980 = vmatmul.mubr.f32.gmra.mrb[0].mxu0 %v979
        %v981 = vpop.f32.mrb[0].mxu0
        %v982 = vadd.f32 %v902, %v981
        %v983 = vpop.f32.mrb[0].mxu0
        %984 = vmatprep.mubr.f32.mxu0 0.0
        %v985 = vand.u32 %v741, 4294901760
        %v986 = vsub.f32 %v741, %v985
        %987 = vmatmul.mubr.f32.gmra.mrb[0].mxu0 %v986
        %v988 = vpop.f32.mrb[0].mxu0
        %v989 = vadd.f32 %v908, %v988
        %v990 = vpop.f32.mrb[0].mxu0
        %991 = vdwg.mxu0
        %992 = vmatprep.subr.mxu0 0.0
        %v993 = vand.u32 %v733, 4294901760
        %994 = vmatpush1.msra.mxu0 %v993
        %995 = vmatprep.subr.mxu0 0.0
        %996 = vmatpush1.msra.mxu0 0.0
        %997 = vmatprep.subr.mxu0 0.0
        %998 = vmatpush1.msra.mxu0 0.0
        %999 = vmatprep.subr.mxu0 0.0
        %1000 = vmatpush1.msra.mxu0 0.0
        %1001 = vmatprep.subr.mxu0 0.0
        %1002 = vmatpush1.msra.mxu0 0.0
        %1003 = vmatprep.subr.mxu0 0.0
        %1004 = vmatpush1.msra.mxu0 0.0
        %1005 = vmatprep.subr.mxu0 0.0
        %1006 = vmatpush1.msra.mxu0 0.0
        %1007 = vmatprep.subr.mxu0 0.0
        %1008 = vmatpush1.msra.mxu0 0.0
        %1009 = vmatprep.subr.mxu0 0.0
        %1010 = vmatpush1.msra.mxu0 0.0
        %1011 = vmatprep.subr.mxu0 0.0
        %1012 = vmatpush1.msra.mxu0 0.0
        %1013 = vmatprep.subr.mxu0 0.0
        %1014 = vmatpush1.msra.mxu0 0.0
        %1015 = vmatprep.subr.mxu0 0.0
        %1016 = vmatpush1.msra.mxu0 0.0
        %1017 = vmatprep.subr.mxu0 0.0
        %1018 = vmatpush1.msra.mxu0 0.0
        %1019 = vmatprep.subr.mxu0 0.0
        %1020 = vmatpush1.msra.mxu0 0.0
        %1021 = vmatprep.subr.mxu0 0.0
        %1022 = vmatpush1.msra.mxu0 0.0
        %1023 = vmatprep.subr.mxu0 0.0
        %1024 = vmatpush1.msra.mxu0 0.0
        %1025 = vmatprep.subr.mxu0 0.0
        %1026 = vmatpush1.msra.mxu0 0.0
        %1027 = vmatprep.subr.mxu0 0.0
        %1028 = vmatpush1.msra.mxu0 0.0
        %1029 = vmatprep.subr.mxu0 0.0
        %1030 = vmatpush1.msra.mxu0 0.0
        %1031 = vmatprep.subr.mxu0 0.0
        %1032 = vmatpush1.msra.mxu0 0.0
        %1033 = vmatprep.subr.mxu0 0.0
        %1034 = vmatpush1.msra.mxu0 0.0
        %1035 = vmatprep.subr.mxu0 0.0
        %1036 = vmatpush1.msra.mxu0 0.0
        %1037 = vmatprep.subr.mxu0 0.0
        %1038 = vmatpush1.msra.mxu0 0.0
        %1039 = vmatprep.subr.mxu0 0.0
        %1040 = vmatpush1.msra.mxu0 0.0
        %1041 = vmatprep.subr.mxu0 0.0
        %1042 = vmatpush1.msra.mxu0 0.0
        %1043 = vmatprep.subr.mxu0 0.0
        %1044 = vmatpush1.msra.mxu0 0.0
        %1045 = vmatprep.subr.mxu0 0.0
        %1046 = vmatpush1.msra.mxu0 0.0
        %1047 = vmatprep.subr.mxu0 0.0
        %1048 = vmatpush1.msra.mxu0 0.0
        %1049 = vmatprep.subr.mxu0 0.0
        %1050 = vmatpush1.msra.mxu0 0.0
        %1051 = vmatprep.subr.mxu0 0.0
        %1052 = vmatpush1.msra.mxu0 0.0
        %1053 = vmatprep.subr.mxu0 0.0
        %1054 = vmatpush1.msra.mxu0 0.0
        %1055 = vmatprep.subr.mxu0 0.0
        %1056 = vmatpush1.msra.mxu0 0.0
        %1057 = vmatprep.mubr.f32.mxu0 0.0
        %v1058 = vand.u32 %v738, 4294901760
        %v1059 = vsub.f32 %v738, %v1058
        %v1060 = vand.u32 %v1059, 4294901760
        %1061 = vmatmul.mubr.f32.gmra.mrb[0].mxu0 %v1060
        %v1062 = vpop.f32.mrb[0].mxu0
        %v1063 = vadd.f32 %v982, %v1062
        %v1064 = vpop.f32.mrb[0].mxu0
        %1065 = vmatprep.mubr.f32.mxu0 0.0
        %v1066 = vand.u32 %v741, 4294901760
        %v1067 = vsub.f32 %v741, %v1066
        %v1068 = vand.u32 %v1067, 4294901760
        %1069 = vmatmul.mubr.f32.gmra.mrb[0].mxu0 %v1068
        %v1070 = vpop.f32.mrb[0].mxu0
        %v1071 = vadd.f32 %v989, %v1070
        %v1072 = vpop.f32.mrb[0].mxu0
        %1073 = vdwg.mxu0
        %1074 = vmatprep.subr.mxu0 0.0
        %v1075 = vand.u32 %v733, 4294901760
        %v1076 = vsub.f32 %v733, %v1075
        %v1077 = vand.u32 %v1076, 4294901760
        %1078 = vmatpush1.msra.mxu0 %v1077
        %1079 = vmatprep.subr.mxu0 0.0
        %1080 = vmatpush1.msra.mxu0 0.0
        %1081 = vmatprep.subr.mxu0 0.0
        %1082 = vmatpush1.msra.mxu0 0.0
        %1083 = vmatprep.subr.mxu0 0.0
        %1084 = vmatpush1.msra.mxu0 0.0
        %1085 = vmatprep.subr.mxu0 0.0
        %1086 = vmatpush1.msra.mxu0 0.0
        %1087 = vmatprep.subr.mxu0 0.0
        %1088 = vmatpush1.msra.mxu0 0.0
        %1089 = vmatprep.subr.mxu0 0.0
        %1090 = vmatpush1.msra.mxu0 0.0
        %1091 = vmatprep.subr.mxu0 0.0
        %1092 = vmatpush1.msra.mxu0 0.0
        %1093 = vmatprep.subr.mxu0 0.0
        %1094 = vmatpush1.msra.mxu0 0.0
        %1095 = vmatprep.subr.mxu0 0.0
        %1096 = vmatpush1.msra.mxu0 0.0
        %1097 = vmatprep.subr.mxu0 0.0
        %1098 = vmatpush1.msra.mxu0 0.0
        %1099 = vmatprep.subr.mxu0 0.0
        %1100 = vmatpush1.msra.mxu0 0.0
        %1101 = vmatprep.subr.mxu0 0.0
        %1102 = vmatpush1.msra.mxu0 0.0
        %1103 = vmatprep.subr.mxu0 0.0
        %1104 = vmatpush1.msra.mxu0 0.0
        %1105 = vmatprep.subr.mxu0 0.0
        %1106 = vmatpush1.msra.mxu0 0.0
        %1107 = vmatprep.subr.mxu0 0.0
        %1108 = vmatpush1.msra.mxu0 0.0
        %1109 = vmatprep.subr.mxu0 0.0
        %1110 = vmatpush1.msra.mxu0 0.0
        %1111 = vmatprep.subr.mxu0 0.0
        %1112 = vmatpush1.msra.mxu0 0.0
        %1113 = vmatprep.subr.mxu0 0.0
        %1114 = vmatpush1.msra.mxu0 0.0
        %1115 = vmatprep.subr.mxu0 0.0
        %1116 = vmatpush1.msra.mxu0 0.0
        %1117 = vmatprep.subr.mxu0 0.0
        %1118 = vmatpush1.msra.mxu0 0.0
        %1119 = vmatprep.subr.mxu0 0.0
        %1120 = vmatpush1.msra.mxu0 0.0
        %1121 = vmatprep.subr.mxu0 0.0
        %1122 = vmatpush1.msra.mxu0 0.0
        %1123 = vmatprep.subr.mxu0 0.0
        %1124 = vmatpush1.msra.mxu0 0.0
        %1125 = vmatprep.subr.mxu0 0.0
        %1126 = vmatpush1.msra.mxu0 0.0
        %1127 = vmatprep.subr.mxu0 0.0
        %1128 = vmatpush1.msra.mxu0 0.0
        %1129 = vmatprep.subr.mxu0 0.0
        %1130 = vmatpush1.msra.mxu0 0.0
        %1131 = vmatprep.subr.mxu0 0.0
        %1132 = vmatpush1.msra.mxu0 0.0
        %1133 = vmatprep.subr.mxu0 0.0
        %1134 = vmatpush1.msra.mxu0 0.0
        %1135 = vmatprep.subr.mxu0 0.0
        %1136 = vmatpush1.msra.mxu0 0.0
        %1137 = vmatprep.subr.mxu0 0.0
        %1138 = vmatpush1.msra.mxu0 0.0
        %1139 = vmatprep.subr.mxu0 0.0
        %1140 = vmatpush1.msra.mxu0 0.0
        %1141 = vmatprep.mubr.f32.mxu0 0.0
        %v1142 = vand.u32 %v738, 4294901760
        %1143 = vmatmul.mubr.f32.gmra.mrb[0].mxu0 %v1142
        %v1144 = vpop.f32.mrb[0].mxu0
        %v1145 = vadd.f32 %v1063, %v1144
        %v1146 = vpop.f32.mrb[0].mxu0
        %1147 = vmatprep.mubr.f32.mxu0 0.0
        %v1148 = vand.u32 %v741, 4294901760
        %1149 = vmatmul.mubr.f32.gmra.mrb[0].mxu0 %v1148
        %v1150 = vpop.f32.mrb[0].mxu0
        %v1151 = vadd.f32 %v1071, %v1150
        %v1152 = vpop.f32.mrb[0].mxu0
        %1153 = vdwg.mxu0
        %1154 = vmatprep.subr.mxu0 0.0
        %v1155 = vand.u32 %v733, 4294901760
        %1156 = vmatpush1.msra.mxu0 %v1155
        %1157 = vmatprep.subr.mxu0 0.0
        %1158 = vmatpush1.msra.mxu0 0.0
        %1159 = vmatprep.subr.mxu0 0.0
        %1160 = vmatpush1.msra.mxu0 0.0
        %1161 = vmatprep.subr.mxu0 0.0
        %1162 = vmatpush1.msra.mxu0 0.0
        %1163 = vmatprep.subr.mxu0 0.0
        %1164 = vmatpush1.msra.mxu0 0.0
        %1165 = vmatprep.subr.mxu0 0.0
        %1166 = vmatpush1.msra.mxu0 0.0
        %1167 = vmatprep.subr.mxu0 0.0
        %1168 = vmatpush1.msra.mxu0 0.0
        %1169 = vmatprep.subr.mxu0 0.0
        %1170 = vmatpush1.msra.mxu0 0.0
        %1171 = vmatprep.subr.mxu0 0.0
        %1172 = vmatpush1.msra.mxu0 0.0
        %1173 = vmatprep.subr.mxu0 0.0
        %1174 = vmatpush1.msra.mxu0 0.0
        %1175 = vmatprep.subr.mxu0 0.0
        %1176 = vmatpush1.msra.mxu0 0.0
        %1177 = vmatprep.subr.mxu0 0.0
        %1178 = vmatpush1.msra.mxu0 0.0
        %1179 = vmatprep.subr.mxu0 0.0
        %1180 = vmatpush1.msra.mxu0 0.0
        %1181 = vmatprep.subr.mxu0 0.0
        %1182 = vmatpush1.msra.mxu0 0.0
        %1183 = vmatprep.subr.mxu0 0.0
        %1184 = vmatpush1.msra.mxu0 0.0
        %1185 = vmatprep.subr.mxu0 0.0
        %1186 = vmatpush1.msra.mxu0 0.0
        %1187 = vmatprep.subr.mxu0 0.0
        %1188 = vmatpush1.msra.mxu0 0.0
        %1189 = vmatprep.subr.mxu0 0.0
        %1190 = vmatpush1.msra.mxu0 0.0
        %1191 = vmatprep.subr.mxu0 0.0
        %1192 = vmatpush1.msra.mxu0 0.0
        %1193 = vmatprep.subr.mxu0 0.0
        %1194 = vmatpush1.msra.mxu0 0.0
        %1195 = vmatprep.subr.mxu0 0.0
        %1196 = vmatpush1.msra.mxu0 0.0
        %1197 = vmatprep.subr.mxu0 0.0
        %1198 = vmatpush1.msra.mxu0 0.0
        %1199 = vmatprep.subr.mxu0 0.0
        %1200 = vmatpush1.msra.mxu0 0.0
        %1201 = vmatprep.subr.mxu0 0.0
        %1202 = vmatpush1.msra.mxu0 0.0
        %1203 = vmatprep.subr.mxu0 0.0
        %1204 = vmatpush1.msra.mxu0 0.0
        %1205 = vmatprep.subr.mxu0 0.0
        %1206 = vmatpush1.msra.mxu0 0.0
        %1207 = vmatprep.subr.mxu0 0.0
        %1208 = vmatpush1.msra.mxu0 0.0
        %1209 = vmatprep.subr.mxu0 0.0
        %1210 = vmatpush1.msra.mxu0 0.0
        %1211 = vmatprep.subr.mxu0 0.0
        %1212 = vmatpush1.msra.mxu0 0.0
        %1213 = vmatprep.subr.mxu0 0.0
        %1214 = vmatpush1.msra.mxu0 0.0
        %1215 = vmatprep.subr.mxu0 0.0
        %1216 = vmatpush1.msra.mxu0 0.0
        %1217 = vmatprep.subr.mxu0 0.0
        %1218 = vmatpush1.msra.mxu0 0.0
        %1219 = vmatprep.mubr.f32.mxu0 0.0
        %v1220 = vand.u32 %v738, 4294901760
        %1221 = vmatmul.mubr.f32.gmra.mrb[0].mxu0 %v1220
        %v1222 = vpop.f32.mrb[0].mxu0
        %v1223 = vadd.f32 %v1145, %v1222
        %v1224 = vpop.f32.mrb[0].mxu0
        %1225 = vmatprep.mubr.f32.mxu0 0.0
        %v1226 = vand.u32 %v741, 4294901760
        %1227 = vmatmul.mubr.f32.gmra.mrb[0].mxu0 %v1226
        %v1228 = vpop.f32.mrb[0].mxu0
        %v1229 = vadd.f32 %v1151, %v1228
        %v1230 = vpop.f32.mrb[0].mxu0
        %1231 = vdwg.mxu0
        %1232 = vst [vmem:[%s257] sm:$0xff] %v1223
        %1233 = vst [vmem:[%s257 + $0x8] sm:$0xff] %v1229
        %s1234 = scalar_lea.vmem %s221, 8 [#allocation2]
        %v1235 = vld [vmem:[%s1234] sm:$0xff]
        %v1236 = vld [vmem:[#allocation5] sm:$0xff]
        %v1237 = vld [vmem:[#allocation5 + $0x8] sm:$0xff]
        %v1238 = vld [vmem:[#allocation7] sm:$0x1]
        %v1240 = vlaneseq
        %v1241 = vshrl.u32 %v1240, 7
        %v1242 = vsub.s32 0, %v1241
        %v1243 = vrot.slane %v1238, %v1242
        %v1246 = vsel %vm270, %v1235, 0
        %1248 = vmatprep.subr.mxu0 0.0
        %v1249 = vand.u32 %v1236, 4294901760
        %1250 = vmatpush1.msra.mxu0 %v1249
        %1251 = vmatprep.subr.mxu0 0.0
        %v1252 = vand.u32 %v1237, 4294901760
        %1253 = vmatpush1.msra.mxu0 %v1252
        %1254 = vmatprep.subr.mxu0 0.0
        %1255 = vmatpush1.msra.mxu0 0.0
        %1256 = vmatprep.subr.mxu0 0.0
        %1257 = vmatpush1.msra.mxu0 0.0
        %1258 = vmatprep.subr.mxu0 0.0
        %1259 = vmatpush1.msra.mxu0 0.0
        %1260 = vmatprep.subr.mxu0 0.0
        %1261 = vmatpush1.msra.mxu0 0.0
        %1262 = vmatprep.subr.mxu0 0.0
        %1263 = vmatpush1.msra.mxu0 0.0
        %1264 = vmatprep.subr.mxu0 0.0
        %1265 = vmatpush1.msra.mxu0 0.0
        %1266 = vmatprep.subr.mxu0 0.0
        %1267 = vmatpush1.msra.mxu0 0.0
        %1268 = vmatprep.subr.mxu0 0.0
        %1269 = vmatpush1.msra.mxu0 0.0
        %1270 = vmatprep.subr.mxu0 0.0
        %1271 = vmatpush1.msra.mxu0 0.0
        %1272 = vmatprep.subr.mxu0 0.0
        %1273 = vmatpush1.msra.mxu0 0.0
        %1274 = vmatprep.subr.mxu0 0.0
        %1275 = vmatpush1.msra.mxu0 0.0
        %1276 = vmatprep.subr.mxu0 0.0
        %1277 = vmatpush1.msra.mxu0 0.0
        %1278 = vmatprep.subr.mxu0 0.0
        %1279 = vmatpush1.msra.mxu0 0.0
        %1280 = vmatprep.subr.mxu0 0.0
        %1281 = vmatpush1.msra.mxu0 0.0
        %1282 = vmatprep.subr.mxu0 0.0
        %1283 = vmatpush1.msra.mxu0 0.0
        %1284 = vmatprep.subr.mxu0 0.0
        %1285 = vmatpush1.msra.mxu0 0.0
        %1286 = vmatprep.subr.mxu0 0.0
        %1287 = vmatpush1.msra.mxu0 0.0
        %1288 = vmatprep.subr.mxu0 0.0
        %1289 = vmatpush1.msra.mxu0 0.0
        %1290 = vmatprep.subr.mxu0 0.0
        %1291 = vmatpush1.msra.mxu0 0.0
        %1292 = vmatprep.subr.mxu0 0.0
        %1293 = vmatpush1.msra.mxu0 0.0
        %1294 = vmatprep.subr.mxu0 0.0
        %1295 = vmatpush1.msra.mxu0 0.0
        %1296 = vmatprep.subr.mxu0 0.0
        %1297 = vmatpush1.msra.mxu0 0.0
        %1298 = vmatprep.subr.mxu0 0.0
        %1299 = vmatpush1.msra.mxu0 0.0
        %1300 = vmatprep.subr.mxu0 0.0
        %1301 = vmatpush1.msra.mxu0 0.0
        %1302 = vmatprep.subr.mxu0 0.0
        %1303 = vmatpush1.msra.mxu0 0.0
        %1304 = vmatprep.subr.mxu0 0.0
        %1305 = vmatpush1.msra.mxu0 0.0
        %1306 = vmatprep.subr.mxu0 0.0
        %1307 = vmatpush1.msra.mxu0 0.0
        %1308 = vmatprep.subr.mxu0 0.0
        %1309 = vmatpush1.msra.mxu0 0.0
        %1310 = vmatprep.subr.mxu0 0.0
        %1311 = vmatpush1.msra.mxu0 0.0
        %1312 = vmatprep.subr.mxu0 0.0
        %1313 = vmatpush1.msra.mxu0 0.0
        %1314 = vmatprep.mubr.f32.mxu0 0.0
        %v1315 = vand.u32 %v1246, 4294901760
        %v1316 = vsub.f32 %v1246, %v1315
        %v1317 = vand.u32 %v1316, 4294901760
        %v1318 = vsub.f32 %v1316, %v1317
        %v1319 = vand.u32 %v1318, 4294901760
        %1320 = vmatmul.mubr.f32.gmra.mrb[0].mxu0 %v1319
        %v1321 = vpop.f32.mrb[0].mxu0
        %v1322 = vadd.f32 %v1243, %v1321
        %v1323 = vpop.f32.mrb[0].mxu0
        %1324 = vdwg.mxu0
        %1325 = vmatprep.subr.mxu0 0.0
        %v1326 = vand.u32 %v1236, 4294901760
        %v1327 = vsub.f32 %v1236, %v1326
        %v1328 = vand.u32 %v1327, 4294901760
        %v1329 = vsub.f32 %v1327, %v1328
        %v1330 = vand.u32 %v1329, 4294901760
        %1331 = vmatpush1.msra.mxu0 %v1330
        %1332 = vmatprep.subr.mxu0 0.0
        %v1333 = vand.u32 %v1237, 4294901760
        %v1334 = vsub.f32 %v1237, %v1333
        %v1335 = vand.u32 %v1334, 4294901760
        %v1336 = vsub.f32 %v1334, %v1335
        %v1337 = vand.u32 %v1336, 4294901760
        %1338 = vmatpush1.msra.mxu0 %v1337
        %1339 = vmatprep.subr.mxu0 0.0
        %1340 = vmatpush1.msra.mxu0 0.0
        %1341 = vmatprep.subr.mxu0 0.0
        %1342 = vmatpush1.msra.mxu0 0.0
        %1343 = vmatprep.subr.mxu0 0.0
        %1344 = vmatpush1.msra.mxu0 0.0
        %1345 = vmatprep.subr.mxu0 0.0
        %1346 = vmatpush1.msra.mxu0 0.0
        %1347 = vmatprep.subr.mxu0 0.0
        %1348 = vmatpush1.msra.mxu0 0.0
        %1349 = vmatprep.subr.mxu0 0.0
        %1350 = vmatpush1.msra.mxu0 0.0
        %1351 = vmatprep.subr.mxu0 0.0
        %1352 = vmatpush1.msra.mxu0 0.0
        %1353 = vmatprep.subr.mxu0 0.0
        %1354 = vmatpush1.msra.mxu0 0.0
        %1355 = vmatprep.subr.mxu0 0.0
        %1356 = vmatpush1.msra.mxu0 0.0
        %1357 = vmatprep.subr.mxu0 0.0
        %1358 = vmatpush1.msra.mxu0 0.0
        %1359 = vmatprep.subr.mxu0 0.0
        %1360 = vmatpush1.msra.mxu0 0.0
        %1361 = vmatprep.subr.mxu0 0.0
        %1362 = vmatpush1.msra.mxu0 0.0
        %1363 = vmatprep.subr.mxu0 0.0
        %1364 = vmatpush1.msra.mxu0 0.0
        %1365 = vmatprep.subr.mxu0 0.0
        %1366 = vmatpush1.msra.mxu0 0.0
        %1367 = vmatprep.subr.mxu0 0.0
        %1368 = vmatpush1.msra.mxu0 0.0
        %1369 = vmatprep.subr.mxu0 0.0
        %1370 = vmatpush1.msra.mxu0 0.0
        %1371 = vmatprep.subr.mxu0 0.0
        %1372 = vmatpush1.msra.mxu0 0.0
        %1373 = vmatprep.subr.mxu0 0.0
        %1374 = vmatpush1.msra.mxu0 0.0
        %1375 = vmatprep.subr.mxu0 0.0
        %1376 = vmatpush1.msra.mxu0 0.0
        %1377 = vmatprep.subr.mxu0 0.0
        %1378 = vmatpush1.msra.mxu0 0.0
        %1379 = vmatprep.subr.mxu0 0.0
        %1380 = vmatpush1.msra.mxu0 0.0
        %1381 = vmatprep.subr.mxu0 0.0
        %1382 = vmatpush1.msra.mxu0 0.0
        %1383 = vmatprep.subr.mxu0 0.0
        %1384 = vmatpush1.msra.mxu0 0.0
        %1385 = vmatprep.subr.mxu0 0.0
        %1386 = vmatpush1.msra.mxu0 0.0
        %1387 = vmatprep.subr.mxu0 0.0
        %1388 = vmatpush1.msra.mxu0 0.0
        %1389 = vmatprep.subr.mxu0 0.0
        %1390 = vmatpush1.msra.mxu0 0.0
        %1391 = vmatprep.subr.mxu0 0.0
        %1392 = vmatpush1.msra.mxu0 0.0
        %1393 = vmatprep.subr.mxu0 0.0
        %1394 = vmatpush1.msra.mxu0 0.0
        %1395 = vmatprep.subr.mxu0 0.0
        %1396 = vmatpush1.msra.mxu0 0.0
        %1397 = vmatprep.subr.mxu0 0.0
        %1398 = vmatpush1.msra.mxu0 0.0
        %1399 = vmatprep.mubr.f32.mxu0 0.0
        %v1400 = vand.u32 %v1246, 4294901760
        %1401 = vmatmul.mubr.f32.gmra.mrb[0].mxu0 %v1400
        %v1402 = vpop.f32.mrb[0].mxu0
        %v1403 = vadd.f32 %v1322, %v1402
        %v1404 = vpop.f32.mrb[0].mxu0
        %1405 = vdwg.mxu0
        %1406 = vmatprep.subr.mxu0 0.0
        %v1407 = vand.u32 %v1236, 4294901760
        %v1408 = vsub.f32 %v1236, %v1407
        %1409 = vmatpush1.msra.mxu0 %v1408
        %1410 = vmatprep.subr.mxu0 0.0
        %v1411 = vand.u32 %v1237, 4294901760
        %v1412 = vsub.f32 %v1237, %v1411
        %1413 = vmatpush1.msra.mxu0 %v1412
        %1414 = vmatprep.subr.mxu0 0.0
        %1415 = vmatpush1.msra.mxu0 0.0
        %1416 = vmatprep.subr.mxu0 0.0
        %1417 = vmatpush1.msra.mxu0 0.0
        %1418 = vmatprep.subr.mxu0 0.0
        %1419 = vmatpush1.msra.mxu0 0.0
        %1420 = vmatprep.subr.mxu0 0.0
        %1421 = vmatpush1.msra.mxu0 0.0
        %1422 = vmatprep.subr.mxu0 0.0
        %1423 = vmatpush1.msra.mxu0 0.0
        %1424 = vmatprep.subr.mxu0 0.0
        %1425 = vmatpush1.msra.mxu0 0.0
        %1426 = vmatprep.subr.mxu0 0.0
        %1427 = vmatpush1.msra.mxu0 0.0
        %1428 = vmatprep.subr.mxu0 0.0
        %1429 = vmatpush1.msra.mxu0 0.0
        %1430 = vmatprep.subr.mxu0 0.0
        %1431 = vmatpush1.msra.mxu0 0.0
        %1432 = vmatprep.subr.mxu0 0.0
        %1433 = vmatpush1.msra.mxu0 0.0
        %1434 = vmatprep.subr.mxu0 0.0
        %1435 = vmatpush1.msra.mxu0 0.0
        %1436 = vmatprep.subr.mxu0 0.0
        %1437 = vmatpush1.msra.mxu0 0.0
        %1438 = vmatprep.subr.mxu0 0.0
        %1439 = vmatpush1.msra.mxu0 0.0
        %1440 = vmatprep.subr.mxu0 0.0
        %1441 = vmatpush1.msra.mxu0 0.0
        %1442 = vmatprep.subr.mxu0 0.0
        %1443 = vmatpush1.msra.mxu0 0.0
        %1444 = vmatprep.subr.mxu0 0.0
        %1445 = vmatpush1.msra.mxu0 0.0
        %1446 = vmatprep.subr.mxu0 0.0
        %1447 = vmatpush1.msra.mxu0 0.0
        %1448 = vmatprep.subr.mxu0 0.0
        %1449 = vmatpush1.msra.mxu0 0.0
        %1450 = vmatprep.subr.mxu0 0.0
        %1451 = vmatpush1.msra.mxu0 0.0
        %1452 = vmatprep.subr.mxu0 0.0
        %1453 = vmatpush1.msra.mxu0 0.0
        %1454 = vmatprep.subr.mxu0 0.0
        %1455 = vmatpush1.msra.mxu0 0.0
        %1456 = vmatprep.subr.mxu0 0.0
        %1457 = vmatpush1.msra.mxu0 0.0
        %1458 = vmatprep.subr.mxu0 0.0
        %1459 = vmatpush1.msra.mxu0 0.0
        %1460 = vmatprep.subr.mxu0 0.0
        %1461 = vmatpush1.msra.mxu0 0.0
        %1462 = vmatprep.subr.mxu0 0.0
        %1463 = vmatpush1.msra.mxu0 0.0
        %1464 = vmatprep.subr.mxu0 0.0
        %1465 = vmatpush1.msra.mxu0 0.0
        %1466 = vmatprep.subr.mxu0 0.0
        %1467 = vmatpush1.msra.mxu0 0.0
        %1468 = vmatprep.subr.mxu0 0.0
        %1469 = vmatpush1.msra.mxu0 0.0
        %1470 = vmatprep.subr.mxu0 0.0
        %1471 = vmatpush1.msra.mxu0 0.0
        %1472 = vmatprep.subr.mxu0 0.0
        %1473 = vmatpush1.msra.mxu0 0.0
        %1474 = vmatprep.mubr.f32.mxu0 0.0
        %v1475 = vand.u32 %v1246, 4294901760
        %v1476 = vsub.f32 %v1246, %v1475
        %1477 = vmatmul.mubr.f32.gmra.mrb[0].mxu0 %v1476
        %v1478 = vpop.f32.mrb[0].mxu0
        %v1479 = vadd.f32 %v1403, %v1478
        %v1480 = vpop.f32.mrb[0].mxu0
        %1481 = vdwg.mxu0
        %1482 = vmatprep.subr.mxu0 0.0
        %v1483 = vand.u32 %v1236, 4294901760
        %1484 = vmatpush1.msra.mxu0 %v1483
        %1485 = vmatprep.subr.mxu0 0.0
        %v1486 = vand.u32 %v1237, 4294901760
        %1487 = vmatpush1.msra.mxu0 %v1486
        %1488 = vmatprep.subr.mxu0 0.0
        %1489 = vmatpush1.msra.mxu0 0.0
        %1490 = vmatprep.subr.mxu0 0.0
        %1491 = vmatpush1.msra.mxu0 0.0
        %1492 = vmatprep.subr.mxu0 0.0
        %1493 = vmatpush1.msra.mxu0 0.0
        %1494 = vmatprep.subr.mxu0 0.0
        %1495 = vmatpush1.msra.mxu0 0.0
        %1496 = vmatprep.subr.mxu0 0.0
        %1497 = vmatpush1.msra.mxu0 0.0
        %1498 = vmatprep.subr.mxu0 0.0
        %1499 = vmatpush1.msra.mxu0 0.0
        %1500 = vmatprep.subr.mxu0 0.0
        %1501 = vmatpush1.msra.mxu0 0.0
        %1502 = vmatprep.subr.mxu0 0.0
        %1503 = vmatpush1.msra.mxu0 0.0
        %1504 = vmatprep.subr.mxu0 0.0
        %1505 = vmatpush1.msra.mxu0 0.0
        %1506 = vmatprep.subr.mxu0 0.0
        %1507 = vmatpush1.msra.mxu0 0.0
        %1508 = vmatprep.subr.mxu0 0.0
        %1509 = vmatpush1.msra.mxu0 0.0
        %1510 = vmatprep.subr.mxu0 0.0
        %1511 = vmatpush1.msra.mxu0 0.0
        %1512 = vmatprep.subr.mxu0 0.0
        %1513 = vmatpush1.msra.mxu0 0.0
        %1514 = vmatprep.subr.mxu0 0.0
        %1515 = vmatpush1.msra.mxu0 0.0
        %1516 = vmatprep.subr.mxu0 0.0
        %1517 = vmatpush1.msra.mxu0 0.0
        %1518 = vmatprep.subr.mxu0 0.0
        %1519 = vmatpush1.msra.mxu0 0.0
        %1520 = vmatprep.subr.mxu0 0.0
        %1521 = vmatpush1.msra.mxu0 0.0
        %1522 = vmatprep.subr.mxu0 0.0
        %1523 = vmatpush1.msra.mxu0 0.0
        %1524 = vmatprep.subr.mxu0 0.0
        %1525 = vmatpush1.msra.mxu0 0.0
        %1526 = vmatprep.subr.mxu0 0.0
        %1527 = vmatpush1.msra.mxu0 0.0
        %1528 = vmatprep.subr.mxu0 0.0
        %1529 = vmatpush1.msra.mxu0 0.0
        %1530 = vmatprep.subr.mxu0 0.0
        %1531 = vmatpush1.msra.mxu0 0.0
        %1532 = vmatprep.subr.mxu0 0.0
        %1533 = vmatpush1.msra.mxu0 0.0
        %1534 = vmatprep.subr.mxu0 0.0
        %1535 = vmatpush1.msra.mxu0 0.0
        %1536 = vmatprep.subr.mxu0 0.0
        %1537 = vmatpush1.msra.mxu0 0.0
        %1538 = vmatprep.subr.mxu0 0.0
        %1539 = vmatpush1.msra.mxu0 0.0
        %1540 = vmatprep.subr.mxu0 0.0
        %1541 = vmatpush1.msra.mxu0 0.0
        %1542 = vmatprep.subr.mxu0 0.0
        %1543 = vmatpush1.msra.mxu0 0.0
        %1544 = vmatprep.subr.mxu0 0.0
        %1545 = vmatpush1.msra.mxu0 0.0
        %1546 = vmatprep.subr.mxu0 0.0
        %1547 = vmatpush1.msra.mxu0 0.0
        %1548 = vmatprep.mubr.f32.mxu0 0.0
        %v1549 = vand.u32 %v1246, 4294901760
        %v1550 = vsub.f32 %v1246, %v1549
        %v1551 = vand.u32 %v1550, 4294901760
        %1552 = vmatmul.mubr.f32.gmra.mrb[0].mxu0 %v1551
        %v1553 = vpop.f32.mrb[0].mxu0
        %v1554 = vadd.f32 %v1479, %v1553
        %v1555 = vpop.f32.mrb[0].mxu0
        %1556 = vdwg.mxu0
        %1557 = vmatprep.subr.mxu0 0.0
        %v1558 = vand.u32 %v1236, 4294901760
        %v1559 = vsub.f32 %v1236, %v1558
        %v1560 = vand.u32 %v1559, 4294901760
        %1561 = vmatpush1.msra.mxu0 %v1560
        %1562 = vmatprep.subr.mxu0 0.0
        %v1563 = vand.u32 %v1237, 4294901760
        %v1564 = vsub.f32 %v1237, %v1563
        %v1565 = vand.u32 %v1564, 4294901760
        %1566 = vmatpush1.msra.mxu0 %v1565
        %1567 = vmatprep.subr.mxu0 0.0
        %1568 = vmatpush1.msra.mxu0 0.0
        %1569 = vmatprep.subr.mxu0 0.0
        %1570 = vmatpush1.msra.mxu0 0.0
        %1571 = vmatprep.subr.mxu0 0.0
        %1572 = vmatpush1.msra.mxu0 0.0
        %1573 = vmatprep.subr.mxu0 0.0
        %1574 = vmatpush1.msra.mxu0 0.0
        %1575 = vmatprep.subr.mxu0 0.0
        %1576 = vmatpush1.msra.mxu0 0.0
        %1577 = vmatprep.subr.mxu0 0.0
        %1578 = vmatpush1.msra.mxu0 0.0
        %1579 = vmatprep.subr.mxu0 0.0
        %1580 = vmatpush1.msra.mxu0 0.0
        %1581 = vmatprep.subr.mxu0 0.0
        %1582 = vmatpush1.msra.mxu0 0.0
        %1583 = vmatprep.subr.mxu0 0.0
        %1584 = vmatpush1.msra.mxu0 0.0
        %1585 = vmatprep.subr.mxu0 0.0
        %1586 = vmatpush1.msra.mxu0 0.0
        %1587 = vmatprep.subr.mxu0 0.0
        %1588 = vmatpush1.msra.mxu0 0.0
        %1589 = vmatprep.subr.mxu0 0.0
        %1590 = vmatpush1.msra.mxu0 0.0
        %1591 = vmatprep.subr.mxu0 0.0
        %1592 = vmatpush1.msra.mxu0 0.0
        %1593 = vmatprep.subr.mxu0 0.0
        %1594 = vmatpush1.msra.mxu0 0.0
        %1595 = vmatprep.subr.mxu0 0.0
        %1596 = vmatpush1.msra.mxu0 0.0
        %1597 = vmatprep.subr.mxu0 0.0
        %1598 = vmatpush1.msra.mxu0 0.0
        %1599 = vmatprep.subr.mxu0 0.0
        %1600 = vmatpush1.msra.mxu0 0.0
        %1601 = vmatprep.subr.mxu0 0.0
        %1602 = vmatpush1.msra.mxu0 0.0
        %1603 = vmatprep.subr.mxu0 0.0
        %1604 = vmatpush1.msra.mxu0 0.0
        %1605 = vmatprep.subr.mxu0 0.0
        %1606 = vmatpush1.msra.mxu0 0.0
        %1607 = vmatprep.subr.mxu0 0.0
        %1608 = vmatpush1.msra.mxu0 0.0
        %1609 = vmatprep.subr.mxu0 0.0
        %1610 = vmatpush1.msra.mxu0 0.0
        %1611 = vmatprep.subr.mxu0 0.0
        %1612 = vmatpush1.msra.mxu0 0.0
        %1613 = vmatprep.subr.mxu0 0.0
        %1614 = vmatpush1.msra.mxu0 0.0
        %1615 = vmatprep.subr.mxu0 0.0
        %1616 = vmatpush1.msra.mxu0 0.0
        %1617 = vmatprep.subr.mxu0 0.0
        %1618 = vmatpush1.msra.mxu0 0.0
        %1619 = vmatprep.subr.mxu0 0.0
        %1620 = vmatpush1.msra.mxu0 0.0
        %1621 = vmatprep.subr.mxu0 0.0
        %1622 = vmatpush1.msra.mxu0 0.0
        %1623 = vmatprep.subr.mxu0 0.0
        %1624 = vmatpush1.msra.mxu0 0.0
        %1625 = vmatprep.subr.mxu0 0.0
        %1626 = vmatpush1.msra.mxu0 0.0
        %1627 = vmatprep.mubr.f32.mxu0 0.0
        %v1628 = vand.u32 %v1246, 4294901760
        %1629 = vmatmul.mubr.f32.gmra.mrb[0].mxu0 %v1628
        %v1630 = vpop.f32.mrb[0].mxu0
        %v1631 = vadd.f32 %v1554, %v1630
        %v1632 = vpop.f32.mrb[0].mxu0
        %1633 = vdwg.mxu0
        %1634 = vmatprep.subr.mxu0 0.0
        %v1635 = vand.u32 %v1236, 4294901760
        %1636 = vmatpush1.msra.mxu0 %v1635
        %1637 = vmatprep.subr.mxu0 0.0
        %v1638 = vand.u32 %v1237, 4294901760
        %1639 = vmatpush1.msra.mxu0 %v1638
        %1640 = vmatprep.subr.mxu0 0.0
        %1641 = vmatpush1.msra.mxu0 0.0
        %1642 = vmatprep.subr.mxu0 0.0
        %1643 = vmatpush1.msra.mxu0 0.0
        %1644 = vmatprep.subr.mxu0 0.0
        %1645 = vmatpush1.msra.mxu0 0.0
        %1646 = vmatprep.subr.mxu0 0.0
        %1647 = vmatpush1.msra.mxu0 0.0
        %1648 = vmatprep.subr.mxu0 0.0
        %1649 = vmatpush1.msra.mxu0 0.0
        %1650 = vmatprep.subr.mxu0 0.0
        %1651 = vmatpush1.msra.mxu0 0.0
        %1652 = vmatprep.subr.mxu0 0.0
        %1653 = vmatpush1.msra.mxu0 0.0
        %1654 = vmatprep.subr.mxu0 0.0
        %1655 = vmatpush1.msra.mxu0 0.0
        %1656 = vmatprep.subr.mxu0 0.0
        %1657 = vmatpush1.msra.mxu0 0.0
        %1658 = vmatprep.subr.mxu0 0.0
        %1659 = vmatpush1.msra.mxu0 0.0
        %1660 = vmatprep.subr.mxu0 0.0
        %1661 = vmatpush1.msra.mxu0 0.0
        %1662 = vmatprep.subr.mxu0 0.0
        %1663 = vmatpush1.msra.mxu0 0.0
        %1664 = vmatprep.subr.mxu0 0.0
        %1665 = vmatpush1.msra.mxu0 0.0
        %1666 = vmatprep.subr.mxu0 0.0
        %1667 = vmatpush1.msra.mxu0 0.0
        %1668 = vmatprep.subr.mxu0 0.0
        %1669 = vmatpush1.msra.mxu0 0.0
        %1670 = vmatprep.subr.mxu0 0.0
        %1671 = vmatpush1.msra.mxu0 0.0
        %1672 = vmatprep.subr.mxu0 0.0
        %1673 = vmatpush1.msra.mxu0 0.0
        %1674 = vmatprep.subr.mxu0 0.0
        %1675 = vmatpush1.msra.mxu0 0.0
        %1676 = vmatprep.subr.mxu0 0.0
        %1677 = vmatpush1.msra.mxu0 0.0
        %1678 = vmatprep.subr.mxu0 0.0
        %1679 = vmatpush1.msra.mxu0 0.0
        %1680 = vmatprep.subr.mxu0 0.0
        %1681 = vmatpush1.msra.mxu0 0.0
        %1682 = vmatprep.subr.mxu0 0.0
        %1683 = vmatpush1.msra.mxu0 0.0
        %1684 = vmatprep.subr.mxu0 0.0
        %1685 = vmatpush1.msra.mxu0 0.0
        %1686 = vmatprep.subr.mxu0 0.0
        %1687 = vmatpush1.msra.mxu0 0.0
        %1688 = vmatprep.subr.mxu0 0.0
        %1689 = vmatpush1.msra.mxu0 0.0
        %1690 = vmatprep.subr.mxu0 0.0
        %1691 = vmatpush1.msra.mxu0 0.0
        %1692 = vmatprep.subr.mxu0 0.0
        %1693 = vmatpush1.msra.mxu0 0.0
        %1694 = vmatprep.subr.mxu0 0.0
        %1695 = vmatpush1.msra.mxu0 0.0
        %1696 = vmatprep.subr.mxu0 0.0
        %1697 = vmatpush1.msra.mxu0 0.0
        %1698 = vmatprep.subr.mxu0 0.0
        %1699 = vmatpush1.msra.mxu0 0.0
        %1700 = vmatprep.mubr.f32.mxu0 0.0
        %v1701 = vand.u32 %v1246, 4294901760
        %1702 = vmatmul.mubr.f32.gmra.mrb[0].mxu0 %v1701
        %v1703 = vpop.f32.mrb[0].mxu0
        %v1704 = vadd.f32 %v1631, %v1703
        %v1705 = vpop.f32.mrb[0].mxu0
        %1706 = vdwg.mxu0
        %v1707 = vmax.f32 %v1704, 0.0
        %v1708 = vld [vmem:[#allocation8] sm:$0xff]
        %v1709 = vld [vmem:[#allocation8 + $0x8] sm:$0xff]
        %v1711 = vsel %vm736, %v1708, 0
        %v1714 = vsel %vm736, %v1709, 0
        %1716 = vmatprep.subr.mxu0 0.0
        %v1717 = vand.u32 %v1707, 4294901760
        %1718 = vmatpush1.msra.mxu0 %v1717
        %1719 = vmatprep.subr.mxu0 0.0
        %1720 = vmatpush1.msra.mxu0 0.0
        %1721 = vmatprep.subr.mxu0 0.0
        %1722 = vmatpush1.msra.mxu0 0.0
        %1723 = vmatprep.subr.mxu0 0.0
        %1724 = vmatpush1.msra.mxu0 0.0
        %1725 = vmatprep.subr.mxu0 0.0
        %1726 = vmatpush1.msra.mxu0 0.0
        %1727 = vmatprep.subr.mxu0 0.0
        %1728 = vmatpush1.msra.mxu0 0.0
        %1729 = vmatprep.subr.mxu0 0.0
        %1730 = vmatpush1.msra.mxu0 0.0
        %1731 = vmatprep.subr.mxu0 0.0
        %1732 = vmatpush1.msra.mxu0 0.0
        %1733 = vmatprep.subr.mxu0 0.0
        %1734 = vmatpush1.msra.mxu0 0.0
        %1735 = vmatprep.subr.mxu0 0.0
        %1736 = vmatpush1.msra.mxu0 0.0
        %1737 = vmatprep.subr.mxu0 0.0
        %1738 = vmatpush1.msra.mxu0 0.0
        %1739 = vmatprep.subr.mxu0 0.0
        %1740 = vmatpush1.msra.mxu0 0.0
        %1741 = vmatprep.subr.mxu0 0.0
        %1742 = vmatpush1.msra.mxu0 0.0
        %1743 = vmatprep.subr.mxu0 0.0
        %1744 = vmatpush1.msra.mxu0 0.0
        %1745 = vmatprep.subr.mxu0 0.0
        %1746 = vmatpush1.msra.mxu0 0.0
        %1747 = vmatprep.subr.mxu0 0.0
        %1748 = vmatpush1.msra.mxu0 0.0
        %1749 = vmatprep.subr.mxu0 0.0
        %1750 = vmatpush1.msra.mxu0 0.0
        %1751 = vmatprep.subr.mxu0 0.0
        %1752 = vmatpush1.msra.mxu0 0.0
        %1753 = vmatprep.subr.mxu0 0.0
        %1754 = vmatpush1.msra.mxu0 0.0
        %1755 = vmatprep.subr.mxu0 0.0
        %1756 = vmatpush1.msra.mxu0 0.0
        %1757 = vmatprep.subr.mxu0 0.0
        %1758 = vmatpush1.msra.mxu0 0.0
        %1759 = vmatprep.subr.mxu0 0.0
        %1760 = vmatpush1.msra.mxu0 0.0
        %1761 = vmatprep.subr.mxu0 0.0
        %1762 = vmatpush1.msra.mxu0 0.0
        %1763 = vmatprep.subr.mxu0 0.0
        %1764 = vmatpush1.msra.mxu0 0.0
        %1765 = vmatprep.subr.mxu0 0.0
        %1766 = vmatpush1.msra.mxu0 0.0
        %1767 = vmatprep.subr.mxu0 0.0
        %1768 = vmatpush1.msra.mxu0 0.0
        %1769 = vmatprep.subr.mxu0 0.0
        %1770 = vmatpush1.msra.mxu0 0.0
        %1771 = vmatprep.subr.mxu0 0.0
        %1772 = vmatpush1.msra.mxu0 0.0
        %1773 = vmatprep.subr.mxu0 0.0
        %1774 = vmatpush1.msra.mxu0 0.0
        %1775 = vmatprep.subr.mxu0 0.0
        %1776 = vmatpush1.msra.mxu0 0.0
        %1777 = vmatprep.subr.mxu0 0.0
        %1778 = vmatpush1.msra.mxu0 0.0
        %1779 = vmatprep.subr.mxu0 0.0
        %1780 = vmatpush1.msra.mxu0 0.0
        %1781 = vmatprep.mubr.f32.mxu0 0.0
        %v1782 = vand.u32 %v1711, 4294901760
        %v1783 = vsub.f32 %v1711, %v1782
        %v1784 = vand.u32 %v1783, 4294901760
        %v1785 = vsub.f32 %v1783, %v1784
        %v1786 = vand.u32 %v1785, 4294901760
        %1787 = vmatmul.mubr.f32.gmra.mrb[0].mxu0 %v1786
        %v1788 = vpop.f32.mrb[0].mxu0
        %v1789 = vadd.f32 0.0, %v1788
        %v1790 = vpop.f32.mrb[0].mxu0
        %1791 = vmatprep.mubr.f32.mxu0 0.0
        %v1792 = vand.u32 %v1714, 4294901760
        %v1793 = vsub.f32 %v1714, %v1792
        %v1794 = vand.u32 %v1793, 4294901760
        %v1795 = vsub.f32 %v1793, %v1794
        %v1796 = vand.u32 %v1795, 4294901760
        %1797 = vmatmul.mubr.f32.gmra.mrb[0].mxu0 %v1796
        %v1798 = vpop.f32.mrb[0].mxu0
        %v1799 = vadd.f32 0.0, %v1798
        %v1800 = vpop.f32.mrb[0].mxu0
        %1801 = vdwg.mxu0
        %1802 = vmatprep.subr.mxu0 0.0
        %v1803 = vand.u32 %v1707, 4294901760
        %v1804 = vsub.f32 %v1707, %v1803
        %v1805 = vand.u32 %v1804, 4294901760
        %v1806 = vsub.f32 %v1804, %v1805
        %v1807 = vand.u32 %v1806, 4294901760
        %1808 = vmatpush1.msra.mxu0 %v1807
        %1809 = vmatprep.subr.mxu0 0.0
        %1810 = vmatpush1.msra.mxu0 0.0
        %1811 = vmatprep.subr.mxu0 0.0
        %1812 = vmatpush1.msra.mxu0 0.0
        %1813 = vmatprep.subr.mxu0 0.0
        %1814 = vmatpush1.msra.mxu0 0.0
        %1815 = vmatprep.subr.mxu0 0.0
        %1816 = vmatpush1.msra.mxu0 0.0
        %1817 = vmatprep.subr.mxu0 0.0
        %1818 = vmatpush1.msra.mxu0 0.0
        %1819 = vmatprep.subr.mxu0 0.0
        %1820 = vmatpush1.msra.mxu0 0.0
        %1821 = vmatprep.subr.mxu0 0.0
        %1822 = vmatpush1.msra.mxu0 0.0
        %1823 = vmatprep.subr.mxu0 0.0
        %1824 = vmatpush1.msra.mxu0 0.0
        %1825 = vmatprep.subr.mxu0 0.0
        %1826 = vmatpush1.msra.mxu0 0.0
        %1827 = vmatprep.subr.mxu0 0.0
        %1828 = vmatpush1.msra.mxu0 0.0
        %1829 = vmatprep.subr.mxu0 0.0
        %1830 = vmatpush1.msra.mxu0 0.0
        %1831 = vmatprep.subr.mxu0 0.0
        %1832 = vmatpush1.msra.mxu0 0.0
        %1833 = vmatprep.subr.mxu0 0.0
        %1834 = vmatpush1.msra.mxu0 0.0
        %1835 = vmatprep.subr.mxu0 0.0
        %1836 = vmatpush1.msra.mxu0 0.0
        %1837 = vmatprep.subr.mxu0 0.0
        %1838 = vmatpush1.msra.mxu0 0.0
        %1839 = vmatprep.subr.mxu0 0.0
        %1840 = vmatpush1.msra.mxu0 0.0
        %1841 = vmatprep.subr.mxu0 0.0
        %1842 = vmatpush1.msra.mxu0 0.0
        %1843 = vmatprep.subr.mxu0 0.0
        %1844 = vmatpush1.msra.mxu0 0.0
        %1845 = vmatprep.subr.mxu0 0.0
        %1846 = vmatpush1.msra.mxu0 0.0
        %1847 = vmatprep.subr.mxu0 0.0
        %1848 = vmatpush1.msra.mxu0 0.0
        %1849 = vmatprep.subr.mxu0 0.0
        %1850 = vmatpush1.msra.mxu0 0.0
        %1851 = vmatprep.subr.mxu0 0.0
        %1852 = vmatpush1.msra.mxu0 0.0
        %1853 = vmatprep.subr.mxu0 0.0
        %1854 = vmatpush1.msra.mxu0 0.0
        %1855 = vmatprep.subr.mxu0 0.0
        %1856 = vmatpush1.msra.mxu0 0.0
        %1857 = vmatprep.subr.mxu0 0.0
        %1858 = vmatpush1.msra.mxu0 0.0
        %1859 = vmatprep.subr.mxu0 0.0
        %1860 = vmatpush1.msra.mxu0 0.0
        %1861 = vmatprep.subr.mxu0 0.0
        %1862 = vmatpush1.msra.mxu0 0.0
        %1863 = vmatprep.subr.mxu0 0.0
        %1864 = vmatpush1.msra.mxu0 0.0
        %1865 = vmatprep.subr.mxu0 0.0
        %1866 = vmatpush1.msra.mxu0 0.0
        %1867 = vmatprep.subr.mxu0 0.0
        %1868 = vmatpush1.msra.mxu0 0.0
        %1869 = vmatprep.subr.mxu0 0.0
        %1870 = vmatpush1.msra.mxu0 0.0
        %1871 = vmatprep.mubr.f32.mxu0 0.0
        %v1872 = vand.u32 %v1711, 4294901760
        %1873 = vmatmul.mubr.f32.gmra.mrb[0].mxu0 %v1872
        %v1874 = vpop.f32.mrb[0].mxu0
        %v1875 = vadd.f32 %v1789, %v1874
        %v1876 = vpop.f32.mrb[0].mxu0
        %1877 = vmatprep.mubr.f32.mxu0 0.0
        %v1878 = vand.u32 %v1714, 4294901760
        %1879 = vmatmul.mubr.f32.gmra.mrb[0].mxu0 %v1878
        %v1880 = vpop.f32.mrb[0].mxu0
        %v1881 = vadd.f32 %v1799, %v1880
        %v1882 = vpop.f32.mrb[0].mxu0
        %1883 = vdwg.mxu0
        %1884 = vmatprep.subr.mxu0 0.0
        %v1885 = vand.u32 %v1707, 4294901760
        %v1886 = vsub.f32 %v1707, %v1885
        %1887 = vmatpush1.msra.mxu0 %v1886
        %1888 = vmatprep.subr.mxu0 0.0
        %1889 = vmatpush1.msra.mxu0 0.0
        %1890 = vmatprep.subr.mxu0 0.0
        %1891 = vmatpush1.msra.mxu0 0.0
        %1892 = vmatprep.subr.mxu0 0.0
        %1893 = vmatpush1.msra.mxu0 0.0
        %1894 = vmatprep.subr.mxu0 0.0
        %1895 = vmatpush1.msra.mxu0 0.0
        %1896 = vmatprep.subr.mxu0 0.0
        %1897 = vmatpush1.msra.mxu0 0.0
        %1898 = vmatprep.subr.mxu0 0.0
        %1899 = vmatpush1.msra.mxu0 0.0
        %1900 = vmatprep.subr.mxu0 0.0
        %1901 = vmatpush1.msra.mxu0 0.0
        %1902 = vmatprep.subr.mxu0 0.0
        %1903 = vmatpush1.msra.mxu0 0.0
        %1904 = vmatprep.subr.mxu0 0.0
        %1905 = vmatpush1.msra.mxu0 0.0
        %1906 = vmatprep.subr.mxu0 0.0
        %1907 = vmatpush1.msra.mxu0 0.0
        %1908 = vmatprep.subr.mxu0 0.0
        %1909 = vmatpush1.msra.mxu0 0.0
        %1910 = vmatprep.subr.mxu0 0.0
        %1911 = vmatpush1.msra.mxu0 0.0
        %1912 = vmatprep.subr.mxu0 0.0
        %1913 = vmatpush1.msra.mxu0 0.0
        %1914 = vmatprep.subr.mxu0 0.0
        %1915 = vmatpush1.msra.mxu0 0.0
        %1916 = vmatprep.subr.mxu0 0.0
        %1917 = vmatpush1.msra.mxu0 0.0
        %1918 = vmatprep.subr.mxu0 0.0
        %1919 = vmatpush1.msra.mxu0 0.0
        %1920 = vmatprep.subr.mxu0 0.0
        %1921 = vmatpush1.msra.mxu0 0.0
        %1922 = vmatprep.subr.mxu0 0.0
        %1923 = vmatpush1.msra.mxu0 0.0
        %1924 = vmatprep.subr.mxu0 0.0
        %1925 = vmatpush1.msra.mxu0 0.0
        %1926 = vmatprep.subr.mxu0 0.0
        %1927 = vmatpush1.msra.mxu0 0.0
        %1928 = vmatprep.subr.mxu0 0.0
        %1929 = vmatpush1.msra.mxu0 0.0
        %1930 = vmatprep.subr.mxu0 0.0
        %1931 = vmatpush1.msra.mxu0 0.0
        %1932 = vmatprep.subr.mxu0 0.0
        %1933 = vmatpush1.msra.mxu0 0.0
        %1934 = vmatprep.subr.mxu0 0.0
        %1935 = vmatpush1.msra.mxu0 0.0
        %1936 = vmatprep.subr.mxu0 0.0
        %1937 = vmatpush1.msra.mxu0 0.0
        %1938 = vmatprep.subr.mxu0 0.0
        %1939 = vmatpush1.msra.mxu0 0.0
        %1940 = vmatprep.subr.mxu0 0.0
        %1941 = vmatpush1.msra.mxu0 0.0
        %1942 = vmatprep.subr.mxu0 0.0
        %1943 = vmatpush1.msra.mxu0 0.0
        %1944 = vmatprep.subr.mxu0 0.0
        %1945 = vmatpush1.msra.mxu0 0.0
        %1946 = vmatprep.subr.mxu0 0.0
        %1947 = vmatpush1.msra.mxu0 0.0
        %1948 = vmatprep.subr.mxu0 0.0
        %1949 = vmatpush1.msra.mxu0 0.0
        %1950 = vmatprep.mubr.f32.mxu0 0.0
        %v1951 = vand.u32 %v1711, 4294901760
        %v1952 = vsub.f32 %v1711, %v1951
        %1953 = vmatmul.mubr.f32.gmra.mrb[0].mxu0 %v1952
        %v1954 = vpop.f32.mrb[0].mxu0
        %v1955 = vadd.f32 %v1875, %v1954
        %v1956 = vpop.f32.mrb[0].mxu0
        %1957 = vmatprep.mubr.f32.mxu0 0.0
        %v1958 = vand.u32 %v1714, 4294901760
        %v1959 = vsub.f32 %v1714, %v1958
        %1960 = vmatmul.mubr.f32.gmra.mrb[0].mxu0 %v1959
        %v1961 = vpop.f32.mrb[0].mxu0
        %v1962 = vadd.f32 %v1881, %v1961
        %v1963 = vpop.f32.mrb[0].mxu0
        %1964 = vdwg.mxu0
        %1965 = vmatprep.subr.mxu0 0.0
        %v1966 = vand.u32 %v1707, 4294901760
        %1967 = vmatpush1.msra.mxu0 %v1966
        %1968 = vmatprep.subr.mxu0 0.0
        %1969 = vmatpush1.msra.mxu0 0.0
        %1970 = vmatprep.subr.mxu0 0.0
        %1971 = vmatpush1.msra.mxu0 0.0
        %1972 = vmatprep.subr.mxu0 0.0
        %1973 = vmatpush1.msra.mxu0 0.0
        %1974 = vmatprep.subr.mxu0 0.0
        %1975 = vmatpush1.msra.mxu0 0.0
        %1976 = vmatprep.subr.mxu0 0.0
        %1977 = vmatpush1.msra.mxu0 0.0
        %1978 = vmatprep.subr.mxu0 0.0
        %1979 = vmatpush1.msra.mxu0 0.0
        %1980 = vmatprep.subr.mxu0 0.0
        %1981 = vmatpush1.msra.mxu0 0.0
        %1982 = vmatprep.subr.mxu0 0.0
        %1983 = vmatpush1.msra.mxu0 0.0
        %1984 = vmatprep.subr.mxu0 0.0
        %1985 = vmatpush1.msra.mxu0 0.0
        %1986 = vmatprep.subr.mxu0 0.0
        %1987 = vmatpush1.msra.mxu0 0.0
        %1988 = vmatprep.subr.mxu0 0.0
        %1989 = vmatpush1.msra.mxu0 0.0
        %1990 = vmatprep.subr.mxu0 0.0
        %1991 = vmatpush1.msra.mxu0 0.0
        %1992 = vmatprep.subr.mxu0 0.0
        %1993 = vmatpush1.msra.mxu0 0.0
        %1994 = vmatprep.subr.mxu0 0.0
        %1995 = vmatpush1.msra.mxu0 0.0
        %1996 = vmatprep.subr.mxu0 0.0
        %1997 = vmatpush1.msra.mxu0 0.0
        %1998 = vmatprep.subr.mxu0 0.0
        %1999 = vmatpush1.msra.mxu0 0.0
        %2000 = vmatprep.subr.mxu0 0.0
        %2001 = vmatpush1.msra.mxu0 0.0
        %2002 = vmatprep.subr.mxu0 0.0
        %2003 = vmatpush1.msra.mxu0 0.0
        %2004 = vmatprep.subr.mxu0 0.0
        %2005 = vmatpush1.msra.mxu0 0.0
        %2006 = vmatprep.subr.mxu0 0.0
        %2007 = vmatpush1.msra.mxu0 0.0
        %2008 = vmatprep.subr.mxu0 0.0
        %2009 = vmatpush1.msra.mxu0 0.0
        %2010 = vmatprep.subr.mxu0 0.0
        %2011 = vmatpush1.msra.mxu0 0.0
        %2012 = vmatprep.subr.mxu0 0.0
        %2013 = vmatpush1.msra.mxu0 0.0
        %2014 = vmatprep.subr.mxu0 0.0
        %2015 = vmatpush1.msra.mxu0 0.0
        %2016 = vmatprep.subr.mxu0 0.0
        %2017 = vmatpush1.msra.mxu0 0.0
        %2018 = vmatprep.subr.mxu0 0.0
        %2019 = vmatpush1.msra.mxu0 0.0
        %2020 = vmatprep.subr.mxu0 0.0
        %2021 = vmatpush1.msra.mxu0 0.0
        %2022 = vmatprep.subr.mxu0 0.0
        %2023 = vmatpush1.msra.mxu0 0.0
        %2024 = vmatprep.subr.mxu0 0.0
        %2025 = vmatpush1.msra.mxu0 0.0
        %2026 = vmatprep.subr.mxu0 0.0
        %2027 = vmatpush1.msra.mxu0 0.0
        %2028 = vmatprep.subr.mxu0 0.0
        %2029 = vmatpush1.msra.mxu0 0.0
        %2030 = vmatprep.mubr.f32.mxu0 0.0
        %v2031 = vand.u32 %v1711, 4294901760
        %v2032 = vsub.f32 %v1711, %v2031
        %v2033 = vand.u32 %v2032, 4294901760
        %2034 = vmatmul.mubr.f32.gmra.mrb[0].mxu0 %v2033
        %v2035 = vpop.f32.mrb[0].mxu0
        %v2036 = vadd.f32 %v1955, %v2035
        %v2037 = vpop.f32.mrb[0].mxu0
        %2038 = vmatprep.mubr.f32.mxu0 0.0
        %v2039 = vand.u32 %v1714, 4294901760
        %v2040 = vsub.f32 %v1714, %v2039
        %v2041 = vand.u32 %v2040, 4294901760
        %2042 = vmatmul.mubr.f32.gmra.mrb[0].mxu0 %v2041
        %v2043 = vpop.f32.mrb[0].mxu0
        %v2044 = vadd.f32 %v1962, %v2043
        %v2045 = vpop.f32.mrb[0].mxu0
        %2046 = vdwg.mxu0
        %2047 = vmatprep.subr.mxu0 0.0
        %v2048 = vand.u32 %v1707, 4294901760
        %v2049 = vsub.f32 %v1707, %v2048
        %v2050 = vand.u32 %v2049, 4294901760
        %2051 = vmatpush1.msra.mxu0 %v2050
        %2052 = vmatprep.subr.mxu0 0.0
        %2053 = vmatpush1.msra.mxu0 0.0
        %2054 = vmatprep.subr.mxu0 0.0
        %2055 = vmatpush1.msra.mxu0 0.0
        %2056 = vmatprep.subr.mxu0 0.0
        %2057 = vmatpush1.msra.mxu0 0.0
        %2058 = vmatprep.subr.mxu0 0.0
        %2059 = vmatpush1.msra.mxu0 0.0
        %2060 = vmatprep.subr.mxu0 0.0
        %2061 = vmatpush1.msra.mxu0 0.0
        %2062 = vmatprep.subr.mxu0 0.0
        %2063 = vmatpush1.msra.mxu0 0.0
        %2064 = vmatprep.subr.mxu0 0.0
        %2065 = vmatpush1.msra.mxu0 0.0
        %2066 = vmatprep.subr.mxu0 0.0
        %2067 = vmatpush1.msra.mxu0 0.0
        %2068 = vmatprep.subr.mxu0 0.0
        %2069 = vmatpush1.msra.mxu0 0.0
        %2070 = vmatprep.subr.mxu0 0.0
        %2071 = vmatpush1.msra.mxu0 0.0
        %2072 = vmatprep.subr.mxu0 0.0
        %2073 = vmatpush1.msra.mxu0 0.0
        %2074 = vmatprep.subr.mxu0 0.0
        %2075 = vmatpush1.msra.mxu0 0.0
        %2076 = vmatprep.subr.mxu0 0.0
        %2077 = vmatpush1.msra.mxu0 0.0
        %2078 = vmatprep.subr.mxu0 0.0
        %2079 = vmatpush1.msra.mxu0 0.0
        %2080 = vmatprep.subr.mxu0 0.0
        %2081 = vmatpush1.msra.mxu0 0.0
        %2082 = vmatprep.subr.mxu0 0.0
        %2083 = vmatpush1.msra.mxu0 0.0
        %2084 = vmatprep.subr.mxu0 0.0
        %2085 = vmatpush1.msra.mxu0 0.0
        %2086 = vmatprep.subr.mxu0 0.0
        %2087 = vmatpush1.msra.mxu0 0.0
        %2088 = vmatprep.subr.mxu0 0.0
        %2089 = vmatpush1.msra.mxu0 0.0
        %2090 = vmatprep.subr.mxu0 0.0
        %2091 = vmatpush1.msra.mxu0 0.0
        %2092 = vmatprep.subr.mxu0 0.0
        %2093 = vmatpush1.msra.mxu0 0.0
        %2094 = vmatprep.subr.mxu0 0.0
        %2095 = vmatpush1.msra.mxu0 0.0
        %2096 = vmatprep.subr.mxu0 0.0
        %2097 = vmatpush1.msra.mxu0 0.0
        %2098 = vmatprep.subr.mxu0 0.0
        %2099 = vmatpush1.msra.mxu0 0.0
        %2100 = vmatprep.subr.mxu0 0.0
        %2101 = vmatpush1.msra.mxu0 0.0
        %2102 = vmatprep.subr.mxu0 0.0
        %2103 = vmatpush1.msra.mxu0 0.0
        %2104 = vmatprep.subr.mxu0 0.0
        %2105 = vmatpush1.msra.mxu0 0.0
        %2106 = vmatprep.subr.mxu0 0.0
        %2107 = vmatpush1.msra.mxu0 0.0
        %2108 = vmatprep.subr.mxu0 0.0
        %2109 = vmatpush1.msra.mxu0 0.0
        %2110 = vmatprep.subr.mxu0 0.0
        %2111 = vmatpush1.msra.mxu0 0.0
        %2112 = vmatprep.subr.mxu0 0.0
        %2113 = vmatpush1.msra.mxu0 0.0
        %2114 = vmatprep.mubr.f32.mxu0 0.0
        %v2115 = vand.u32 %v1711, 4294901760
        %2116 = vmatmul.mubr.f32.gmra.mrb[0].mxu0 %v2115
        %v2117 = vpop.f32.mrb[0].mxu0
        %v2118 = vadd.f32 %v2036, %v2117
        %v2119 = vpop.f32.mrb[0].mxu0
        %2120 = vmatprep.mubr.f32.mxu0 0.0
        %v2121 = vand.u32 %v1714, 4294901760
        %2122 = vmatmul.mubr.f32.gmra.mrb[0].mxu0 %v2121
        %v2123 = vpop.f32.mrb[0].mxu0
        %v2124 = vadd.f32 %v2044, %v2123
        %v2125 = vpop.f32.mrb[0].mxu0
        %2126 = vdwg.mxu0
        %2127 = vmatprep.subr.mxu0 0.0
        %v2128 = vand.u32 %v1707, 4294901760
        %2129 = vmatpush1.msra.mxu0 %v2128
        %2130 = vmatprep.subr.mxu0 0.0
        %2131 = vmatpush1.msra.mxu0 0.0
        %2132 = vmatprep.subr.mxu0 0.0
        %2133 = vmatpush1.msra.mxu0 0.0
        %2134 = vmatprep.subr.mxu0 0.0
        %2135 = vmatpush1.msra.mxu0 0.0
        %2136 = vmatprep.subr.mxu0 0.0
        %2137 = vmatpush1.msra.mxu0 0.0
        %2138 = vmatprep.subr.mxu0 0.0
        %2139 = vmatpush1.msra.mxu0 0.0
        %2140 = vmatprep.subr.mxu0 0.0
        %2141 = vmatpush1.msra.mxu0 0.0
        %2142 = vmatprep.subr.mxu0 0.0
        %2143 = vmatpush1.msra.mxu0 0.0
        %2144 = vmatprep.subr.mxu0 0.0
        %2145 = vmatpush1.msra.mxu0 0.0
        %2146 = vmatprep.subr.mxu0 0.0
        %2147 = vmatpush1.msra.mxu0 0.0
        %2148 = vmatprep.subr.mxu0 0.0
        %2149 = vmatpush1.msra.mxu0 0.0
        %2150 = vmatprep.subr.mxu0 0.0
        %2151 = vmatpush1.msra.mxu0 0.0
        %2152 = vmatprep.subr.mxu0 0.0
        %2153 = vmatpush1.msra.mxu0 0.0
        %2154 = vmatprep.subr.mxu0 0.0
        %2155 = vmatpush1.msra.mxu0 0.0
        %2156 = vmatprep.subr.mxu0 0.0
        %2157 = vmatpush1.msra.mxu0 0.0
        %2158 = vmatprep.subr.mxu0 0.0
        %2159 = vmatpush1.msra.mxu0 0.0
        %2160 = vmatprep.subr.mxu0 0.0
        %2161 = vmatpush1.msra.mxu0 0.0
        %2162 = vmatprep.subr.mxu0 0.0
        %2163 = vmatpush1.msra.mxu0 0.0
        %2164 = vmatprep.subr.mxu0 0.0
        %2165 = vmatpush1.msra.mxu0 0.0
        %2166 = vmatprep.subr.mxu0 0.0
        %2167 = vmatpush1.msra.mxu0 0.0
        %2168 = vmatprep.subr.mxu0 0.0
        %2169 = vmatpush1.msra.mxu0 0.0
        %2170 = vmatprep.subr.mxu0 0.0
        %2171 = vmatpush1.msra.mxu0 0.0
        %2172 = vmatprep.subr.mxu0 0.0
        %2173 = vmatpush1.msra.mxu0 0.0
        %2174 = vmatprep.subr.mxu0 0.0
        %2175 = vmatpush1.msra.mxu0 0.0
        %2176 = vmatprep.subr.mxu0 0.0
        %2177 = vmatpush1.msra.mxu0 0.0
        %2178 = vmatprep.subr.mxu0 0.0
        %2179 = vmatpush1.msra.mxu0 0.0
        %2180 = vmatprep.subr.mxu0 0.0
        %2181 = vmatpush1.msra.mxu0 0.0
        %2182 = vmatprep.subr.mxu0 0.0
        %2183 = vmatpush1.msra.mxu0 0.0
        %2184 = vmatprep.subr.mxu0 0.0
        %2185 = vmatpush1.msra.mxu0 0.0
        %2186 = vmatprep.subr.mxu0 0.0
        %2187 = vmatpush1.msra.mxu0 0.0
        %2188 = vmatprep.subr.mxu0 0.0
        %2189 = vmatpush1.msra.mxu0 0.0
        %2190 = vmatprep.subr.mxu0 0.0
        %2191 = vmatpush1.msra.mxu0 0.0
        %2192 = vmatprep.mubr.f32.mxu0 0.0
        %v2193 = vand.u32 %v1711, 4294901760
        %2194 = vmatmul.mubr.f32.gmra.mrb[0].mxu0 %v2193
        %v2195 = vpop.f32.mrb[0].mxu0
        %v2196 = vadd.f32 %v2118, %v2195
        %v2197 = vpop.f32.mrb[0].mxu0
        %2198 = vmatprep.mubr.f32.mxu0 0.0
        %v2199 = vand.u32 %v1714, 4294901760
        %2200 = vmatmul.mubr.f32.gmra.mrb[0].mxu0 %v2199
        %v2201 = vpop.f32.mrb[0].mxu0
        %v2202 = vadd.f32 %v2124, %v2201
        %v2203 = vpop.f32.mrb[0].mxu0
        %2204 = vdwg.mxu0
        %s2205 = scalar_lea.vmem %s257, 16 [#allocation10]
        %2206 = vst [vmem:[%s2205] sm:$0xff] %v2196
        %2207 = vst [vmem:[%s2205 + $0x8] sm:$0xff] %v2202
        %s2208 = scalar_lea.vmem %s221, 16 [#allocation2]
        %v2209 = vld [vmem:[%s2208] sm:$0xff]
        %v2210 = vld [vmem:[#allocation5] sm:$0xff]
        %v2211 = vld [vmem:[#allocation5 + $0x8] sm:$0xff]
        %v2212 = vld [vmem:[#allocation7] sm:$0x1]
        %v2214 = vlaneseq
        %v2215 = vshrl.u32 %v2214, 7
        %v2216 = vsub.s32 0, %v2215
        %v2217 = vrot.slane %v2212, %v2216
        %v2220 = vsel %vm270, %v2209, 0
        %2222 = vmatprep.subr.mxu0 0.0
        %v2223 = vand.u32 %v2210, 4294901760
        %2224 = vmatpush1.msra.mxu0 %v2223
        %2225 = vmatprep.subr.mxu0 0.0
        %v2226 = vand.u32 %v2211, 4294901760
        %2227 = vmatpush1.msra.mxu0 %v2226
        %2228 = vmatprep.subr.mxu0 0.0
        %2229 = vmatpush1.msra.mxu0 0.0
        %2230 = vmatprep.subr.mxu0 0.0
        %2231 = vmatpush1.msra.mxu0 0.0
        %2232 = vmatprep.subr.mxu0 0.0
        %2233 = vmatpush1.msra.mxu0 0.0
        %2234 = vmatprep.subr.mxu0 0.0
        %2235 = vmatpush1.msra.mxu0 0.0
        %2236 = vmatprep.subr.mxu0 0.0
        %2237 = vmatpush1.msra.mxu0 0.0
        %2238 = vmatprep.subr.mxu0 0.0
        %2239 = vmatpush1.msra.mxu0 0.0
        %2240 = vmatprep.subr.mxu0 0.0
        %2241 = vmatpush1.msra.mxu0 0.0
        %2242 = vmatprep.subr.mxu0 0.0
        %2243 = vmatpush1.msra.mxu0 0.0
        %2244 = vmatprep.subr.mxu0 0.0
        %2245 = vmatpush1.msra.mxu0 0.0
        %2246 = vmatprep.subr.mxu0 0.0
        %2247 = vmatpush1.msra.mxu0 0.0
        %2248 = vmatprep.subr.mxu0 0.0
        %2249 = vmatpush1.msra.mxu0 0.0
        %2250 = vmatprep.subr.mxu0 0.0
        %2251 = vmatpush1.msra.mxu0 0.0
        %2252 = vmatprep.subr.mxu0 0.0
        %2253 = vmatpush1.msra.mxu0 0.0
        %2254 = vmatprep.subr.mxu0 0.0
        %2255 = vmatpush1.msra.mxu0 0.0
        %2256 = vmatprep.subr.mxu0 0.0
        %2257 = vmatpush1.msra.mxu0 0.0
        %2258 = vmatprep.subr.mxu0 0.0
        %2259 = vmatpush1.msra.mxu0 0.0
        %2260 = vmatprep.subr.mxu0 0.0
        %2261 = vmatpush1.msra.mxu0 0.0
        %2262 = vmatprep.subr.mxu0 0.0
        %2263 = vmatpush1.msra.mxu0 0.0
        %2264 = vmatprep.subr.mxu0 0.0
        %2265 = vmatpush1.msra.mxu0 0.0
        %2266 = vmatprep.subr.mxu0 0.0
        %2267 = vmatpush1.msra.mxu0 0.0
        %2268 = vmatprep.subr.mxu0 0.0
        %2269 = vmatpush1.msra.mxu0 0.0
        %2270 = vmatprep.subr.mxu0 0.0
        %2271 = vmatpush1.msra.mxu0 0.0
        %2272 = vmatprep.subr.mxu0 0.0
        %2273 = vmatpush1.msra.mxu0 0.0
        %2274 = vmatprep.subr.mxu0 0.0
        %2275 = vmatpush1.msra.mxu0 0.0
        %2276 = vmatprep.subr.mxu0 0.0
        %2277 = vmatpush1.msra.mxu0 0.0
        %2278 = vmatprep.subr.mxu0 0.0
        %2279 = vmatpush1.msra.mxu0 0.0
        %2280 = vmatprep.subr.mxu0 0.0
        %2281 = vmatpush1.msra.mxu0 0.0
        %2282 = vmatprep.subr.mxu0 0.0
        %2283 = vmatpush1.msra.mxu0 0.0
        %2284 = vmatprep.subr.mxu0 0.0
        %2285 = vmatpush1.msra.mxu0 0.0
        %2286 = vmatprep.subr.mxu0 0.0
        %2287 = vmatpush1.msra.mxu0 0.0
        %2288 = vmatprep.mubr.f32.mxu0 0.0
        %v2289 = vand.u32 %v2220, 4294901760
        %v2290 = vsub.f32 %v2220, %v2289
        %v2291 = vand.u32 %v2290, 4294901760
        %v2292 = vsub.f32 %v2290, %v2291
        %v2293 = vand.u32 %v2292, 4294901760
        %2294 = vmatmul.mubr.f32.gmra.mrb[0].mxu0 %v2293
        %v2295 = vpop.f32.mrb[0].mxu0
        %v2296 = vadd.f32 %v2217, %v2295
        %v2297 = vpop.f32.mrb[0].mxu0
        %2298 = vdwg.mxu0
        %2299 = vmatprep.subr.mxu0 0.0
        %v2300 = vand.u32 %v2210, 4294901760
        %v2301 = vsub.f32 %v2210, %v2300
        %v2302 = vand.u32 %v2301, 4294901760
        %v2303 = vsub.f32 %v2301, %v2302
        %v2304 = vand.u32 %v2303, 4294901760
        %2305 = vmatpush1.msra.mxu0 %v2304
        %2306 = vmatprep.subr.mxu0 0.0
        %v2307 = vand.u32 %v2211, 4294901760
        %v2308 = vsub.f32 %v2211, %v2307
        %v2309 = vand.u32 %v2308, 4294901760
        %v2310 = vsub.f32 %v2308, %v2309
        %v2311 = vand.u32 %v2310, 4294901760
        %2312 = vmatpush1.msra.mxu0 %v2311
        %2313 = vmatprep.subr.mxu0 0.0
        %2314 = vmatpush1.msra.mxu0 0.0
        %2315 = vmatprep.subr.mxu0 0.0
        %2316 = vmatpush1.msra.mxu0 0.0
        %2317 = vmatprep.subr.mxu0 0.0
        %2318 = vmatpush1.msra.mxu0 0.0
        %2319 = vmatprep.subr.mxu0 0.0
        %2320 = vmatpush1.msra.mxu0 0.0
        %2321 = vmatprep.subr.mxu0 0.0
        %2322 = vmatpush1.msra.mxu0 0.0
        %2323 = vmatprep.subr.mxu0 0.0
        %2324 = vmatpush1.msra.mxu0 0.0
        %2325 = vmatprep.subr.mxu0 0.0
        %2326 = vmatpush1.msra.mxu0 0.0
        %2327 = vmatprep.subr.mxu0 0.0
        %2328 = vmatpush1.msra.mxu0 0.0
        %2329 = vmatprep.subr.mxu0 0.0
        %2330 = vmatpush1.msra.mxu0 0.0
        %2331 = vmatprep.subr.mxu0 0.0
        %2332 = vmatpush1.msra.mxu0 0.0
        %2333 = vmatprep.subr.mxu0 0.0
        %2334 = vmatpush1.msra.mxu0 0.0
        %2335 = vmatprep.subr.mxu0 0.0
        %2336 = vmatpush1.msra.mxu0 0.0
        %2337 = vmatprep.subr.mxu0 0.0
        %2338 = vmatpush1.msra.mxu0 0.0
        %2339 = vmatprep.subr.mxu0 0.0
        %2340 = vmatpush1.msra.mxu0 0.0
        %2341 = vmatprep.subr.mxu0 0.0
        %2342 = vmatpush1.msra.mxu0 0.0
        %2343 = vmatprep.subr.mxu0 0.0
        %2344 = vmatpush1.msra.mxu0 0.0
        %2345 = vmatprep.subr.mxu0 0.0
        %2346 = vmatpush1.msra.mxu0 0.0
        %2347 = vmatprep.subr.mxu0 0.0
        %2348 = vmatpush1.msra.mxu0 0.0
        %2349 = vmatprep.subr.mxu0 0.0
        %2350 = vmatpush1.msra.mxu0 0.0
        %2351 = vmatprep.subr.mxu0 0.0
        %2352 = vmatpush1.msra.mxu0 0.0
        %2353 = vmatprep.subr.mxu0 0.0
        %2354 = vmatpush1.msra.mxu0 0.0
        %2355 = vmatprep.subr.mxu0 0.0
        %2356 = vmatpush1.msra.mxu0 0.0
        %2357 = vmatprep.subr.mxu0 0.0
        %2358 = vmatpush1.msra.mxu0 0.0
        %2359 = vmatprep.subr.mxu0 0.0
        %2360 = vmatpush1.msra.mxu0 0.0
        %2361 = vmatprep.subr.mxu0 0.0
        %2362 = vmatpush1.msra.mxu0 0.0
        %2363 = vmatprep.subr.mxu0 0.0
        %2364 = vmatpush1.msra.mxu0 0.0
        %2365 = vmatprep.subr.mxu0 0.0
        %2366 = vmatpush1.msra.mxu0 0.0
        %2367 = vmatprep.subr.mxu0 0.0
        %2368 = vmatpush1.msra.mxu0 0.0
        %2369 = vmatprep.subr.mxu0 0.0
        %2370 = vmatpush1.msra.mxu0 0.0
        %2371 = vmatprep.subr.mxu0 0.0
        %2372 = vmatpush1.msra.mxu0 0.0
        %2373 = vmatprep.mubr.f32.mxu0 0.0
        %v2374 = vand.u32 %v2220, 4294901760
        %2375 = vmatmul.mubr.f32.gmra.mrb[0].mxu0 %v2374
        %v2376 = vpop.f32.mrb[0].mxu0
        %v2377 = vadd.f32 %v2296, %v2376
        %v2378 = vpop.f32.mrb[0].mxu0
        %2379 = vdwg.mxu0
        %2380 = vmatprep.subr.mxu0 0.0
        %v2381 = vand.u32 %v2210, 4294901760
        %v2382 = vsub.f32 %v2210, %v2381
        %2383 = vmatpush1.msra.mxu0 %v2382
        %2384 = vmatprep.subr.mxu0 0.0
        %v2385 = vand.u32 %v2211, 4294901760
        %v2386 = vsub.f32 %v2211, %v2385
        %2387 = vmatpush1.msra.mxu0 %v2386
        %2388 = vmatprep.subr.mxu0 0.0
        %2389 = vmatpush1.msra.mxu0 0.0
        %2390 = vmatprep.subr.mxu0 0.0
        %2391 = vmatpush1.msra.mxu0 0.0
        %2392 = vmatprep.subr.mxu0 0.0
        %2393 = vmatpush1.msra.mxu0 0.0
        %2394 = vmatprep.subr.mxu0 0.0
        %2395 = vmatpush1.msra.mxu0 0.0
        %2396 = vmatprep.subr.mxu0 0.0
        %2397 = vmatpush1.msra.mxu0 0.0
        %2398 = vmatprep.subr.mxu0 0.0
        %2399 = vmatpush1.msra.mxu0 0.0
        %2400 = vmatprep.subr.mxu0 0.0
        %2401 = vmatpush1.msra.mxu0 0.0
        %2402 = vmatprep.subr.mxu0 0.0
        %2403 = vmatpush1.msra.mxu0 0.0
        %2404 = vmatprep.subr.mxu0 0.0
        %2405 = vmatpush1.msra.mxu0 0.0
        %2406 = vmatprep.subr.mxu0 0.0
        %2407 = vmatpush1.msra.mxu0 0.0
        %2408 = vmatprep.subr.mxu0 0.0
        %2409 = vmatpush1.msra.mxu0 0.0
        %2410 = vmatprep.subr.mxu0 0.0
        %2411 = vmatpush1.msra.mxu0 0.0
        %2412 = vmatprep.subr.mxu0 0.0
        %2413 = vmatpush1.msra.mxu0 0.0
        %2414 = vmatprep.subr.mxu0 0.0
        %2415 = vmatpush1.msra.mxu0 0.0
        %2416 = vmatprep.subr.mxu0 0.0
        %2417 = vmatpush1.msra.mxu0 0.0
        %2418 = vmatprep.subr.mxu0 0.0
        %2419 = vmatpush1.msra.mxu0 0.0
        %2420 = vmatprep.subr.mxu0 0.0
        %2421 = vmatpush1.msra.mxu0 0.0
        %2422 = vmatprep.subr.mxu0 0.0
        %2423 = vmatpush1.msra.mxu0 0.0
        %2424 = vmatprep.subr.mxu0 0.0
        %2425 = vmatpush1.msra.mxu0 0.0
        %2426 = vmatprep.subr.mxu0 0.0
        %2427 = vmatpush1.msra.mxu0 0.0
        %2428 = vmatprep.subr.mxu0 0.0
        %2429 = vmatpush1.msra.mxu0 0.0
        %2430 = vmatprep.subr.mxu0 0.0
        %2431 = vmatpush1.msra.mxu0 0.0
        %2432 = vmatprep.subr.mxu0 0.0
        %2433 = vmatpush1.msra.mxu0 0.0
        %2434 = vmatprep.subr.mxu0 0.0
        %2435 = vmatpush1.msra.mxu0 0.0
        %2436 = vmatprep.subr.mxu0 0.0
        %2437 = vmatpush1.msra.mxu0 0.0
        %2438 = vmatprep.subr.mxu0 0.0
        %2439 = vmatpush1.msra.mxu0 0.0
        %2440 = vmatprep.subr.mxu0 0.0
        %2441 = vmatpush1.msra.mxu0 0.0
        %2442 = vmatprep.subr.mxu0 0.0
        %2443 = vmatpush1.msra.mxu0 0.0
        %2444 = vmatprep.subr.mxu0 0.0
        %2445 = vmatpush1.msra.mxu0 0.0
        %2446 = vmatprep.subr.mxu0 0.0
        %2447 = vmatpush1.msra.mxu0 0.0
        %2448 = vmatprep.mubr.f32.mxu0 0.0
        %v2449 = vand.u32 %v2220, 4294901760
        %v2450 = vsub.f32 %v2220, %v2449
        %2451 = vmatmul.mubr.f32.gmra.mrb[0].mxu0 %v2450
        %v2452 = vpop.f32.mrb[0].mxu0
        %v2453 = vadd.f32 %v2377, %v2452
        %v2454 = vpop.f32.mrb[0].mxu0
        %2455 = vdwg.mxu0
        %2456 = vmatprep.subr.mxu0 0.0
        %v2457 = vand.u32 %v2210, 4294901760
        %2458 = vmatpush1.msra.mxu0 %v2457
        %2459 = vmatprep.subr.mxu0 0.0
        %v2460 = vand.u32 %v2211, 4294901760
        %2461 = vmatpush1.msra.mxu0 %v2460
        %2462 = vmatprep.subr.mxu0 0.0
        %2463 = vmatpush1.msra.mxu0 0.0
        %2464 = vmatprep.subr.mxu0 0.0
        %2465 = vmatpush1.msra.mxu0 0.0
        %2466 = vmatprep.subr.mxu0 0.0
        %2467 = vmatpush1.msra.mxu0 0.0
        %2468 = vmatprep.subr.mxu0 0.0
        %2469 = vmatpush1.msra.mxu0 0.0
        %2470 = vmatprep.subr.mxu0 0.0
        %2471 = vmatpush1.msra.mxu0 0.0
        %2472 = vmatprep.subr.mxu0 0.0
        %2473 = vmatpush1.msra.mxu0 0.0
        %2474 = vmatprep.subr.mxu0 0.0
        %2475 = vmatpush1.msra.mxu0 0.0
        %2476 = vmatprep.subr.mxu0 0.0
        %2477 = vmatpush1.msra.mxu0 0.0
        %2478 = vmatprep.subr.mxu0 0.0
        %2479 = vmatpush1.msra.mxu0 0.0
        %2480 = vmatprep.subr.mxu0 0.0
        %2481 = vmatpush1.msra.mxu0 0.0
        %2482 = vmatprep.subr.mxu0 0.0
        %2483 = vmatpush1.msra.mxu0 0.0
        %2484 = vmatprep.subr.mxu0 0.0
        %2485 = vmatpush1.msra.mxu0 0.0
        %2486 = vmatprep.subr.mxu0 0.0
        %2487 = vmatpush1.msra.mxu0 0.0
        %2488 = vmatprep.subr.mxu0 0.0
        %2489 = vmatpush1.msra.mxu0 0.0
        %2490 = vmatprep.subr.mxu0 0.0
        %2491 = vmatpush1.msra.mxu0 0.0
        %2492 = vmatprep.subr.mxu0 0.0
        %2493 = vmatpush1.msra.mxu0 0.0
        %2494 = vmatprep.subr.mxu0 0.0
        %2495 = vmatpush1.msra.mxu0 0.0
        %2496 = vmatprep.subr.mxu0 0.0
        %2497 = vmatpush1.msra.mxu0 0.0
        %2498 = vmatprep.subr.mxu0 0.0
        %2499 = vmatpush1.msra.mxu0 0.0
        %2500 = vmatprep.subr.mxu0 0.0
        %2501 = vmatpush1.msra.mxu0 0.0
        %2502 = vmatprep.subr.mxu0 0.0
        %2503 = vmatpush1.msra.mxu0 0.0
        %2504 = vmatprep.subr.mxu0 0.0
        %2505 = vmatpush1.msra.mxu0 0.0
        %2506 = vmatprep.subr.mxu0 0.0
        %2507 = vmatpush1.msra.mxu0 0.0
        %2508 = vmatprep.subr.mxu0 0.0
        %2509 = vmatpush1.msra.mxu0 0.0
        %2510 = vmatprep.subr.mxu0 0.0
        %2511 = vmatpush1.msra.mxu0 0.0
        %2512 = vmatprep.subr.mxu0 0.0
        %2513 = vmatpush1.msra.mxu0 0.0
        %2514 = vmatprep.subr.mxu0 0.0
        %2515 = vmatpush1.msra.mxu0 0.0
        %2516 = vmatprep.subr.mxu0 0.0
        %2517 = vmatpush1.msra.mxu0 0.0
        %2518 = vmatprep.subr.mxu0 0.0
        %2519 = vmatpush1.msra.mxu0 0.0
        %2520 = vmatprep.subr.mxu0 0.0
        %2521 = vmatpush1.msra.mxu0 0.0
        %2522 = vmatprep.mubr.f32.mxu0 0.0
        %v2523 = vand.u32 %v2220, 4294901760
        %v2524 = vsub.f32 %v2220, %v2523
        %v2525 = vand.u32 %v2524, 4294901760
        %2526 = vmatmul.mubr.f32.gmra.mrb[0].mxu0 %v2525
        %v2527 = vpop.f32.mrb[0].mxu0
        %v2528 = vadd.f32 %v2453, %v2527
        %v2529 = vpop.f32.mrb[0].mxu0
        %2530 = vdwg.mxu0
        %2531 = vmatprep.subr.mxu0 0.0
        %v2532 = vand.u32 %v2210, 4294901760
        %v2533 = vsub.f32 %v2210, %v2532
        %v2534 = vand.u32 %v2533, 4294901760
        %2535 = vmatpush1.msra.mxu0 %v2534
        %2536 = vmatprep.subr.mxu0 0.0
        %v2537 = vand.u32 %v2211, 4294901760
        %v2538 = vsub.f32 %v2211, %v2537
        %v2539 = vand.u32 %v2538, 4294901760
        %2540 = vmatpush1.msra.mxu0 %v2539
        %2541 = vmatprep.subr.mxu0 0.0
        %2542 = vmatpush1.msra.mxu0 0.0
        %2543 = vmatprep.subr.mxu0 0.0
        %2544 = vmatpush1.msra.mxu0 0.0
        %2545 = vmatprep.subr.mxu0 0.0
        %2546 = vmatpush1.msra.mxu0 0.0
        %2547 = vmatprep.subr.mxu0 0.0
        %2548 = vmatpush1.msra.mxu0 0.0
        %2549 = vmatprep.subr.mxu0 0.0
        %2550 = vmatpush1.msra.mxu0 0.0
        %2551 = vmatprep.subr.mxu0 0.0
        %2552 = vmatpush1.msra.mxu0 0.0
        %2553 = vmatprep.subr.mxu0 0.0
        %2554 = vmatpush1.msra.mxu0 0.0
        %2555 = vmatprep.subr.mxu0 0.0
        %2556 = vmatpush1.msra.mxu0 0.0
        %2557 = vmatprep.subr.mxu0 0.0
        %2558 = vmatpush1.msra.mxu0 0.0
        %2559 = vmatprep.subr.mxu0 0.0
        %2560 = vmatpush1.msra.mxu0 0.0
        %2561 = vmatprep.subr.mxu0 0.0
        %2562 = vmatpush1.msra.mxu0 0.0
        %2563 = vmatprep.subr.mxu0 0.0
        %2564 = vmatpush1.msra.mxu0 0.0
        %2565 = vmatprep.subr.mxu0 0.0
        %2566 = vmatpush1.msra.mxu0 0.0
        %2567 = vmatprep.subr.mxu0 0.0
        %2568 = vmatpush1.msra.mxu0 0.0
        %2569 = vmatprep.subr.mxu0 0.0
        %2570 = vmatpush1.msra.mxu0 0.0
        %2571 = vmatprep.subr.mxu0 0.0
        %2572 = vmatpush1.msra.mxu0 0.0
        %2573 = vmatprep.subr.mxu0 0.0
        %2574 = vmatpush1.msra.mxu0 0.0
        %2575 = vmatprep.subr.mxu0 0.0
        %2576 = vmatpush1.msra.mxu0 0.0
        %2577 = vmatprep.subr.mxu0 0.0
        %2578 = vmatpush1.msra.mxu0 0.0
        %2579 = vmatprep.subr.mxu0 0.0
        %2580 = vmatpush1.msra.mxu0 0.0
        %2581 = vmatprep.subr.mxu0 0.0
        %2582 = vmatpush1.msra.mxu0 0.0
        %2583 = vmatprep.subr.mxu0 0.0
        %2584 = vmatpush1.msra.mxu0 0.0
        %2585 = vmatprep.subr.mxu0 0.0
        %2586 = vmatpush1.msra.mxu0 0.0
        %2587 = vmatprep.subr.mxu0 0.0
        %2588 = vmatpush1.msra.mxu0 0.0
        %2589 = vmatprep.subr.mxu0 0.0
        %2590 = vmatpush1.msra.mxu0 0.0
        %2591 = vmatprep.subr.mxu0 0.0
        %2592 = vmatpush1.msra.mxu0 0.0
        %2593 = vmatprep.subr.mxu0 0.0
        %2594 = vmatpush1.msra.mxu0 0.0
        %2595 = vmatprep.subr.mxu0 0.0
        %2596 = vmatpush1.msra.mxu0 0.0
        %2597 = vmatprep.subr.mxu0 0.0
        %2598 = vmatpush1.msra.mxu0 0.0
        %2599 = vmatprep.subr.mxu0 0.0
        %2600 = vmatpush1.msra.mxu0 0.0
        %2601 = vmatprep.mubr.f32.mxu0 0.0
        %v2602 = vand.u32 %v2220, 4294901760
        %2603 = vmatmul.mubr.f32.gmra.mrb[0].mxu0 %v2602
        %v2604 = vpop.f32.mrb[0].mxu0
        %v2605 = vadd.f32 %v2528, %v2604
        %v2606 = vpop.f32.mrb[0].mxu0
        %2607 = vdwg.mxu0
        %2608 = vmatprep.subr.mxu0 0.0
        %v2609 = vand.u32 %v2210, 4294901760
        %2610 = vmatpush1.msra.mxu0 %v2609
        %2611 = vmatprep.subr.mxu0 0.0
        %v2612 = vand.u32 %v2211, 4294901760
        %2613 = vmatpush1.msra.mxu0 %v2612
        %2614 = vmatprep.subr.mxu0 0.0
        %2615 = vmatpush1.msra.mxu0 0.0
        %2616 = vmatprep.subr.mxu0 0.0
        %2617 = vmatpush1.msra.mxu0 0.0
        %2618 = vmatprep.subr.mxu0 0.0
        %2619 = vmatpush1.msra.mxu0 0.0
        %2620 = vmatprep.subr.mxu0 0.0
        %2621 = vmatpush1.msra.mxu0 0.0
        %2622 = vmatprep.subr.mxu0 0.0
        %2623 = vmatpush1.msra.mxu0 0.0
        %2624 = vmatprep.subr.mxu0 0.0
        %2625 = vmatpush1.msra.mxu0 0.0
        %2626 = vmatprep.subr.mxu0 0.0
        %2627 = vmatpush1.msra.mxu0 0.0
        %2628 = vmatprep.subr.mxu0 0.0
        %2629 = vmatpush1.msra.mxu0 0.0
        %2630 = vmatprep.subr.mxu0 0.0
        %2631 = vmatpush1.msra.mxu0 0.0
        %2632 = vmatprep.subr.mxu0 0.0
        %2633 = vmatpush1.msra.mxu0 0.0
        %2634 = vmatprep.subr.mxu0 0.0
        %2635 = vmatpush1.msra.mxu0 0.0
        %2636 = vmatprep.subr.mxu0 0.0
        %2637 = vmatpush1.msra.mxu0 0.0
        %2638 = vmatprep.subr.mxu0 0.0
        %2639 = vmatpush1.msra.mxu0 0.0
        %2640 = vmatprep.subr.mxu0 0.0
        %2641 = vmatpush1.msra.mxu0 0.0
        %2642 = vmatprep.subr.mxu0 0.0
        %2643 = vmatpush1.msra.mxu0 0.0
        %2644 = vmatprep.subr.mxu0 0.0
        %2645 = vmatpush1.msra.mxu0 0.0
        %2646 = vmatprep.subr.mxu0 0.0
        %2647 = vmatpush1.msra.mxu0 0.0
        %2648 = vmatprep.subr.mxu0 0.0
        %2649 = vmatpush1.msra.mxu0 0.0
        %2650 = vmatprep.subr.mxu0 0.0
        %2651 = vmatpush1.msra.mxu0 0.0
        %2652 = vmatprep.subr.mxu0 0.0
        %2653 = vmatpush1.msra.mxu0 0.0
        %2654 = vmatprep.subr.mxu0 0.0
        %2655 = vmatpush1.msra.mxu0 0.0
        %2656 = vmatprep.subr.mxu0 0.0
        %2657 = vmatpush1.msra.mxu0 0.0
        %2658 = vmatprep.subr.mxu0 0.0
        %2659 = vmatpush1.msra.mxu0 0.0
        %2660 = vmatprep.subr.mxu0 0.0
        %2661 = vmatpush1.msra.mxu0 0.0
        %2662 = vmatprep.subr.mxu0 0.0
        %2663 = vmatpush1.msra.mxu0 0.0
        %2664 = vmatprep.subr.mxu0 0.0
        %2665 = vmatpush1.msra.mxu0 0.0
        %2666 = vmatprep.subr.mxu0 0.0
        %2667 = vmatpush1.msra.mxu0 0.0
        %2668 = vmatprep.subr.mxu0 0.0
        %2669 = vmatpush1.msra.mxu0 0.0
        %2670 = vmatprep.subr.mxu0 0.0
        %2671 = vmatpush1.msra.mxu0 0.0
        %2672 = vmatprep.subr.mxu0 0.0
        %2673 = vmatpush1.msra.mxu0 0.0
        %2674 = vmatprep.mubr.f32.mxu0 0.0
        %v2675 = vand.u32 %v2220, 4294901760
        %2676 = vmatmul.mubr.f32.gmra.mrb[0].mxu0 %v2675
        %v2677 = vpop.f32.mrb[0].mxu0
        %v2678 = vadd.f32 %v2605, %v2677
        %v2679 = vpop.f32.mrb[0].mxu0
        %2680 = vdwg.mxu0
        %v2681 = vmax.f32 %v2678, 0.0
        %v2682 = vld [vmem:[#allocation8] sm:$0xff]
        %v2683 = vld [vmem:[#allocation8 + $0x8] sm:$0xff]
        %v2685 = vsel %vm736, %v2682, 0
        %v2688 = vsel %vm736, %v2683, 0
        %2690 = vmatprep.subr.mxu0 0.0
        %v2691 = vand.u32 %v2681, 4294901760
        %2692 = vmatpush1.msra.mxu0 %v2691
        %2693 = vmatprep.subr.mxu0 0.0
        %2694 = vmatpush1.msra.mxu0 0.0
        %2695 = vmatprep.subr.mxu0 0.0
        %2696 = vmatpush1.msra.mxu0 0.0
        %2697 = vmatprep.subr.mxu0 0.0
        %2698 = vmatpush1.msra.mxu0 0.0
        %2699 = vmatprep.subr.mxu0 0.0
        %2700 = vmatpush1.msra.mxu0 0.0
        %2701 = vmatprep.subr.mxu0 0.0
        %2702 = vmatpush1.msra.mxu0 0.0
        %2703 = vmatprep.subr.mxu0 0.0
        %2704 = vmatpush1.msra.mxu0 0.0
        %2705 = vmatprep.subr.mxu0 0.0
        %2706 = vmatpush1.msra.mxu0 0.0
        %2707 = vmatprep.subr.mxu0 0.0
        %2708 = vmatpush1.msra.mxu0 0.0
        %2709 = vmatprep.subr.mxu0 0.0
        %2710 = vmatpush1.msra.mxu0 0.0
        %2711 = vmatprep.subr.mxu0 0.0
        %2712 = vmatpush1.msra.mxu0 0.0
        %2713 = vmatprep.subr.mxu0 0.0
        %2714 = vmatpush1.msra.mxu0 0.0
        %2715 = vmatprep.subr.mxu0 0.0
        %2716 = vmatpush1.msra.mxu0 0.0
        %2717 = vmatprep.subr.mxu0 0.0
        %2718 = vmatpush1.msra.mxu0 0.0
        %2719 = vmatprep.subr.mxu0 0.0
        %2720 = vmatpush1.msra.mxu0 0.0
        %2721 = vmatprep.subr.mxu0 0.0
        %2722 = vmatpush1.msra.mxu0 0.0
        %2723 = vmatprep.subr.mxu0 0.0
        %2724 = vmatpush1.msra.mxu0 0.0
        %2725 = vmatprep.subr.mxu0 0.0
        %2726 = vmatpush1.msra.mxu0 0.0
        %2727 = vmatprep.subr.mxu0 0.0
        %2728 = vmatpush1.msra.mxu0 0.0
        %2729 = vmatprep.subr.mxu0 0.0
        %2730 = vmatpush1.msra.mxu0 0.0
        %2731 = vmatprep.subr.mxu0 0.0
        %2732 = vmatpush1.msra.mxu0 0.0
        %2733 = vmatprep.subr.mxu0 0.0
        %2734 = vmatpush1.msra.mxu0 0.0
        %2735 = vmatprep.subr.mxu0 0.0
        %2736 = vmatpush1.msra.mxu0 0.0
        %2737 = vmatprep.subr.mxu0 0.0
        %2738 = vmatpush1.msra.mxu0 0.0
        %2739 = vmatprep.subr.mxu0 0.0
        %2740 = vmatpush1.msra.mxu0 0.0
        %2741 = vmatprep.subr.mxu0 0.0
        %2742 = vmatpush1.msra.mxu0 0.0
        %2743 = vmatprep.subr.mxu0 0.0
        %2744 = vmatpush1.msra.mxu0 0.0
        %2745 = vmatprep.subr.mxu0 0.0
        %2746 = vmatpush1.msra.mxu0 0.0
        %2747 = vmatprep.subr.mxu0 0.0
        %2748 = vmatpush1.msra.mxu0 0.0
        %2749 = vmatprep.subr.mxu0 0.0
        %2750 = vmatpush1.msra.mxu0 0.0
        %2751 = vmatprep.subr.mxu0 0.0
        %2752 = vmatpush1.msra.mxu0 0.0
        %2753 = vmatprep.subr.mxu0 0.0
        %2754 = vmatpush1.msra.mxu0 0.0
        %2755 = vmatprep.mubr.f32.mxu0 0.0
        %v2756 = vand.u32 %v2685, 4294901760
        %v2757 = vsub.f32 %v2685, %v2756
        %v2758 = vand.u32 %v2757, 4294901760
        %v2759 = vsub.f32 %v2757, %v2758
        %v2760 = vand.u32 %v2759, 4294901760
        %2761 = vmatmul.mubr.f32.gmra.mrb[0].mxu0 %v2760
        %v2762 = vpop.f32.mrb[0].mxu0
        %v2763 = vadd.f32 0.0, %v2762
        %v2764 = vpop.f32.mrb[0].mxu0
        %2765 = vmatprep.mubr.f32.mxu0 0.0
        %v2766 = vand.u32 %v2688, 4294901760
        %v2767 = vsub.f32 %v2688, %v2766
        %v2768 = vand.u32 %v2767, 4294901760
        %v2769 = vsub.f32 %v2767, %v2768
        %v2770 = vand.u32 %v2769, 4294901760
        %2771 = vmatmul.mubr.f32.gmra.mrb[0].mxu0 %v2770
        %v2772 = vpop.f32.mrb[0].mxu0
        %v2773 = vadd.f32 0.0, %v2772
        %v2774 = vpop.f32.mrb[0].mxu0
        %2775 = vdwg.mxu0
        %2776 = vmatprep.subr.mxu0 0.0
        %v2777 = vand.u32 %v2681, 4294901760
        %v2778 = vsub.f32 %v2681, %v2777
        %v2779 = vand.u32 %v2778, 4294901760
        %v2780 = vsub.f32 %v2778, %v2779
        %v2781 = vand.u32 %v2780, 4294901760
        %2782 = vmatpush1.msra.mxu0 %v2781
        %2783 = vmatprep.subr.mxu0 0.0
        %2784 = vmatpush1.msra.mxu0 0.0
        %2785 = vmatprep.subr.mxu0 0.0
        %2786 = vmatpush1.msra.mxu0 0.0
        %2787 = vmatprep.subr.mxu0 0.0
        %2788 = vmatpush1.msra.mxu0 0.0
        %2789 = vmatprep.subr.mxu0 0.0
        %2790 = vmatpush1.msra.mxu0 0.0
        %2791 = vmatprep.subr.mxu0 0.0
        %2792 = vmatpush1.msra.mxu0 0.0
        %2793 = vmatprep.subr.mxu0 0.0
        %2794 = vmatpush1.msra.mxu0 0.0
        %2795 = vmatprep.subr.mxu0 0.0
        %2796 = vmatpush1.msra.mxu0 0.0
        %2797 = vmatprep.subr.mxu0 0.0
        %2798 = vmatpush1.msra.mxu0 0.0
        %2799 = vmatprep.subr.mxu0 0.0
        %2800 = vmatpush1.msra.mxu0 0.0
        %2801 = vmatprep.subr.mxu0 0.0
        %2802 = vmatpush1.msra.mxu0 0.0
        %2803 = vmatprep.subr.mxu0 0.0
        %2804 = vmatpush1.msra.mxu0 0.0
        %2805 = vmatprep.subr.mxu0 0.0
        %2806 = vmatpush1.msra.mxu0 0.0
        %2807 = vmatprep.subr.mxu0 0.0
        %2808 = vmatpush1.msra.mxu0 0.0
        %2809 = vmatprep.subr.mxu0 0.0
        %2810 = vmatpush1.msra.mxu0 0.0
        %2811 = vmatprep.subr.mxu0 0.0
        %2812 = vmatpush1.msra.mxu0 0.0
        %2813 = vmatprep.subr.mxu0 0.0
        %2814 = vmatpush1.msra.mxu0 0.0
        %2815 = vmatprep.subr.mxu0 0.0
        %2816 = vmatpush1.msra.mxu0 0.0
        %2817 = vmatprep.subr.mxu0 0.0
        %2818 = vmatpush1.msra.mxu0 0.0
        %2819 = vmatprep.subr.mxu0 0.0
        %2820 = vmatpush1.msra.mxu0 0.0
        %2821 = vmatprep.subr.mxu0 0.0
        %2822 = vmatpush1.msra.mxu0 0.0
        %2823 = vmatprep.subr.mxu0 0.0
        %2824 = vmatpush1.msra.mxu0 0.0
        %2825 = vmatprep.subr.mxu0 0.0
        %2826 = vmatpush1.msra.mxu0 0.0
        %2827 = vmatprep.subr.mxu0 0.0
        %2828 = vmatpush1.msra.mxu0 0.0
        %2829 = vmatprep.subr.mxu0 0.0
        %2830 = vmatpush1.msra.mxu0 0.0
        %2831 = vmatprep.subr.mxu0 0.0
        %2832 = vmatpush1.msra.mxu0 0.0
        %2833 = vmatprep.subr.mxu0 0.0
        %2834 = vmatpush1.msra.mxu0 0.0
        %2835 = vmatprep.subr.mxu0 0.0
        %2836 = vmatpush1.msra.mxu0 0.0
        %2837 = vmatprep.subr.mxu0 0.0
        %2838 = vmatpush1.msra.mxu0 0.0
        %2839 = vmatprep.subr.mxu0 0.0
        %2840 = vmatpush1.msra.mxu0 0.0
        %2841 = vmatprep.subr.mxu0 0.0
        %2842 = vmatpush1.msra.mxu0 0.0
        %2843 = vmatprep.subr.mxu0 0.0
        %2844 = vmatpush1.msra.mxu0 0.0
        %2845 = vmatprep.mubr.f32.mxu0 0.0
        %v2846 = vand.u32 %v2685, 4294901760
        %2847 = vmatmul.mubr.f32.gmra.mrb[0].mxu0 %v2846
        %v2848 = vpop.f32.mrb[0].mxu0
        %v2849 = vadd.f32 %v2763, %v2848
        %v2850 = vpop.f32.mrb[0].mxu0
        %2851 = vmatprep.mubr.f32.mxu0 0.0
        %v2852 = vand.u32 %v2688, 4294901760
        %2853 = vmatmul.mubr.f32.gmra.mrb[0].mxu0 %v2852
        %v2854 = vpop.f32.mrb[0].mxu0
        %v2855 = vadd.f32 %v2773, %v2854
        %v2856 = vpop.f32.mrb[0].mxu0
        %2857 = vdwg.mxu0
        %2858 = vmatprep.subr.mxu0 0.0
        %v2859 = vand.u32 %v2681, 4294901760
        %v2860 = vsub.f32 %v2681, %v2859
        %2861 = vmatpush1.msra.mxu0 %v2860
        %2862 = vmatprep.subr.mxu0 0.0
        %2863 = vmatpush1.msra.mxu0 0.0
        %2864 = vmatprep.subr.mxu0 0.0
        %2865 = vmatpush1.msra.mxu0 0.0
        %2866 = vmatprep.subr.mxu0 0.0
        %2867 = vmatpush1.msra.mxu0 0.0
        %2868 = vmatprep.subr.mxu0 0.0
        %2869 = vmatpush1.msra.mxu0 0.0
        %2870 = vmatprep.subr.mxu0 0.0
        %2871 = vmatpush1.msra.mxu0 0.0
        %2872 = vmatprep.subr.mxu0 0.0
        %2873 = vmatpush1.msra.mxu0 0.0
        %2874 = vmatprep.subr.mxu0 0.0
        %2875 = vmatpush1.msra.mxu0 0.0
        %2876 = vmatprep.subr.mxu0 0.0
        %2877 = vmatpush1.msra.mxu0 0.0
        %2878 = vmatprep.subr.mxu0 0.0
        %2879 = vmatpush1.msra.mxu0 0.0
        %2880 = vmatprep.subr.mxu0 0.0
        %2881 = vmatpush1.msra.mxu0 0.0
        %2882 = vmatprep.subr.mxu0 0.0
        %2883 = vmatpush1.msra.mxu0 0.0
        %2884 = vmatprep.subr.mxu0 0.0
        %2885 = vmatpush1.msra.mxu0 0.0
        %2886 = vmatprep.subr.mxu0 0.0
        %2887 = vmatpush1.msra.mxu0 0.0
        %2888 = vmatprep.subr.mxu0 0.0
        %2889 = vmatpush1.msra.mxu0 0.0
        %2890 = vmatprep.subr.mxu0 0.0
        %2891 = vmatpush1.msra.mxu0 0.0
        %2892 = vmatprep.subr.mxu0 0.0
        %2893 = vmatpush1.msra.mxu0 0.0
        %2894 = vmatprep.subr.mxu0 0.0
        %2895 = vmatpush1.msra.mxu0 0.0
        %2896 = vmatprep.subr.mxu0 0.0
        %2897 = vmatpush1.msra.mxu0 0.0
        %2898 = vmatprep.subr.mxu0 0.0
        %2899 = vmatpush1.msra.mxu0 0.0
        %2900 = vmatprep.subr.mxu0 0.0
        %2901 = vmatpush1.msra.mxu0 0.0
        %2902 = vmatprep.subr.mxu0 0.0
        %2903 = vmatpush1.msra.mxu0 0.0
        %2904 = vmatprep.subr.mxu0 0.0
        %2905 = vmatpush1.msra.mxu0 0.0
        %2906 = vmatprep.subr.mxu0 0.0
        %2907 = vmatpush1.msra.mxu0 0.0
        %2908 = vmatprep.subr.mxu0 0.0
        %2909 = vmatpush1.msra.mxu0 0.0
        %2910 = vmatprep.subr.mxu0 0.0
        %2911 = vmatpush1.msra.mxu0 0.0
        %2912 = vmatprep.subr.mxu0 0.0
        %2913 = vmatpush1.msra.mxu0 0.0
        %2914 = vmatprep.subr.mxu0 0.0
        %2915 = vmatpush1.msra.mxu0 0.0
        %2916 = vmatprep.subr.mxu0 0.0
        %2917 = vmatpush1.msra.mxu0 0.0
        %2918 = vmatprep.subr.mxu0 0.0
        %2919 = vmatpush1.msra.mxu0 0.0
        %2920 = vmatprep.subr.mxu0 0.0
        %2921 = vmatpush1.msra.mxu0 0.0
        %2922 = vmatprep.subr.mxu0 0.0
        %2923 = vmatpush1.msra.mxu0 0.0
        %2924 = vmatprep.mubr.f32.mxu0 0.0
        %v2925 = vand.u32 %v2685, 4294901760
        %v2926 = vsub.f32 %v2685, %v2925
        %2927 = vmatmul.mubr.f32.gmra.mrb[0].mxu0 %v2926
        %v2928 = vpop.f32.mrb[0].mxu0
        %v2929 = vadd.f32 %v2849, %v2928
        %v2930 = vpop.f32.mrb[0].mxu0
        %2931 = vmatprep.mubr.f32.mxu0 0.0
        %v2932 = vand.u32 %v2688, 4294901760
        %v2933 = vsub.f32 %v2688, %v2932
        %2934 = vmatmul.mubr.f32.gmra.mrb[0].mxu0 %v2933
        %v2935 = vpop.f32.mrb[0].mxu0
        %v2936 = vadd.f32 %v2855, %v2935
        %v2937 = vpop.f32.mrb[0].mxu0
        %2938 = vdwg.mxu0
        %2939 = vmatprep.subr.mxu0 0.0
        %v2940 = vand.u32 %v2681, 4294901760
        %2941 = vmatpush1.msra.mxu0 %v2940
        %2942 = vmatprep.subr.mxu0 0.0
        %2943 = vmatpush1.msra.mxu0 0.0
        %2944 = vmatprep.subr.mxu0 0.0
        %2945 = vmatpush1.msra.mxu0 0.0
        %2946 = vmatprep.subr.mxu0 0.0
        %2947 = vmatpush1.msra.mxu0 0.0
        %2948 = vmatprep.subr.mxu0 0.0
        %2949 = vmatpush1.msra.mxu0 0.0
        %2950 = vmatprep.subr.mxu0 0.0
        %2951 = vmatpush1.msra.mxu0 0.0
        %2952 = vmatprep.subr.mxu0 0.0
        %2953 = vmatpush1.msra.mxu0 0.0
        %2954 = vmatprep.subr.mxu0 0.0
        %2955 = vmatpush1.msra.mxu0 0.0
        %2956 = vmatprep.subr.mxu0 0.0
        %2957 = vmatpush1.msra.mxu0 0.0
        %2958 = vmatprep.subr.mxu0 0.0
        %2959 = vmatpush1.msra.mxu0 0.0
        %2960 = vmatprep.subr.mxu0 0.0
        %2961 = vmatpush1.msra.mxu0 0.0
        %2962 = vmatprep.subr.mxu0 0.0
        %2963 = vmatpush1.msra.mxu0 0.0
        %2964 = vmatprep.subr.mxu0 0.0
        %2965 = vmatpush1.msra.mxu0 0.0
        %2966 = vmatprep.subr.mxu0 0.0
        %2967 = vmatpush1.msra.mxu0 0.0
        %2968 = vmatprep.subr.mxu0 0.0
        %2969 = vmatpush1.msra.mxu0 0.0
        %2970 = vmatprep.subr.mxu0 0.0
        %2971 = vmatpush1.msra.mxu0 0.0
        %2972 = vmatprep.subr.mxu0 0.0
        %2973 = vmatpush1.msra.mxu0 0.0
        %2974 = vmatprep.subr.mxu0 0.0
        %2975 = vmatpush1.msra.mxu0 0.0
        %2976 = vmatprep.subr.mxu0 0.0
        %2977 = vmatpush1.msra.mxu0 0.0
        %2978 = vmatprep.subr.mxu0 0.0
        %2979 = vmatpush1.msra.mxu0 0.0
        %2980 = vmatprep.subr.mxu0 0.0
        %2981 = vmatpush1.msra.mxu0 0.0
        %2982 = vmatprep.subr.mxu0 0.0
        %2983 = vmatpush1.msra.mxu0 0.0
        %2984 = vmatprep.subr.mxu0 0.0
        %2985 = vmatpush1.msra.mxu0 0.0
        %2986 = vmatprep.subr.mxu0 0.0
        %2987 = vmatpush1.msra.mxu0 0.0
        %2988 = vmatprep.subr.mxu0 0.0
        %2989 = vmatpush1.msra.mxu0 0.0
        %2990 = vmatprep.subr.mxu0 0.0
        %2991 = vmatpush1.msra.mxu0 0.0
        %2992 = vmatprep.subr.mxu0 0.0
        %2993 = vmatpush1.msra.mxu0 0.0
        %2994 = vmatprep.subr.mxu0 0.0
        %2995 = vmatpush1.msra.mxu0 0.0
        %2996 = vmatprep.subr.mxu0 0.0
        %2997 = vmatpush1.msra.mxu0 0.0
        %2998 = vmatprep.subr.mxu0 0.0
        %2999 = vmatpush1.msra.mxu0 0.0
        %3000 = vmatprep.subr.mxu0 0.0
        %3001 = vmatpush1.msra.mxu0 0.0
        %3002 = vmatprep.subr.mxu0 0.0
        %3003 = vmatpush1.msra.mxu0 0.0
        %3004 = vmatprep.mubr.f32.mxu0 0.0
        %v3005 = vand.u32 %v2685, 4294901760
        %v3006 = vsub.f32 %v2685, %v3005
        %v3007 = vand.u32 %v3006, 4294901760
        %3008 = vmatmul.mubr.f32.gmra.mrb[0].mxu0 %v3007
        %v3009 = vpop.f32.mrb[0].mxu0
        %v3010 = vadd.f32 %v2929, %v3009
        %v3011 = vpop.f32.mrb[0].mxu0
        %3012 = vmatprep.mubr.f32.mxu0 0.0
        %v3013 = vand.u32 %v2688, 4294901760
        %v3014 = vsub.f32 %v2688, %v3013
        %v3015 = vand.u32 %v3014, 4294901760
        %3016 = vmatmul.mubr.f32.gmra.mrb[0].mxu0 %v3015
        %v3017 = vpop.f32.mrb[0].mxu0
        %v3018 = vadd.f32 %v2936, %v3017
        %v3019 = vpop.f32.mrb[0].mxu0
        %3020 = vdwg.mxu0
        %3021 = vmatprep.subr.mxu0 0.0
        %v3022 = vand.u32 %v2681, 4294901760
        %v3023 = vsub.f32 %v2681, %v3022
        %v3024 = vand.u32 %v3023, 4294901760
        %3025 = vmatpush1.msra.mxu0 %v3024
        %3026 = vmatprep.subr.mxu0 0.0
        %3027 = vmatpush1.msra.mxu0 0.0
        %3028 = vmatprep.subr.mxu0 0.0
        %3029 = vmatpush1.msra.mxu0 0.0
        %3030 = vmatprep.subr.mxu0 0.0
        %3031 = vmatpush1.msra.mxu0 0.0
        %3032 = vmatprep.subr.mxu0 0.0
        %3033 = vmatpush1.msra.mxu0 0.0
        %3034 = vmatprep.subr.mxu0 0.0
        %3035 = vmatpush1.msra.mxu0 0.0
        %3036 = vmatprep.subr.mxu0 0.0
        %3037 = vmatpush1.msra.mxu0 0.0
        %3038 = vmatprep.subr.mxu0 0.0
        %3039 = vmatpush1.msra.mxu0 0.0
        %3040 = vmatprep.subr.mxu0 0.0
        %3041 = vmatpush1.msra.mxu0 0.0
        %3042 = vmatprep.subr.mxu0 0.0
        %3043 = vmatpush1.msra.mxu0 0.0
        %3044 = vmatprep.subr.mxu0 0.0
        %3045 = vmatpush1.msra.mxu0 0.0
        %3046 = vmatprep.subr.mxu0 0.0
        %3047 = vmatpush1.msra.mxu0 0.0
        %3048 = vmatprep.subr.mxu0 0.0
        %3049 = vmatpush1.msra.mxu0 0.0
        %3050 = vmatprep.subr.mxu0 0.0
        %3051 = vmatpush1.msra.mxu0 0.0
        %3052 = vmatprep.subr.mxu0 0.0
        %3053 = vmatpush1.msra.mxu0 0.0
        %3054 = vmatprep.subr.mxu0 0.0
        %3055 = vmatpush1.msra.mxu0 0.0
        %3056 = vmatprep.subr.mxu0 0.0
        %3057 = vmatpush1.msra.mxu0 0.0
        %3058 = vmatprep.subr.mxu0 0.0
        %3059 = vmatpush1.msra.mxu0 0.0
        %3060 = vmatprep.subr.mxu0 0.0
        %3061 = vmatpush1.msra.mxu0 0.0
        %3062 = vmatprep.subr.mxu0 0.0
        %3063 = vmatpush1.msra.mxu0 0.0
        %3064 = vmatprep.subr.mxu0 0.0
        %3065 = vmatpush1.msra.mxu0 0.0
        %3066 = vmatprep.subr.mxu0 0.0
        %3067 = vmatpush1.msra.mxu0 0.0
        %3068 = vmatprep.subr.mxu0 0.0
        %3069 = vmatpush1.msra.mxu0 0.0
        %3070 = vmatprep.subr.mxu0 0.0
        %3071 = vmatpush1.msra.mxu0 0.0
        %3072 = vmatprep.subr.mxu0 0.0
        %3073 = vmatpush1.msra.mxu0 0.0
        %3074 = vmatprep.subr.mxu0 0.0
        %3075 = vmatpush1.msra.mxu0 0.0
        %3076 = vmatprep.subr.mxu0 0.0
        %3077 = vmatpush1.msra.mxu0 0.0
        %3078 = vmatprep.subr.mxu0 0.0
        %3079 = vmatpush1.msra.mxu0 0.0
        %3080 = vmatprep.subr.mxu0 0.0
        %3081 = vmatpush1.msra.mxu0 0.0
        %3082 = vmatprep.subr.mxu0 0.0
        %3083 = vmatpush1.msra.mxu0 0.0
        %3084 = vmatprep.subr.mxu0 0.0
        %3085 = vmatpush1.msra.mxu0 0.0
        %3086 = vmatprep.subr.mxu0 0.0
        %3087 = vmatpush1.msra.mxu0 0.0
        %3088 = vmatprep.mubr.f32.mxu0 0.0
        %v3089 = vand.u32 %v2685, 4294901760
        %3090 = vmatmul.mubr.f32.gmra.mrb[0].mxu0 %v3089
        %v3091 = vpop.f32.mrb[0].mxu0
        %v3092 = vadd.f32 %v3010, %v3091
        %v3093 = vpop.f32.mrb[0].mxu0
        %3094 = vmatprep.mubr.f32.mxu0 0.0
        %v3095 = vand.u32 %v2688, 4294901760
        %3096 = vmatmul.mubr.f32.gmra.mrb[0].mxu0 %v3095
        %v3097 = vpop.f32.mrb[0].mxu0
        %v3098 = vadd.f32 %v3018, %v3097
        %v3099 = vpop.f32.mrb[0].mxu0
        %3100 = vdwg.mxu0
        %3101 = vmatprep.subr.mxu0 0.0
        %v3102 = vand.u32 %v2681, 4294901760
        %3103 = vmatpush1.msra.mxu0 %v3102
        %3104 = vmatprep.subr.mxu0 0.0
        %3105 = vmatpush1.msra.mxu0 0.0
        %3106 = vmatprep.subr.mxu0 0.0
        %3107 = vmatpush1.msra.mxu0 0.0
        %3108 = vmatprep.subr.mxu0 0.0
        %3109 = vmatpush1.msra.mxu0 0.0
        %3110 = vmatprep.subr.mxu0 0.0
        %3111 = vmatpush1.msra.mxu0 0.0
        %3112 = vmatprep.subr.mxu0 0.0
        %3113 = vmatpush1.msra.mxu0 0.0
        %3114 = vmatprep.subr.mxu0 0.0
        %3115 = vmatpush1.msra.mxu0 0.0
        %3116 = vmatprep.subr.mxu0 0.0
        %3117 = vmatpush1.msra.mxu0 0.0
        %3118 = vmatprep.subr.mxu0 0.0
        %3119 = vmatpush1.msra.mxu0 0.0
        %3120 = vmatprep.subr.mxu0 0.0
        %3121 = vmatpush1.msra.mxu0 0.0
        %3122 = vmatprep.subr.mxu0 0.0
        %3123 = vmatpush1.msra.mxu0 0.0
        %3124 = vmatprep.subr.mxu0 0.0
        %3125 = vmatpush1.msra.mxu0 0.0
        %3126 = vmatprep.subr.mxu0 0.0
        %3127 = vmatpush1.msra.mxu0 0.0
        %3128 = vmatprep.subr.mxu0 0.0
        %3129 = vmatpush1.msra.mxu0 0.0
        %3130 = vmatprep.subr.mxu0 0.0
        %3131 = vmatpush1.msra.mxu0 0.0
        %3132 = vmatprep.subr.mxu0 0.0
        %3133 = vmatpush1.msra.mxu0 0.0
        %3134 = vmatprep.subr.mxu0 0.0
        %3135 = vmatpush1.msra.mxu0 0.0
        %3136 = vmatprep.subr.mxu0 0.0
        %3137 = vmatpush1.msra.mxu0 0.0
        %3138 = vmatprep.subr.mxu0 0.0
        %3139 = vmatpush1.msra.mxu0 0.0
        %3140 = vmatprep.subr.mxu0 0.0
        %3141 = vmatpush1.msra.mxu0 0.0
        %3142 = vmatprep.subr.mxu0 0.0
        %3143 = vmatpush1.msra.mxu0 0.0
        %3144 = vmatprep.subr.mxu0 0.0
        %3145 = vmatpush1.msra.mxu0 0.0
        %3146 = vmatprep.subr.mxu0 0.0
        %3147 = vmatpush1.msra.mxu0 0.0
        %3148 = vmatprep.subr.mxu0 0.0
        %3149 = vmatpush1.msra.mxu0 0.0
        %3150 = vmatprep.subr.mxu0 0.0
        %3151 = vmatpush1.msra.mxu0 0.0
        %3152 = vmatprep.subr.mxu0 0.0
        %3153 = vmatpush1.msra.mxu0 0.0
        %3154 = vmatprep.subr.mxu0 0.0
        %3155 = vmatpush1.msra.mxu0 0.0
        %3156 = vmatprep.subr.mxu0 0.0
        %3157 = vmatpush1.msra.mxu0 0.0
        %3158 = vmatprep.subr.mxu0 0.0
        %3159 = vmatpush1.msra.mxu0 0.0
        %3160 = vmatprep.subr.mxu0 0.0
        %3161 = vmatpush1.msra.mxu0 0.0
        %3162 = vmatprep.subr.mxu0 0.0
        %3163 = vmatpush1.msra.mxu0 0.0
        %3164 = vmatprep.subr.mxu0 0.0
        %3165 = vmatpush1.msra.mxu0 0.0
        %3166 = vmatprep.mubr.f32.mxu0 0.0
        %v3167 = vand.u32 %v2685, 4294901760
        %3168 = vmatmul.mubr.f32.gmra.mrb[0].mxu0 %v3167
        %v3169 = vpop.f32.mrb[0].mxu0
        %v3170 = vadd.f32 %v3092, %v3169
        %v3171 = vpop.f32.mrb[0].mxu0
        %3172 = vmatprep.mubr.f32.mxu0 0.0
        %v3173 = vand.u32 %v2688, 4294901760
        %3174 = vmatmul.mubr.f32.gmra.mrb[0].mxu0 %v3173
        %v3175 = vpop.f32.mrb[0].mxu0
        %v3176 = vadd.f32 %v3098, %v3175
        %v3177 = vpop.f32.mrb[0].mxu0
        %3178 = vdwg.mxu0
        %s3179 = scalar_lea.vmem %s257, 32 [#allocation10]
        %3180 = vst [vmem:[%s3179] sm:$0xff] %v3170
        %3181 = vst [vmem:[%s3179 + $0x8] sm:$0xff] %v3176
        %s3182 = scalar_lea.vmem %s221, 24 [#allocation2]
        %v3183 = vld [vmem:[%s3182] sm:$0xff]
        %v3184 = vld [vmem:[#allocation5] sm:$0xff]
        %v3185 = vld [vmem:[#allocation5 + $0x8] sm:$0xff]
        %v3186 = vld [vmem:[#allocation7] sm:$0x1]
        %v3188 = vlaneseq
        %v3189 = vshrl.u32 %v3188, 7
        %v3190 = vsub.s32 0, %v3189
        %v3191 = vrot.slane %v3186, %v3190
        %v3194 = vsel %vm270, %v3183, 0
        %3196 = vmatprep.subr.mxu0 0.0
        %v3197 = vand.u32 %v3184, 4294901760
        %3198 = vmatpush1.msra.mxu0 %v3197
        %3199 = vmatprep.subr.mxu0 0.0
        %v3200 = vand.u32 %v3185, 4294901760
        %3201 = vmatpush1.msra.mxu0 %v3200
        %3202 = vmatprep.subr.mxu0 0.0
        %3203 = vmatpush1.msra.mxu0 0.0
        %3204 = vmatprep.subr.mxu0 0.0
        %3205 = vmatpush1.msra.mxu0 0.0
        %3206 = vmatprep.subr.mxu0 0.0
        %3207 = vmatpush1.msra.mxu0 0.0
        %3208 = vmatprep.subr.mxu0 0.0
        %3209 = vmatpush1.msra.mxu0 0.0
        %3210 = vmatprep.subr.mxu0 0.0
        %3211 = vmatpush1.msra.mxu0 0.0
        %3212 = vmatprep.subr.mxu0 0.0
        %3213 = vmatpush1.msra.mxu0 0.0
        %3214 = vmatprep.subr.mxu0 0.0
        %3215 = vmatpush1.msra.mxu0 0.0
        %3216 = vmatprep.subr.mxu0 0.0
        %3217 = vmatpush1.msra.mxu0 0.0
        %3218 = vmatprep.subr.mxu0 0.0
        %3219 = vmatpush1.msra.mxu0 0.0
        %3220 = vmatprep.subr.mxu0 0.0
        %3221 = vmatpush1.msra.mxu0 0.0
        %3222 = vmatprep.subr.mxu0 0.0
        %3223 = vmatpush1.msra.mxu0 0.0
        %3224 = vmatprep.subr.mxu0 0.0
        %3225 = vmatpush1.msra.mxu0 0.0
        %3226 = vmatprep.subr.mxu0 0.0
        %3227 = vmatpush1.msra.mxu0 0.0
        %3228 = vmatprep.subr.mxu0 0.0
        %3229 = vmatpush1.msra.mxu0 0.0
        %3230 = vmatprep.subr.mxu0 0.0
        %3231 = vmatpush1.msra.mxu0 0.0
        %3232 = vmatprep.subr.mxu0 0.0
        %3233 = vmatpush1.msra.mxu0 0.0
        %3234 = vmatprep.subr.mxu0 0.0
        %3235 = vmatpush1.msra.mxu0 0.0
        %3236 = vmatprep.subr.mxu0 0.0
        %3237 = vmatpush1.msra.mxu0 0.0
        %3238 = vmatprep.subr.mxu0 0.0
        %3239 = vmatpush1.msra.mxu0 0.0
        %3240 = vmatprep.subr.mxu0 0.0
        %3241 = vmatpush1.msra.mxu0 0.0
        %3242 = vmatprep.subr.mxu0 0.0
        %3243 = vmatpush1.msra.mxu0 0.0
        %3244 = vmatprep.subr.mxu0 0.0
        %3245 = vmatpush1.msra.mxu0 0.0
        %3246 = vmatprep.subr.mxu0 0.0
        %3247 = vmatpush1.msra.mxu0 0.0
        %3248 = vmatprep.subr.mxu0 0.0
        %3249 = vmatpush1.msra.mxu0 0.0
        %3250 = vmatprep.subr.mxu0 0.0
        %3251 = vmatpush1.msra.mxu0 0.0
        %3252 = vmatprep.subr.mxu0 0.0
        %3253 = vmatpush1.msra.mxu0 0.0
        %3254 = vmatprep.subr.mxu0 0.0
        %3255 = vmatpush1.msra.mxu0 0.0
        %3256 = vmatprep.subr.mxu0 0.0
        %3257 = vmatpush1.msra.mxu0 0.0
        %3258 = vmatprep.subr.mxu0 0.0
        %3259 = vmatpush1.msra.mxu0 0.0
        %3260 = vmatprep.subr.mxu0 0.0
        %3261 = vmatpush1.msra.mxu0 0.0
        %3262 = vmatprep.mubr.f32.mxu0 0.0
        %v3263 = vand.u32 %v3194, 4294901760
        %v3264 = vsub.f32 %v3194, %v3263
        %v3265 = vand.u32 %v3264, 4294901760
        %v3266 = vsub.f32 %v3264, %v3265
        %v3267 = vand.u32 %v3266, 4294901760
        %3268 = vmatmul.mubr.f32.gmra.mrb[0].mxu0 %v3267
        %v3269 = vpop.f32.mrb[0].mxu0
        %v3270 = vadd.f32 %v3191, %v3269
        %v3271 = vpop.f32.mrb[0].mxu0
        %3272 = vdwg.mxu0
        %3273 = vmatprep.subr.mxu0 0.0
        %v3274 = vand.u32 %v3184, 4294901760
        %v3275 = vsub.f32 %v3184, %v3274
        %v3276 = vand.u32 %v3275, 4294901760
        %v3277 = vsub.f32 %v3275, %v3276
        %v3278 = vand.u32 %v3277, 4294901760
        %3279 = vmatpush1.msra.mxu0 %v3278
        %3280 = vmatprep.subr.mxu0 0.0
        %v3281 = vand.u32 %v3185, 4294901760
        %v3282 = vsub.f32 %v3185, %v3281
        %v3283 = vand.u32 %v3282, 4294901760
        %v3284 = vsub.f32 %v3282, %v3283
        %v3285 = vand.u32 %v3284, 4294901760
        %3286 = vmatpush1.msra.mxu0 %v3285
        %3287 = vmatprep.subr.mxu0 0.0
        %3288 = vmatpush1.msra.mxu0 0.0
        %3289 = vmatprep.subr.mxu0 0.0
        %3290 = vmatpush1.msra.mxu0 0.0
        %3291 = vmatprep.subr.mxu0 0.0
        %3292 = vmatpush1.msra.mxu0 0.0
        %3293 = vmatprep.subr.mxu0 0.0
        %3294 = vmatpush1.msra.mxu0 0.0
        %3295 = vmatprep.subr.mxu0 0.0
        %3296 = vmatpush1.msra.mxu0 0.0
        %3297 = vmatprep.subr.mxu0 0.0
        %3298 = vmatpush1.msra.mxu0 0.0
        %3299 = vmatprep.subr.mxu0 0.0
        %3300 = vmatpush1.msra.mxu0 0.0
        %3301 = vmatprep.subr.mxu0 0.0
        %3302 = vmatpush1.msra.mxu0 0.0
        %3303 = vmatprep.subr.mxu0 0.0
        %3304 = vmatpush1.msra.mxu0 0.0
        %3305 = vmatprep.subr.mxu0 0.0
        %3306 = vmatpush1.msra.mxu0 0.0
        %3307 = vmatprep.subr.mxu0 0.0
        %3308 = vmatpush1.msra.mxu0 0.0
        %3309 = vmatprep.subr.mxu0 0.0
        %3310 = vmatpush1.msra.mxu0 0.0
        %3311 = vmatprep.subr.mxu0 0.0
        %3312 = vmatpush1.msra.mxu0 0.0
        %3313 = vmatprep.subr.mxu0 0.0
        %3314 = vmatpush1.msra.mxu0 0.0
        %3315 = vmatprep.subr.mxu0 0.0
        %3316 = vmatpush1.msra.mxu0 0.0
        %3317 = vmatprep.subr.mxu0 0.0
        %3318 = vmatpush1.msra.mxu0 0.0
        %3319 = vmatprep.subr.mxu0 0.0
        %3320 = vmatpush1.msra.mxu0 0.0
        %3321 = vmatprep.subr.mxu0 0.0
        %3322 = vmatpush1.msra.mxu0 0.0
        %3323 = vmatprep.subr.mxu0 0.0
        %3324 = vmatpush1.msra.mxu0 0.0
        %3325 = vmatprep.subr.mxu0 0.0
        %3326 = vmatpush1.msra.mxu0 0.0
        %3327 = vmatprep.subr.mxu0 0.0
        %3328 = vmatpush1.msra.mxu0 0.0
        %3329 = vmatprep.subr.mxu0 0.0
        %3330 = vmatpush1.msra.mxu0 0.0
        %3331 = vmatprep.subr.mxu0 0.0
        %3332 = vmatpush1.msra.mxu0 0.0
        %3333 = vmatprep.subr.mxu0 0.0
        %3334 = vmatpush1.msra.mxu0 0.0
        %3335 = vmatprep.subr.mxu0 0.0
        %3336 = vmatpush1.msra.mxu0 0.0
        %3337 = vmatprep.subr.mxu0 0.0
        %3338 = vmatpush1.msra.mxu0 0.0
        %3339 = vmatprep.subr.mxu0 0.0
        %3340 = vmatpush1.msra.mxu0 0.0
        %3341 = vmatprep.subr.mxu0 0.0
        %3342 = vmatpush1.msra.mxu0 0.0
        %3343 = vmatprep.subr.mxu0 0.0
        %3344 = vmatpush1.msra.mxu0 0.0
        %3345 = vmatprep.subr.mxu0 0.0
        %3346 = vmatpush1.msra.mxu0 0.0
        %3347 = vmatprep.mubr.f32.mxu0 0.0
        %v3348 = vand.u32 %v3194, 4294901760
        %3349 = vmatmul.mubr.f32.gmra.mrb[0].mxu0 %v3348
        %v3350 = vpop.f32.mrb[0].mxu0
        %v3351 = vadd.f32 %v3270, %v3350
        %v3352 = vpop.f32.mrb[0].mxu0
        %3353 = vdwg.mxu0
        %3354 = vmatprep.subr.mxu0 0.0
        %v3355 = vand.u32 %v3184, 4294901760
        %v3356 = vsub.f32 %v3184, %v3355
        %3357 = vmatpush1.msra.mxu0 %v3356
        %3358 = vmatprep.subr.mxu0 0.0
        %v3359 = vand.u32 %v3185, 4294901760
        %v3360 = vsub.f32 %v3185, %v3359
        %3361 = vmatpush1.msra.mxu0 %v3360
        %3362 = vmatprep.subr.mxu0 0.0
        %3363 = vmatpush1.msra.mxu0 0.0
        %3364 = vmatprep.subr.mxu0 0.0
        %3365 = vmatpush1.msra.mxu0 0.0
        %3366 = vmatprep.subr.mxu0 0.0
        %3367 = vmatpush1.msra.mxu0 0.0
        %3368 = vmatprep.subr.mxu0 0.0
        %3369 = vmatpush1.msra.mxu0 0.0
        %3370 = vmatprep.subr.mxu0 0.0
        %3371 = vmatpush1.msra.mxu0 0.0
        %3372 = vmatprep.subr.mxu0 0.0
        %3373 = vmatpush1.msra.mxu0 0.0
        %3374 = vmatprep.subr.mxu0 0.0
        %3375 = vmatpush1.msra.mxu0 0.0
        %3376 = vmatprep.subr.mxu0 0.0
        %3377 = vmatpush1.msra.mxu0 0.0
        %3378 = vmatprep.subr.mxu0 0.0
        %3379 = vmatpush1.msra.mxu0 0.0
        %3380 = vmatprep.subr.mxu0 0.0
        %3381 = vmatpush1.msra.mxu0 0.0
        %3382 = vmatprep.subr.mxu0 0.0
        %3383 = vmatpush1.msra.mxu0 0.0
        %3384 = vmatprep.subr.mxu0 0.0
        %3385 = vmatpush1.msra.mxu0 0.0
        %3386 = vmatprep.subr.mxu0 0.0
        %3387 = vmatpush1.msra.mxu0 0.0
        %3388 = vmatprep.subr.mxu0 0.0
        %3389 = vmatpush1.msra.mxu0 0.0
        %3390 = vmatprep.subr.mxu0 0.0
        %3391 = vmatpush1.msra.mxu0 0.0
        %3392 = vmatprep.subr.mxu0 0.0
        %3393 = vmatpush1.msra.mxu0 0.0
        %3394 = vmatprep.subr.mxu0 0.0
        %3395 = vmatpush1.msra.mxu0 0.0
        %3396 = vmatprep.subr.mxu0 0.0
        %3397 = vmatpush1.msra.mxu0 0.0
        %3398 = vmatprep.subr.mxu0 0.0
        %3399 = vmatpush1.msra.mxu0 0.0
        %3400 = vmatprep.subr.mxu0 0.0
        %3401 = vmatpush1.msra.mxu0 0.0
        %3402 = vmatprep.subr.mxu0 0.0
        %3403 = vmatpush1.msra.mxu0 0.0
        %3404 = vmatprep.subr.mxu0 0.0
        %3405 = vmatpush1.msra.mxu0 0.0
        %3406 = vmatprep.subr.mxu0 0.0
        %3407 = vmatpush1.msra.mxu0 0.0
        %3408 = vmatprep.subr.mxu0 0.0
        %3409 = vmatpush1.msra.mxu0 0.0
        %3410 = vmatprep.subr.mxu0 0.0
        %3411 = vmatpush1.msra.mxu0 0.0
        %3412 = vmatprep.subr.mxu0 0.0
        %3413 = vmatpush1.msra.mxu0 0.0
        %3414 = vmatprep.subr.mxu0 0.0
        %3415 = vmatpush1.msra.mxu0 0.0
        %3416 = vmatprep.subr.mxu0 0.0
        %3417 = vmatpush1.msra.mxu0 0.0
        %3418 = vmatprep.subr.mxu0 0.0
        %3419 = vmatpush1.msra.mxu0 0.0
        %3420 = vmatprep.subr.mxu0 0.0
        %3421 = vmatpush1.msra.mxu0 0.0
        %3422 = vmatprep.mubr.f32.mxu0 0.0
        %v3423 = vand.u32 %v3194, 4294901760
        %v3424 = vsub.f32 %v3194, %v3423
        %3425 = vmatmul.mubr.f32.gmra.mrb[0].mxu0 %v3424
        %v3426 = vpop.f32.mrb[0].mxu0
        %v3427 = vadd.f32 %v3351, %v3426
        %v3428 = vpop.f32.mrb[0].mxu0
        %3429 = vdwg.mxu0
        %3430 = vmatprep.subr.mxu0 0.0
        %v3431 = vand.u32 %v3184, 4294901760
        %3432 = vmatpush1.msra.mxu0 %v3431
        %3433 = vmatprep.subr.mxu0 0.0
        %v3434 = vand.u32 %v3185, 4294901760
        %3435 = vmatpush1.msra.mxu0 %v3434
        %3436 = vmatprep.subr.mxu0 0.0
        %3437 = vmatpush1.msra.mxu0 0.0
        %3438 = vmatprep.subr.mxu0 0.0
        %3439 = vmatpush1.msra.mxu0 0.0
        %3440 = vmatprep.subr.mxu0 0.0
        %3441 = vmatpush1.msra.mxu0 0.0
        %3442 = vmatprep.subr.mxu0 0.0
        %3443 = vmatpush1.msra.mxu0 0.0
        %3444 = vmatprep.subr.mxu0 0.0
        %3445 = vmatpush1.msra.mxu0 0.0
        %3446 = vmatprep.subr.mxu0 0.0
        %3447 = vmatpush1.msra.mxu0 0.0
        %3448 = vmatprep.subr.mxu0 0.0
        %3449 = vmatpush1.msra.mxu0 0.0
        %3450 = vmatprep.subr.mxu0 0.0
        %3451 = vmatpush1.msra.mxu0 0.0
        %3452 = vmatprep.subr.mxu0 0.0
        %3453 = vmatpush1.msra.mxu0 0.0
        %3454 = vmatprep.subr.mxu0 0.0
        %3455 = vmatpush1.msra.mxu0 0.0
        %3456 = vmatprep.subr.mxu0 0.0
        %3457 = vmatpush1.msra.mxu0 0.0
        %3458 = vmatprep.subr.mxu0 0.0
        %3459 = vmatpush1.msra.mxu0 0.0
        %3460 = vmatprep.subr.mxu0 0.0
        %3461 = vmatpush1.msra.mxu0 0.0
        %3462 = vmatprep.subr.mxu0 0.0
        %3463 = vmatpush1.msra.mxu0 0.0
        %3464 = vmatprep.subr.mxu0 0.0
        %3465 = vmatpush1.msra.mxu0 0.0
        %3466 = vmatprep.subr.mxu0 0.0
        %3467 = vmatpush1.msra.mxu0 0.0
        %3468 = vmatprep.subr.mxu0 0.0
        %3469 = vmatpush1.msra.mxu0 0.0
        %3470 = vmatprep.subr.mxu0 0.0
        %3471 = vmatpush1.msra.mxu0 0.0
        %3472 = vmatprep.subr.mxu0 0.0
        %3473 = vmatpush1.msra.mxu0 0.0
        %3474 = vmatprep.subr.mxu0 0.0
        %3475 = vmatpush1.msra.mxu0 0.0
        %3476 = vmatprep.subr.mxu0 0.0
        %3477 = vmatpush1.msra.mxu0 0.0
        %3478 = vmatprep.subr.mxu0 0.0
        %3479 = vmatpush1.msra.mxu0 0.0
        %3480 = vmatprep.subr.mxu0 0.0
        %3481 = vmatpush1.msra.mxu0 0.0
        %3482 = vmatprep.subr.mxu0 0.0
        %3483 = vmatpush1.msra.mxu0 0.0
        %3484 = vmatprep.subr.mxu0 0.0
        %3485 = vmatpush1.msra.mxu0 0.0
        %3486 = vmatprep.subr.mxu0 0.0
        %3487 = vmatpush1.msra.mxu0 0.0
        %3488 = vmatprep.subr.mxu0 0.0
        %3489 = vmatpush1.msra.mxu0 0.0
        %3490 = vmatprep.subr.mxu0 0.0
        %3491 = vmatpush1.msra.mxu0 0.0
        %3492 = vmatprep.subr.mxu0 0.0
        %3493 = vmatpush1.msra.mxu0 0.0
        %3494 = vmatprep.subr.mxu0 0.0
        %3495 = vmatpush1.msra.mxu0 0.0
        %3496 = vmatprep.mubr.f32.mxu0 0.0
        %v3497 = vand.u32 %v3194, 4294901760
        %v3498 = vsub.f32 %v3194, %v3497
        %v3499 = vand.u32 %v3498, 4294901760
        %3500 = vmatmul.mubr.f32.gmra.mrb[0].mxu0 %v3499
        %v3501 = vpop.f32.mrb[0].mxu0
        %v3502 = vadd.f32 %v3427, %v3501
        %v3503 = vpop.f32.mrb[0].mxu0
        %3504 = vdwg.mxu0
        %3505 = vmatprep.subr.mxu0 0.0
        %v3506 = vand.u32 %v3184, 4294901760
        %v3507 = vsub.f32 %v3184, %v3506
        %v3508 = vand.u32 %v3507, 4294901760
        %3509 = vmatpush1.msra.mxu0 %v3508
        %3510 = vmatprep.subr.mxu0 0.0
        %v3511 = vand.u32 %v3185, 4294901760
        %v3512 = vsub.f32 %v3185, %v3511
        %v3513 = vand.u32 %v3512, 4294901760
        %3514 = vmatpush1.msra.mxu0 %v3513
        %3515 = vmatprep.subr.mxu0 0.0
        %3516 = vmatpush1.msra.mxu0 0.0
        %3517 = vmatprep.subr.mxu0 0.0
        %3518 = vmatpush1.msra.mxu0 0.0
        %3519 = vmatprep.subr.mxu0 0.0
        %3520 = vmatpush1.msra.mxu0 0.0
        %3521 = vmatprep.subr.mxu0 0.0
        %3522 = vmatpush1.msra.mxu0 0.0
        %3523 = vmatprep.subr.mxu0 0.0
        %3524 = vmatpush1.msra.mxu0 0.0
        %3525 = vmatprep.subr.mxu0 0.0
        %3526 = vmatpush1.msra.mxu0 0.0
        %3527 = vmatprep.subr.mxu0 0.0
        %3528 = vmatpush1.msra.mxu0 0.0
        %3529 = vmatprep.subr.mxu0 0.0
        %3530 = vmatpush1.msra.mxu0 0.0
        %3531 = vmatprep.subr.mxu0 0.0
        %3532 = vmatpush1.msra.mxu0 0.0
        %3533 = vmatprep.subr.mxu0 0.0
        %3534 = vmatpush1.msra.mxu0 0.0
        %3535 = vmatprep.subr.mxu0 0.0
        %3536 = vmatpush1.msra.mxu0 0.0
        %3537 = vmatprep.subr.mxu0 0.0
        %3538 = vmatpush1.msra.mxu0 0.0
        %3539 = vmatprep.subr.mxu0 0.0
        %3540 = vmatpush1.msra.mxu0 0.0
        %3541 = vmatprep.subr.mxu0 0.0
        %3542 = vmatpush1.msra.mxu0 0.0
        %3543 = vmatprep.subr.mxu0 0.0
        %3544 = vmatpush1.msra.mxu0 0.0
        %3545 = vmatprep.subr.mxu0 0.0
        %3546 = vmatpush1.msra.mxu0 0.0
        %3547 = vmatprep.subr.mxu0 0.0
        %3548 = vmatpush1.msra.mxu0 0.0
        %3549 = vmatprep.subr.mxu0 0.0
        %3550 = vmatpush1.msra.mxu0 0.0
        %3551 = vmatprep.subr.mxu0 0.0
        %3552 = vmatpush1.msra.mxu0 0.0
        %3553 = vmatprep.subr.mxu0 0.0
        %3554 = vmatpush1.msra.mxu0 0.0
        %3555 = vmatprep.subr.mxu0 0.0
        %3556 = vmatpush1.msra.mxu0 0.0
        %3557 = vmatprep.subr.mxu0 0.0
        %3558 = vmatpush1.msra.mxu0 0.0
        %3559 = vmatprep.subr.mxu0 0.0
        %3560 = vmatpush1.msra.mxu0 0.0
        %3561 = vmatprep.subr.mxu0 0.0
        %3562 = vmatpush1.msra.mxu0 0.0
        %3563 = vmatprep.subr.mxu0 0.0
        %3564 = vmatpush1.msra.mxu0 0.0
        %3565 = vmatprep.subr.mxu0 0.0
        %3566 = vmatpush1.msra.mxu0 0.0
        %3567 = vmatprep.subr.mxu0 0.0
        %3568 = vmatpush1.msra.mxu0 0.0
        %3569 = vmatprep.subr.mxu0 0.0
        %3570 = vmatpush1.msra.mxu0 0.0
        %3571 = vmatprep.subr.mxu0 0.0
        %3572 = vmatpush1.msra.mxu0 0.0
        %3573 = vmatprep.subr.mxu0 0.0
        %3574 = vmatpush1.msra.mxu0 0.0
        %3575 = vmatprep.mubr.f32.mxu0 0.0
        %v3576 = vand.u32 %v3194, 4294901760
        %3577 = vmatmul.mubr.f32.gmra.mrb[0].mxu0 %v3576
        %v3578 = vpop.f32.mrb[0].mxu0
        %v3579 = vadd.f32 %v3502, %v3578
        %v3580 = vpop.f32.mrb[0].mxu0
        %3581 = vdwg.mxu0
        %3582 = vmatprep.subr.mxu0 0.0
        %v3583 = vand.u32 %v3184, 4294901760
        %3584 = vmatpush1.msra.mxu0 %v3583
        %3585 = vmatprep.subr.mxu0 0.0
        %v3586 = vand.u32 %v3185, 4294901760
        %3587 = vmatpush1.msra.mxu0 %v3586
        %3588 = vmatprep.subr.mxu0 0.0
        %3589 = vmatpush1.msra.mxu0 0.0
        %3590 = vmatprep.subr.mxu0 0.0
        %3591 = vmatpush1.msra.mxu0 0.0
        %3592 = vmatprep.subr.mxu0 0.0
        %3593 = vmatpush1.msra.mxu0 0.0
        %3594 = vmatprep.subr.mxu0 0.0
        %3595 = vmatpush1.msra.mxu0 0.0
        %3596 = vmatprep.subr.mxu0 0.0
        %3597 = vmatpush1.msra.mxu0 0.0
        %3598 = vmatprep.subr.mxu0 0.0
        %3599 = vmatpush1.msra.mxu0 0.0
        %3600 = vmatprep.subr.mxu0 0.0
        %3601 = vmatpush1.msra.mxu0 0.0
        %3602 = vmatprep.subr.mxu0 0.0
        %3603 = vmatpush1.msra.mxu0 0.0
        %3604 = vmatprep.subr.mxu0 0.0
        %3605 = vmatpush1.msra.mxu0 0.0
        %3606 = vmatprep.subr.mxu0 0.0
        %3607 = vmatpush1.msra.mxu0 0.0
        %3608 = vmatprep.subr.mxu0 0.0
        %3609 = vmatpush1.msra.mxu0 0.0
        %3610 = vmatprep.subr.mxu0 0.0
        %3611 = vmatpush1.msra.mxu0 0.0
        %3612 = vmatprep.subr.mxu0 0.0
        %3613 = vmatpush1.msra.mxu0 0.0
        %3614 = vmatprep.subr.mxu0 0.0
        %3615 = vmatpush1.msra.mxu0 0.0
        %3616 = vmatprep.subr.mxu0 0.0
        %3617 = vmatpush1.msra.mxu0 0.0
        %3618 = vmatprep.subr.mxu0 0.0
        %3619 = vmatpush1.msra.mxu0 0.0
        %3620 = vmatprep.subr.mxu0 0.0
        %3621 = vmatpush1.msra.mxu0 0.0
        %3622 = vmatprep.subr.mxu0 0.0
        %3623 = vmatpush1.msra.mxu0 0.0
        %3624 = vmatprep.subr.mxu0 0.0
        %3625 = vmatpush1.msra.mxu0 0.0
        %3626 = vmatprep.subr.mxu0 0.0
        %3627 = vmatpush1.msra.mxu0 0.0
        %3628 = vmatprep.subr.mxu0 0.0
        %3629 = vmatpush1.msra.mxu0 0.0
        %3630 = vmatprep.subr.mxu0 0.0
        %3631 = vmatpush1.msra.mxu0 0.0
        %3632 = vmatprep.subr.mxu0 0.0
        %3633 = vmatpush1.msra.mxu0 0.0
        %3634 = vmatprep.subr.mxu0 0.0
        %3635 = vmatpush1.msra.mxu0 0.0
        %3636 = vmatprep.subr.mxu0 0.0
        %3637 = vmatpush1.msra.mxu0 0.0
        %3638 = vmatprep.subr.mxu0 0.0
        %3639 = vmatpush1.msra.mxu0 0.0
        %3640 = vmatprep.subr.mxu0 0.0
        %3641 = vmatpush1.msra.mxu0 0.0
        %3642 = vmatprep.subr.mxu0 0.0
        %3643 = vmatpush1.msra.mxu0 0.0
        %3644 = vmatprep.subr.mxu0 0.0
        %3645 = vmatpush1.msra.mxu0 0.0
        %3646 = vmatprep.subr.mxu0 0.0
        %3647 = vmatpush1.msra.mxu0 0.0
        %3648 = vmatprep.mubr.f32.mxu0 0.0
        %v3649 = vand.u32 %v3194, 4294901760
        %3650 = vmatmul.mubr.f32.gmra.mrb[0].mxu0 %v3649
        %v3651 = vpop.f32.mrb[0].mxu0
        %v3652 = vadd.f32 %v3579, %v3651
        %v3653 = vpop.f32.mrb[0].mxu0
        %3654 = vdwg.mxu0
        %v3655 = vmax.f32 %v3652, 0.0
        %v3656 = vld [vmem:[#allocation8] sm:$0xff]
        %v3657 = vld [vmem:[#allocation8 + $0x8] sm:$0xff]
        %v3659 = vsel %vm736, %v3656, 0
        %v3662 = vsel %vm736, %v3657, 0
        %3664 = vmatprep.subr.mxu0 0.0
        %v3665 = vand.u32 %v3655, 4294901760
        %3666 = vmatpush1.msra.mxu0 %v3665
        %3667 = vmatprep.subr.mxu0 0.0
        %3668 = vmatpush1.msra.mxu0 0.0
        %3669 = vmatprep.subr.mxu0 0.0
        %3670 = vmatpush1.msra.mxu0 0.0
        %3671 = vmatprep.subr.mxu0 0.0
        %3672 = vmatpush1.msra.mxu0 0.0
        %3673 = vmatprep.subr.mxu0 0.0
        %3674 = vmatpush1.msra.mxu0 0.0
        %3675 = vmatprep.subr.mxu0 0.0
        %3676 = vmatpush1.msra.mxu0 0.0
        %3677 = vmatprep.subr.mxu0 0.0
        %3678 = vmatpush1.msra.mxu0 0.0
        %3679 = vmatprep.subr.mxu0 0.0
        %3680 = vmatpush1.msra.mxu0 0.0
        %3681 = vmatprep.subr.mxu0 0.0
        %3682 = vmatpush1.msra.mxu0 0.0
        %3683 = vmatprep.subr.mxu0 0.0
        %3684 = vmatpush1.msra.mxu0 0.0
        %3685 = vmatprep.subr.mxu0 0.0
        %3686 = vmatpush1.msra.mxu0 0.0
        %3687 = vmatprep.subr.mxu0 0.0
        %3688 = vmatpush1.msra.mxu0 0.0
        %3689 = vmatprep.subr.mxu0 0.0
        %3690 = vmatpush1.msra.mxu0 0.0
        %3691 = vmatprep.subr.mxu0 0.0
        %3692 = vmatpush1.msra.mxu0 0.0
        %3693 = vmatprep.subr.mxu0 0.0
        %3694 = vmatpush1.msra.mxu0 0.0
        %3695 = vmatprep.subr.mxu0 0.0
        %3696 = vmatpush1.msra.mxu0 0.0
        %3697 = vmatprep.subr.mxu0 0.0
        %3698 = vmatpush1.msra.mxu0 0.0
        %3699 = vmatprep.subr.mxu0 0.0
        %3700 = vmatpush1.msra.mxu0 0.0
        %3701 = vmatprep.subr.mxu0 0.0
        %3702 = vmatpush1.msra.mxu0 0.0
        %3703 = vmatprep.subr.mxu0 0.0
        %3704 = vmatpush1.msra.mxu0 0.0
        %3705 = vmatprep.subr.mxu0 0.0
        %3706 = vmatpush1.msra.mxu0 0.0
        %3707 = vmatprep.subr.mxu0 0.0
        %3708 = vmatpush1.msra.mxu0 0.0
        %3709 = vmatprep.subr.mxu0 0.0
        %3710 = vmatpush1.msra.mxu0 0.0
        %3711 = vmatprep.subr.mxu0 0.0
        %3712 = vmatpush1.msra.mxu0 0.0
        %3713 = vmatprep.subr.mxu0 0.0
        %3714 = vmatpush1.msra.mxu0 0.0
        %3715 = vmatprep.subr.mxu0 0.0
        %3716 = vmatpush1.msra.mxu0 0.0
        %3717 = vmatprep.subr.mxu0 0.0
        %3718 = vmatpush1.msra.mxu0 0.0
        %3719 = vmatprep.subr.mxu0 0.0
        %3720 = vmatpush1.msra.mxu0 0.0
        %3721 = vmatprep.subr.mxu0 0.0
        %3722 = vmatpush1.msra.mxu0 0.0
        %3723 = vmatprep.subr.mxu0 0.0
        %3724 = vmatpush1.msra.mxu0 0.0
        %3725 = vmatprep.subr.mxu0 0.0
        %3726 = vmatpush1.msra.mxu0 0.0
        %3727 = vmatprep.subr.mxu0 0.0
        %3728 = vmatpush1.msra.mxu0 0.0
        %3729 = vmatprep.mubr.f32.mxu0 0.0
        %v3730 = vand.u32 %v3659, 4294901760
        %v3731 = vsub.f32 %v3659, %v3730
        %v3732 = vand.u32 %v3731, 4294901760
        %v3733 = vsub.f32 %v3731, %v3732
        %v3734 = vand.u32 %v3733, 4294901760
        %3735 = vmatmul.mubr.f32.gmra.mrb[0].mxu0 %v3734
        %v3736 = vpop.f32.mrb[0].mxu0
        %v3737 = vadd.f32 0.0, %v3736
        %v3738 = vpop.f32.mrb[0].mxu0
        %3739 = vmatprep.mubr.f32.mxu0 0.0
        %v3740 = vand.u32 %v3662, 4294901760
        %v3741 = vsub.f32 %v3662, %v3740
        %v3742 = vand.u32 %v3741, 4294901760
        %v3743 = vsub.f32 %v3741, %v3742
        %v3744 = vand.u32 %v3743, 4294901760
        %3745 = vmatmul.mubr.f32.gmra.mrb[0].mxu0 %v3744
        %v3746 = vpop.f32.mrb[0].mxu0
        %v3747 = vadd.f32 0.0, %v3746
        %v3748 = vpop.f32.mrb[0].mxu0
        %3749 = vdwg.mxu0
        %3750 = vmatprep.subr.mxu0 0.0
        %v3751 = vand.u32 %v3655, 4294901760
        %v3752 = vsub.f32 %v3655, %v3751
        %v3753 = vand.u32 %v3752, 4294901760
        %v3754 = vsub.f32 %v3752, %v3753
        %v3755 = vand.u32 %v3754, 4294901760
        %3756 = vmatpush1.msra.mxu0 %v3755
        %3757 = vmatprep.subr.mxu0 0.0
        %3758 = vmatpush1.msra.mxu0 0.0
        %3759 = vmatprep.subr.mxu0 0.0
        %3760 = vmatpush1.msra.mxu0 0.0
        %3761 = vmatprep.subr.mxu0 0.0
        %3762 = vmatpush1.msra.mxu0 0.0
        %3763 = vmatprep.subr.mxu0 0.0
        %3764 = vmatpush1.msra.mxu0 0.0
        %3765 = vmatprep.subr.mxu0 0.0
        %3766 = vmatpush1.msra.mxu0 0.0
        %3767 = vmatprep.subr.mxu0 0.0
        %3768 = vmatpush1.msra.mxu0 0.0
        %3769 = vmatprep.subr.mxu0 0.0
        %3770 = vmatpush1.msra.mxu0 0.0
        %3771 = vmatprep.subr.mxu0 0.0
        %3772 = vmatpush1.msra.mxu0 0.0
        %3773 = vmatprep.subr.mxu0 0.0
        %3774 = vmatpush1.msra.mxu0 0.0
        %3775 = vmatprep.subr.mxu0 0.0
        %3776 = vmatpush1.msra.mxu0 0.0
        %3777 = vmatprep.subr.mxu0 0.0
        %3778 = vmatpush1.msra.mxu0 0.0
        %3779 = vmatprep.subr.mxu0 0.0
        %3780 = vmatpush1.msra.mxu0 0.0
        %3781 = vmatprep.subr.mxu0 0.0
        %3782 = vmatpush1.msra.mxu0 0.0
        %3783 = vmatprep.subr.mxu0 0.0
        %3784 = vmatpush1.msra.mxu0 0.0
        %3785 = vmatprep.subr.mxu0 0.0
        %3786 = vmatpush1.msra.mxu0 0.0
        %3787 = vmatprep.subr.mxu0 0.0
        %3788 = vmatpush1.msra.mxu0 0.0
        %3789 = vmatprep.subr.mxu0 0.0
        %3790 = vmatpush1.msra.mxu0 0.0
        %3791 = vmatprep.subr.mxu0 0.0
        %3792 = vmatpush1.msra.mxu0 0.0
        %3793 = vmatprep.subr.mxu0 0.0
        %3794 = vmatpush1.msra.mxu0 0.0
        %3795 = vmatprep.subr.mxu0 0.0
        %3796 = vmatpush1.msra.mxu0 0.0
        %3797 = vmatprep.subr.mxu0 0.0
        %3798 = vmatpush1.msra.mxu0 0.0
        %3799 = vmatprep.subr.mxu0 0.0
        %3800 = vmatpush1.msra.mxu0 0.0
        %3801 = vmatprep.subr.mxu0 0.0
        %3802 = vmatpush1.msra.mxu0 0.0
        %3803 = vmatprep.subr.mxu0 0.0
        %3804 = vmatpush1.msra.mxu0 0.0
        %3805 = vmatprep.subr.mxu0 0.0
        %3806 = vmatpush1.msra.mxu0 0.0
        %3807 = vmatprep.subr.mxu0 0.0
        %3808 = vmatpush1.msra.mxu0 0.0
        %3809 = vmatprep.subr.mxu0 0.0
        %3810 = vmatpush1.msra.mxu0 0.0
        %3811 = vmatprep.subr.mxu0 0.0
        %3812 = vmatpush1.msra.mxu0 0.0
        %3813 = vmatprep.subr.mxu0 0.0
        %3814 = vmatpush1.msra.mxu0 0.0
        %3815 = vmatprep.subr.mxu0 0.0
        %3816 = vmatpush1.msra.mxu0 0.0
        %3817 = vmatprep.subr.mxu0 0.0
        %3818 = vmatpush1.msra.mxu0 0.0
        %3819 = vmatprep.mubr.f32.mxu0 0.0
        %v3820 = vand.u32 %v3659, 4294901760
        %3821 = vmatmul.mubr.f32.gmra.mrb[0].mxu0 %v3820
        %v3822 = vpop.f32.mrb[0].mxu0
        %v3823 = vadd.f32 %v3737, %v3822
        %v3824 = vpop.f32.mrb[0].mxu0
        %3825 = vmatprep.mubr.f32.mxu0 0.0
        %v3826 = vand.u32 %v3662, 4294901760
        %3827 = vmatmul.mubr.f32.gmra.mrb[0].mxu0 %v3826
        %v3828 = vpop.f32.mrb[0].mxu0
        %v3829 = vadd.f32 %v3747, %v3828
        %v3830 = vpop.f32.mrb[0].mxu0
        %3831 = vdwg.mxu0
        %3832 = vmatprep.subr.mxu0 0.0
        %v3833 = vand.u32 %v3655, 4294901760
        %v3834 = vsub.f32 %v3655, %v3833
        %3835 = vmatpush1.msra.mxu0 %v3834
        %3836 = vmatprep.subr.mxu0 0.0
        %3837 = vmatpush1.msra.mxu0 0.0
        %3838 = vmatprep.subr.mxu0 0.0
        %3839 = vmatpush1.msra.mxu0 0.0
        %3840 = vmatprep.subr.mxu0 0.0
        %3841 = vmatpush1.msra.mxu0 0.0
        %3842 = vmatprep.subr.mxu0 0.0
        %3843 = vmatpush1.msra.mxu0 0.0
        %3844 = vmatprep.subr.mxu0 0.0
        %3845 = vmatpush1.msra.mxu0 0.0
        %3846 = vmatprep.subr.mxu0 0.0
        %3847 = vmatpush1.msra.mxu0 0.0
        %3848 = vmatprep.subr.mxu0 0.0
        %3849 = vmatpush1.msra.mxu0 0.0
        %3850 = vmatprep.subr.mxu0 0.0
        %3851 = vmatpush1.msra.mxu0 0.0
        %3852 = vmatprep.subr.mxu0 0.0
        %3853 = vmatpush1.msra.mxu0 0.0
        %3854 = vmatprep.subr.mxu0 0.0
        %3855 = vmatpush1.msra.mxu0 0.0
        %3856 = vmatprep.subr.mxu0 0.0
        %3857 = vmatpush1.msra.mxu0 0.0
        %3858 = vmatprep.subr.mxu0 0.0
        %3859 = vmatpush1.msra.mxu0 0.0
        %3860 = vmatprep.subr.mxu0 0.0
        %3861 = vmatpush1.msra.mxu0 0.0
        %3862 = vmatprep.subr.mxu0 0.0
        %3863 = vmatpush1.msra.mxu0 0.0
        %3864 = vmatprep.subr.mxu0 0.0
        %3865 = vmatpush1.msra.mxu0 0.0
        %3866 = vmatprep.subr.mxu0 0.0
        %3867 = vmatpush1.msra.mxu0 0.0
        %3868 = vmatprep.subr.mxu0 0.0
        %3869 = vmatpush1.msra.mxu0 0.0
        %3870 = vmatprep.subr.mxu0 0.0
        %3871 = vmatpush1.msra.mxu0 0.0
        %3872 = vmatprep.subr.mxu0 0.0
        %3873 = vmatpush1.msra.mxu0 0.0
        %3874 = vmatprep.subr.mxu0 0.0
        %3875 = vmatpush1.msra.mxu0 0.0
        %3876 = vmatprep.subr.mxu0 0.0
        %3877 = vmatpush1.msra.mxu0 0.0
        %3878 = vmatprep.subr.mxu0 0.0
        %3879 = vmatpush1.msra.mxu0 0.0
        %3880 = vmatprep.subr.mxu0 0.0
        %3881 = vmatpush1.msra.mxu0 0.0
        %3882 = vmatprep.subr.mxu0 0.0
        %3883 = vmatpush1.msra.mxu0 0.0
        %3884 = vmatprep.subr.mxu0 0.0
        %3885 = vmatpush1.msra.mxu0 0.0
        %3886 = vmatprep.subr.mxu0 0.0
        %3887 = vmatpush1.msra.mxu0 0.0
        %3888 = vmatprep.subr.mxu0 0.0
        %3889 = vmatpush1.msra.mxu0 0.0
        %3890 = vmatprep.subr.mxu0 0.0
        %3891 = vmatpush1.msra.mxu0 0.0
        %3892 = vmatprep.subr.mxu0 0.0
        %3893 = vmatpush1.msra.mxu0 0.0
        %3894 = vmatprep.subr.mxu0 0.0
        %3895 = vmatpush1.msra.mxu0 0.0
        %3896 = vmatprep.subr.mxu0 0.0
        %3897 = vmatpush1.msra.mxu0 0.0
        %3898 = vmatprep.mubr.f32.mxu0 0.0
        %v3899 = vand.u32 %v3659, 4294901760
        %v3900 = vsub.f32 %v3659, %v3899
        %3901 = vmatmul.mubr.f32.gmra.mrb[0].mxu0 %v3900
        %v3902 = vpop.f32.mrb[0].mxu0
        %v3903 = vadd.f32 %v3823, %v3902
        %v3904 = vpop.f32.mrb[0].mxu0
        %3905 = vmatprep.mubr.f32.mxu0 0.0
        %v3906 = vand.u32 %v3662, 4294901760
        %v3907 = vsub.f32 %v3662, %v3906
        %3908 = vmatmul.mubr.f32.gmra.mrb[0].mxu0 %v3907
        %v3909 = vpop.f32.mrb[0].mxu0
        %v3910 = vadd.f32 %v3829, %v3909
        %v3911 = vpop.f32.mrb[0].mxu0
        %3912 = vdwg.mxu0
        %3913 = vmatprep.subr.mxu0 0.0
        %v3914 = vand.u32 %v3655, 4294901760
        %3915 = vmatpush1.msra.mxu0 %v3914
        %3916 = vmatprep.subr.mxu0 0.0
        %3917 = vmatpush1.msra.mxu0 0.0
        %3918 = vmatprep.subr.mxu0 0.0
        %3919 = vmatpush1.msra.mxu0 0.0
        %3920 = vmatprep.subr.mxu0 0.0
        %3921 = vmatpush1.msra.mxu0 0.0
        %3922 = vmatprep.subr.mxu0 0.0
        %3923 = vmatpush1.msra.mxu0 0.0
        %3924 = vmatprep.subr.mxu0 0.0
        %3925 = vmatpush1.msra.mxu0 0.0
        %3926 = vmatprep.subr.mxu0 0.0
        %3927 = vmatpush1.msra.mxu0 0.0
        %3928 = vmatprep.subr.mxu0 0.0
        %3929 = vmatpush1.msra.mxu0 0.0
        %3930 = vmatprep.subr.mxu0 0.0
        %3931 = vmatpush1.msra.mxu0 0.0
        %3932 = vmatprep.subr.mxu0 0.0
        %3933 = vmatpush1.msra.mxu0 0.0
        %3934 = vmatprep.subr.mxu0 0.0
        %3935 = vmatpush1.msra.mxu0 0.0
        %3936 = vmatprep.subr.mxu0 0.0
        %3937 = vmatpush1.msra.mxu0 0.0
        %3938 = vmatprep.subr.mxu0 0.0
        %3939 = vmatpush1.msra.mxu0 0.0
        %3940 = vmatprep.subr.mxu0 0.0
        %3941 = vmatpush1.msra.mxu0 0.0
        %3942 = vmatprep.subr.mxu0 0.0
        %3943 = vmatpush1.msra.mxu0 0.0
        %3944 = vmatprep.subr.mxu0 0.0
        %3945 = vmatpush1.msra.mxu0 0.0
        %3946 = vmatprep.subr.mxu0 0.0
        %3947 = vmatpush1.msra.mxu0 0.0
        %3948 = vmatprep.subr.mxu0 0.0
        %3949 = vmatpush1.msra.mxu0 0.0
        %3950 = vmatprep.subr.mxu0 0.0
        %3951 = vmatpush1.msra.mxu0 0.0
        %3952 = vmatprep.subr.mxu0 0.0
        %3953 = vmatpush1.msra.mxu0 0.0
        %3954 = vmatprep.subr.mxu0 0.0
        %3955 = vmatpush1.msra.mxu0 0.0
        %3956 = vmatprep.subr.mxu0 0.0
        %3957 = vmatpush1.msra.mxu0 0.0
        %3958 = vmatprep.subr.mxu0 0.0
        %3959 = vmatpush1.msra.mxu0 0.0
        %3960 = vmatprep.subr.mxu0 0.0
        %3961 = vmatpush1.msra.mxu0 0.0
        %3962 = vmatprep.subr.mxu0 0.0
        %3963 = vmatpush1.msra.mxu0 0.0
        %3964 = vmatprep.subr.mxu0 0.0
        %3965 = vmatpush1.msra.mxu0 0.0
        %3966 = vmatprep.subr.mxu0 0.0
        %3967 = vmatpush1.msra.mxu0 0.0
        %3968 = vmatprep.subr.mxu0 0.0
        %3969 = vmatpush1.msra.mxu0 0.0
        %3970 = vmatprep.subr.mxu0 0.0
        %3971 = vmatpush1.msra.mxu0 0.0
        %3972 = vmatprep.subr.mxu0 0.0
        %3973 = vmatpush1.msra.mxu0 0.0
        %3974 = vmatprep.subr.mxu0 0.0
        %3975 = vmatpush1.msra.mxu0 0.0
        %3976 = vmatprep.subr.mxu0 0.0
        %3977 = vmatpush1.msra.mxu0 0.0
        %3978 = vmatprep.mubr.f32.mxu0 0.0
        %v3979 = vand.u32 %v3659, 4294901760
        %v3980 = vsub.f32 %v3659, %v3979
        %v3981 = vand.u32 %v3980, 4294901760
        %3982 = vmatmul.mubr.f32.gmra.mrb[0].mxu0 %v3981
        %v3983 = vpop.f32.mrb[0].mxu0
        %v3984 = vadd.f32 %v3903, %v3983
        %v3985 = vpop.f32.mrb[0].mxu0
        %3986 = vmatprep.mubr.f32.mxu0 0.0
        %v3987 = vand.u32 %v3662, 4294901760
        %v3988 = vsub.f32 %v3662, %v3987
        %v3989 = vand.u32 %v3988, 4294901760
        %3990 = vmatmul.mubr.f32.gmra.mrb[0].mxu0 %v3989
        %v3991 = vpop.f32.mrb[0].mxu0
        %v3992 = vadd.f32 %v3910, %v3991
        %v3993 = vpop.f32.mrb[0].mxu0
        %3994 = vdwg.mxu0
        %3995 = vmatprep.subr.mxu0 0.0
        %v3996 = vand.u32 %v3655, 4294901760
        %v3997 = vsub.f32 %v3655, %v3996
        %v3998 = vand.u32 %v3997, 4294901760
        %3999 = vmatpush1.msra.mxu0 %v3998
        %4000 = vmatprep.subr.mxu0 0.0
        %4001 = vmatpush1.msra.mxu0 0.0
        %4002 = vmatprep.subr.mxu0 0.0
        %4003 = vmatpush1.msra.mxu0 0.0
        %4004 = vmatprep.subr.mxu0 0.0
        %4005 = vmatpush1.msra.mxu0 0.0
        %4006 = vmatprep.subr.mxu0 0.0
        %4007 = vmatpush1.msra.mxu0 0.0
        %4008 = vmatprep.subr.mxu0 0.0
        %4009 = vmatpush1.msra.mxu0 0.0
        %4010 = vmatprep.subr.mxu0 0.0
        %4011 = vmatpush1.msra.mxu0 0.0
        %4012 = vmatprep.subr.mxu0 0.0
        %4013 = vmatpush1.msra.mxu0 0.0
        %4014 = vmatprep.subr.mxu0 0.0
        %4015 = vmatpush1.msra.mxu0 0.0
        %4016 = vmatprep.subr.mxu0 0.0
        %4017 = vmatpush1.msra.mxu0 0.0
        %4018 = vmatprep.subr.mxu0 0.0
        %4019 = vmatpush1.msra.mxu0 0.0
        %4020 = vmatprep.subr.mxu0 0.0
        %4021 = vmatpush1.msra.mxu0 0.0
        %4022 = vmatprep.subr.mxu0 0.0
        %4023 = vmatpush1.msra.mxu0 0.0
        %4024 = vmatprep.subr.mxu0 0.0
        %4025 = vmatpush1.msra.mxu0 0.0
        %4026 = vmatprep.subr.mxu0 0.0
        %4027 = vmatpush1.msra.mxu0 0.0
        %4028 = vmatprep.subr.mxu0 0.0
        %4029 = vmatpush1.msra.mxu0 0.0
        %4030 = vmatprep.subr.mxu0 0.0
        %4031 = vmatpush1.msra.mxu0 0.0
        %4032 = vmatprep.subr.mxu0 0.0
        %4033 = vmatpush1.msra.mxu0 0.0
        %4034 = vmatprep.subr.mxu0 0.0
        %4035 = vmatpush1.msra.mxu0 0.0
        %4036 = vmatprep.subr.mxu0 0.0
        %4037 = vmatpush1.msra.mxu0 0.0
        %4038 = vmatprep.subr.mxu0 0.0
        %4039 = vmatpush1.msra.mxu0 0.0
        %4040 = vmatprep.subr.mxu0 0.0
        %4041 = vmatpush1.msra.mxu0 0.0
        %4042 = vmatprep.subr.mxu0 0.0
        %4043 = vmatpush1.msra.mxu0 0.0
        %4044 = vmatprep.subr.mxu0 0.0
        %4045 = vmatpush1.msra.mxu0 0.0
        %4046 = vmatprep.subr.mxu0 0.0
        %4047 = vmatpush1.msra.mxu0 0.0
        %4048 = vmatprep.subr.mxu0 0.0
        %4049 = vmatpush1.msra.mxu0 0.0
        %4050 = vmatprep.subr.mxu0 0.0
        %4051 = vmatpush1.msra.mxu0 0.0
        %4052 = vmatprep.subr.mxu0 0.0
        %4053 = vmatpush1.msra.mxu0 0.0
        %4054 = vmatprep.subr.mxu0 0.0
        %4055 = vmatpush1.msra.mxu0 0.0
        %4056 = vmatprep.subr.mxu0 0.0
        %4057 = vmatpush1.msra.mxu0 0.0
        %4058 = vmatprep.subr.mxu0 0.0
        %4059 = vmatpush1.msra.mxu0 0.0
        %4060 = vmatprep.subr.mxu0 0.0
        %4061 = vmatpush1.msra.mxu0 0.0
        %4062 = vmatprep.mubr.f32.mxu0 0.0
        %v4063 = vand.u32 %v3659, 4294901760
        %4064 = vmatmul.mubr.f32.gmra.mrb[0].mxu0 %v4063
        %v4065 = vpop.f32.mrb[0].mxu0
        %v4066 = vadd.f32 %v3984, %v4065
        %v4067 = vpop.f32.mrb[0].mxu0
        %4068 = vmatprep.mubr.f32.mxu0 0.0
        %v4069 = vand.u32 %v3662, 4294901760
        %4070 = vmatmul.mubr.f32.gmra.mrb[0].mxu0 %v4069
        %v4071 = vpop.f32.mrb[0].mxu0
        %v4072 = vadd.f32 %v3992, %v4071
        %v4073 = vpop.f32.mrb[0].mxu0
        %4074 = vdwg.mxu0
        %4075 = vmatprep.subr.mxu0 0.0
        %v4076 = vand.u32 %v3655, 4294901760
        %4077 = vmatpush1.msra.mxu0 %v4076
        %4078 = vmatprep.subr.mxu0 0.0
        %4079 = vmatpush1.msra.mxu0 0.0
        %4080 = vmatprep.subr.mxu0 0.0
        %4081 = vmatpush1.msra.mxu0 0.0
        %4082 = vmatprep.subr.mxu0 0.0
        %4083 = vmatpush1.msra.mxu0 0.0
        %4084 = vmatprep.subr.mxu0 0.0
        %4085 = vmatpush1.msra.mxu0 0.0
        %4086 = vmatprep.subr.mxu0 0.0
        %4087 = vmatpush1.msra.mxu0 0.0
        %4088 = vmatprep.subr.mxu0 0.0
        %4089 = vmatpush1.msra.mxu0 0.0
        %4090 = vmatprep.subr.mxu0 0.0
        %4091 = vmatpush1.msra.mxu0 0.0
        %4092 = vmatprep.subr.mxu0 0.0
        %4093 = vmatpush1.msra.mxu0 0.0
        %4094 = vmatprep.subr.mxu0 0.0
        %4095 = vmatpush1.msra.mxu0 0.0
        %4096 = vmatprep.subr.mxu0 0.0
        %4097 = vmatpush1.msra.mxu0 0.0
        %4098 = vmatprep.subr.mxu0 0.0
        %4099 = vmatpush1.msra.mxu0 0.0
        %4100 = vmatprep.subr.mxu0 0.0
        %4101 = vmatpush1.msra.mxu0 0.0
        %4102 = vmatprep.subr.mxu0 0.0
        %4103 = vmatpush1.msra.mxu0 0.0
        %4104 = vmatprep.subr.mxu0 0.0
        %4105 = vmatpush1.msra.mxu0 0.0
        %4106 = vmatprep.subr.mxu0 0.0
        %4107 = vmatpush1.msra.mxu0 0.0
        %4108 = vmatprep.subr.mxu0 0.0
        %4109 = vmatpush1.msra.mxu0 0.0
        %4110 = vmatprep.subr.mxu0 0.0
        %4111 = vmatpush1.msra.mxu0 0.0
        %4112 = vmatprep.subr.mxu0 0.0
        %4113 = vmatpush1.msra.mxu0 0.0
        %4114 = vmatprep.subr.mxu0 0.0
        %4115 = vmatpush1.msra.mxu0 0.0
        %4116 = vmatprep.subr.mxu0 0.0
        %4117 = vmatpush1.msra.mxu0 0.0
        %4118 = vmatprep.subr.mxu0 0.0
        %4119 = vmatpush1.msra.mxu0 0.0
        %4120 = vmatprep.subr.mxu0 0.0
        %4121 = vmatpush1.msra.mxu0 0.0
        %4122 = vmatprep.subr.mxu0 0.0
        %4123 = vmatpush1.msra.mxu0 0.0
        %4124 = vmatprep.subr.mxu0 0.0
        %4125 = vmatpush1.msra.mxu0 0.0
        %4126 = vmatprep.subr.mxu0 0.0
        %4127 = vmatpush1.msra.mxu0 0.0
        %4128 = vmatprep.subr.mxu0 0.0
        %4129 = vmatpush1.msra.mxu0 0.0
        %4130 = vmatprep.subr.mxu0 0.0
        %4131 = vmatpush1.msra.mxu0 0.0
        %4132 = vmatprep.subr.mxu0 0.0
        %4133 = vmatpush1.msra.mxu0 0.0
        %4134 = vmatprep.subr.mxu0 0.0
        %4135 = vmatpush1.msra.mxu0 0.0
        %4136 = vmatprep.subr.mxu0 0.0
        %4137 = vmatpush1.msra.mxu0 0.0
        %4138 = vmatprep.subr.mxu0 0.0
        %4139 = vmatpush1.msra.mxu0 0.0
        %4140 = vmatprep.mubr.f32.mxu0 0.0
        %v4141 = vand.u32 %v3659, 4294901760
        %4142 = vmatmul.mubr.f32.gmra.mrb[0].mxu0 %v4141
        %v4143 = vpop.f32.mrb[0].mxu0
        %v4144 = vadd.f32 %v4066, %v4143
        %v4145 = vpop.f32.mrb[0].mxu0
        %4146 = vmatprep.mubr.f32.mxu0 0.0
        %v4147 = vand.u32 %v3662, 4294901760
        %4148 = vmatmul.mubr.f32.gmra.mrb[0].mxu0 %v4147
        %v4149 = vpop.f32.mrb[0].mxu0
        %v4150 = vadd.f32 %v4072, %v4149
        %v4151 = vpop.f32.mrb[0].mxu0
        %4152 = vdwg.mxu0
        %s4153 = scalar_lea.vmem %s257, 48 [#allocation10]
        %4154 = vst [vmem:[%s4153] sm:$0xff] %v4144
        %4155 = vst [vmem:[%s4153 + $0x8] sm:$0xff] %v4150
        %s4156 = scalar_lea.vmem %s221, 32 [#allocation2]
        %v4157 = vld [vmem:[%s4156] sm:$0xff]
        %v4158 = vld [vmem:[#allocation5] sm:$0xff]
        %v4159 = vld [vmem:[#allocation5 + $0x8] sm:$0xff]
        %v4160 = vld [vmem:[#allocation7] sm:$0x1]
        %v4162 = vlaneseq
        %v4163 = vshrl.u32 %v4162, 7
        %v4164 = vsub.s32 0, %v4163
        %v4165 = vrot.slane %v4160, %v4164
        %v4168 = vsel %vm270, %v4157, 0
        %4170 = vmatprep.subr.mxu0 0.0
        %v4171 = vand.u32 %v4158, 4294901760
        %4172 = vmatpush1.msra.mxu0 %v4171
        %4173 = vmatprep.subr.mxu0 0.0
        %v4174 = vand.u32 %v4159, 4294901760
        %4175 = vmatpush1.msra.mxu0 %v4174
        %4176 = vmatprep.subr.mxu0 0.0
        %4177 = vmatpush1.msra.mxu0 0.0
        %4178 = vmatprep.subr.mxu0 0.0
        %4179 = vmatpush1.msra.mxu0 0.0
        %4180 = vmatprep.subr.mxu0 0.0
        %4181 = vmatpush1.msra.mxu0 0.0
        %4182 = vmatprep.subr.mxu0 0.0
        %4183 = vmatpush1.msra.mxu0 0.0
        %4184 = vmatprep.subr.mxu0 0.0
        %4185 = vmatpush1.msra.mxu0 0.0
        %4186 = vmatprep.subr.mxu0 0.0
        %4187 = vmatpush1.msra.mxu0 0.0
        %4188 = vmatprep.subr.mxu0 0.0
        %4189 = vmatpush1.msra.mxu0 0.0
        %4190 = vmatprep.subr.mxu0 0.0
        %4191 = vmatpush1.msra.mxu0 0.0
        %4192 = vmatprep.subr.mxu0 0.0
        %4193 = vmatpush1.msra.mxu0 0.0
        %4194 = vmatprep.subr.mxu0 0.0
        %4195 = vmatpush1.msra.mxu0 0.0
        %4196 = vmatprep.subr.mxu0 0.0
        %4197 = vmatpush1.msra.mxu0 0.0
        %4198 = vmatprep.subr.mxu0 0.0
        %4199 = vmatpush1.msra.mxu0 0.0
        %4200 = vmatprep.subr.mxu0 0.0
        %4201 = vmatpush1.msra.mxu0 0.0
        %4202 = vmatprep.subr.mxu0 0.0
        %4203 = vmatpush1.msra.mxu0 0.0
        %4204 = vmatprep.subr.mxu0 0.0
        %4205 = vmatpush1.msra.mxu0 0.0
        %4206 = vmatprep.subr.mxu0 0.0
        %4207 = vmatpush1.msra.mxu0 0.0
        %4208 = vmatprep.subr.mxu0 0.0
        %4209 = vmatpush1.msra.mxu0 0.0
        %4210 = vmatprep.subr.mxu0 0.0
        %4211 = vmatpush1.msra.mxu0 0.0
        %4212 = vmatprep.subr.mxu0 0.0
        %4213 = vmatpush1.msra.mxu0 0.0
        %4214 = vmatprep.subr.mxu0 0.0
        %4215 = vmatpush1.msra.mxu0 0.0
        %4216 = vmatprep.subr.mxu0 0.0
        %4217 = vmatpush1.msra.mxu0 0.0
        %4218 = vmatprep.subr.mxu0 0.0
        %4219 = vmatpush1.msra.mxu0 0.0
        %4220 = vmatprep.subr.mxu0 0.0
        %4221 = vmatpush1.msra.mxu0 0.0
        %4222 = vmatprep.subr.mxu0 0.0
        %4223 = vmatpush1.msra.mxu0 0.0
        %4224 = vmatprep.subr.mxu0 0.0
        %4225 = vmatpush1.msra.mxu0 0.0
        %4226 = vmatprep.subr.mxu0 0.0
        %4227 = vmatpush1.msra.mxu0 0.0
        %4228 = vmatprep.subr.mxu0 0.0
        %4229 = vmatpush1.msra.mxu0 0.0
        %4230 = vmatprep.subr.mxu0 0.0
        %4231 = vmatpush1.msra.mxu0 0.0
        %4232 = vmatprep.subr.mxu0 0.0
        %4233 = vmatpush1.msra.mxu0 0.0
        %4234 = vmatprep.subr.mxu0 0.0
        %4235 = vmatpush1.msra.mxu0 0.0
        %4236 = vmatprep.mubr.f32.mxu0 0.0
        %v4237 = vand.u32 %v4168, 4294901760
        %v4238 = vsub.f32 %v4168, %v4237
        %v4239 = vand.u32 %v4238, 4294901760
        %v4240 = vsub.f32 %v4238, %v4239
        %v4241 = vand.u32 %v4240, 4294901760
        %4242 = vmatmul.mubr.f32.gmra.mrb[0].mxu0 %v4241
        %v4243 = vpop.f32.mrb[0].mxu0
        %v4244 = vadd.f32 %v4165, %v4243
        %v4245 = vpop.f32.mrb[0].mxu0
        %4246 = vdwg.mxu0
        %4247 = vmatprep.subr.mxu0 0.0
        %v4248 = vand.u32 %v4158, 4294901760
        %v4249 = vsub.f32 %v4158, %v4248
        %v4250 = vand.u32 %v4249, 4294901760
        %v4251 = vsub.f32 %v4249, %v4250
        %v4252 = vand.u32 %v4251, 4294901760
        %4253 = vmatpush1.msra.mxu0 %v4252
        %4254 = vmatprep.subr.mxu0 0.0
        %v4255 = vand.u32 %v4159, 4294901760
        %v4256 = vsub.f32 %v4159, %v4255
        %v4257 = vand.u32 %v4256, 4294901760
        %v4258 = vsub.f32 %v4256, %v4257
        %v4259 = vand.u32 %v4258, 4294901760
        %4260 = vmatpush1.msra.mxu0 %v4259
        %4261 = vmatprep.subr.mxu0 0.0
        %4262 = vmatpush1.msra.mxu0 0.0
        %4263 = vmatprep.subr.mxu0 0.0
        %4264 = vmatpush1.msra.mxu0 0.0
        %4265 = vmatprep.subr.mxu0 0.0
        %4266 = vmatpush1.msra.mxu0 0.0
        %4267 = vmatprep.subr.mxu0 0.0
        %4268 = vmatpush1.msra.mxu0 0.0
        %4269 = vmatprep.subr.mxu0 0.0
        %4270 = vmatpush1.msra.mxu0 0.0
        %4271 = vmatprep.subr.mxu0 0.0
        %4272 = vmatpush1.msra.mxu0 0.0
        %4273 = vmatprep.subr.mxu0 0.0
        %4274 = vmatpush1.msra.mxu0 0.0
        %4275 = vmatprep.subr.mxu0 0.0
        %4276 = vmatpush1.msra.mxu0 0.0
        %4277 = vmatprep.subr.mxu0 0.0
        %4278 = vmatpush1.msra.mxu0 0.0
        %4279 = vmatprep.subr.mxu0 0.0
        %4280 = vmatpush1.msra.mxu0 0.0
        %4281 = vmatprep.subr.mxu0 0.0
        %4282 = vmatpush1.msra.mxu0 0.0
        %4283 = vmatprep.subr.mxu0 0.0
        %4284 = vmatpush1.msra.mxu0 0.0
        %4285 = vmatprep.subr.mxu0 0.0
        %4286 = vmatpush1.msra.mxu0 0.0
        %4287 = vmatprep.subr.mxu0 0.0
        %4288 = vmatpush1.msra.mxu0 0.0
        %4289 = vmatprep.subr.mxu0 0.0
        %4290 = vmatpush1.msra.mxu0 0.0
        %4291 = vmatprep.subr.mxu0 0.0
        %4292 = vmatpush1.msra.mxu0 0.0
        %4293 = vmatprep.subr.mxu0 0.0
        %4294 = vmatpush1.msra.mxu0 0.0
        %4295 = vmatprep.subr.mxu0 0.0
        %4296 = vmatpush1.msra.mxu0 0.0
        %4297 = vmatprep.subr.mxu0 0.0
        %4298 = vmatpush1.msra.mxu0 0.0
        %4299 = vmatprep.subr.mxu0 0.0
        %4300 = vmatpush1.msra.mxu0 0.0
        %4301 = vmatprep.subr.mxu0 0.0
        %4302 = vmatpush1.msra.mxu0 0.0
        %4303 = vmatprep.subr.mxu0 0.0
        %4304 = vmatpush1.msra.mxu0 0.0
        %4305 = vmatprep.subr.mxu0 0.0
        %4306 = vmatpush1.msra.mxu0 0.0
        %4307 = vmatprep.subr.mxu0 0.0
        %4308 = vmatpush1.msra.mxu0 0.0
        %4309 = vmatprep.subr.mxu0 0.0
        %4310 = vmatpush1.msra.mxu0 0.0
        %4311 = vmatprep.subr.mxu0 0.0
        %4312 = vmatpush1.msra.mxu0 0.0
        %4313 = vmatprep.subr.mxu0 0.0
        %4314 = vmatpush1.msra.mxu0 0.0
        %4315 = vmatprep.subr.mxu0 0.0
        %4316 = vmatpush1.msra.mxu0 0.0
        %4317 = vmatprep.subr.mxu0 0.0
        %4318 = vmatpush1.msra.mxu0 0.0
        %4319 = vmatprep.subr.mxu0 0.0
        %4320 = vmatpush1.msra.mxu0 0.0
        %4321 = vmatprep.mubr.f32.mxu0 0.0
        %v4322 = vand.u32 %v4168, 4294901760
        %4323 = vmatmul.mubr.f32.gmra.mrb[0].mxu0 %v4322
        %v4324 = vpop.f32.mrb[0].mxu0
        %v4325 = vadd.f32 %v4244, %v4324
        %v4326 = vpop.f32.mrb[0].mxu0
        %4327 = vdwg.mxu0
        %4328 = vmatprep.subr.mxu0 0.0
        %v4329 = vand.u32 %v4158, 4294901760
        %v4330 = vsub.f32 %v4158, %v4329
        %4331 = vmatpush1.msra.mxu0 %v4330
        %4332 = vmatprep.subr.mxu0 0.0
        %v4333 = vand.u32 %v4159, 4294901760
        %v4334 = vsub.f32 %v4159, %v4333
        %4335 = vmatpush1.msra.mxu0 %v4334
        %4336 = vmatprep.subr.mxu0 0.0
        %4337 = vmatpush1.msra.mxu0 0.0
        %4338 = vmatprep.subr.mxu0 0.0
        %4339 = vmatpush1.msra.mxu0 0.0
        %4340 = vmatprep.subr.mxu0 0.0
        %4341 = vmatpush1.msra.mxu0 0.0
        %4342 = vmatprep.subr.mxu0 0.0
        %4343 = vmatpush1.msra.mxu0 0.0
        %4344 = vmatprep.subr.mxu0 0.0
        %4345 = vmatpush1.msra.mxu0 0.0
        %4346 = vmatprep.subr.mxu0 0.0
        %4347 = vmatpush1.msra.mxu0 0.0
        %4348 = vmatprep.subr.mxu0 0.0
        %4349 = vmatpush1.msra.mxu0 0.0
        %4350 = vmatprep.subr.mxu0 0.0
        %4351 = vmatpush1.msra.mxu0 0.0
        %4352 = vmatprep.subr.mxu0 0.0
        %4353 = vmatpush1.msra.mxu0 0.0
        %4354 = vmatprep.subr.mxu0 0.0
        %4355 = vmatpush1.msra.mxu0 0.0
        %4356 = vmatprep.subr.mxu0 0.0
        %4357 = vmatpush1.msra.mxu0 0.0
        %4358 = vmatprep.subr.mxu0 0.0
        %4359 = vmatpush1.msra.mxu0 0.0
        %4360 = vmatprep.subr.mxu0 0.0
        %4361 = vmatpush1.msra.mxu0 0.0
        %4362 = vmatprep.subr.mxu0 0.0
        %4363 = vmatpush1.msra.mxu0 0.0
        %4364 = vmatprep.subr.mxu0 0.0
        %4365 = vmatpush1.msra.mxu0 0.0
        %4366 = vmatprep.subr.mxu0 0.0
        %4367 = vmatpush1.msra.mxu0 0.0
        %4368 = vmatprep.subr.mxu0 0.0
        %4369 = vmatpush1.msra.mxu0 0.0
        %4370 = vmatprep.subr.mxu0 0.0
        %4371 = vmatpush1.msra.mxu0 0.0
        %4372 = vmatprep.subr.mxu0 0.0
        %4373 = vmatpush1.msra.mxu0 0.0
        %4374 = vmatprep.subr.mxu0 0.0
        %4375 = vmatpush1.msra.mxu0 0.0
        %4376 = vmatprep.subr.mxu0 0.0
        %4377 = vmatpush1.msra.mxu0 0.0
        %4378 = vmatprep.subr.mxu0 0.0
        %4379 = vmatpush1.msra.mxu0 0.0
        %4380 = vmatprep.subr.mxu0 0.0
        %4381 = vmatpush1.msra.mxu0 0.0
        %4382 = vmatprep.subr.mxu0 0.0
        %4383 = vmatpush1.msra.mxu0 0.0
        %4384 = vmatprep.subr.mxu0 0.0
        %4385 = vmatpush1.msra.mxu0 0.0
        %4386 = vmatprep.subr.mxu0 0.0
        %4387 = vmatpush1.msra.mxu0 0.0
        %4388 = vmatprep.subr.mxu0 0.0
        %4389 = vmatpush1.msra.mxu0 0.0
        %4390 = vmatprep.subr.mxu0 0.0
        %4391 = vmatpush1.msra.mxu0 0.0
        %4392 = vmatprep.subr.mxu0 0.0
        %4393 = vmatpush1.msra.mxu0 0.0
        %4394 = vmatprep.subr.mxu0 0.0
        %4395 = vmatpush1.msra.mxu0 0.0
        %4396 = vmatprep.mubr.f32.mxu0 0.0
        %v4397 = vand.u32 %v4168, 4294901760
        %v4398 = vsub.f32 %v4168, %v4397
        %4399 = vmatmul.mubr.f32.gmra.mrb[0].mxu0 %v4398
        %v4400 = vpop.f32.mrb[0].mxu0
        %v4401 = vadd.f32 %v4325, %v4400
        %v4402 = vpop.f32.mrb[0].mxu0
        %4403 = vdwg.mxu0
        %4404 = vmatprep.subr.mxu0 0.0
        %v4405 = vand.u32 %v4158, 4294901760
        %4406 = vmatpush1.msra.mxu0 %v4405
        %4407 = vmatprep.subr.mxu0 0.0
        %v4408 = vand.u32 %v4159, 4294901760
        %4409 = vmatpush1.msra.mxu0 %v4408
        %4410 = vmatprep.subr.mxu0 0.0
        %4411 = vmatpush1.msra.mxu0 0.0
        %4412 = vmatprep.subr.mxu0 0.0
        %4413 = vmatpush1.msra.mxu0 0.0
        %4414 = vmatprep.subr.mxu0 0.0
        %4415 = vmatpush1.msra.mxu0 0.0
        %4416 = vmatprep.subr.mxu0 0.0
        %4417 = vmatpush1.msra.mxu0 0.0
        %4418 = vmatprep.subr.mxu0 0.0
        %4419 = vmatpush1.msra.mxu0 0.0
        %4420 = vmatprep.subr.mxu0 0.0
        %4421 = vmatpush1.msra.mxu0 0.0
        %4422 = vmatprep.subr.mxu0 0.0
        %4423 = vmatpush1.msra.mxu0 0.0
        %4424 = vmatprep.subr.mxu0 0.0
        %4425 = vmatpush1.msra.mxu0 0.0
        %4426 = vmatprep.subr.mxu0 0.0
        %4427 = vmatpush1.msra.mxu0 0.0
        %4428 = vmatprep.subr.mxu0 0.0
        %4429 = vmatpush1.msra.mxu0 0.0
        %4430 = vmatprep.subr.mxu0 0.0
        %4431 = vmatpush1.msra.mxu0 0.0
        %4432 = vmatprep.subr.mxu0 0.0
        %4433 = vmatpush1.msra.mxu0 0.0
        %4434 = vmatprep.subr.mxu0 0.0
        %4435 = vmatpush1.msra.mxu0 0.0
        %4436 = vmatprep.subr.mxu0 0.0
        %4437 = vmatpush1.msra.mxu0 0.0
        %4438 = vmatprep.subr.mxu0 0.0
        %4439 = vmatpush1.msra.mxu0 0.0
        %4440 = vmatprep.subr.mxu0 0.0
        %4441 = vmatpush1.msra.mxu0 0.0
        %4442 = vmatprep.subr.mxu0 0.0
        %4443 = vmatpush1.msra.mxu0 0.0
        %4444 = vmatprep.subr.mxu0 0.0
        %4445 = vmatpush1.msra.mxu0 0.0
        %4446 = vmatprep.subr.mxu0 0.0
        %4447 = vmatpush1.msra.mxu0 0.0
        %4448 = vmatprep.subr.mxu0 0.0
        %4449 = vmatpush1.msra.mxu0 0.0
        %4450 = vmatprep.subr.mxu0 0.0
        %4451 = vmatpush1.msra.mxu0 0.0
        %4452 = vmatprep.subr.mxu0 0.0
        %4453 = vmatpush1.msra.mxu0 0.0
        %4454 = vmatprep.subr.mxu0 0.0
        %4455 = vmatpush1.msra.mxu0 0.0
        %4456 = vmatprep.subr.mxu0 0.0
        %4457 = vmatpush1.msra.mxu0 0.0
        %4458 = vmatprep.subr.mxu0 0.0
        %4459 = vmatpush1.msra.mxu0 0.0
        %4460 = vmatprep.subr.mxu0 0.0
        %4461 = vmatpush1.msra.mxu0 0.0
        %4462 = vmatprep.subr.mxu0 0.0
        %4463 = vmatpush1.msra.mxu0 0.0
        %4464 = vmatprep.subr.mxu0 0.0
        %4465 = vmatpush1.msra.mxu0 0.0
        %4466 = vmatprep.subr.mxu0 0.0
        %4467 = vmatpush1.msra.mxu0 0.0
        %4468 = vmatprep.subr.mxu0 0.0
        %4469 = vmatpush1.msra.mxu0 0.0
        %4470 = vmatprep.mubr.f32.mxu0 0.0
        %v4471 = vand.u32 %v4168, 4294901760
        %v4472 = vsub.f32 %v4168, %v4471
        %v4473 = vand.u32 %v4472, 4294901760
        %4474 = vmatmul.mubr.f32.gmra.mrb[0].mxu0 %v4473
        %v4475 = vpop.f32.mrb[0].mxu0
        %v4476 = vadd.f32 %v4401, %v4475
        %v4477 = vpop.f32.mrb[0].mxu0
        %4478 = vdwg.mxu0
        %4479 = vmatprep.subr.mxu0 0.0
        %v4480 = vand.u32 %v4158, 4294901760
        %v4481 = vsub.f32 %v4158, %v4480
        %v4482 = vand.u32 %v4481, 4294901760
        %4483 = vmatpush1.msra.mxu0 %v4482
        %4484 = vmatprep.subr.mxu0 0.0
        %v4485 = vand.u32 %v4159, 4294901760
        %v4486 = vsub.f32 %v4159, %v4485
        %v4487 = vand.u32 %v4486, 4294901760
        %4488 = vmatpush1.msra.mxu0 %v4487
        %4489 = vmatprep.subr.mxu0 0.0
        %4490 = vmatpush1.msra.mxu0 0.0
        %4491 = vmatprep.subr.mxu0 0.0
        %4492 = vmatpush1.msra.mxu0 0.0
        %4493 = vmatprep.subr.mxu0 0.0
        %4494 = vmatpush1.msra.mxu0 0.0
        %4495 = vmatprep.subr.mxu0 0.0
        %4496 = vmatpush1.msra.mxu0 0.0
        %4497 = vmatprep.subr.mxu0 0.0
        %4498 = vmatpush1.msra.mxu0 0.0
        %4499 = vmatprep.subr.mxu0 0.0
        %4500 = vmatpush1.msra.mxu0 0.0
        %4501 = vmatprep.subr.mxu0 0.0
        %4502 = vmatpush1.msra.mxu0 0.0
        %4503 = vmatprep.subr.mxu0 0.0
        %4504 = vmatpush1.msra.mxu0 0.0
        %4505 = vmatprep.subr.mxu0 0.0
        %4506 = vmatpush1.msra.mxu0 0.0
        %4507 = vmatprep.subr.mxu0 0.0
        %4508 = vmatpush1.msra.mxu0 0.0
        %4509 = vmatprep.subr.mxu0 0.0
        %4510 = vmatpush1.msra.mxu0 0.0
        %4511 = vmatprep.subr.mxu0 0.0
        %4512 = vmatpush1.msra.mxu0 0.0
        %4513 = vmatprep.subr.mxu0 0.0
        %4514 = vmatpush1.msra.mxu0 0.0
        %4515 = vmatprep.subr.mxu0 0.0
        %4516 = vmatpush1.msra.mxu0 0.0
        %4517 = vmatprep.subr.mxu0 0.0
        %4518 = vmatpush1.msra.mxu0 0.0
        %4519 = vmatprep.subr.mxu0 0.0
        %4520 = vmatpush1.msra.mxu0 0.0
        %4521 = vmatprep.subr.mxu0 0.0
        %4522 = vmatpush1.msra.mxu0 0.0
        %4523 = vmatprep.subr.mxu0 0.0
        %4524 = vmatpush1.msra.mxu0 0.0
        %4525 = vmatprep.subr.mxu0 0.0
        %4526 = vmatpush1.msra.mxu0 0.0
        %4527 = vmatprep.subr.mxu0 0.0
        %4528 = vmatpush1.msra.mxu0 0.0
        %4529 = vmatprep.subr.mxu0 0.0
        %4530 = vmatpush1.msra.mxu0 0.0
        %4531 = vmatprep.subr.mxu0 0.0
        %4532 = vmatpush1.msra.mxu0 0.0
        %4533 = vmatprep.subr.mxu0 0.0
        %4534 = vmatpush1.msra.mxu0 0.0
        %4535 = vmatprep.subr.mxu0 0.0
        %4536 = vmatpush1.msra.mxu0 0.0
        %4537 = vmatprep.subr.mxu0 0.0
        %4538 = vmatpush1.msra.mxu0 0.0
        %4539 = vmatprep.subr.mxu0 0.0
        %4540 = vmatpush1.msra.mxu0 0.0
        %4541 = vmatprep.subr.mxu0 0.0
        %4542 = vmatpush1.msra.mxu0 0.0
        %4543 = vmatprep.subr.mxu0 0.0
        %4544 = vmatpush1.msra.mxu0 0.0
        %4545 = vmatprep.subr.mxu0 0.0
        %4546 = vmatpush1.msra.mxu0 0.0
        %4547 = vmatprep.subr.mxu0 0.0
        %4548 = vmatpush1.msra.mxu0 0.0
        %4549 = vmatprep.mubr.f32.mxu0 0.0
        %v4550 = vand.u32 %v4168, 4294901760
        %4551 = vmatmul.mubr.f32.gmra.mrb[0].mxu0 %v4550
        %v4552 = vpop.f32.mrb[0].mxu0
        %v4553 = vadd.f32 %v4476, %v4552
        %v4554 = vpop.f32.mrb[0].mxu0
        %4555 = vdwg.mxu0
        %4556 = vmatprep.subr.mxu0 0.0
        %v4557 = vand.u32 %v4158, 4294901760
        %4558 = vmatpush1.msra.mxu0 %v4557
        %4559 = vmatprep.subr.mxu0 0.0
        %v4560 = vand.u32 %v4159, 4294901760
        %4561 = vmatpush1.msra.mxu0 %v4560
        %4562 = vmatprep.subr.mxu0 0.0
        %4563 = vmatpush1.msra.mxu0 0.0
        %4564 = vmatprep.subr.mxu0 0.0
        %4565 = vmatpush1.msra.mxu0 0.0
        %4566 = vmatprep.subr.mxu0 0.0
        %4567 = vmatpush1.msra.mxu0 0.0
        %4568 = vmatprep.subr.mxu0 0.0
        %4569 = vmatpush1.msra.mxu0 0.0
        %4570 = vmatprep.subr.mxu0 0.0
        %4571 = vmatpush1.msra.mxu0 0.0
        %4572 = vmatprep.subr.mxu0 0.0
        %4573 = vmatpush1.msra.mxu0 0.0
        %4574 = vmatprep.subr.mxu0 0.0
        %4575 = vmatpush1.msra.mxu0 0.0
        %4576 = vmatprep.subr.mxu0 0.0
        %4577 = vmatpush1.msra.mxu0 0.0
        %4578 = vmatprep.subr.mxu0 0.0
        %4579 = vmatpush1.msra.mxu0 0.0
        %4580 = vmatprep.subr.mxu0 0.0
        %4581 = vmatpush1.msra.mxu0 0.0
        %4582 = vmatprep.subr.mxu0 0.0
        %4583 = vmatpush1.msra.mxu0 0.0
        %4584 = vmatprep.subr.mxu0 0.0
        %4585 = vmatpush1.msra.mxu0 0.0
        %4586 = vmatprep.subr.mxu0 0.0
        %4587 = vmatpush1.msra.mxu0 0.0
        %4588 = vmatprep.subr.mxu0 0.0
        %4589 = vmatpush1.msra.mxu0 0.0
        %4590 = vmatprep.subr.mxu0 0.0
        %4591 = vmatpush1.msra.mxu0 0.0
        %4592 = vmatprep.subr.mxu0 0.0
        %4593 = vmatpush1.msra.mxu0 0.0
        %4594 = vmatprep.subr.mxu0 0.0
        %4595 = vmatpush1.msra.mxu0 0.0
        %4596 = vmatprep.subr.mxu0 0.0
        %4597 = vmatpush1.msra.mxu0 0.0
        %4598 = vmatprep.subr.mxu0 0.0
        %4599 = vmatpush1.msra.mxu0 0.0
        %4600 = vmatprep.subr.mxu0 0.0
        %4601 = vmatpush1.msra.mxu0 0.0
        %4602 = vmatprep.subr.mxu0 0.0
        %4603 = vmatpush1.msra.mxu0 0.0
        %4604 = vmatprep.subr.mxu0 0.0
        %4605 = vmatpush1.msra.mxu0 0.0
        %4606 = vmatprep.subr.mxu0 0.0
        %4607 = vmatpush1.msra.mxu0 0.0
        %4608 = vmatprep.subr.mxu0 0.0
        %4609 = vmatpush1.msra.mxu0 0.0
        %4610 = vmatprep.subr.mxu0 0.0
        %4611 = vmatpush1.msra.mxu0 0.0
        %4612 = vmatprep.subr.mxu0 0.0
        %4613 = vmatpush1.msra.mxu0 0.0
        %4614 = vmatprep.subr.mxu0 0.0
        %4615 = vmatpush1.msra.mxu0 0.0
        %4616 = vmatprep.subr.mxu0 0.0
        %4617 = vmatpush1.msra.mxu0 0.0
        %4618 = vmatprep.subr.mxu0 0.0
        %4619 = vmatpush1.msra.mxu0 0.0
        %4620 = vmatprep.subr.mxu0 0.0
        %4621 = vmatpush1.msra.mxu0 0.0
        %4622 = vmatprep.mubr.f32.mxu0 0.0
        %v4623 = vand.u32 %v4168, 4294901760
        %4624 = vmatmul.mubr.f32.gmra.mrb[0].mxu0 %v4623
        %v4625 = vpop.f32.mrb[0].mxu0
        %v4626 = vadd.f32 %v4553, %v4625
        %v4627 = vpop.f32.mrb[0].mxu0
        %4628 = vdwg.mxu0
        %v4629 = vmax.f32 %v4626, 0.0
        %v4630 = vld [vmem:[#allocation8] sm:$0xff]
        %v4631 = vld [vmem:[#allocation8 + $0x8] sm:$0xff]
        %v4633 = vsel %vm736, %v4630, 0
        %v4636 = vsel %vm736, %v4631, 0
        %4638 = vmatprep.subr.mxu0 0.0
        %v4639 = vand.u32 %v4629, 4294901760
        %4640 = vmatpush1.msra.mxu0 %v4639
        %4641 = vmatprep.subr.mxu0 0.0
        %4642 = vmatpush1.msra.mxu0 0.0
        %4643 = vmatprep.subr.mxu0 0.0
        %4644 = vmatpush1.msra.mxu0 0.0
        %4645 = vmatprep.subr.mxu0 0.0
        %4646 = vmatpush1.msra.mxu0 0.0
        %4647 = vmatprep.subr.mxu0 0.0
        %4648 = vmatpush1.msra.mxu0 0.0
        %4649 = vmatprep.subr.mxu0 0.0
        %4650 = vmatpush1.msra.mxu0 0.0
        %4651 = vmatprep.subr.mxu0 0.0
        %4652 = vmatpush1.msra.mxu0 0.0
        %4653 = vmatprep.subr.mxu0 0.0
        %4654 = vmatpush1.msra.mxu0 0.0
        %4655 = vmatprep.subr.mxu0 0.0
        %4656 = vmatpush1.msra.mxu0 0.0
        %4657 = vmatprep.subr.mxu0 0.0
        %4658 = vmatpush1.msra.mxu0 0.0
        %4659 = vmatprep.subr.mxu0 0.0
        %4660 = vmatpush1.msra.mxu0 0.0
        %4661 = vmatprep.subr.mxu0 0.0
        %4662 = vmatpush1.msra.mxu0 0.0
        %4663 = vmatprep.subr.mxu0 0.0
        %4664 = vmatpush1.msra.mxu0 0.0
        %4665 = vmatprep.subr.mxu0 0.0
        %4666 = vmatpush1.msra.mxu0 0.0
        %4667 = vmatprep.subr.mxu0 0.0
        %4668 = vmatpush1.msra.mxu0 0.0
        %4669 = vmatprep.subr.mxu0 0.0
        %4670 = vmatpush1.msra.mxu0 0.0
        %4671 = vmatprep.subr.mxu0 0.0
        %4672 = vmatpush1.msra.mxu0 0.0
        %4673 = vmatprep.subr.mxu0 0.0
        %4674 = vmatpush1.msra.mxu0 0.0
        %4675 = vmatprep.subr.mxu0 0.0
        %4676 = vmatpush1.msra.mxu0 0.0
        %4677 = vmatprep.subr.mxu0 0.0
        %4678 = vmatpush1.msra.mxu0 0.0
        %4679 = vmatprep.subr.mxu0 0.0
        %4680 = vmatpush1.msra.mxu0 0.0
        %4681 = vmatprep.subr.mxu0 0.0
        %4682 = vmatpush1.msra.mxu0 0.0
        %4683 = vmatprep.subr.mxu0 0.0
        %4684 = vmatpush1.msra.mxu0 0.0
        %4685 = vmatprep.subr.mxu0 0.0
        %4686 = vmatpush1.msra.mxu0 0.0
        %4687 = vmatprep.subr.mxu0 0.0
        %4688 = vmatpush1.msra.mxu0 0.0
        %4689 = vmatprep.subr.mxu0 0.0
        %4690 = vmatpush1.msra.mxu0 0.0
        %4691 = vmatprep.subr.mxu0 0.0
        %4692 = vmatpush1.msra.mxu0 0.0
        %4693 = vmatprep.subr.mxu0 0.0
        %4694 = vmatpush1.msra.mxu0 0.0
        %4695 = vmatprep.subr.mxu0 0.0
        %4696 = vmatpush1.msra.mxu0 0.0
        %4697 = vmatprep.subr.mxu0 0.0
        %4698 = vmatpush1.msra.mxu0 0.0
        %4699 = vmatprep.subr.mxu0 0.0
        %4700 = vmatpush1.msra.mxu0 0.0
        %4701 = vmatprep.subr.mxu0 0.0
        %4702 = vmatpush1.msra.mxu0 0.0
        %4703 = vmatprep.mubr.f32.mxu0 0.0
        %v4704 = vand.u32 %v4633, 4294901760
        %v4705 = vsub.f32 %v4633, %v4704
        %v4706 = vand.u32 %v4705, 4294901760
        %v4707 = vsub.f32 %v4705, %v4706
        %v4708 = vand.u32 %v4707, 4294901760
        %4709 = vmatmul.mubr.f32.gmra.mrb[0].mxu0 %v4708
        %v4710 = vpop.f32.mrb[0].mxu0
        %v4711 = vadd.f32 0.0, %v4710
        %v4712 = vpop.f32.mrb[0].mxu0
        %4713 = vmatprep.mubr.f32.mxu0 0.0
        %v4714 = vand.u32 %v4636, 4294901760
        %v4715 = vsub.f32 %v4636, %v4714
        %v4716 = vand.u32 %v4715, 4294901760
        %v4717 = vsub.f32 %v4715, %v4716
        %v4718 = vand.u32 %v4717, 4294901760
        %4719 = vmatmul.mubr.f32.gmra.mrb[0].mxu0 %v4718
        %v4720 = vpop.f32.mrb[0].mxu0
        %v4721 = vadd.f32 0.0, %v4720
        %v4722 = vpop.f32.mrb[0].mxu0
        %4723 = vdwg.mxu0
        %4724 = vmatprep.subr.mxu0 0.0
        %v4725 = vand.u32 %v4629, 4294901760
        %v4726 = vsub.f32 %v4629, %v4725
        %v4727 = vand.u32 %v4726, 4294901760
        %v4728 = vsub.f32 %v4726, %v4727
        %v4729 = vand.u32 %v4728, 4294901760
        %4730 = vmatpush1.msra.mxu0 %v4729
        %4731 = vmatprep.subr.mxu0 0.0
        %4732 = vmatpush1.msra.mxu0 0.0
        %4733 = vmatprep.subr.mxu0 0.0
        %4734 = vmatpush1.msra.mxu0 0.0
        %4735 = vmatprep.subr.mxu0 0.0
        %4736 = vmatpush1.msra.mxu0 0.0
        %4737 = vmatprep.subr.mxu0 0.0
        %4738 = vmatpush1.msra.mxu0 0.0
        %4739 = vmatprep.subr.mxu0 0.0
        %4740 = vmatpush1.msra.mxu0 0.0
        %4741 = vmatprep.subr.mxu0 0.0
        %4742 = vmatpush1.msra.mxu0 0.0
        %4743 = vmatprep.subr.mxu0 0.0
        %4744 = vmatpush1.msra.mxu0 0.0
        %4745 = vmatprep.subr.mxu0 0.0
        %4746 = vmatpush1.msra.mxu0 0.0
        %4747 = vmatprep.subr.mxu0 0.0
        %4748 = vmatpush1.msra.mxu0 0.0
        %4749 = vmatprep.subr.mxu0 0.0
        %4750 = vmatpush1.msra.mxu0 0.0
        %4751 = vmatprep.subr.mxu0 0.0
        %4752 = vmatpush1.msra.mxu0 0.0
        %4753 = vmatprep.subr.mxu0 0.0
        %4754 = vmatpush1.msra.mxu0 0.0
        %4755 = vmatprep.subr.mxu0 0.0
        %4756 = vmatpush1.msra.mxu0 0.0
        %4757 = vmatprep.subr.mxu0 0.0
        %4758 = vmatpush1.msra.mxu0 0.0
        %4759 = vmatprep.subr.mxu0 0.0
        %4760 = vmatpush1.msra.mxu0 0.0
        %4761 = vmatprep.subr.mxu0 0.0
        %4762 = vmatpush1.msra.mxu0 0.0
        %4763 = vmatprep.subr.mxu0 0.0
        %4764 = vmatpush1.msra.mxu0 0.0
        %4765 = vmatprep.subr.mxu0 0.0
        %4766 = vmatpush1.msra.mxu0 0.0
        %4767 = vmatprep.subr.mxu0 0.0
        %4768 = vmatpush1.msra.mxu0 0.0
        %4769 = vmatprep.subr.mxu0 0.0
        %4770 = vmatpush1.msra.mxu0 0.0
        %4771 = vmatprep.subr.mxu0 0.0
        %4772 = vmatpush1.msra.mxu0 0.0
        %4773 = vmatprep.subr.mxu0 0.0
        %4774 = vmatpush1.msra.mxu0 0.0
        %4775 = vmatprep.subr.mxu0 0.0
        %4776 = vmatpush1.msra.mxu0 0.0
        %4777 = vmatprep.subr.mxu0 0.0
        %4778 = vmatpush1.msra.mxu0 0.0
        %4779 = vmatprep.subr.mxu0 0.0
        %4780 = vmatpush1.msra.mxu0 0.0
        %4781 = vmatprep.subr.mxu0 0.0
        %4782 = vmatpush1.msra.mxu0 0.0
        %4783 = vmatprep.subr.mxu0 0.0
        %4784 = vmatpush1.msra.mxu0 0.0
        %4785 = vmatprep.subr.mxu0 0.0
        %4786 = vmatpush1.msra.mxu0 0.0
        %4787 = vmatprep.subr.mxu0 0.0
        %4788 = vmatpush1.msra.mxu0 0.0
        %4789 = vmatprep.subr.mxu0 0.0
        %4790 = vmatpush1.msra.mxu0 0.0
        %4791 = vmatprep.subr.mxu0 0.0
        %4792 = vmatpush1.msra.mxu0 0.0
        %4793 = vmatprep.mubr.f32.mxu0 0.0
        %v4794 = vand.u32 %v4633, 4294901760
        %4795 = vmatmul.mubr.f32.gmra.mrb[0].mxu0 %v4794
        %v4796 = vpop.f32.mrb[0].mxu0
        %v4797 = vadd.f32 %v4711, %v4796
        %v4798 = vpop.f32.mrb[0].mxu0
        %4799 = vmatprep.mubr.f32.mxu0 0.0
        %v4800 = vand.u32 %v4636, 4294901760
        %4801 = vmatmul.mubr.f32.gmra.mrb[0].mxu0 %v4800
        %v4802 = vpop.f32.mrb[0].mxu0
        %v4803 = vadd.f32 %v4721, %v4802
        %v4804 = vpop.f32.mrb[0].mxu0
        %4805 = vdwg.mxu0
        %4806 = vmatprep.subr.mxu0 0.0
        %v4807 = vand.u32 %v4629, 4294901760
        %v4808 = vsub.f32 %v4629, %v4807
        %4809 = vmatpush1.msra.mxu0 %v4808
        %4810 = vmatprep.subr.mxu0 0.0
        %4811 = vmatpush1.msra.mxu0 0.0
        %4812 = vmatprep.subr.mxu0 0.0
        %4813 = vmatpush1.msra.mxu0 0.0
        %4814 = vmatprep.subr.mxu0 0.0
        %4815 = vmatpush1.msra.mxu0 0.0
        %4816 = vmatprep.subr.mxu0 0.0
        %4817 = vmatpush1.msra.mxu0 0.0
        %4818 = vmatprep.subr.mxu0 0.0
        %4819 = vmatpush1.msra.mxu0 0.0
        %4820 = vmatprep.subr.mxu0 0.0
        %4821 = vmatpush1.msra.mxu0 0.0
        %4822 = vmatprep.subr.mxu0 0.0
        %4823 = vmatpush1.msra.mxu0 0.0
        %4824 = vmatprep.subr.mxu0 0.0
        %4825 = vmatpush1.msra.mxu0 0.0
        %4826 = vmatprep.subr.mxu0 0.0
        %4827 = vmatpush1.msra.mxu0 0.0
        %4828 = vmatprep.subr.mxu0 0.0
        %4829 = vmatpush1.msra.mxu0 0.0
        %4830 = vmatprep.subr.mxu0 0.0
        %4831 = vmatpush1.msra.mxu0 0.0
        %4832 = vmatprep.subr.mxu0 0.0
        %4833 = vmatpush1.msra.mxu0 0.0
        %4834 = vmatprep.subr.mxu0 0.0
        %4835 = vmatpush1.msra.mxu0 0.0
        %4836 = vmatprep.subr.mxu0 0.0
        %4837 = vmatpush1.msra.mxu0 0.0
        %4838 = vmatprep.subr.mxu0 0.0
        %4839 = vmatpush1.msra.mxu0 0.0
        %4840 = vmatprep.subr.mxu0 0.0
        %4841 = vmatpush1.msra.mxu0 0.0
        %4842 = vmatprep.subr.mxu0 0.0
        %4843 = vmatpush1.msra.mxu0 0.0
        %4844 = vmatprep.subr.mxu0 0.0
        %4845 = vmatpush1.msra.mxu0 0.0
        %4846 = vmatprep.subr.mxu0 0.0
        %4847 = vmatpush1.msra.mxu0 0.0
        %4848 = vmatprep.subr.mxu0 0.0
        %4849 = vmatpush1.msra.mxu0 0.0
        %4850 = vmatprep.subr.mxu0 0.0
        %4851 = vmatpush1.msra.mxu0 0.0
        %4852 = vmatprep.subr.mxu0 0.0
        %4853 = vmatpush1.msra.mxu0 0.0
        %4854 = vmatprep.subr.mxu0 0.0
        %4855 = vmatpush1.msra.mxu0 0.0
        %4856 = vmatprep.subr.mxu0 0.0
        %4857 = vmatpush1.msra.mxu0 0.0
        %4858 = vmatprep.subr.mxu0 0.0
        %4859 = vmatpush1.msra.mxu0 0.0
        %4860 = vmatprep.subr.mxu0 0.0
        %4861 = vmatpush1.msra.mxu0 0.0
        %4862 = vmatprep.subr.mxu0 0.0
        %4863 = vmatpush1.msra.mxu0 0.0
        %4864 = vmatprep.subr.mxu0 0.0
        %4865 = vmatpush1.msra.mxu0 0.0
        %4866 = vmatprep.subr.mxu0 0.0
        %4867 = vmatpush1.msra.mxu0 0.0
        %4868 = vmatprep.subr.mxu0 0.0
        %4869 = vmatpush1.msra.mxu0 0.0
        %4870 = vmatprep.subr.mxu0 0.0
        %4871 = vmatpush1.msra.mxu0 0.0
        %4872 = vmatprep.mubr.f32.mxu0 0.0
        %v4873 = vand.u32 %v4633, 4294901760
        %v4874 = vsub.f32 %v4633, %v4873
        %4875 = vmatmul.mubr.f32.gmra.mrb[0].mxu0 %v4874
        %v4876 = vpop.f32.mrb[0].mxu0
        %v4877 = vadd.f32 %v4797, %v4876
        %v4878 = vpop.f32.mrb[0].mxu0
        %4879 = vmatprep.mubr.f32.mxu0 0.0
        %v4880 = vand.u32 %v4636, 4294901760
        %v4881 = vsub.f32 %v4636, %v4880
        %4882 = vmatmul.mubr.f32.gmra.mrb[0].mxu0 %v4881
        %v4883 = vpop.f32.mrb[0].mxu0
        %v4884 = vadd.f32 %v4803, %v4883
        %v4885 = vpop.f32.mrb[0].mxu0
        %4886 = vdwg.mxu0
        %4887 = vmatprep.subr.mxu0 0.0
        %v4888 = vand.u32 %v4629, 4294901760
        %4889 = vmatpush1.msra.mxu0 %v4888
        %4890 = vmatprep.subr.mxu0 0.0
        %4891 = vmatpush1.msra.mxu0 0.0
        %4892 = vmatprep.subr.mxu0 0.0
        %4893 = vmatpush1.msra.mxu0 0.0
        %4894 = vmatprep.subr.mxu0 0.0
        %4895 = vmatpush1.msra.mxu0 0.0
        %4896 = vmatprep.subr.mxu0 0.0
        %4897 = vmatpush1.msra.mxu0 0.0
        %4898 = vmatprep.subr.mxu0 0.0
        %4899 = vmatpush1.msra.mxu0 0.0
        %4900 = vmatprep.subr.mxu0 0.0
        %4901 = vmatpush1.msra.mxu0 0.0
        %4902 = vmatprep.subr.mxu0 0.0
        %4903 = vmatpush1.msra.mxu0 0.0
        %4904 = vmatprep.subr.mxu0 0.0
        %4905 = vmatpush1.msra.mxu0 0.0
        %4906 = vmatprep.subr.mxu0 0.0
        %4907 = vmatpush1.msra.mxu0 0.0
        %4908 = vmatprep.subr.mxu0 0.0
        %4909 = vmatpush1.msra.mxu0 0.0
        %4910 = vmatprep.subr.mxu0 0.0
        %4911 = vmatpush1.msra.mxu0 0.0
        %4912 = vmatprep.subr.mxu0 0.0
        %4913 = vmatpush1.msra.mxu0 0.0
        %4914 = vmatprep.subr.mxu0 0.0
        %4915 = vmatpush1.msra.mxu0 0.0
        %4916 = vmatprep.subr.mxu0 0.0
        %4917 = vmatpush1.msra.mxu0 0.0
        %4918 = vmatprep.subr.mxu0 0.0
        %4919 = vmatpush1.msra.mxu0 0.0
        %4920 = vmatprep.subr.mxu0 0.0
        %4921 = vmatpush1.msra.mxu0 0.0
        %4922 = vmatprep.subr.mxu0 0.0
        %4923 = vmatpush1.msra.mxu0 0.0
        %4924 = vmatprep.subr.mxu0 0.0
        %4925 = vmatpush1.msra.mxu0 0.0
        %4926 = vmatprep.subr.mxu0 0.0
        %4927 = vmatpush1.msra.mxu0 0.0
        %4928 = vmatprep.subr.mxu0 0.0
        %4929 = vmatpush1.msra.mxu0 0.0
        %4930 = vmatprep.subr.mxu0 0.0
        %4931 = vmatpush1.msra.mxu0 0.0
        %4932 = vmatprep.subr.mxu0 0.0
        %4933 = vmatpush1.msra.mxu0 0.0
        %4934 = vmatprep.subr.mxu0 0.0
        %4935 = vmatpush1.msra.mxu0 0.0
        %4936 = vmatprep.subr.mxu0 0.0
        %4937 = vmatpush1.msra.mxu0 0.0
        %4938 = vmatprep.subr.mxu0 0.0
        %4939 = vmatpush1.msra.mxu0 0.0
        %4940 = vmatprep.subr.mxu0 0.0
        %4941 = vmatpush1.msra.mxu0 0.0
        %4942 = vmatprep.subr.mxu0 0.0
        %4943 = vmatpush1.msra.mxu0 0.0
        %4944 = vmatprep.subr.mxu0 0.0
        %4945 = vmatpush1.msra.mxu0 0.0
        %4946 = vmatprep.subr.mxu0 0.0
        %4947 = vmatpush1.msra.mxu0 0.0
        %4948 = vmatprep.subr.mxu0 0.0
        %4949 = vmatpush1.msra.mxu0 0.0
        %4950 = vmatprep.subr.mxu0 0.0
        %4951 = vmatpush1.msra.mxu0 0.0
        %4952 = vmatprep.mubr.f32.mxu0 0.0
        %v4953 = vand.u32 %v4633, 4294901760
        %v4954 = vsub.f32 %v4633, %v4953
        %v4955 = vand.u32 %v4954, 4294901760
        %4956 = vmatmul.mubr.f32.gmra.mrb[0].mxu0 %v4955
        %v4957 = vpop.f32.mrb[0].mxu0
        %v4958 = vadd.f32 %v4877, %v4957
        %v4959 = vpop.f32.mrb[0].mxu0
        %4960 = vmatprep.mubr.f32.mxu0 0.0
        %v4961 = vand.u32 %v4636, 4294901760
        %v4962 = vsub.f32 %v4636, %v4961
        %v4963 = vand.u32 %v4962, 4294901760
        %4964 = vmatmul.mubr.f32.gmra.mrb[0].mxu0 %v4963
        %v4965 = vpop.f32.mrb[0].mxu0
        %v4966 = vadd.f32 %v4884, %v4965
        %v4967 = vpop.f32.mrb[0].mxu0
        %4968 = vdwg.mxu0
        %4969 = vmatprep.subr.mxu0 0.0
        %v4970 = vand.u32 %v4629, 4294901760
        %v4971 = vsub.f32 %v4629, %v4970
        %v4972 = vand.u32 %v4971, 4294901760
        %4973 = vmatpush1.msra.mxu0 %v4972
        %4974 = vmatprep.subr.mxu0 0.0
        %4975 = vmatpush1.msra.mxu0 0.0
        %4976 = vmatprep.subr.mxu0 0.0
        %4977 = vmatpush1.msra.mxu0 0.0
        %4978 = vmatprep.subr.mxu0 0.0
        %4979 = vmatpush1.msra.mxu0 0.0
        %4980 = vmatprep.subr.mxu0 0.0
        %4981 = vmatpush1.msra.mxu0 0.0
        %4982 = vmatprep.subr.mxu0 0.0
        %4983 = vmatpush1.msra.mxu0 0.0
        %4984 = vmatprep.subr.mxu0 0.0
        %4985 = vmatpush1.msra.mxu0 0.0
        %4986 = vmatprep.subr.mxu0 0.0
        %4987 = vmatpush1.msra.mxu0 0.0
        %4988 = vmatprep.subr.mxu0 0.0
        %4989 = vmatpush1.msra.mxu0 0.0
        %4990 = vmatprep.subr.mxu0 0.0
        %4991 = vmatpush1.msra.mxu0 0.0
        %4992 = vmatprep.subr.mxu0 0.0
        %4993 = vmatpush1.msra.mxu0 0.0
        %4994 = vmatprep.subr.mxu0 0.0
        %4995 = vmatpush1.msra.mxu0 0.0
        %4996 = vmatprep.subr.mxu0 0.0
        %4997 = vmatpush1.msra.mxu0 0.0
        %4998 = vmatprep.subr.mxu0 0.0
        %4999 = vmatpush1.msra.mxu0 0.0
        %5000 = vmatprep.subr.mxu0 0.0
        %5001 = vmatpush1.msra.mxu0 0.0
        %5002 = vmatprep.subr.mxu0 0.0
        %5003 = vmatpush1.msra.mxu0 0.0
        %5004 = vmatprep.subr.mxu0 0.0
        %5005 = vmatpush1.msra.mxu0 0.0
        %5006 = vmatprep.subr.mxu0 0.0
        %5007 = vmatpush1.msra.mxu0 0.0
        %5008 = vmatprep.subr.mxu0 0.0
        %5009 = vmatpush1.msra.mxu0 0.0
        %5010 = vmatprep.subr.mxu0 0.0
        %5011 = vmatpush1.msra.mxu0 0.0
        %5012 = vmatprep.subr.mxu0 0.0
        %5013 = vmatpush1.msra.mxu0 0.0
        %5014 = vmatprep.subr.mxu0 0.0
        %5015 = vmatpush1.msra.mxu0 0.0
        %5016 = vmatprep.subr.mxu0 0.0
        %5017 = vmatpush1.msra.mxu0 0.0
        %5018 = vmatprep.subr.mxu0 0.0
        %5019 = vmatpush1.msra.mxu0 0.0
        %5020 = vmatprep.subr.mxu0 0.0
        %5021 = vmatpush1.msra.mxu0 0.0
        %5022 = vmatprep.subr.mxu0 0.0
        %5023 = vmatpush1.msra.mxu0 0.0
        %5024 = vmatprep.subr.mxu0 0.0
        %5025 = vmatpush1.msra.mxu0 0.0
        %5026 = vmatprep.subr.mxu0 0.0
        %5027 = vmatpush1.msra.mxu0 0.0
        %5028 = vmatprep.subr.mxu0 0.0
        %5029 = vmatpush1.msra.mxu0 0.0
        %5030 = vmatprep.subr.mxu0 0.0
        %5031 = vmatpush1.msra.mxu0 0.0
        %5032 = vmatprep.subr.mxu0 0.0
        %5033 = vmatpush1.msra.mxu0 0.0
        %5034 = vmatprep.subr.mxu0 0.0
        %5035 = vmatpush1.msra.mxu0 0.0
        %5036 = vmatprep.mubr.f32.mxu0 0.0
        %v5037 = vand.u32 %v4633, 4294901760
        %5038 = vmatmul.mubr.f32.gmra.mrb[0].mxu0 %v5037
        %v5039 = vpop.f32.mrb[0].mxu0
        %v5040 = vadd.f32 %v4958, %v5039
        %v5041 = vpop.f32.mrb[0].mxu0
        %5042 = vmatprep.mubr.f32.mxu0 0.0
        %v5043 = vand.u32 %v4636, 4294901760
        %5044 = vmatmul.mubr.f32.gmra.mrb[0].mxu0 %v5043
        %v5045 = vpop.f32.mrb[0].mxu0
        %v5046 = vadd.f32 %v4966, %v5045
        %v5047 = vpop.f32.mrb[0].mxu0
        %5048 = vdwg.mxu0
        %5049 = vmatprep.subr.mxu0 0.0
        %v5050 = vand.u32 %v4629, 4294901760
        %5051 = vmatpush1.msra.mxu0 %v5050
        %5052 = vmatprep.subr.mxu0 0.0
        %5053 = vmatpush1.msra.mxu0 0.0
        %5054 = vmatprep.subr.mxu0 0.0
        %5055 = vmatpush1.msra.mxu0 0.0
        %5056 = vmatprep.subr.mxu0 0.0
        %5057 = vmatpush1.msra.mxu0 0.0
        %5058 = vmatprep.subr.mxu0 0.0
        %5059 = vmatpush1.msra.mxu0 0.0
        %5060 = vmatprep.subr.mxu0 0.0
        %5061 = vmatpush1.msra.mxu0 0.0
        %5062 = vmatprep.subr.mxu0 0.0
        %5063 = vmatpush1.msra.mxu0 0.0
        %5064 = vmatprep.subr.mxu0 0.0
        %5065 = vmatpush1.msra.mxu0 0.0
        %5066 = vmatprep.subr.mxu0 0.0
        %5067 = vmatpush1.msra.mxu0 0.0
        %5068 = vmatprep.subr.mxu0 0.0
        %5069 = vmatpush1.msra.mxu0 0.0
        %5070 = vmatprep.subr.mxu0 0.0
        %5071 = vmatpush1.msra.mxu0 0.0
        %5072 = vmatprep.subr.mxu0 0.0
        %5073 = vmatpush1.msra.mxu0 0.0
        %5074 = vmatprep.subr.mxu0 0.0
        %5075 = vmatpush1.msra.mxu0 0.0
        %5076 = vmatprep.subr.mxu0 0.0
        %5077 = vmatpush1.msra.mxu0 0.0
        %5078 = vmatprep.subr.mxu0 0.0
        %5079 = vmatpush1.msra.mxu0 0.0
        %5080 = vmatprep.subr.mxu0 0.0
        %5081 = vmatpush1.msra.mxu0 0.0
        %5082 = vmatprep.subr.mxu0 0.0
        %5083 = vmatpush1.msra.mxu0 0.0
        %5084 = vmatprep.subr.mxu0 0.0
        %5085 = vmatpush1.msra.mxu0 0.0
        %5086 = vmatprep.subr.mxu0 0.0
        %5087 = vmatpush1.msra.mxu0 0.0
        %5088 = vmatprep.subr.mxu0 0.0
        %5089 = vmatpush1.msra.mxu0 0.0
        %5090 = vmatprep.subr.mxu0 0.0
        %5091 = vmatpush1.msra.mxu0 0.0
        %5092 = vmatprep.subr.mxu0 0.0
        %5093 = vmatpush1.msra.mxu0 0.0
        %5094 = vmatprep.subr.mxu0 0.0
        %5095 = vmatpush1.msra.mxu0 0.0
        %5096 = vmatprep.subr.mxu0 0.0
        %5097 = vmatpush1.msra.mxu0 0.0
        %5098 = vmatprep.subr.mxu0 0.0
        %5099 = vmatpush1.msra.mxu0 0.0
        %5100 = vmatprep.subr.mxu0 0.0
        %5101 = vmatpush1.msra.mxu0 0.0
        %5102 = vmatprep.subr.mxu0 0.0
        %5103 = vmatpush1.msra.mxu0 0.0
        %5104 = vmatprep.subr.mxu0 0.0
        %5105 = vmatpush1.msra.mxu0 0.0
        %5106 = vmatprep.subr.mxu0 0.0
        %5107 = vmatpush1.msra.mxu0 0.0
        %5108 = vmatprep.subr.mxu0 0.0
        %5109 = vmatpush1.msra.mxu0 0.0
        %5110 = vmatprep.subr.mxu0 0.0
        %5111 = vmatpush1.msra.mxu0 0.0
        %5112 = vmatprep.subr.mxu0 0.0
        %5113 = vmatpush1.msra.mxu0 0.0
        %5114 = vmatprep.mubr.f32.mxu0 0.0
        %v5115 = vand.u32 %v4633, 4294901760
        %5116 = vmatmul.mubr.f32.gmra.mrb[0].mxu0 %v5115
        %v5117 = vpop.f32.mrb[0].mxu0
        %v5118 = vadd.f32 %v5040, %v5117
        %v5119 = vpop.f32.mrb[0].mxu0
        %5120 = vmatprep.mubr.f32.mxu0 0.0
        %v5121 = vand.u32 %v4636, 4294901760
        %5122 = vmatmul.mubr.f32.gmra.mrb[0].mxu0 %v5121
        %v5123 = vpop.f32.mrb[0].mxu0
        %v5124 = vadd.f32 %v5046, %v5123
        %v5125 = vpop.f32.mrb[0].mxu0
        %5126 = vdwg.mxu0
        %s5127 = scalar_lea.vmem %s257, 64 [#allocation10]
        %5128 = vst [vmem:[%s5127] sm:$0xff] %v5118
        %5129 = vst [vmem:[%s5127 + $0x8] sm:$0xff] %v5124
        %s5130 = scalar_lea.vmem %s221, 40 [#allocation2]
        %v5131 = vld [vmem:[%s5130] sm:$0xff]
        %v5132 = vld [vmem:[#allocation5] sm:$0xff]
        %v5133 = vld [vmem:[#allocation5 + $0x8] sm:$0xff]
        %v5134 = vld [vmem:[#allocation7] sm:$0x1]
        %v5136 = vlaneseq
        %v5137 = vshrl.u32 %v5136, 7
        %v5138 = vsub.s32 0, %v5137
        %v5139 = vrot.slane %v5134, %v5138
        %v5142 = vsel %vm270, %v5131, 0
        %5144 = vmatprep.subr.mxu0 0.0
        %v5145 = vand.u32 %v5132, 4294901760
        %5146 = vmatpush1.msra.mxu0 %v5145
        %5147 = vmatprep.subr.mxu0 0.0
        %v5148 = vand.u32 %v5133, 4294901760
        %5149 = vmatpush1.msra.mxu0 %v5148
        %5150 = vmatprep.subr.mxu0 0.0
        %5151 = vmatpush1.msra.mxu0 0.0
        %5152 = vmatprep.subr.mxu0 0.0
        %5153 = vmatpush1.msra.mxu0 0.0
        %5154 = vmatprep.subr.mxu0 0.0
        %5155 = vmatpush1.msra.mxu0 0.0
        %5156 = vmatprep.subr.mxu0 0.0
        %5157 = vmatpush1.msra.mxu0 0.0
        %5158 = vmatprep.subr.mxu0 0.0
        %5159 = vmatpush1.msra.mxu0 0.0
        %5160 = vmatprep.subr.mxu0 0.0
        %5161 = vmatpush1.msra.mxu0 0.0
        %5162 = vmatprep.subr.mxu0 0.0
        %5163 = vmatpush1.msra.mxu0 0.0
        %5164 = vmatprep.subr.mxu0 0.0
        %5165 = vmatpush1.msra.mxu0 0.0
        %5166 = vmatprep.subr.mxu0 0.0
        %5167 = vmatpush1.msra.mxu0 0.0
        %5168 = vmatprep.subr.mxu0 0.0
        %5169 = vmatpush1.msra.mxu0 0.0
        %5170 = vmatprep.subr.mxu0 0.0
        %5171 = vmatpush1.msra.mxu0 0.0
        %5172 = vmatprep.subr.mxu0 0.0
        %5173 = vmatpush1.msra.mxu0 0.0
        %5174 = vmatprep.subr.mxu0 0.0
        %5175 = vmatpush1.msra.mxu0 0.0
        %5176 = vmatprep.subr.mxu0 0.0
        %5177 = vmatpush1.msra.mxu0 0.0
        %5178 = vmatprep.subr.mxu0 0.0
        %5179 = vmatpush1.msra.mxu0 0.0
        %5180 = vmatprep.subr.mxu0 0.0
        %5181 = vmatpush1.msra.mxu0 0.0
        %5182 = vmatprep.subr.mxu0 0.0
        %5183 = vmatpush1.msra.mxu0 0.0
        %5184 = vmatprep.subr.mxu0 0.0
        %5185 = vmatpush1.msra.mxu0 0.0
        %5186 = vmatprep.subr.mxu0 0.0
        %5187 = vmatpush1.msra.mxu0 0.0
        %5188 = vmatprep.subr.mxu0 0.0
        %5189 = vmatpush1.msra.mxu0 0.0
        %5190 = vmatprep.subr.mxu0 0.0
        %5191 = vmatpush1.msra.mxu0 0.0
        %5192 = vmatprep.subr.mxu0 0.0
        %5193 = vmatpush1.msra.mxu0 0.0
        %5194 = vmatprep.subr.mxu0 0.0
        %5195 = vmatpush1.msra.mxu0 0.0
        %5196 = vmatprep.subr.mxu0 0.0
        %5197 = vmatpush1.msra.mxu0 0.0
        %5198 = vmatprep.subr.mxu0 0.0
        %5199 = vmatpush1.msra.mxu0 0.0
        %5200 = vmatprep.subr.mxu0 0.0
        %5201 = vmatpush1.msra.mxu0 0.0
        %5202 = vmatprep.subr.mxu0 0.0
        %5203 = vmatpush1.msra.mxu0 0.0
        %5204 = vmatprep.subr.mxu0 0.0
        %5205 = vmatpush1.msra.mxu0 0.0
        %5206 = vmatprep.subr.mxu0 0.0
        %5207 = vmatpush1.msra.mxu0 0.0
        %5208 = vmatprep.subr.mxu0 0.0
        %5209 = vmatpush1.msra.mxu0 0.0
        %5210 = vmatprep.mubr.f32.mxu0 0.0
        %v5211 = vand.u32 %v5142, 4294901760
        %v5212 = vsub.f32 %v5142, %v5211
        %v5213 = vand.u32 %v5212, 4294901760
        %v5214 = vsub.f32 %v5212, %v5213
        %v5215 = vand.u32 %v5214, 4294901760
        %5216 = vmatmul.mubr.f32.gmra.mrb[0].mxu0 %v5215
        %v5217 = vpop.f32.mrb[0].mxu0
        %v5218 = vadd.f32 %v5139, %v5217
        %v5219 = vpop.f32.mrb[0].mxu0
        %5220 = vdwg.mxu0
        %5221 = vmatprep.subr.mxu0 0.0
        %v5222 = vand.u32 %v5132, 4294901760
        %v5223 = vsub.f32 %v5132, %v5222
        %v5224 = vand.u32 %v5223, 4294901760
        %v5225 = vsub.f32 %v5223, %v5224
        %v5226 = vand.u32 %v5225, 4294901760
        %5227 = vmatpush1.msra.mxu0 %v5226
        %5228 = vmatprep.subr.mxu0 0.0
        %v5229 = vand.u32 %v5133, 4294901760
        %v5230 = vsub.f32 %v5133, %v5229
        %v5231 = vand.u32 %v5230, 4294901760
        %v5232 = vsub.f32 %v5230, %v5231
        %v5233 = vand.u32 %v5232, 4294901760
        %5234 = vmatpush1.msra.mxu0 %v5233
        %5235 = vmatprep.subr.mxu0 0.0
        %5236 = vmatpush1.msra.mxu0 0.0
        %5237 = vmatprep.subr.mxu0 0.0
        %5238 = vmatpush1.msra.mxu0 0.0
        %5239 = vmatprep.subr.mxu0 0.0
        %5240 = vmatpush1.msra.mxu0 0.0
        %5241 = vmatprep.subr.mxu0 0.0
        %5242 = vmatpush1.msra.mxu0 0.0
        %5243 = vmatprep.subr.mxu0 0.0
        %5244 = vmatpush1.msra.mxu0 0.0
        %5245 = vmatprep.subr.mxu0 0.0
        %5246 = vmatpush1.msra.mxu0 0.0
        %5247 = vmatprep.subr.mxu0 0.0
        %5248 = vmatpush1.msra.mxu0 0.0
        %5249 = vmatprep.subr.mxu0 0.0
        %5250 = vmatpush1.msra.mxu0 0.0
        %5251 = vmatprep.subr.mxu0 0.0
        %5252 = vmatpush1.msra.mxu0 0.0
        %5253 = vmatprep.subr.mxu0 0.0
        %5254 = vmatpush1.msra.mxu0 0.0
        %5255 = vmatprep.subr.mxu0 0.0
        %5256 = vmatpush1.msra.mxu0 0.0
        %5257 = vmatprep.subr.mxu0 0.0
        %5258 = vmatpush1.msra.mxu0 0.0
        %5259 = vmatprep.subr.mxu0 0.0
        %5260 = vmatpush1.msra.mxu0 0.0
        %5261 = vmatprep.subr.mxu0 0.0
        %5262 = vmatpush1.msra.mxu0 0.0
        %5263 = vmatprep.subr.mxu0 0.0
        %5264 = vmatpush1.msra.mxu0 0.0
        %5265 = vmatprep.subr.mxu0 0.0
        %5266 = vmatpush1.msra.mxu0 0.0
        %5267 = vmatprep.subr.mxu0 0.0
        %5268 = vmatpush1.msra.mxu0 0.0
        %5269 = vmatprep.subr.mxu0 0.0
        %5270 = vmatpush1.msra.mxu0 0.0
        %5271 = vmatprep.subr.mxu0 0.0
        %5272 = vmatpush1.msra.mxu0 0.0
        %5273 = vmatprep.subr.mxu0 0.0
        %5274 = vmatpush1.msra.mxu0 0.0
        %5275 = vmatprep.subr.mxu0 0.0
        %5276 = vmatpush1.msra.mxu0 0.0
        %5277 = vmatprep.subr.mxu0 0.0
        %5278 = vmatpush1.msra.mxu0 0.0
        %5279 = vmatprep.subr.mxu0 0.0
        %5280 = vmatpush1.msra.mxu0 0.0
        %5281 = vmatprep.subr.mxu0 0.0
        %5282 = vmatpush1.msra.mxu0 0.0
        %5283 = vmatprep.subr.mxu0 0.0
        %5284 = vmatpush1.msra.mxu0 0.0
        %5285 = vmatprep.subr.mxu0 0.0
        %5286 = vmatpush1.msra.mxu0 0.0
        %5287 = vmatprep.subr.mxu0 0.0
        %5288 = vmatpush1.msra.mxu0 0.0
        %5289 = vmatprep.subr.mxu0 0.0
        %5290 = vmatpush1.msra.mxu0 0.0
        %5291 = vmatprep.subr.mxu0 0.0
        %5292 = vmatpush1.msra.mxu0 0.0
        %5293 = vmatprep.subr.mxu0 0.0
        %5294 = vmatpush1.msra.mxu0 0.0
        %5295 = vmatprep.mubr.f32.mxu0 0.0
        %v5296 = vand.u32 %v5142, 4294901760
        %5297 = vmatmul.mubr.f32.gmra.mrb[0].mxu0 %v5296
        %v5298 = vpop.f32.mrb[0].mxu0
        %v5299 = vadd.f32 %v5218, %v5298
        %v5300 = vpop.f32.mrb[0].mxu0
        %5301 = vdwg.mxu0
        %5302 = vmatprep.subr.mxu0 0.0
        %v5303 = vand.u32 %v5132, 4294901760
        %v5304 = vsub.f32 %v5132, %v5303
        %5305 = vmatpush1.msra.mxu0 %v5304
        %5306 = vmatprep.subr.mxu0 0.0
        %v5307 = vand.u32 %v5133, 4294901760
        %v5308 = vsub.f32 %v5133, %v5307
        %5309 = vmatpush1.msra.mxu0 %v5308
        %5310 = vmatprep.subr.mxu0 0.0
        %5311 = vmatpush1.msra.mxu0 0.0
        %5312 = vmatprep.subr.mxu0 0.0
        %5313 = vmatpush1.msra.mxu0 0.0
        %5314 = vmatprep.subr.mxu0 0.0
        %5315 = vmatpush1.msra.mxu0 0.0
        %5316 = vmatprep.subr.mxu0 0.0
        %5317 = vmatpush1.msra.mxu0 0.0
        %5318 = vmatprep.subr.mxu0 0.0
        %5319 = vmatpush1.msra.mxu0 0.0
        %5320 = vmatprep.subr.mxu0 0.0
        %5321 = vmatpush1.msra.mxu0 0.0
        %5322 = vmatprep.subr.mxu0 0.0
        %5323 = vmatpush1.msra.mxu0 0.0
        %5324 = vmatprep.subr.mxu0 0.0
        %5325 = vmatpush1.msra.mxu0 0.0
        %5326 = vmatprep.subr.mxu0 0.0
        %5327 = vmatpush1.msra.mxu0 0.0
        %5328 = vmatprep.subr.mxu0 0.0
        %5329 = vmatpush1.msra.mxu0 0.0
        %5330 = vmatprep.subr.mxu0 0.0
        %5331 = vmatpush1.msra.mxu0 0.0
        %5332 = vmatprep.subr.mxu0 0.0
        %5333 = vmatpush1.msra.mxu0 0.0
        %5334 = vmatprep.subr.mxu0 0.0
        %5335 = vmatpush1.msra.mxu0 0.0
        %5336 = vmatprep.subr.mxu0 0.0
        %5337 = vmatpush1.msra.mxu0 0.0
        %5338 = vmatprep.subr.mxu0 0.0
        %5339 = vmatpush1.msra.mxu0 0.0
        %5340 = vmatprep.subr.mxu0 0.0
        %5341 = vmatpush1.msra.mxu0 0.0
        %5342 = vmatprep.subr.mxu0 0.0
        %5343 = vmatpush1.msra.mxu0 0.0
        %5344 = vmatprep.subr.mxu0 0.0
        %5345 = vmatpush1.msra.mxu0 0.0
        %5346 = vmatprep.subr.mxu0 0.0
        %5347 = vmatpush1.msra.mxu0 0.0
        %5348 = vmatprep.subr.mxu0 0.0
        %5349 = vmatpush1.msra.mxu0 0.0
        %5350 = vmatprep.subr.mxu0 0.0
        %5351 = vmatpush1.msra.mxu0 0.0
        %5352 = vmatprep.subr.mxu0 0.0
        %5353 = vmatpush1.msra.mxu0 0.0
        %5354 = vmatprep.subr.mxu0 0.0
        %5355 = vmatpush1.msra.mxu0 0.0
        %5356 = vmatprep.subr.mxu0 0.0
        %5357 = vmatpush1.msra.mxu0 0.0
        %5358 = vmatprep.subr.mxu0 0.0
        %5359 = vmatpush1.msra.mxu0 0.0
        %5360 = vmatprep.subr.mxu0 0.0
        %5361 = vmatpush1.msra.mxu0 0.0
        %5362 = vmatprep.subr.mxu0 0.0
        %5363 = vmatpush1.msra.mxu0 0.0
        %5364 = vmatprep.subr.mxu0 0.0
        %5365 = vmatpush1.msra.mxu0 0.0
        %5366 = vmatprep.subr.mxu0 0.0
        %5367 = vmatpush1.msra.mxu0 0.0
        %5368 = vmatprep.subr.mxu0 0.0
        %5369 = vmatpush1.msra.mxu0 0.0
        %5370 = vmatprep.mubr.f32.mxu0 0.0
        %v5371 = vand.u32 %v5142, 4294901760
        %v5372 = vsub.f32 %v5142, %v5371
        %5373 = vmatmul.mubr.f32.gmra.mrb[0].mxu0 %v5372
        %v5374 = vpop.f32.mrb[0].mxu0
        %v5375 = vadd.f32 %v5299, %v5374
        %v5376 = vpop.f32.mrb[0].mxu0
        %5377 = vdwg.mxu0
        %5378 = vmatprep.subr.mxu0 0.0
        %v5379 = vand.u32 %v5132, 4294901760
        %5380 = vmatpush1.msra.mxu0 %v5379
        %5381 = vmatprep.subr.mxu0 0.0
        %v5382 = vand.u32 %v5133, 4294901760
        %5383 = vmatpush1.msra.mxu0 %v5382
        %5384 = vmatprep.subr.mxu0 0.0
        %5385 = vmatpush1.msra.mxu0 0.0
        %5386 = vmatprep.subr.mxu0 0.0
        %5387 = vmatpush1.msra.mxu0 0.0
        %5388 = vmatprep.subr.mxu0 0.0
        %5389 = vmatpush1.msra.mxu0 0.0
        %5390 = vmatprep.subr.mxu0 0.0
        %5391 = vmatpush1.msra.mxu0 0.0
        %5392 = vmatprep.subr.mxu0 0.0
        %5393 = vmatpush1.msra.mxu0 0.0
        %5394 = vmatprep.subr.mxu0 0.0
        %5395 = vmatpush1.msra.mxu0 0.0
        %5396 = vmatprep.subr.mxu0 0.0
        %5397 = vmatpush1.msra.mxu0 0.0
        %5398 = vmatprep.subr.mxu0 0.0
        %5399 = vmatpush1.msra.mxu0 0.0
        %5400 = vmatprep.subr.mxu0 0.0
        %5401 = vmatpush1.msra.mxu0 0.0
        %5402 = vmatprep.subr.mxu0 0.0
        %5403 = vmatpush1.msra.mxu0 0.0
        %5404 = vmatprep.subr.mxu0 0.0
        %5405 = vmatpush1.msra.mxu0 0.0
        %5406 = vmatprep.subr.mxu0 0.0
        %5407 = vmatpush1.msra.mxu0 0.0
        %5408 = vmatprep.subr.mxu0 0.0
        %5409 = vmatpush1.msra.mxu0 0.0
        %5410 = vmatprep.subr.mxu0 0.0
        %5411 = vmatpush1.msra.mxu0 0.0
        %5412 = vmatprep.subr.mxu0 0.0
        %5413 = vmatpush1.msra.mxu0 0.0
        %5414 = vmatprep.subr.mxu0 0.0
        %5415 = vmatpush1.msra.mxu0 0.0
        %5416 = vmatprep.subr.mxu0 0.0
        %5417 = vmatpush1.msra.mxu0 0.0
        %5418 = vmatprep.subr.mxu0 0.0
        %5419 = vmatpush1.msra.mxu0 0.0
        %5420 = vmatprep.subr.mxu0 0.0
        %5421 = vmatpush1.msra.mxu0 0.0
        %5422 = vmatprep.subr.mxu0 0.0
        %5423 = vmatpush1.msra.mxu0 0.0
        %5424 = vmatprep.subr.mxu0 0.0
        %5425 = vmatpush1.msra.mxu0 0.0
        %5426 = vmatprep.subr.mxu0 0.0
        %5427 = vmatpush1.msra.mxu0 0.0
        %5428 = vmatprep.subr.mxu0 0.0
        %5429 = vmatpush1.msra.mxu0 0.0
        %5430 = vmatprep.subr.mxu0 0.0
        %5431 = vmatpush1.msra.mxu0 0.0
        %5432 = vmatprep.subr.mxu0 0.0
        %5433 = vmatpush1.msra.mxu0 0.0
        %5434 = vmatprep.subr.mxu0 0.0
        %5435 = vmatpush1.msra.mxu0 0.0
        %5436 = vmatprep.subr.mxu0 0.0
        %5437 = vmatpush1.msra.mxu0 0.0
        %5438 = vmatprep.subr.mxu0 0.0
        %5439 = vmatpush1.msra.mxu0 0.0
        %5440 = vmatprep.subr.mxu0 0.0
        %5441 = vmatpush1.msra.mxu0 0.0
        %5442 = vmatprep.subr.mxu0 0.0
        %5443 = vmatpush1.msra.mxu0 0.0
        %5444 = vmatprep.mubr.f32.mxu0 0.0
        %v5445 = vand.u32 %v5142, 4294901760
        %v5446 = vsub.f32 %v5142, %v5445
        %v5447 = vand.u32 %v5446, 4294901760
        %5448 = vmatmul.mubr.f32.gmra.mrb[0].mxu0 %v5447
        %v5449 = vpop.f32.mrb[0].mxu0
        %v5450 = vadd.f32 %v5375, %v5449
        %v5451 = vpop.f32.mrb[0].mxu0
        %5452 = vdwg.mxu0
        %5453 = vmatprep.subr.mxu0 0.0
        %v5454 = vand.u32 %v5132, 4294901760
        %v5455 = vsub.f32 %v5132, %v5454
        %v5456 = vand.u32 %v5455, 4294901760
        %5457 = vmatpush1.msra.mxu0 %v5456
        %5458 = vmatprep.subr.mxu0 0.0
        %v5459 = vand.u32 %v5133, 4294901760
        %v5460 = vsub.f32 %v5133, %v5459
        %v5461 = vand.u32 %v5460, 4294901760
        %5462 = vmatpush1.msra.mxu0 %v5461
        %5463 = vmatprep.subr.mxu0 0.0
        %5464 = vmatpush1.msra.mxu0 0.0
        %5465 = vmatprep.subr.mxu0 0.0
        %5466 = vmatpush1.msra.mxu0 0.0
        %5467 = vmatprep.subr.mxu0 0.0
        %5468 = vmatpush1.msra.mxu0 0.0
        %5469 = vmatprep.subr.mxu0 0.0
        %5470 = vmatpush1.msra.mxu0 0.0
        %5471 = vmatprep.subr.mxu0 0.0
        %5472 = vmatpush1.msra.mxu0 0.0
        %5473 = vmatprep.subr.mxu0 0.0
        %5474 = vmatpush1.msra.mxu0 0.0
        %5475 = vmatprep.subr.mxu0 0.0
        %5476 = vmatpush1.msra.mxu0 0.0
        %5477 = vmatprep.subr.mxu0 0.0
        %5478 = vmatpush1.msra.mxu0 0.0
        %5479 = vmatprep.subr.mxu0 0.0
        %5480 = vmatpush1.msra.mxu0 0.0
        %5481 = vmatprep.subr.mxu0 0.0
        %5482 = vmatpush1.msra.mxu0 0.0
        %5483 = vmatprep.subr.mxu0 0.0
        %5484 = vmatpush1.msra.mxu0 0.0
        %5485 = vmatprep.subr.mxu0 0.0
        %5486 = vmatpush1.msra.mxu0 0.0
        %5487 = vmatprep.subr.mxu0 0.0
        %5488 = vmatpush1.msra.mxu0 0.0
        %5489 = vmatprep.subr.mxu0 0.0
        %5490 = vmatpush1.msra.mxu0 0.0
        %5491 = vmatprep.subr.mxu0 0.0
        %5492 = vmatpush1.msra.mxu0 0.0
        %5493 = vmatprep.subr.mxu0 0.0
        %5494 = vmatpush1.msra.mxu0 0.0
        %5495 = vmatprep.subr.mxu0 0.0
        %5496 = vmatpush1.msra.mxu0 0.0
        %5497 = vmatprep.subr.mxu0 0.0
        %5498 = vmatpush1.msra.mxu0 0.0
        %5499 = vmatprep.subr.mxu0 0.0
        %5500 = vmatpush1.msra.mxu0 0.0
        %5501 = vmatprep.subr.mxu0 0.0
        %5502 = vmatpush1.msra.mxu0 0.0
        %5503 = vmatprep.subr.mxu0 0.0
        %5504 = vmatpush1.msra.mxu0 0.0
        %5505 = vmatprep.subr.mxu0 0.0
        %5506 = vmatpush1.msra.mxu0 0.0
        %5507 = vmatprep.subr.mxu0 0.0
        %5508 = vmatpush1.msra.mxu0 0.0
        %5509 = vmatprep.subr.mxu0 0.0
        %5510 = vmatpush1.msra.mxu0 0.0
        %5511 = vmatprep.subr.mxu0 0.0
        %5512 = vmatpush1.msra.mxu0 0.0
        %5513 = vmatprep.subr.mxu0 0.0
        %5514 = vmatpush1.msra.mxu0 0.0
        %5515 = vmatprep.subr.mxu0 0.0
        %5516 = vmatpush1.msra.mxu0 0.0
        %5517 = vmatprep.subr.mxu0 0.0
        %5518 = vmatpush1.msra.mxu0 0.0
        %5519 = vmatprep.subr.mxu0 0.0
        %5520 = vmatpush1.msra.mxu0 0.0
        %5521 = vmatprep.subr.mxu0 0.0
        %5522 = vmatpush1.msra.mxu0 0.0
        %5523 = vmatprep.mubr.f32.mxu0 0.0
        %v5524 = vand.u32 %v5142, 4294901760
        %5525 = vmatmul.mubr.f32.gmra.mrb[0].mxu0 %v5524
        %v5526 = vpop.f32.mrb[0].mxu0
        %v5527 = vadd.f32 %v5450, %v5526
        %v5528 = vpop.f32.mrb[0].mxu0
        %5529 = vdwg.mxu0
        %5530 = vmatprep.subr.mxu0 0.0
        %v5531 = vand.u32 %v5132, 4294901760
        %5532 = vmatpush1.msra.mxu0 %v5531
        %5533 = vmatprep.subr.mxu0 0.0
        %v5534 = vand.u32 %v5133, 4294901760
        %5535 = vmatpush1.msra.mxu0 %v5534
        %5536 = vmatprep.subr.mxu0 0.0
        %5537 = vmatpush1.msra.mxu0 0.0
        %5538 = vmatprep.subr.mxu0 0.0
        %5539 = vmatpush1.msra.mxu0 0.0
        %5540 = vmatprep.subr.mxu0 0.0
        %5541 = vmatpush1.msra.mxu0 0.0
        %5542 = vmatprep.subr.mxu0 0.0
        %5543 = vmatpush1.msra.mxu0 0.0
        %5544 = vmatprep.subr.mxu0 0.0
        %5545 = vmatpush1.msra.mxu0 0.0
        %5546 = vmatprep.subr.mxu0 0.0
        %5547 = vmatpush1.msra.mxu0 0.0
        %5548 = vmatprep.subr.mxu0 0.0
        %5549 = vmatpush1.msra.mxu0 0.0
        %5550 = vmatprep.subr.mxu0 0.0
        %5551 = vmatpush1.msra.mxu0 0.0
        %5552 = vmatprep.subr.mxu0 0.0
        %5553 = vmatpush1.msra.mxu0 0.0
        %5554 = vmatprep.subr.mxu0 0.0
        %5555 = vmatpush1.msra.mxu0 0.0
        %5556 = vmatprep.subr.mxu0 0.0
        %5557 = vmatpush1.msra.mxu0 0.0
        %5558 = vmatprep.subr.mxu0 0.0
        %5559 = vmatpush1.msra.mxu0 0.0
        %5560 = vmatprep.subr.mxu0 0.0
        %5561 = vmatpush1.msra.mxu0 0.0
        %5562 = vmatprep.subr.mxu0 0.0
        %5563 = vmatpush1.msra.mxu0 0.0
        %5564 = vmatprep.subr.mxu0 0.0
        %5565 = vmatpush1.msra.mxu0 0.0
        %5566 = vmatprep.subr.mxu0 0.0
        %5567 = vmatpush1.msra.mxu0 0.0
        %5568 = vmatprep.subr.mxu0 0.0
        %5569 = vmatpush1.msra.mxu0 0.0
        %5570 = vmatprep.subr.mxu0 0.0
        %5571 = vmatpush1.msra.mxu0 0.0
        %5572 = vmatprep.subr.mxu0 0.0
        %5573 = vmatpush1.msra.mxu0 0.0
        %5574 = vmatprep.subr.mxu0 0.0
        %5575 = vmatpush1.msra.mxu0 0.0
        %5576 = vmatprep.subr.mxu0 0.0
        %5577 = vmatpush1.msra.mxu0 0.0
        %5578 = vmatprep.subr.mxu0 0.0
        %5579 = vmatpush1.msra.mxu0 0.0
        %5580 = vmatprep.subr.mxu0 0.0
        %5581 = vmatpush1.msra.mxu0 0.0
        %5582 = vmatprep.subr.mxu0 0.0
        %5583 = vmatpush1.msra.mxu0 0.0
        %5584 = vmatprep.subr.mxu0 0.0
        %5585 = vmatpush1.msra.mxu0 0.0
        %5586 = vmatprep.subr.mxu0 0.0
        %5587 = vmatpush1.msra.mxu0 0.0
        %5588 = vmatprep.subr.mxu0 0.0
        %5589 = vmatpush1.msra.mxu0 0.0
        %5590 = vmatprep.subr.mxu0 0.0
        %5591 = vmatpush1.msra.mxu0 0.0
        %5592 = vmatprep.subr.mxu0 0.0
        %5593 = vmatpush1.msra.mxu0 0.0
        %5594 = vmatprep.subr.mxu0 0.0
        %5595 = vmatpush1.msra.mxu0 0.0
        %5596 = vmatprep.mubr.f32.mxu0 0.0
        %v5597 = vand.u32 %v5142, 4294901760
        %5598 = vmatmul.mubr.f32.gmra.mrb[0].mxu0 %v5597
        %v5599 = vpop.f32.mrb[0].mxu0
        %v5600 = vadd.f32 %v5527, %v5599
        %v5601 = vpop.f32.mrb[0].mxu0
        %5602 = vdwg.mxu0
        %v5603 = vmax.f32 %v5600, 0.0
        %v5604 = vld [vmem:[#allocation8] sm:$0xff]
        %v5605 = vld [vmem:[#allocation8 + $0x8] sm:$0xff]
        %v5607 = vsel %vm736, %v5604, 0
        %v5610 = vsel %vm736, %v5605, 0
        %5612 = vmatprep.subr.mxu0 0.0
        %v5613 = vand.u32 %v5603, 4294901760
        %5614 = vmatpush1.msra.mxu0 %v5613
        %5615 = vmatprep.subr.mxu0 0.0
        %5616 = vmatpush1.msra.mxu0 0.0
        %5617 = vmatprep.subr.mxu0 0.0
        %5618 = vmatpush1.msra.mxu0 0.0
        %5619 = vmatprep.subr.mxu0 0.0
        %5620 = vmatpush1.msra.mxu0 0.0
        %5621 = vmatprep.subr.mxu0 0.0
        %5622 = vmatpush1.msra.mxu0 0.0
        %5623 = vmatprep.subr.mxu0 0.0
        %5624 = vmatpush1.msra.mxu0 0.0
        %5625 = vmatprep.subr.mxu0 0.0
        %5626 = vmatpush1.msra.mxu0 0.0
        %5627 = vmatprep.subr.mxu0 0.0
        %5628 = vmatpush1.msra.mxu0 0.0
        %5629 = vmatprep.subr.mxu0 0.0
        %5630 = vmatpush1.msra.mxu0 0.0
        %5631 = vmatprep.subr.mxu0 0.0
        %5632 = vmatpush1.msra.mxu0 0.0
        %5633 = vmatprep.subr.mxu0 0.0
        %5634 = vmatpush1.msra.mxu0 0.0
        %5635 = vmatprep.subr.mxu0 0.0
        %5636 = vmatpush1.msra.mxu0 0.0
        %5637 = vmatprep.subr.mxu0 0.0
        %5638 = vmatpush1.msra.mxu0 0.0
        %5639 = vmatprep.subr.mxu0 0.0
        %5640 = vmatpush1.msra.mxu0 0.0
        %5641 = vmatprep.subr.mxu0 0.0
        %5642 = vmatpush1.msra.mxu0 0.0
        %5643 = vmatprep.subr.mxu0 0.0
        %5644 = vmatpush1.msra.mxu0 0.0
        %5645 = vmatprep.subr.mxu0 0.0
        %5646 = vmatpush1.msra.mxu0 0.0
        %5647 = vmatprep.subr.mxu0 0.0
        %5648 = vmatpush1.msra.mxu0 0.0
        %5649 = vmatprep.subr.mxu0 0.0
        %5650 = vmatpush1.msra.mxu0 0.0
        %5651 = vmatprep.subr.mxu0 0.0
        %5652 = vmatpush1.msra.mxu0 0.0
        %5653 = vmatprep.subr.mxu0 0.0
        %5654 = vmatpush1.msra.mxu0 0.0
        %5655 = vmatprep.subr.mxu0 0.0
        %5656 = vmatpush1.msra.mxu0 0.0
        %5657 = vmatprep.subr.mxu0 0.0
        %5658 = vmatpush1.msra.mxu0 0.0
        %5659 = vmatprep.subr.mxu0 0.0
        %5660 = vmatpush1.msra.mxu0 0.0
        %5661 = vmatprep.subr.mxu0 0.0
        %5662 = vmatpush1.msra.mxu0 0.0
        %5663 = vmatprep.subr.mxu0 0.0
        %5664 = vmatpush1.msra.mxu0 0.0
        %5665 = vmatprep.subr.mxu0 0.0
        %5666 = vmatpush1.msra.mxu0 0.0
        %5667 = vmatprep.subr.mxu0 0.0
        %5668 = vmatpush1.msra.mxu0 0.0
        %5669 = vmatprep.subr.mxu0 0.0
        %5670 = vmatpush1.msra.mxu0 0.0
        %5671 = vmatprep.subr.mxu0 0.0
        %5672 = vmatpush1.msra.mxu0 0.0
        %5673 = vmatprep.subr.mxu0 0.0
        %5674 = vmatpush1.msra.mxu0 0.0
        %5675 = vmatprep.subr.mxu0 0.0
        %5676 = vmatpush1.msra.mxu0 0.0
        %5677 = vmatprep.mubr.f32.mxu0 0.0
        %v5678 = vand.u32 %v5607, 4294901760
        %v5679 = vsub.f32 %v5607, %v5678
        %v5680 = vand.u32 %v5679, 4294901760
        %v5681 = vsub.f32 %v5679, %v5680
        %v5682 = vand.u32 %v5681, 4294901760
        %5683 = vmatmul.mubr.f32.gmra.mrb[0].mxu0 %v5682
        %v5684 = vpop.f32.mrb[0].mxu0
        %v5685 = vadd.f32 0.0, %v5684
        %v5686 = vpop.f32.mrb[0].mxu0
        %5687 = vmatprep.mubr.f32.mxu0 0.0
        %v5688 = vand.u32 %v5610, 4294901760
        %v5689 = vsub.f32 %v5610, %v5688
        %v5690 = vand.u32 %v5689, 4294901760
        %v5691 = vsub.f32 %v5689, %v5690
        %v5692 = vand.u32 %v5691, 4294901760
        %5693 = vmatmul.mubr.f32.gmra.mrb[0].mxu0 %v5692
        %v5694 = vpop.f32.mrb[0].mxu0
        %v5695 = vadd.f32 0.0, %v5694
        %v5696 = vpop.f32.mrb[0].mxu0
        %5697 = vdwg.mxu0
        %5698 = vmatprep.subr.mxu0 0.0
        %v5699 = vand.u32 %v5603, 4294901760
        %v5700 = vsub.f32 %v5603, %v5699
        %v5701 = vand.u32 %v5700, 4294901760
        %v5702 = vsub.f32 %v5700, %v5701
        %v5703 = vand.u32 %v5702, 4294901760
        %5704 = vmatpush1.msra.mxu0 %v5703
        %5705 = vmatprep.subr.mxu0 0.0
        %5706 = vmatpush1.msra.mxu0 0.0
        %5707 = vmatprep.subr.mxu0 0.0
        %5708 = vmatpush1.msra.mxu0 0.0
        %5709 = vmatprep.subr.mxu0 0.0
        %5710 = vmatpush1.msra.mxu0 0.0
        %5711 = vmatprep.subr.mxu0 0.0
        %5712 = vmatpush1.msra.mxu0 0.0
        %5713 = vmatprep.subr.mxu0 0.0
        %5714 = vmatpush1.msra.mxu0 0.0
        %5715 = vmatprep.subr.mxu0 0.0
        %5716 = vmatpush1.msra.mxu0 0.0
        %5717 = vmatprep.subr.mxu0 0.0
        %5718 = vmatpush1.msra.mxu0 0.0
        %5719 = vmatprep.subr.mxu0 0.0
        %5720 = vmatpush1.msra.mxu0 0.0
        %5721 = vmatprep.subr.mxu0 0.0
        %5722 = vmatpush1.msra.mxu0 0.0
        %5723 = vmatprep.subr.mxu0 0.0
        %5724 = vmatpush1.msra.mxu0 0.0
        %5725 = vmatprep.subr.mxu0 0.0
        %5726 = vmatpush1.msra.mxu0 0.0
        %5727 = vmatprep.subr.mxu0 0.0
        %5728 = vmatpush1.msra.mxu0 0.0
        %5729 = vmatprep.subr.mxu0 0.0
        %5730 = vmatpush1.msra.mxu0 0.0
        %5731 = vmatprep.subr.mxu0 0.0
        %5732 = vmatpush1.msra.mxu0 0.0
        %5733 = vmatprep.subr.mxu0 0.0
        %5734 = vmatpush1.msra.mxu0 0.0
        %5735 = vmatprep.subr.mxu0 0.0
        %5736 = vmatpush1.msra.mxu0 0.0
        %5737 = vmatprep.subr.mxu0 0.0
        %5738 = vmatpush1.msra.mxu0 0.0
        %5739 = vmatprep.subr.mxu0 0.0
        %5740 = vmatpush1.msra.mxu0 0.0
        %5741 = vmatprep.subr.mxu0 0.0
        %5742 = vmatpush1.msra.mxu0 0.0
        %5743 = vmatprep.subr.mxu0 0.0
        %5744 = vmatpush1.msra.mxu0 0.0
        %5745 = vmatprep.subr.mxu0 0.0
        %5746 = vmatpush1.msra.mxu0 0.0
        %5747 = vmatprep.subr.mxu0 0.0
        %5748 = vmatpush1.msra.mxu0 0.0
        %5749 = vmatprep.subr.mxu0 0.0
        %5750 = vmatpush1.msra.mxu0 0.0
        %5751 = vmatprep.subr.mxu0 0.0
        %5752 = vmatpush1.msra.mxu0 0.0
        %5753 = vmatprep.subr.mxu0 0.0
        %5754 = vmatpush1.msra.mxu0 0.0
        %5755 = vmatprep.subr.mxu0 0.0
        %5756 = vmatpush1.msra.mxu0 0.0
        %5757 = vmatprep.subr.mxu0 0.0
        %5758 = vmatpush1.msra.mxu0 0.0
        %5759 = vmatprep.subr.mxu0 0.0
        %5760 = vmatpush1.msra.mxu0 0.0
        %5761 = vmatprep.subr.mxu0 0.0
        %5762 = vmatpush1.msra.mxu0 0.0
        %5763 = vmatprep.subr.mxu0 0.0
        %5764 = vmatpush1.msra.mxu0 0.0
        %5765 = vmatprep.subr.mxu0 0.0
        %5766 = vmatpush1.msra.mxu0 0.0
        %5767 = vmatprep.mubr.f32.mxu0 0.0
        %v5768 = vand.u32 %v5607, 4294901760
        %5769 = vmatmul.mubr.f32.gmra.mrb[0].mxu0 %v5768
        %v5770 = vpop.f32.mrb[0].mxu0
        %v5771 = vadd.f32 %v5685, %v5770
        %v5772 = vpop.f32.mrb[0].mxu0
        %5773 = vmatprep.mubr.f32.mxu0 0.0
        %v5774 = vand.u32 %v5610, 4294901760
        %5775 = vmatmul.mubr.f32.gmra.mrb[0].mxu0 %v5774
        %v5776 = vpop.f32.mrb[0].mxu0
        %v5777 = vadd.f32 %v5695, %v5776
        %v5778 = vpop.f32.mrb[0].mxu0
        %5779 = vdwg.mxu0
        %5780 = vmatprep.subr.mxu0 0.0
        %v5781 = vand.u32 %v5603, 4294901760
        %v5782 = vsub.f32 %v5603, %v5781
        %5783 = vmatpush1.msra.mxu0 %v5782
        %5784 = vmatprep.subr.mxu0 0.0
        %5785 = vmatpush1.msra.mxu0 0.0
        %5786 = vmatprep.subr.mxu0 0.0
        %5787 = vmatpush1.msra.mxu0 0.0
        %5788 = vmatprep.subr.mxu0 0.0
        %5789 = vmatpush1.msra.mxu0 0.0
        %5790 = vmatprep.subr.mxu0 0.0
        %5791 = vmatpush1.msra.mxu0 0.0
        %5792 = vmatprep.subr.mxu0 0.0
        %5793 = vmatpush1.msra.mxu0 0.0
        %5794 = vmatprep.subr.mxu0 0.0
        %5795 = vmatpush1.msra.mxu0 0.0
        %5796 = vmatprep.subr.mxu0 0.0
        %5797 = vmatpush1.msra.mxu0 0.0
        %5798 = vmatprep.subr.mxu0 0.0
        %5799 = vmatpush1.msra.mxu0 0.0
        %5800 = vmatprep.subr.mxu0 0.0
        %5801 = vmatpush1.msra.mxu0 0.0
        %5802 = vmatprep.subr.mxu0 0.0
        %5803 = vmatpush1.msra.mxu0 0.0
        %5804 = vmatprep.subr.mxu0 0.0
        %5805 = vmatpush1.msra.mxu0 0.0
        %5806 = vmatprep.subr.mxu0 0.0
        %5807 = vmatpush1.msra.mxu0 0.0
        %5808 = vmatprep.subr.mxu0 0.0
        %5809 = vmatpush1.msra.mxu0 0.0
        %5810 = vmatprep.subr.mxu0 0.0
        %5811 = vmatpush1.msra.mxu0 0.0
        %5812 = vmatprep.subr.mxu0 0.0
        %5813 = vmatpush1.msra.mxu0 0.0
        %5814 = vmatprep.subr.mxu0 0.0
        %5815 = vmatpush1.msra.mxu0 0.0
        %5816 = vmatprep.subr.mxu0 0.0
        %5817 = vmatpush1.msra.mxu0 0.0
        %5818 = vmatprep.subr.mxu0 0.0
        %5819 = vmatpush1.msra.mxu0 0.0
        %5820 = vmatprep.subr.mxu0 0.0
        %5821 = vmatpush1.msra.mxu0 0.0
        %5822 = vmatprep.subr.mxu0 0.0
        %5823 = vmatpush1.msra.mxu0 0.0
        %5824 = vmatprep.subr.mxu0 0.0
        %5825 = vmatpush1.msra.mxu0 0.0
        %5826 = vmatprep.subr.mxu0 0.0
        %5827 = vmatpush1.msra.mxu0 0.0
        %5828 = vmatprep.subr.mxu0 0.0
        %5829 = vmatpush1.msra.mxu0 0.0
        %5830 = vmatprep.subr.mxu0 0.0
        %5831 = vmatpush1.msra.mxu0 0.0
        %5832 = vmatprep.subr.mxu0 0.0
        %5833 = vmatpush1.msra.mxu0 0.0
        %5834 = vmatprep.subr.mxu0 0.0
        %5835 = vmatpush1.msra.mxu0 0.0
        %5836 = vmatprep.subr.mxu0 0.0
        %5837 = vmatpush1.msra.mxu0 0.0
        %5838 = vmatprep.subr.mxu0 0.0
        %5839 = vmatpush1.msra.mxu0 0.0
        %5840 = vmatprep.subr.mxu0 0.0
        %5841 = vmatpush1.msra.mxu0 0.0
        %5842 = vmatprep.subr.mxu0 0.0
        %5843 = vmatpush1.msra.mxu0 0.0
        %5844 = vmatprep.subr.mxu0 0.0
        %5845 = vmatpush1.msra.mxu0 0.0
        %5846 = vmatprep.mubr.f32.mxu0 0.0
        %v5847 = vand.u32 %v5607, 4294901760
        %v5848 = vsub.f32 %v5607, %v5847
        %5849 = vmatmul.mubr.f32.gmra.mrb[0].mxu0 %v5848
        %v5850 = vpop.f32.mrb[0].mxu0
        %v5851 = vadd.f32 %v5771, %v5850
        %v5852 = vpop.f32.mrb[0].mxu0
        %5853 = vmatprep.mubr.f32.mxu0 0.0
        %v5854 = vand.u32 %v5610, 4294901760
        %v5855 = vsub.f32 %v5610, %v5854
        %5856 = vmatmul.mubr.f32.gmra.mrb[0].mxu0 %v5855
        %v5857 = vpop.f32.mrb[0].mxu0
        %v5858 = vadd.f32 %v5777, %v5857
        %v5859 = vpop.f32.mrb[0].mxu0
        %5860 = vdwg.mxu0
        %5861 = vmatprep.subr.mxu0 0.0
        %v5862 = vand.u32 %v5603, 4294901760
        %5863 = vmatpush1.msra.mxu0 %v5862
        %5864 = vmatprep.subr.mxu0 0.0
        %5865 = vmatpush1.msra.mxu0 0.0
        %5866 = vmatprep.subr.mxu0 0.0
        %5867 = vmatpush1.msra.mxu0 0.0
        %5868 = vmatprep.subr.mxu0 0.0
        %5869 = vmatpush1.msra.mxu0 0.0
        %5870 = vmatprep.subr.mxu0 0.0
        %5871 = vmatpush1.msra.mxu0 0.0
        %5872 = vmatprep.subr.mxu0 0.0
        %5873 = vmatpush1.msra.mxu0 0.0
        %5874 = vmatprep.subr.mxu0 0.0
        %5875 = vmatpush1.msra.mxu0 0.0
        %5876 = vmatprep.subr.mxu0 0.0
        %5877 = vmatpush1.msra.mxu0 0.0
        %5878 = vmatprep.subr.mxu0 0.0
        %5879 = vmatpush1.msra.mxu0 0.0
        %5880 = vmatprep.subr.mxu0 0.0
        %5881 = vmatpush1.msra.mxu0 0.0
        %5882 = vmatprep.subr.mxu0 0.0
        %5883 = vmatpush1.msra.mxu0 0.0
        %5884 = vmatprep.subr.mxu0 0.0
        %5885 = vmatpush1.msra.mxu0 0.0
        %5886 = vmatprep.subr.mxu0 0.0
        %5887 = vmatpush1.msra.mxu0 0.0
        %5888 = vmatprep.subr.mxu0 0.0
        %5889 = vmatpush1.msra.mxu0 0.0
        %5890 = vmatprep.subr.mxu0 0.0
        %5891 = vmatpush1.msra.mxu0 0.0
        %5892 = vmatprep.subr.mxu0 0.0
        %5893 = vmatpush1.msra.mxu0 0.0
        %5894 = vmatprep.subr.mxu0 0.0
        %5895 = vmatpush1.msra.mxu0 0.0
        %5896 = vmatprep.subr.mxu0 0.0
        %5897 = vmatpush1.msra.mxu0 0.0
        %5898 = vmatprep.subr.mxu0 0.0
        %5899 = vmatpush1.msra.mxu0 0.0
        %5900 = vmatprep.subr.mxu0 0.0
        %5901 = vmatpush1.msra.mxu0 0.0
        %5902 = vmatprep.subr.mxu0 0.0
        %5903 = vmatpush1.msra.mxu0 0.0
        %5904 = vmatprep.subr.mxu0 0.0
        %5905 = vmatpush1.msra.mxu0 0.0
        %5906 = vmatprep.subr.mxu0 0.0
        %5907 = vmatpush1.msra.mxu0 0.0
        %5908 = vmatprep.subr.mxu0 0.0
        %5909 = vmatpush1.msra.mxu0 0.0
        %5910 = vmatprep.subr.mxu0 0.0
        %5911 = vmatpush1.msra.mxu0 0.0
        %5912 = vmatprep.subr.mxu0 0.0
        %5913 = vmatpush1.msra.mxu0 0.0
        %5914 = vmatprep.subr.mxu0 0.0
        %5915 = vmatpush1.msra.mxu0 0.0
        %5916 = vmatprep.subr.mxu0 0.0
        %5917 = vmatpush1.msra.mxu0 0.0
        %5918 = vmatprep.subr.mxu0 0.0
        %5919 = vmatpush1.msra.mxu0 0.0
        %5920 = vmatprep.subr.mxu0 0.0
        %5921 = vmatpush1.msra.mxu0 0.0
        %5922 = vmatprep.subr.mxu0 0.0
        %5923 = vmatpush1.msra.mxu0 0.0
        %5924 = vmatprep.subr.mxu0 0.0
        %5925 = vmatpush1.msra.mxu0 0.0
        %5926 = vmatprep.mubr.f32.mxu0 0.0
        %v5927 = vand.u32 %v5607, 4294901760
        %v5928 = vsub.f32 %v5607, %v5927
        %v5929 = vand.u32 %v5928, 4294901760
        %5930 = vmatmul.mubr.f32.gmra.mrb[0].mxu0 %v5929
        %v5931 = vpop.f32.mrb[0].mxu0
        %v5932 = vadd.f32 %v5851, %v5931
        %v5933 = vpop.f32.mrb[0].mxu0
        %5934 = vmatprep.mubr.f32.mxu0 0.0
        %v5935 = vand.u32 %v5610, 4294901760
        %v5936 = vsub.f32 %v5610, %v5935
        %v5937 = vand.u32 %v5936, 4294901760
        %5938 = vmatmul.mubr.f32.gmra.mrb[0].mxu0 %v5937
        %v5939 = vpop.f32.mrb[0].mxu0
        %v5940 = vadd.f32 %v5858, %v5939
        %v5941 = vpop.f32.mrb[0].mxu0
        %5942 = vdwg.mxu0
        %5943 = vmatprep.subr.mxu0 0.0
        %v5944 = vand.u32 %v5603, 4294901760
        %v5945 = vsub.f32 %v5603, %v5944
        %v5946 = vand.u32 %v5945, 4294901760
        %5947 = vmatpush1.msra.mxu0 %v5946
        %5948 = vmatprep.subr.mxu0 0.0
        %5949 = vmatpush1.msra.mxu0 0.0
        %5950 = vmatprep.subr.mxu0 0.0
        %5951 = vmatpush1.msra.mxu0 0.0
        %5952 = vmatprep.subr.mxu0 0.0
        %5953 = vmatpush1.msra.mxu0 0.0
        %5954 = vmatprep.subr.mxu0 0.0
        %5955 = vmatpush1.msra.mxu0 0.0
        %5956 = vmatprep.subr.mxu0 0.0
        %5957 = vmatpush1.msra.mxu0 0.0
        %5958 = vmatprep.subr.mxu0 0.0
        %5959 = vmatpush1.msra.mxu0 0.0
        %5960 = vmatprep.subr.mxu0 0.0
        %5961 = vmatpush1.msra.mxu0 0.0
        %5962 = vmatprep.subr.mxu0 0.0
        %5963 = vmatpush1.msra.mxu0 0.0
        %5964 = vmatprep.subr.mxu0 0.0
        %5965 = vmatpush1.msra.mxu0 0.0
        %5966 = vmatprep.subr.mxu0 0.0
        %5967 = vmatpush1.msra.mxu0 0.0
        %5968 = vmatprep.subr.mxu0 0.0
        %5969 = vmatpush1.msra.mxu0 0.0
        %5970 = vmatprep.subr.mxu0 0.0
        %5971 = vmatpush1.msra.mxu0 0.0
        %5972 = vmatprep.subr.mxu0 0.0
        %5973 = vmatpush1.msra.mxu0 0.0
        %5974 = vmatprep.subr.mxu0 0.0
        %5975 = vmatpush1.msra.mxu0 0.0
        %5976 = vmatprep.subr.mxu0 0.0
        %5977 = vmatpush1.msra.mxu0 0.0
        %5978 = vmatprep.subr.mxu0 0.0
        %5979 = vmatpush1.msra.mxu0 0.0
        %5980 = vmatprep.subr.mxu0 0.0
        %5981 = vmatpush1.msra.mxu0 0.0
        %5982 = vmatprep.subr.mxu0 0.0
        %5983 = vmatpush1.msra.mxu0 0.0
        %5984 = vmatprep.subr.mxu0 0.0
        %5985 = vmatpush1.msra.mxu0 0.0
        %5986 = vmatprep.subr.mxu0 0.0
        %5987 = vmatpush1.msra.mxu0 0.0
        %5988 = vmatprep.subr.mxu0 0.0
        %5989 = vmatpush1.msra.mxu0 0.0
        %5990 = vmatprep.subr.mxu0 0.0
        %5991 = vmatpush1.msra.mxu0 0.0
        %5992 = vmatprep.subr.mxu0 0.0
        %5993 = vmatpush1.msra.mxu0 0.0
        %5994 = vmatprep.subr.mxu0 0.0
        %5995 = vmatpush1.msra.mxu0 0.0
        %5996 = vmatprep.subr.mxu0 0.0
        %5997 = vmatpush1.msra.mxu0 0.0
        %5998 = vmatprep.subr.mxu0 0.0
        %5999 = vmatpush1.msra.mxu0 0.0
        %6000 = vmatprep.subr.mxu0 0.0
        %6001 = vmatpush1.msra.mxu0 0.0
        %6002 = vmatprep.subr.mxu0 0.0
        %6003 = vmatpush1.msra.mxu0 0.0
        %6004 = vmatprep.subr.mxu0 0.0
        %6005 = vmatpush1.msra.mxu0 0.0
        %6006 = vmatprep.subr.mxu0 0.0
        %6007 = vmatpush1.msra.mxu0 0.0
        %6008 = vmatprep.subr.mxu0 0.0
        %6009 = vmatpush1.msra.mxu0 0.0
        %6010 = vmatprep.mubr.f32.mxu0 0.0
        %v6011 = vand.u32 %v5607, 4294901760
        %6012 = vmatmul.mubr.f32.gmra.mrb[0].mxu0 %v6011
        %v6013 = vpop.f32.mrb[0].mxu0
        %v6014 = vadd.f32 %v5932, %v6013
        %v6015 = vpop.f32.mrb[0].mxu0
        %6016 = vmatprep.mubr.f32.mxu0 0.0
        %v6017 = vand.u32 %v5610, 4294901760
        %6018 = vmatmul.mubr.f32.gmra.mrb[0].mxu0 %v6017
        %v6019 = vpop.f32.mrb[0].mxu0
        %v6020 = vadd.f32 %v5940, %v6019
        %v6021 = vpop.f32.mrb[0].mxu0
        %6022 = vdwg.mxu0
        %6023 = vmatprep.subr.mxu0 0.0
        %v6024 = vand.u32 %v5603, 4294901760
        %6025 = vmatpush1.msra.mxu0 %v6024
        %6026 = vmatprep.subr.mxu0 0.0
        %6027 = vmatpush1.msra.mxu0 0.0
        %6028 = vmatprep.subr.mxu0 0.0
        %6029 = vmatpush1.msra.mxu0 0.0
        %6030 = vmatprep.subr.mxu0 0.0
        %6031 = vmatpush1.msra.mxu0 0.0
        %6032 = vmatprep.subr.mxu0 0.0
        %6033 = vmatpush1.msra.mxu0 0.0
        %6034 = vmatprep.subr.mxu0 0.0
        %6035 = vmatpush1.msra.mxu0 0.0
        %6036 = vmatprep.subr.mxu0 0.0
        %6037 = vmatpush1.msra.mxu0 0.0
        %6038 = vmatprep.subr.mxu0 0.0
        %6039 = vmatpush1.msra.mxu0 0.0
        %6040 = vmatprep.subr.mxu0 0.0
        %6041 = vmatpush1.msra.mxu0 0.0
        %6042 = vmatprep.subr.mxu0 0.0
        %6043 = vmatpush1.msra.mxu0 0.0
        %6044 = vmatprep.subr.mxu0 0.0
        %6045 = vmatpush1.msra.mxu0 0.0
        %6046 = vmatprep.subr.mxu0 0.0
        %6047 = vmatpush1.msra.mxu0 0.0
        %6048 = vmatprep.subr.mxu0 0.0
        %6049 = vmatpush1.msra.mxu0 0.0
        %6050 = vmatprep.subr.mxu0 0.0
        %6051 = vmatpush1.msra.mxu0 0.0
        %6052 = vmatprep.subr.mxu0 0.0
        %6053 = vmatpush1.msra.mxu0 0.0
        %6054 = vmatprep.subr.mxu0 0.0
        %6055 = vmatpush1.msra.mxu0 0.0
        %6056 = vmatprep.subr.mxu0 0.0
        %6057 = vmatpush1.msra.mxu0 0.0
        %6058 = vmatprep.subr.mxu0 0.0
        %6059 = vmatpush1.msra.mxu0 0.0
        %6060 = vmatprep.subr.mxu0 0.0
        %6061 = vmatpush1.msra.mxu0 0.0
        %6062 = vmatprep.subr.mxu0 0.0
        %6063 = vmatpush1.msra.mxu0 0.0
        %6064 = vmatprep.subr.mxu0 0.0
        %6065 = vmatpush1.msra.mxu0 0.0
        %6066 = vmatprep.subr.mxu0 0.0
        %6067 = vmatpush1.msra.mxu0 0.0
        %6068 = vmatprep.subr.mxu0 0.0
        %6069 = vmatpush1.msra.mxu0 0.0
        %6070 = vmatprep.subr.mxu0 0.0
        %6071 = vmatpush1.msra.mxu0 0.0
        %6072 = vmatprep.subr.mxu0 0.0
        %6073 = vmatpush1.msra.mxu0 0.0
        %6074 = vmatprep.subr.mxu0 0.0
        %6075 = vmatpush1.msra.mxu0 0.0
        %6076 = vmatprep.subr.mxu0 0.0
        %6077 = vmatpush1.msra.mxu0 0.0
        %6078 = vmatprep.subr.mxu0 0.0
        %6079 = vmatpush1.msra.mxu0 0.0
        %6080 = vmatprep.subr.mxu0 0.0
        %6081 = vmatpush1.msra.mxu0 0.0
        %6082 = vmatprep.subr.mxu0 0.0
        %6083 = vmatpush1.msra.mxu0 0.0
        %6084 = vmatprep.subr.mxu0 0.0
        %6085 = vmatpush1.msra.mxu0 0.0
        %6086 = vmatprep.subr.mxu0 0.0
        %6087 = vmatpush1.msra.mxu0 0.0
        %6088 = vmatprep.mubr.f32.mxu0 0.0
        %v6089 = vand.u32 %v5607, 4294901760
        %6090 = vmatmul.mubr.f32.gmra.mrb[0].mxu0 %v6089
        %v6091 = vpop.f32.mrb[0].mxu0
        %v6092 = vadd.f32 %v6014, %v6091
        %v6093 = vpop.f32.mrb[0].mxu0
        %6094 = vmatprep.mubr.f32.mxu0 0.0
        %v6095 = vand.u32 %v5610, 4294901760
        %6096 = vmatmul.mubr.f32.gmra.mrb[0].mxu0 %v6095
        %v6097 = vpop.f32.mrb[0].mxu0
        %v6098 = vadd.f32 %v6020, %v6097
        %v6099 = vpop.f32.mrb[0].mxu0
        %6100 = vdwg.mxu0
        %s6101 = scalar_lea.vmem %s257, 80 [#allocation10]
        %6102 = vst [vmem:[%s6101] sm:$0xff] %v6092
        %6103 = vst [vmem:[%s6101 + $0x8] sm:$0xff] %v6098
        %s6104 = scalar_lea.vmem %s221, 48 [#allocation2]
        %v6105 = vld [vmem:[%s6104] sm:$0xff]
        %v6106 = vld [vmem:[#allocation5] sm:$0xff]
        %v6107 = vld [vmem:[#allocation5 + $0x8] sm:$0xff]
        %v6108 = vld [vmem:[#allocation7] sm:$0x1]
        %v6110 = vlaneseq
        %v6111 = vshrl.u32 %v6110, 7
        %v6112 = vsub.s32 0, %v6111
        %v6113 = vrot.slane %v6108, %v6112
        %v6116 = vsel %vm270, %v6105, 0
        %6118 = vmatprep.subr.mxu0 0.0
        %v6119 = vand.u32 %v6106, 4294901760
        %6120 = vmatpush1.msra.mxu0 %v6119
        %6121 = vmatprep.subr.mxu0 0.0
        %v6122 = vand.u32 %v6107, 4294901760
        %6123 = vmatpush1.msra.mxu0 %v6122
        %6124 = vmatprep.subr.mxu0 0.0
        %6125 = vmatpush1.msra.mxu0 0.0
        %6126 = vmatprep.subr.mxu0 0.0
        %6127 = vmatpush1.msra.mxu0 0.0
        %6128 = vmatprep.subr.mxu0 0.0
        %6129 = vmatpush1.msra.mxu0 0.0
        %6130 = vmatprep.subr.mxu0 0.0
        %6131 = vmatpush1.msra.mxu0 0.0
        %6132 = vmatprep.subr.mxu0 0.0
        %6133 = vmatpush1.msra.mxu0 0.0
        %6134 = vmatprep.subr.mxu0 0.0
        %6135 = vmatpush1.msra.mxu0 0.0
        %6136 = vmatprep.subr.mxu0 0.0
        %6137 = vmatpush1.msra.mxu0 0.0
        %6138 = vmatprep.subr.mxu0 0.0
        %6139 = vmatpush1.msra.mxu0 0.0
        %6140 = vmatprep.subr.mxu0 0.0
        %6141 = vmatpush1.msra.mxu0 0.0
        %6142 = vmatprep.subr.mxu0 0.0
        %6143 = vmatpush1.msra.mxu0 0.0
        %6144 = vmatprep.subr.mxu0 0.0
        %6145 = vmatpush1.msra.mxu0 0.0
        %6146 = vmatprep.subr.mxu0 0.0
        %6147 = vmatpush1.msra.mxu0 0.0
        %6148 = vmatprep.subr.mxu0 0.0
        %6149 = vmatpush1.msra.mxu0 0.0
        %6150 = vmatprep.subr.mxu0 0.0
        %6151 = vmatpush1.msra.mxu0 0.0
        %6152 = vmatprep.subr.mxu0 0.0
        %6153 = vmatpush1.msra.mxu0 0.0
        %6154 = vmatprep.subr.mxu0 0.0
        %6155 = vmatpush1.msra.mxu0 0.0
        %6156 = vmatprep.subr.mxu0 0.0
        %6157 = vmatpush1.msra.mxu0 0.0
        %6158 = vmatprep.subr.mxu0 0.0
        %6159 = vmatpush1.msra.mxu0 0.0
        %6160 = vmatprep.subr.mxu0 0.0
        %6161 = vmatpush1.msra.mxu0 0.0
        %6162 = vmatprep.subr.mxu0 0.0
        %6163 = vmatpush1.msra.mxu0 0.0
        %6164 = vmatprep.subr.mxu0 0.0
        %6165 = vmatpush1.msra.mxu0 0.0
        %6166 = vmatprep.subr.mxu0 0.0
        %6167 = vmatpush1.msra.mxu0 0.0
        %6168 = vmatprep.subr.mxu0 0.0
        %6169 = vmatpush1.msra.mxu0 0.0
        %6170 = vmatprep.subr.mxu0 0.0
        %6171 = vmatpush1.msra.mxu0 0.0
        %6172 = vmatprep.subr.mxu0 0.0
        %6173 = vmatpush1.msra.mxu0 0.0
        %6174 = vmatprep.subr.mxu0 0.0
        %6175 = vmatpush1.msra.mxu0 0.0
        %6176 = vmatprep.subr.mxu0 0.0
        %6177 = vmatpush1.msra.mxu0 0.0
        %6178 = vmatprep.subr.mxu0 0.0
        %6179 = vmatpush1.msra.mxu0 0.0
        %6180 = vmatprep.subr.mxu0 0.0
        %6181 = vmatpush1.msra.mxu0 0.0
        %6182 = vmatprep.subr.mxu0 0.0
        %6183 = vmatpush1.msra.mxu0 0.0
        %6184 = vmatprep.mubr.f32.mxu0 0.0
        %v6185 = vand.u32 %v6116, 4294901760
        %v6186 = vsub.f32 %v6116, %v6185
        %v6187 = vand.u32 %v6186, 4294901760
        %v6188 = vsub.f32 %v6186, %v6187
        %v6189 = vand.u32 %v6188, 4294901760
        %6190 = vmatmul.mubr.f32.gmra.mrb[0].mxu0 %v6189
        %v6191 = vpop.f32.mrb[0].mxu0
        %v6192 = vadd.f32 %v6113, %v6191
        %v6193 = vpop.f32.mrb[0].mxu0
        %6194 = vdwg.mxu0
        %6195 = vmatprep.subr.mxu0 0.0
        %v6196 = vand.u32 %v6106, 4294901760
        %v6197 = vsub.f32 %v6106, %v6196
        %v6198 = vand.u32 %v6197, 4294901760
        %v6199 = vsub.f32 %v6197, %v6198
        %v6200 = vand.u32 %v6199, 4294901760
        %6201 = vmatpush1.msra.mxu0 %v6200
        %6202 = vmatprep.subr.mxu0 0.0
        %v6203 = vand.u32 %v6107, 4294901760
        %v6204 = vsub.f32 %v6107, %v6203
        %v6205 = vand.u32 %v6204, 4294901760
        %v6206 = vsub.f32 %v6204, %v6205
        %v6207 = vand.u32 %v6206, 4294901760
        %6208 = vmatpush1.msra.mxu0 %v6207
        %6209 = vmatprep.subr.mxu0 0.0
        %6210 = vmatpush1.msra.mxu0 0.0
        %6211 = vmatprep.subr.mxu0 0.0
        %6212 = vmatpush1.msra.mxu0 0.0
        %6213 = vmatprep.subr.mxu0 0.0
        %6214 = vmatpush1.msra.mxu0 0.0
        %6215 = vmatprep.subr.mxu0 0.0
        %6216 = vmatpush1.msra.mxu0 0.0
        %6217 = vmatprep.subr.mxu0 0.0
        %6218 = vmatpush1.msra.mxu0 0.0
        %6219 = vmatprep.subr.mxu0 0.0
        %6220 = vmatpush1.msra.mxu0 0.0
        %6221 = vmatprep.subr.mxu0 0.0
        %6222 = vmatpush1.msra.mxu0 0.0
        %6223 = vmatprep.subr.mxu0 0.0
        %6224 = vmatpush1.msra.mxu0 0.0
        %6225 = vmatprep.subr.mxu0 0.0
        %6226 = vmatpush1.msra.mxu0 0.0
        %6227 = vmatprep.subr.mxu0 0.0
        %6228 = vmatpush1.msra.mxu0 0.0
        %6229 = vmatprep.subr.mxu0 0.0
        %6230 = vmatpush1.msra.mxu0 0.0
        %6231 = vmatprep.subr.mxu0 0.0
        %6232 = vmatpush1.msra.mxu0 0.0
        %6233 = vmatprep.subr.mxu0 0.0
        %6234 = vmatpush1.msra.mxu0 0.0
        %6235 = vmatprep.subr.mxu0 0.0
        %6236 = vmatpush1.msra.mxu0 0.0
        %6237 = vmatprep.subr.mxu0 0.0
        %6238 = vmatpush1.msra.mxu0 0.0
        %6239 = vmatprep.subr.mxu0 0.0
        %6240 = vmatpush1.msra.mxu0 0.0
        %6241 = vmatprep.subr.mxu0 0.0
        %6242 = vmatpush1.msra.mxu0 0.0
        %6243 = vmatprep.subr.mxu0 0.0
        %6244 = vmatpush1.msra.mxu0 0.0
        %6245 = vmatprep.subr.mxu0 0.0
        %6246 = vmatpush1.msra.mxu0 0.0
        %6247 = vmatprep.subr.mxu0 0.0
        %6248 = vmatpush1.msra.mxu0 0.0
        %6249 = vmatprep.subr.mxu0 0.0
        %6250 = vmatpush1.msra.mxu0 0.0
        %6251 = vmatprep.subr.mxu0 0.0
        %6252 = vmatpush1.msra.mxu0 0.0
        %6253 = vmatprep.subr.mxu0 0.0
        %6254 = vmatpush1.msra.mxu0 0.0
        %6255 = vmatprep.subr.mxu0 0.0
        %6256 = vmatpush1.msra.mxu0 0.0
        %6257 = vmatprep.subr.mxu0 0.0
        %6258 = vmatpush1.msra.mxu0 0.0
        %6259 = vmatprep.subr.mxu0 0.0
        %6260 = vmatpush1.msra.mxu0 0.0
        %6261 = vmatprep.subr.mxu0 0.0
        %6262 = vmatpush1.msra.mxu0 0.0
        %6263 = vmatprep.subr.mxu0 0.0
        %6264 = vmatpush1.msra.mxu0 0.0
        %6265 = vmatprep.subr.mxu0 0.0
        %6266 = vmatpush1.msra.mxu0 0.0
        %6267 = vmatprep.subr.mxu0 0.0
        %6268 = vmatpush1.msra.mxu0 0.0
        %6269 = vmatprep.mubr.f32.mxu0 0.0
        %v6270 = vand.u32 %v6116, 4294901760
        %6271 = vmatmul.mubr.f32.gmra.mrb[0].mxu0 %v6270
        %v6272 = vpop.f32.mrb[0].mxu0
        %v6273 = vadd.f32 %v6192, %v6272
        %v6274 = vpop.f32.mrb[0].mxu0
        %6275 = vdwg.mxu0
        %6276 = vmatprep.subr.mxu0 0.0
        %v6277 = vand.u32 %v6106, 4294901760
        %v6278 = vsub.f32 %v6106, %v6277
        %6279 = vmatpush1.msra.mxu0 %v6278
        %6280 = vmatprep.subr.mxu0 0.0
        %v6281 = vand.u32 %v6107, 4294901760
        %v6282 = vsub.f32 %v6107, %v6281
        %6283 = vmatpush1.msra.mxu0 %v6282
        %6284 = vmatprep.subr.mxu0 0.0
        %6285 = vmatpush1.msra.mxu0 0.0
        %6286 = vmatprep.subr.mxu0 0.0
        %6287 = vmatpush1.msra.mxu0 0.0
        %6288 = vmatprep.subr.mxu0 0.0
        %6289 = vmatpush1.msra.mxu0 0.0
        %6290 = vmatprep.subr.mxu0 0.0
        %6291 = vmatpush1.msra.mxu0 0.0
        %6292 = vmatprep.subr.mxu0 0.0
        %6293 = vmatpush1.msra.mxu0 0.0
        %6294 = vmatprep.subr.mxu0 0.0
        %6295 = vmatpush1.msra.mxu0 0.0
        %6296 = vmatprep.subr.mxu0 0.0
        %6297 = vmatpush1.msra.mxu0 0.0
        %6298 = vmatprep.subr.mxu0 0.0
        %6299 = vmatpush1.msra.mxu0 0.0
        %6300 = vmatprep.subr.mxu0 0.0
        %6301 = vmatpush1.msra.mxu0 0.0
        %6302 = vmatprep.subr.mxu0 0.0
        %6303 = vmatpush1.msra.mxu0 0.0
        %6304 = vmatprep.subr.mxu0 0.0
        %6305 = vmatpush1.msra.mxu0 0.0
        %6306 = vmatprep.subr.mxu0 0.0
        %6307 = vmatpush1.msra.mxu0 0.0
        %6308 = vmatprep.subr.mxu0 0.0
        %6309 = vmatpush1.msra.mxu0 0.0
        %6310 = vmatprep.subr.mxu0 0.0
        %6311 = vmatpush1.msra.mxu0 0.0
        %6312 = vmatprep.subr.mxu0 0.0
        %6313 = vmatpush1.msra.mxu0 0.0
        %6314 = vmatprep.subr.mxu0 0.0
        %6315 = vmatpush1.msra.mxu0 0.0
        %6316 = vmatprep.subr.mxu0 0.0
        %6317 = vmatpush1.msra.mxu0 0.0
        %6318 = vmatprep.subr.mxu0 0.0
        %6319 = vmatpush1.msra.mxu0 0.0
        %6320 = vmatprep.subr.mxu0 0.0
        %6321 = vmatpush1.msra.mxu0 0.0
        %6322 = vmatprep.subr.mxu0 0.0
        %6323 = vmatpush1.msra.mxu0 0.0
        %6324 = vmatprep.subr.mxu0 0.0
        %6325 = vmatpush1.msra.mxu0 0.0
        %6326 = vmatprep.subr.mxu0 0.0
        %6327 = vmatpush1.msra.mxu0 0.0
        %6328 = vmatprep.subr.mxu0 0.0
        %6329 = vmatpush1.msra.mxu0 0.0
        %6330 = vmatprep.subr.mxu0 0.0
        %6331 = vmatpush1.msra.mxu0 0.0
        %6332 = vmatprep.subr.mxu0 0.0
        %6333 = vmatpush1.msra.mxu0 0.0
        %6334 = vmatprep.subr.mxu0 0.0
        %6335 = vmatpush1.msra.mxu0 0.0
        %6336 = vmatprep.subr.mxu0 0.0
        %6337 = vmatpush1.msra.mxu0 0.0
        %6338 = vmatprep.subr.mxu0 0.0
        %6339 = vmatpush1.msra.mxu0 0.0
        %6340 = vmatprep.subr.mxu0 0.0
        %6341 = vmatpush1.msra.mxu0 0.0
        %6342 = vmatprep.subr.mxu0 0.0
        %6343 = vmatpush1.msra.mxu0 0.0
        %6344 = vmatprep.mubr.f32.mxu0 0.0
        %v6345 = vand.u32 %v6116, 4294901760
        %v6346 = vsub.f32 %v6116, %v6345
        %6347 = vmatmul.mubr.f32.gmra.mrb[0].mxu0 %v6346
        %v6348 = vpop.f32.mrb[0].mxu0
        %v6349 = vadd.f32 %v6273, %v6348
        %v6350 = vpop.f32.mrb[0].mxu0
        %6351 = vdwg.mxu0
        %6352 = vmatprep.subr.mxu0 0.0
        %v6353 = vand.u32 %v6106, 4294901760
        %6354 = vmatpush1.msra.mxu0 %v6353
        %6355 = vmatprep.subr.mxu0 0.0
        %v6356 = vand.u32 %v6107, 4294901760
        %6357 = vmatpush1.msra.mxu0 %v6356
        %6358 = vmatprep.subr.mxu0 0.0
        %6359 = vmatpush1.msra.mxu0 0.0
        %6360 = vmatprep.subr.mxu0 0.0
        %6361 = vmatpush1.msra.mxu0 0.0
        %6362 = vmatprep.subr.mxu0 0.0
        %6363 = vmatpush1.msra.mxu0 0.0
        %6364 = vmatprep.subr.mxu0 0.0
        %6365 = vmatpush1.msra.mxu0 0.0
        %6366 = vmatprep.subr.mxu0 0.0
        %6367 = vmatpush1.msra.mxu0 0.0
        %6368 = vmatprep.subr.mxu0 0.0
        %6369 = vmatpush1.msra.mxu0 0.0
        %6370 = vmatprep.subr.mxu0 0.0
        %6371 = vmatpush1.msra.mxu0 0.0
        %6372 = vmatprep.subr.mxu0 0.0
        %6373 = vmatpush1.msra.mxu0 0.0
        %6374 = vmatprep.subr.mxu0 0.0
        %6375 = vmatpush1.msra.mxu0 0.0
        %6376 = vmatprep.subr.mxu0 0.0
        %6377 = vmatpush1.msra.mxu0 0.0
        %6378 = vmatprep.subr.mxu0 0.0
        %6379 = vmatpush1.msra.mxu0 0.0
        %6380 = vmatprep.subr.mxu0 0.0
        %6381 = vmatpush1.msra.mxu0 0.0
        %6382 = vmatprep.subr.mxu0 0.0
        %6383 = vmatpush1.msra.mxu0 0.0
        %6384 = vmatprep.subr.mxu0 0.0
        %6385 = vmatpush1.msra.mxu0 0.0
        %6386 = vmatprep.subr.mxu0 0.0
        %6387 = vmatpush1.msra.mxu0 0.0
        %6388 = vmatprep.subr.mxu0 0.0
        %6389 = vmatpush1.msra.mxu0 0.0
        %6390 = vmatprep.subr.mxu0 0.0
        %6391 = vmatpush1.msra.mxu0 0.0
        %6392 = vmatprep.subr.mxu0 0.0
        %6393 = vmatpush1.msra.mxu0 0.0
        %6394 = vmatprep.subr.mxu0 0.0
        %6395 = vmatpush1.msra.mxu0 0.0
        %6396 = vmatprep.subr.mxu0 0.0
        %6397 = vmatpush1.msra.mxu0 0.0
        %6398 = vmatprep.subr.mxu0 0.0
        %6399 = vmatpush1.msra.mxu0 0.0
        %6400 = vmatprep.subr.mxu0 0.0
        %6401 = vmatpush1.msra.mxu0 0.0
        %6402 = vmatprep.subr.mxu0 0.0
        %6403 = vmatpush1.msra.mxu0 0.0
        %6404 = vmatprep.subr.mxu0 0.0
        %6405 = vmatpush1.msra.mxu0 0.0
        %6406 = vmatprep.subr.mxu0 0.0
        %6407 = vmatpush1.msra.mxu0 0.0
        %6408 = vmatprep.subr.mxu0 0.0
        %6409 = vmatpush1.msra.mxu0 0.0
        %6410 = vmatprep.subr.mxu0 0.0
        %6411 = vmatpush1.msra.mxu0 0.0
        %6412 = vmatprep.subr.mxu0 0.0
        %6413 = vmatpush1.msra.mxu0 0.0
        %6414 = vmatprep.subr.mxu0 0.0
        %6415 = vmatpush1.msra.mxu0 0.0
        %6416 = vmatprep.subr.mxu0 0.0
        %6417 = vmatpush1.msra.mxu0 0.0
        %6418 = vmatprep.mubr.f32.mxu0 0.0
        %v6419 = vand.u32 %v6116, 4294901760
        %v6420 = vsub.f32 %v6116, %v6419
        %v6421 = vand.u32 %v6420, 4294901760
        %6422 = vmatmul.mubr.f32.gmra.mrb[0].mxu0 %v6421
        %v6423 = vpop.f32.mrb[0].mxu0
        %v6424 = vadd.f32 %v6349, %v6423
        %v6425 = vpop.f32.mrb[0].mxu0
        %6426 = vdwg.mxu0
        %6427 = vmatprep.subr.mxu0 0.0
        %v6428 = vand.u32 %v6106, 4294901760
        %v6429 = vsub.f32 %v6106, %v6428
        %v6430 = vand.u32 %v6429, 4294901760
        %6431 = vmatpush1.msra.mxu0 %v6430
        %6432 = vmatprep.subr.mxu0 0.0
        %v6433 = vand.u32 %v6107, 4294901760
        %v6434 = vsub.f32 %v6107, %v6433
        %v6435 = vand.u32 %v6434, 4294901760
        %6436 = vmatpush1.msra.mxu0 %v6435
        %6437 = vmatprep.subr.mxu0 0.0
        %6438 = vmatpush1.msra.mxu0 0.0
        %6439 = vmatprep.subr.mxu0 0.0
        %6440 = vmatpush1.msra.mxu0 0.0
        %6441 = vmatprep.subr.mxu0 0.0
        %6442 = vmatpush1.msra.mxu0 0.0
        %6443 = vmatprep.subr.mxu0 0.0
        %6444 = vmatpush1.msra.mxu0 0.0
        %6445 = vmatprep.subr.mxu0 0.0
        %6446 = vmatpush1.msra.mxu0 0.0
        %6447 = vmatprep.subr.mxu0 0.0
        %6448 = vmatpush1.msra.mxu0 0.0
        %6449 = vmatprep.subr.mxu0 0.0
        %6450 = vmatpush1.msra.mxu0 0.0
        %6451 = vmatprep.subr.mxu0 0.0
        %6452 = vmatpush1.msra.mxu0 0.0
        %6453 = vmatprep.subr.mxu0 0.0
        %6454 = vmatpush1.msra.mxu0 0.0
        %6455 = vmatprep.subr.mxu0 0.0
        %6456 = vmatpush1.msra.mxu0 0.0
        %6457 = vmatprep.subr.mxu0 0.0
        %6458 = vmatpush1.msra.mxu0 0.0
        %6459 = vmatprep.subr.mxu0 0.0
        %6460 = vmatpush1.msra.mxu0 0.0
        %6461 = vmatprep.subr.mxu0 0.0
        %6462 = vmatpush1.msra.mxu0 0.0
        %6463 = vmatprep.subr.mxu0 0.0
        %6464 = vmatpush1.msra.mxu0 0.0
        %6465 = vmatprep.subr.mxu0 0.0
        %6466 = vmatpush1.msra.mxu0 0.0
        %6467 = vmatprep.subr.mxu0 0.0
        %6468 = vmatpush1.msra.mxu0 0.0
        %6469 = vmatprep.subr.mxu0 0.0
        %6470 = vmatpush1.msra.mxu0 0.0
        %6471 = vmatprep.subr.mxu0 0.0
        %6472 = vmatpush1.msra.mxu0 0.0
        %6473 = vmatprep.subr.mxu0 0.0
        %6474 = vmatpush1.msra.mxu0 0.0
        %6475 = vmatprep.subr.mxu0 0.0
        %6476 = vmatpush1.msra.mxu0 0.0
        %6477 = vmatprep.subr.mxu0 0.0
        %6478 = vmatpush1.msra.mxu0 0.0
        %6479 = vmatprep.subr.mxu0 0.0
        %6480 = vmatpush1.msra.mxu0 0.0
        %6481 = vmatprep.subr.mxu0 0.0
        %6482 = vmatpush1.msra.mxu0 0.0
        %6483 = vmatprep.subr.mxu0 0.0
        %6484 = vmatpush1.msra.mxu0 0.0
        %6485 = vmatprep.subr.mxu0 0.0
        %6486 = vmatpush1.msra.mxu0 0.0
        %6487 = vmatprep.subr.mxu0 0.0
        %6488 = vmatpush1.msra.mxu0 0.0
        %6489 = vmatprep.subr.mxu0 0.0
        %6490 = vmatpush1.msra.mxu0 0.0
        %6491 = vmatprep.subr.mxu0 0.0
        %6492 = vmatpush1.msra.mxu0 0.0
        %6493 = vmatprep.subr.mxu0 0.0
        %6494 = vmatpush1.msra.mxu0 0.0
        %6495 = vmatprep.subr.mxu0 0.0
        %6496 = vmatpush1.msra.mxu0 0.0
        %6497 = vmatprep.mubr.f32.mxu0 0.0
        %v6498 = vand.u32 %v6116, 4294901760
        %6499 = vmatmul.mubr.f32.gmra.mrb[0].mxu0 %v6498
        %v6500 = vpop.f32.mrb[0].mxu0
        %v6501 = vadd.f32 %v6424, %v6500
        %v6502 = vpop.f32.mrb[0].mxu0
        %6503 = vdwg.mxu0
        %6504 = vmatprep.subr.mxu0 0.0
        %v6505 = vand.u32 %v6106, 4294901760
        %6506 = vmatpush1.msra.mxu0 %v6505
        %6507 = vmatprep.subr.mxu0 0.0
        %v6508 = vand.u32 %v6107, 4294901760
        %6509 = vmatpush1.msra.mxu0 %v6508
        %6510 = vmatprep.subr.mxu0 0.0
        %6511 = vmatpush1.msra.mxu0 0.0
        %6512 = vmatprep.subr.mxu0 0.0
        %6513 = vmatpush1.msra.mxu0 0.0
        %6514 = vmatprep.subr.mxu0 0.0
        %6515 = vmatpush1.msra.mxu0 0.0
        %6516 = vmatprep.subr.mxu0 0.0
        %6517 = vmatpush1.msra.mxu0 0.0
        %6518 = vmatprep.subr.mxu0 0.0
        %6519 = vmatpush1.msra.mxu0 0.0
        %6520 = vmatprep.subr.mxu0 0.0
        %6521 = vmatpush1.msra.mxu0 0.0
        %6522 = vmatprep.subr.mxu0 0.0
        %6523 = vmatpush1.msra.mxu0 0.0
        %6524 = vmatprep.subr.mxu0 0.0
        %6525 = vmatpush1.msra.mxu0 0.0
        %6526 = vmatprep.subr.mxu0 0.0
        %6527 = vmatpush1.msra.mxu0 0.0
        %6528 = vmatprep.subr.mxu0 0.0
        %6529 = vmatpush1.msra.mxu0 0.0
        %6530 = vmatprep.subr.mxu0 0.0
        %6531 = vmatpush1.msra.mxu0 0.0
        %6532 = vmatprep.subr.mxu0 0.0
        %6533 = vmatpush1.msra.mxu0 0.0
        %6534 = vmatprep.subr.mxu0 0.0
        %6535 = vmatpush1.msra.mxu0 0.0
        %6536 = vmatprep.subr.mxu0 0.0
        %6537 = vmatpush1.msra.mxu0 0.0
        %6538 = vmatprep.subr.mxu0 0.0
        %6539 = vmatpush1.msra.mxu0 0.0
        %6540 = vmatprep.subr.mxu0 0.0
        %6541 = vmatpush1.msra.mxu0 0.0
        %6542 = vmatprep.subr.mxu0 0.0
        %6543 = vmatpush1.msra.mxu0 0.0
        %6544 = vmatprep.subr.mxu0 0.0
        %6545 = vmatpush1.msra.mxu0 0.0
        %6546 = vmatprep.subr.mxu0 0.0
        %6547 = vmatpush1.msra.mxu0 0.0
        %6548 = vmatprep.subr.mxu0 0.0
        %6549 = vmatpush1.msra.mxu0 0.0
        %6550 = vmatprep.subr.mxu0 0.0
        %6551 = vmatpush1.msra.mxu0 0.0
        %6552 = vmatprep.subr.mxu0 0.0
        %6553 = vmatpush1.msra.mxu0 0.0
        %6554 = vmatprep.subr.mxu0 0.0
        %6555 = vmatpush1.msra.mxu0 0.0
        %6556 = vmatprep.subr.mxu0 0.0
        %6557 = vmatpush1.msra.mxu0 0.0
        %6558 = vmatprep.subr.mxu0 0.0
        %6559 = vmatpush1.msra.mxu0 0.0
        %6560 = vmatprep.subr.mxu0 0.0
        %6561 = vmatpush1.msra.mxu0 0.0
        %6562 = vmatprep.subr.mxu0 0.0
        %6563 = vmatpush1.msra.mxu0 0.0
        %6564 = vmatprep.subr.mxu0 0.0
        %6565 = vmatpush1.msra.mxu0 0.0
        %6566 = vmatprep.subr.mxu0 0.0
        %6567 = vmatpush1.msra.mxu0 0.0
        %6568 = vmatprep.subr.mxu0 0.0
        %6569 = vmatpush1.msra.mxu0 0.0
        %6570 = vmatprep.mubr.f32.mxu0 0.0
        %v6571 = vand.u32 %v6116, 4294901760
        %6572 = vmatmul.mubr.f32.gmra.mrb[0].mxu0 %v6571
        %v6573 = vpop.f32.mrb[0].mxu0
        %v6574 = vadd.f32 %v6501, %v6573
        %v6575 = vpop.f32.mrb[0].mxu0
        %6576 = vdwg.mxu0
        %v6577 = vmax.f32 %v6574, 0.0
        %v6578 = vld [vmem:[#allocation8] sm:$0xff]
        %v6579 = vld [vmem:[#allocation8 + $0x8] sm:$0xff]
        %v6581 = vsel %vm736, %v6578, 0
        %v6584 = vsel %vm736, %v6579, 0
        %6586 = vmatprep.subr.mxu0 0.0
        %v6587 = vand.u32 %v6577, 4294901760
        %6588 = vmatpush1.msra.mxu0 %v6587
        %6589 = vmatprep.subr.mxu0 0.0
        %6590 = vmatpush1.msra.mxu0 0.0
        %6591 = vmatprep.subr.mxu0 0.0
        %6592 = vmatpush1.msra.mxu0 0.0
        %6593 = vmatprep.subr.mxu0 0.0
        %6594 = vmatpush1.msra.mxu0 0.0
        %6595 = vmatprep.subr.mxu0 0.0
        %6596 = vmatpush1.msra.mxu0 0.0
        %6597 = vmatprep.subr.mxu0 0.0
        %6598 = vmatpush1.msra.mxu0 0.0
        %6599 = vmatprep.subr.mxu0 0.0
        %6600 = vmatpush1.msra.mxu0 0.0
        %6601 = vmatprep.subr.mxu0 0.0
        %6602 = vmatpush1.msra.mxu0 0.0
        %6603 = vmatprep.subr.mxu0 0.0
        %6604 = vmatpush1.msra.mxu0 0.0
        %6605 = vmatprep.subr.mxu0 0.0
        %6606 = vmatpush1.msra.mxu0 0.0
        %6607 = vmatprep.subr.mxu0 0.0
        %6608 = vmatpush1.msra.mxu0 0.0
        %6609 = vmatprep.subr.mxu0 0.0
        %6610 = vmatpush1.msra.mxu0 0.0
        %6611 = vmatprep.subr.mxu0 0.0
        %6612 = vmatpush1.msra.mxu0 0.0
        %6613 = vmatprep.subr.mxu0 0.0
        %6614 = vmatpush1.msra.mxu0 0.0
        %6615 = vmatprep.subr.mxu0 0.0
        %6616 = vmatpush1.msra.mxu0 0.0
        %6617 = vmatprep.subr.mxu0 0.0
        %6618 = vmatpush1.msra.mxu0 0.0
        %6619 = vmatprep.subr.mxu0 0.0
        %6620 = vmatpush1.msra.mxu0 0.0
        %6621 = vmatprep.subr.mxu0 0.0
        %6622 = vmatpush1.msra.mxu0 0.0
        %6623 = vmatprep.subr.mxu0 0.0
        %6624 = vmatpush1.msra.mxu0 0.0
        %6625 = vmatprep.subr.mxu0 0.0
        %6626 = vmatpush1.msra.mxu0 0.0
        %6627 = vmatprep.subr.mxu0 0.0
        %6628 = vmatpush1.msra.mxu0 0.0
        %6629 = vmatprep.subr.mxu0 0.0
        %6630 = vmatpush1.msra.mxu0 0.0
        %6631 = vmatprep.subr.mxu0 0.0
        %6632 = vmatpush1.msra.mxu0 0.0
        %6633 = vmatprep.subr.mxu0 0.0
        %6634 = vmatpush1.msra.mxu0 0.0
        %6635 = vmatprep.subr.mxu0 0.0
        %6636 = vmatpush1.msra.mxu0 0.0
        %6637 = vmatprep.subr.mxu0 0.0
        %6638 = vmatpush1.msra.mxu0 0.0
        %6639 = vmatprep.subr.mxu0 0.0
        %6640 = vmatpush1.msra.mxu0 0.0
        %6641 = vmatprep.subr.mxu0 0.0
        %6642 = vmatpush1.msra.mxu0 0.0
        %6643 = vmatprep.subr.mxu0 0.0
        %6644 = vmatpush1.msra.mxu0 0.0
        %6645 = vmatprep.subr.mxu0 0.0
        %6646 = vmatpush1.msra.mxu0 0.0
        %6647 = vmatprep.subr.mxu0 0.0
        %6648 = vmatpush1.msra.mxu0 0.0
        %6649 = vmatprep.subr.mxu0 0.0
        %6650 = vmatpush1.msra.mxu0 0.0
        %6651 = vmatprep.mubr.f32.mxu0 0.0
        %v6652 = vand.u32 %v6581, 4294901760
        %v6653 = vsub.f32 %v6581, %v6652
        %v6654 = vand.u32 %v6653, 4294901760
        %v6655 = vsub.f32 %v6653, %v6654
        %v6656 = vand.u32 %v6655, 4294901760
        %6657 = vmatmul.mubr.f32.gmra.mrb[0].mxu0 %v6656
        %v6658 = vpop.f32.mrb[0].mxu0
        %v6659 = vadd.f32 0.0, %v6658
        %v6660 = vpop.f32.mrb[0].mxu0
        %6661 = vmatprep.mubr.f32.mxu0 0.0
        %v6662 = vand.u32 %v6584, 4294901760
        %v6663 = vsub.f32 %v6584, %v6662
        %v6664 = vand.u32 %v6663, 4294901760
        %v6665 = vsub.f32 %v6663, %v6664
        %v6666 = vand.u32 %v6665, 4294901760
        %6667 = vmatmul.mubr.f32.gmra.mrb[0].mxu0 %v6666
        %v6668 = vpop.f32.mrb[0].mxu0
        %v6669 = vadd.f32 0.0, %v6668
        %v6670 = vpop.f32.mrb[0].mxu0
        %6671 = vdwg.mxu0
        %6672 = vmatprep.subr.mxu0 0.0
        %v6673 = vand.u32 %v6577, 4294901760
        %v6674 = vsub.f32 %v6577, %v6673
        %v6675 = vand.u32 %v6674, 4294901760
        %v6676 = vsub.f32 %v6674, %v6675
        %v6677 = vand.u32 %v6676, 4294901760
        %6678 = vmatpush1.msra.mxu0 %v6677
        %6679 = vmatprep.subr.mxu0 0.0
        %6680 = vmatpush1.msra.mxu0 0.0
        %6681 = vmatprep.subr.mxu0 0.0
        %6682 = vmatpush1.msra.mxu0 0.0
        %6683 = vmatprep.subr.mxu0 0.0
        %6684 = vmatpush1.msra.mxu0 0.0
        %6685 = vmatprep.subr.mxu0 0.0
        %6686 = vmatpush1.msra.mxu0 0.0
        %6687 = vmatprep.subr.mxu0 0.0
        %6688 = vmatpush1.msra.mxu0 0.0
        %6689 = vmatprep.subr.mxu0 0.0
        %6690 = vmatpush1.msra.mxu0 0.0
        %6691 = vmatprep.subr.mxu0 0.0
        %6692 = vmatpush1.msra.mxu0 0.0
        %6693 = vmatprep.subr.mxu0 0.0
        %6694 = vmatpush1.msra.mxu0 0.0
        %6695 = vmatprep.subr.mxu0 0.0
        %6696 = vmatpush1.msra.mxu0 0.0
        %6697 = vmatprep.subr.mxu0 0.0
        %6698 = vmatpush1.msra.mxu0 0.0
        %6699 = vmatprep.subr.mxu0 0.0
        %6700 = vmatpush1.msra.mxu0 0.0
        %6701 = vmatprep.subr.mxu0 0.0
        %6702 = vmatpush1.msra.mxu0 0.0
        %6703 = vmatprep.subr.mxu0 0.0
        %6704 = vmatpush1.msra.mxu0 0.0
        %6705 = vmatprep.subr.mxu0 0.0
        %6706 = vmatpush1.msra.mxu0 0.0
        %6707 = vmatprep.subr.mxu0 0.0
        %6708 = vmatpush1.msra.mxu0 0.0
        %6709 = vmatprep.subr.mxu0 0.0
        %6710 = vmatpush1.msra.mxu0 0.0
        %6711 = vmatprep.subr.mxu0 0.0
        %6712 = vmatpush1.msra.mxu0 0.0
        %6713 = vmatprep.subr.mxu0 0.0
        %6714 = vmatpush1.msra.mxu0 0.0
        %6715 = vmatprep.subr.mxu0 0.0
        %6716 = vmatpush1.msra.mxu0 0.0
        %6717 = vmatprep.subr.mxu0 0.0
        %6718 = vmatpush1.msra.mxu0 0.0
        %6719 = vmatprep.subr.mxu0 0.0
        %6720 = vmatpush1.msra.mxu0 0.0
        %6721 = vmatprep.subr.mxu0 0.0
        %6722 = vmatpush1.msra.mxu0 0.0
        %6723 = vmatprep.subr.mxu0 0.0
        %6724 = vmatpush1.msra.mxu0 0.0
        %6725 = vmatprep.subr.mxu0 0.0
        %6726 = vmatpush1.msra.mxu0 0.0
        %6727 = vmatprep.subr.mxu0 0.0
        %6728 = vmatpush1.msra.mxu0 0.0
        %6729 = vmatprep.subr.mxu0 0.0
        %6730 = vmatpush1.msra.mxu0 0.0
        %6731 = vmatprep.subr.mxu0 0.0
        %6732 = vmatpush1.msra.mxu0 0.0
        %6733 = vmatprep.subr.mxu0 0.0
        %6734 = vmatpush1.msra.mxu0 0.0
        %6735 = vmatprep.subr.mxu0 0.0
        %6736 = vmatpush1.msra.mxu0 0.0
        %6737 = vmatprep.subr.mxu0 0.0
        %6738 = vmatpush1.msra.mxu0 0.0
        %6739 = vmatprep.subr.mxu0 0.0
        %6740 = vmatpush1.msra.mxu0 0.0
        %6741 = vmatprep.mubr.f32.mxu0 0.0
        %v6742 = vand.u32 %v6581, 4294901760
        %6743 = vmatmul.mubr.f32.gmra.mrb[0].mxu0 %v6742
        %v6744 = vpop.f32.mrb[0].mxu0
        %v6745 = vadd.f32 %v6659, %v6744
        %v6746 = vpop.f32.mrb[0].mxu0
        %6747 = vmatprep.mubr.f32.mxu0 0.0
        %v6748 = vand.u32 %v6584, 4294901760
        %6749 = vmatmul.mubr.f32.gmra.mrb[0].mxu0 %v6748
        %v6750 = vpop.f32.mrb[0].mxu0
        %v6751 = vadd.f32 %v6669, %v6750
        %v6752 = vpop.f32.mrb[0].mxu0
        %6753 = vdwg.mxu0
        %6754 = vmatprep.subr.mxu0 0.0
        %v6755 = vand.u32 %v6577, 4294901760
        %v6756 = vsub.f32 %v6577, %v6755
        %6757 = vmatpush1.msra.mxu0 %v6756
        %6758 = vmatprep.subr.mxu0 0.0
        %6759 = vmatpush1.msra.mxu0 0.0
        %6760 = vmatprep.subr.mxu0 0.0
        %6761 = vmatpush1.msra.mxu0 0.0
        %6762 = vmatprep.subr.mxu0 0.0
        %6763 = vmatpush1.msra.mxu0 0.0
        %6764 = vmatprep.subr.mxu0 0.0
        %6765 = vmatpush1.msra.mxu0 0.0
        %6766 = vmatprep.subr.mxu0 0.0
        %6767 = vmatpush1.msra.mxu0 0.0
        %6768 = vmatprep.subr.mxu0 0.0
        %6769 = vmatpush1.msra.mxu0 0.0
        %6770 = vmatprep.subr.mxu0 0.0
        %6771 = vmatpush1.msra.mxu0 0.0
        %6772 = vmatprep.subr.mxu0 0.0
        %6773 = vmatpush1.msra.mxu0 0.0
        %6774 = vmatprep.subr.mxu0 0.0
        %6775 = vmatpush1.msra.mxu0 0.0
        %6776 = vmatprep.subr.mxu0 0.0
        %6777 = vmatpush1.msra.mxu0 0.0
        %6778 = vmatprep.subr.mxu0 0.0
        %6779 = vmatpush1.msra.mxu0 0.0
        %6780 = vmatprep.subr.mxu0 0.0
        %6781 = vmatpush1.msra.mxu0 0.0
        %6782 = vmatprep.subr.mxu0 0.0
        %6783 = vmatpush1.msra.mxu0 0.0
        %6784 = vmatprep.subr.mxu0 0.0
        %6785 = vmatpush1.msra.mxu0 0.0
        %6786 = vmatprep.subr.mxu0 0.0
        %6787 = vmatpush1.msra.mxu0 0.0
        %6788 = vmatprep.subr.mxu0 0.0
        %6789 = vmatpush1.msra.mxu0 0.0
        %6790 = vmatprep.subr.mxu0 0.0
        %6791 = vmatpush1.msra.mxu0 0.0
        %6792 = vmatprep.subr.mxu0 0.0
        %6793 = vmatpush1.msra.mxu0 0.0
        %6794 = vmatprep.subr.mxu0 0.0
        %6795 = vmatpush1.msra.mxu0 0.0
        %6796 = vmatprep.subr.mxu0 0.0
        %6797 = vmatpush1.msra.mxu0 0.0
        %6798 = vmatprep.subr.mxu0 0.0
        %6799 = vmatpush1.msra.mxu0 0.0
        %6800 = vmatprep.subr.mxu0 0.0
        %6801 = vmatpush1.msra.mxu0 0.0
        %6802 = vmatprep.subr.mxu0 0.0
        %6803 = vmatpush1.msra.mxu0 0.0
        %6804 = vmatprep.subr.mxu0 0.0
        %6805 = vmatpush1.msra.mxu0 0.0
        %6806 = vmatprep.subr.mxu0 0.0
        %6807 = vmatpush1.msra.mxu0 0.0
        %6808 = vmatprep.subr.mxu0 0.0
        %6809 = vmatpush1.msra.mxu0 0.0
        %6810 = vmatprep.subr.mxu0 0.0
        %6811 = vmatpush1.msra.mxu0 0.0
        %6812 = vmatprep.subr.mxu0 0.0
        %6813 = vmatpush1.msra.mxu0 0.0
        %6814 = vmatprep.subr.mxu0 0.0
        %6815 = vmatpush1.msra.mxu0 0.0
        %6816 = vmatprep.subr.mxu0 0.0
        %6817 = vmatpush1.msra.mxu0 0.0
        %6818 = vmatprep.subr.mxu0 0.0
        %6819 = vmatpush1.msra.mxu0 0.0
        %6820 = vmatprep.mubr.f32.mxu0 0.0
        %v6821 = vand.u32 %v6581, 4294901760
        %v6822 = vsub.f32 %v6581, %v6821
        %6823 = vmatmul.mubr.f32.gmra.mrb[0].mxu0 %v6822
        %v6824 = vpop.f32.mrb[0].mxu0
        %v6825 = vadd.f32 %v6745, %v6824
        %v6826 = vpop.f32.mrb[0].mxu0
        %6827 = vmatprep.mubr.f32.mxu0 0.0
        %v6828 = vand.u32 %v6584, 4294901760
        %v6829 = vsub.f32 %v6584, %v6828
        %6830 = vmatmul.mubr.f32.gmra.mrb[0].mxu0 %v6829
        %v6831 = vpop.f32.mrb[0].mxu0
        %v6832 = vadd.f32 %v6751, %v6831
        %v6833 = vpop.f32.mrb[0].mxu0
        %6834 = vdwg.mxu0
        %6835 = vmatprep.subr.mxu0 0.0
        %v6836 = vand.u32 %v6577, 4294901760
        %6837 = vmatpush1.msra.mxu0 %v6836
        %6838 = vmatprep.subr.mxu0 0.0
        %6839 = vmatpush1.msra.mxu0 0.0
        %6840 = vmatprep.subr.mxu0 0.0
        %6841 = vmatpush1.msra.mxu0 0.0
        %6842 = vmatprep.subr.mxu0 0.0
        %6843 = vmatpush1.msra.mxu0 0.0
        %6844 = vmatprep.subr.mxu0 0.0
        %6845 = vmatpush1.msra.mxu0 0.0
        %6846 = vmatprep.subr.mxu0 0.0
        %6847 = vmatpush1.msra.mxu0 0.0
        %6848 = vmatprep.subr.mxu0 0.0
        %6849 = vmatpush1.msra.mxu0 0.0
        %6850 = vmatprep.subr.mxu0 0.0
        %6851 = vmatpush1.msra.mxu0 0.0
        %6852 = vmatprep.subr.mxu0 0.0
        %6853 = vmatpush1.msra.mxu0 0.0
        %6854 = vmatprep.subr.mxu0 0.0
        %6855 = vmatpush1.msra.mxu0 0.0
        %6856 = vmatprep.subr.mxu0 0.0
        %6857 = vmatpush1.msra.mxu0 0.0
        %6858 = vmatprep.subr.mxu0 0.0
        %6859 = vmatpush1.msra.mxu0 0.0
        %6860 = vmatprep.subr.mxu0 0.0
        %6861 = vmatpush1.msra.mxu0 0.0
        %6862 = vmatprep.subr.mxu0 0.0
        %6863 = vmatpush1.msra.mxu0 0.0
        %6864 = vmatprep.subr.mxu0 0.0
        %6865 = vmatpush1.msra.mxu0 0.0
        %6866 = vmatprep.subr.mxu0 0.0
        %6867 = vmatpush1.msra.mxu0 0.0
        %6868 = vmatprep.subr.mxu0 0.0
        %6869 = vmatpush1.msra.mxu0 0.0
        %6870 = vmatprep.subr.mxu0 0.0
        %6871 = vmatpush1.msra.mxu0 0.0
        %6872 = vmatprep.subr.mxu0 0.0
        %6873 = vmatpush1.msra.mxu0 0.0
        %6874 = vmatprep.subr.mxu0 0.0
        %6875 = vmatpush1.msra.mxu0 0.0
        %6876 = vmatprep.subr.mxu0 0.0
        %6877 = vmatpush1.msra.mxu0 0.0
        %6878 = vmatprep.subr.mxu0 0.0
        %6879 = vmatpush1.msra.mxu0 0.0
        %6880 = vmatprep.subr.mxu0 0.0
        %6881 = vmatpush1.msra.mxu0 0.0
        %6882 = vmatprep.subr.mxu0 0.0
        %6883 = vmatpush1.msra.mxu0 0.0
        %6884 = vmatprep.subr.mxu0 0.0
        %6885 = vmatpush1.msra.mxu0 0.0
        %6886 = vmatprep.subr.mxu0 0.0
        %6887 = vmatpush1.msra.mxu0 0.0
        %6888 = vmatprep.subr.mxu0 0.0
        %6889 = vmatpush1.msra.mxu0 0.0
        %6890 = vmatprep.subr.mxu0 0.0
        %6891 = vmatpush1.msra.mxu0 0.0
        %6892 = vmatprep.subr.mxu0 0.0
        %6893 = vmatpush1.msra.mxu0 0.0
        %6894 = vmatprep.subr.mxu0 0.0
        %6895 = vmatpush1.msra.mxu0 0.0
        %6896 = vmatprep.subr.mxu0 0.0
        %6897 = vmatpush1.msra.mxu0 0.0
        %6898 = vmatprep.subr.mxu0 0.0
        %6899 = vmatpush1.msra.mxu0 0.0
        %6900 = vmatprep.mubr.f32.mxu0 0.0
        %v6901 = vand.u32 %v6581, 4294901760
        %v6902 = vsub.f32 %v6581, %v6901
        %v6903 = vand.u32 %v6902, 4294901760
        %6904 = vmatmul.mubr.f32.gmra.mrb[0].mxu0 %v6903
        %v6905 = vpop.f32.mrb[0].mxu0
        %v6906 = vadd.f32 %v6825, %v6905
        %v6907 = vpop.f32.mrb[0].mxu0
        %6908 = vmatprep.mubr.f32.mxu0 0.0
        %v6909 = vand.u32 %v6584, 4294901760
        %v6910 = vsub.f32 %v6584, %v6909
        %v6911 = vand.u32 %v6910, 4294901760
        %6912 = vmatmul.mubr.f32.gmra.mrb[0].mxu0 %v6911
        %v6913 = vpop.f32.mrb[0].mxu0
        %v6914 = vadd.f32 %v6832, %v6913
        %v6915 = vpop.f32.mrb[0].mxu0
        %6916 = vdwg.mxu0
        %6917 = vmatprep.subr.mxu0 0.0
        %v6918 = vand.u32 %v6577, 4294901760
        %v6919 = vsub.f32 %v6577, %v6918
        %v6920 = vand.u32 %v6919, 4294901760
        %6921 = vmatpush1.msra.mxu0 %v6920
        %6922 = vmatprep.subr.mxu0 0.0
        %6923 = vmatpush1.msra.mxu0 0.0
        %6924 = vmatprep.subr.mxu0 0.0
        %6925 = vmatpush1.msra.mxu0 0.0
        %6926 = vmatprep.subr.mxu0 0.0
        %6927 = vmatpush1.msra.mxu0 0.0
        %6928 = vmatprep.subr.mxu0 0.0
        %6929 = vmatpush1.msra.mxu0 0.0
        %6930 = vmatprep.subr.mxu0 0.0
        %6931 = vmatpush1.msra.mxu0 0.0
        %6932 = vmatprep.subr.mxu0 0.0
        %6933 = vmatpush1.msra.mxu0 0.0
        %6934 = vmatprep.subr.mxu0 0.0
        %6935 = vmatpush1.msra.mxu0 0.0
        %6936 = vmatprep.subr.mxu0 0.0
        %6937 = vmatpush1.msra.mxu0 0.0
        %6938 = vmatprep.subr.mxu0 0.0
        %6939 = vmatpush1.msra.mxu0 0.0
        %6940 = vmatprep.subr.mxu0 0.0
        %6941 = vmatpush1.msra.mxu0 0.0
        %6942 = vmatprep.subr.mxu0 0.0
        %6943 = vmatpush1.msra.mxu0 0.0
        %6944 = vmatprep.subr.mxu0 0.0
        %6945 = vmatpush1.msra.mxu0 0.0
        %6946 = vmatprep.subr.mxu0 0.0
        %6947 = vmatpush1.msra.mxu0 0.0
        %6948 = vmatprep.subr.mxu0 0.0
        %6949 = vmatpush1.msra.mxu0 0.0
        %6950 = vmatprep.subr.mxu0 0.0
        %6951 = vmatpush1.msra.mxu0 0.0
        %6952 = vmatprep.subr.mxu0 0.0
        %6953 = vmatpush1.msra.mxu0 0.0
        %6954 = vmatprep.subr.mxu0 0.0
        %6955 = vmatpush1.msra.mxu0 0.0
        %6956 = vmatprep.subr.mxu0 0.0
        %6957 = vmatpush1.msra.mxu0 0.0
        %6958 = vmatprep.subr.mxu0 0.0
        %6959 = vmatpush1.msra.mxu0 0.0
        %6960 = vmatprep.subr.mxu0 0.0
        %6961 = vmatpush1.msra.mxu0 0.0
        %6962 = vmatprep.subr.mxu0 0.0
        %6963 = vmatpush1.msra.mxu0 0.0
        %6964 = vmatprep.subr.mxu0 0.0
        %6965 = vmatpush1.msra.mxu0 0.0
        %6966 = vmatprep.subr.mxu0 0.0
        %6967 = vmatpush1.msra.mxu0 0.0
        %6968 = vmatprep.subr.mxu0 0.0
        %6969 = vmatpush1.msra.mxu0 0.0
        %6970 = vmatprep.subr.mxu0 0.0
        %6971 = vmatpush1.msra.mxu0 0.0
        %6972 = vmatprep.subr.mxu0 0.0
        %6973 = vmatpush1.msra.mxu0 0.0
        %6974 = vmatprep.subr.mxu0 0.0
        %6975 = vmatpush1.msra.mxu0 0.0
        %6976 = vmatprep.subr.mxu0 0.0
        %6977 = vmatpush1.msra.mxu0 0.0
        %6978 = vmatprep.subr.mxu0 0.0
        %6979 = vmatpush1.msra.mxu0 0.0
        %6980 = vmatprep.subr.mxu0 0.0
        %6981 = vmatpush1.msra.mxu0 0.0
        %6982 = vmatprep.subr.mxu0 0.0
        %6983 = vmatpush1.msra.mxu0 0.0
        %6984 = vmatprep.mubr.f32.mxu0 0.0
        %v6985 = vand.u32 %v6581, 4294901760
        %6986 = vmatmul.mubr.f32.gmra.mrb[0].mxu0 %v6985
        %v6987 = vpop.f32.mrb[0].mxu0
        %v6988 = vadd.f32 %v6906, %v6987
        %v6989 = vpop.f32.mrb[0].mxu0
        %6990 = vmatprep.mubr.f32.mxu0 0.0
        %v6991 = vand.u32 %v6584, 4294901760
        %6992 = vmatmul.mubr.f32.gmra.mrb[0].mxu0 %v6991
        %v6993 = vpop.f32.mrb[0].mxu0
        %v6994 = vadd.f32 %v6914, %v6993
        %v6995 = vpop.f32.mrb[0].mxu0
        %6996 = vdwg.mxu0
        %6997 = vmatprep.subr.mxu0 0.0
        %v6998 = vand.u32 %v6577, 4294901760
        %6999 = vmatpush1.msra.mxu0 %v6998
        %7000 = vmatprep.subr.mxu0 0.0
        %7001 = vmatpush1.msra.mxu0 0.0
        %7002 = vmatprep.subr.mxu0 0.0
        %7003 = vmatpush1.msra.mxu0 0.0
        %7004 = vmatprep.subr.mxu0 0.0
        %7005 = vmatpush1.msra.mxu0 0.0
        %7006 = vmatprep.subr.mxu0 0.0
        %7007 = vmatpush1.msra.mxu0 0.0
        %7008 = vmatprep.subr.mxu0 0.0
        %7009 = vmatpush1.msra.mxu0 0.0
        %7010 = vmatprep.subr.mxu0 0.0
        %7011 = vmatpush1.msra.mxu0 0.0
        %7012 = vmatprep.subr.mxu0 0.0
        %7013 = vmatpush1.msra.mxu0 0.0
        %7014 = vmatprep.subr.mxu0 0.0
        %7015 = vmatpush1.msra.mxu0 0.0
        %7016 = vmatprep.subr.mxu0 0.0
        %7017 = vmatpush1.msra.mxu0 0.0
        %7018 = vmatprep.subr.mxu0 0.0
        %7019 = vmatpush1.msra.mxu0 0.0
        %7020 = vmatprep.subr.mxu0 0.0
        %7021 = vmatpush1.msra.mxu0 0.0
        %7022 = vmatprep.subr.mxu0 0.0
        %7023 = vmatpush1.msra.mxu0 0.0
        %7024 = vmatprep.subr.mxu0 0.0
        %7025 = vmatpush1.msra.mxu0 0.0
        %7026 = vmatprep.subr.mxu0 0.0
        %7027 = vmatpush1.msra.mxu0 0.0
        %7028 = vmatprep.subr.mxu0 0.0
        %7029 = vmatpush1.msra.mxu0 0.0
        %7030 = vmatprep.subr.mxu0 0.0
        %7031 = vmatpush1.msra.mxu0 0.0
        %7032 = vmatprep.subr.mxu0 0.0
        %7033 = vmatpush1.msra.mxu0 0.0
        %7034 = vmatprep.subr.mxu0 0.0
        %7035 = vmatpush1.msra.mxu0 0.0
        %7036 = vmatprep.subr.mxu0 0.0
        %7037 = vmatpush1.msra.mxu0 0.0
        %7038 = vmatprep.subr.mxu0 0.0
        %7039 = vmatpush1.msra.mxu0 0.0
        %7040 = vmatprep.subr.mxu0 0.0
        %7041 = vmatpush1.msra.mxu0 0.0
        %7042 = vmatprep.subr.mxu0 0.0
        %7043 = vmatpush1.msra.mxu0 0.0
        %7044 = vmatprep.subr.mxu0 0.0
        %7045 = vmatpush1.msra.mxu0 0.0
        %7046 = vmatprep.subr.mxu0 0.0
        %7047 = vmatpush1.msra.mxu0 0.0
        %7048 = vmatprep.subr.mxu0 0.0
        %7049 = vmatpush1.msra.mxu0 0.0
        %7050 = vmatprep.subr.mxu0 0.0
        %7051 = vmatpush1.msra.mxu0 0.0
        %7052 = vmatprep.subr.mxu0 0.0
        %7053 = vmatpush1.msra.mxu0 0.0
        %7054 = vmatprep.subr.mxu0 0.0
        %7055 = vmatpush1.msra.mxu0 0.0
        %7056 = vmatprep.subr.mxu0 0.0
        %7057 = vmatpush1.msra.mxu0 0.0
        %7058 = vmatprep.subr.mxu0 0.0
        %7059 = vmatpush1.msra.mxu0 0.0
        %7060 = vmatprep.subr.mxu0 0.0
        %7061 = vmatpush1.msra.mxu0 0.0
        %7062 = vmatprep.mubr.f32.mxu0 0.0
        %v7063 = vand.u32 %v6581, 4294901760
        %7064 = vmatmul.mubr.f32.gmra.mrb[0].mxu0 %v7063
        %v7065 = vpop.f32.mrb[0].mxu0
        %v7066 = vadd.f32 %v6988, %v7065
        %v7067 = vpop.f32.mrb[0].mxu0
        %7068 = vmatprep.mubr.f32.mxu0 0.0
        %v7069 = vand.u32 %v6584, 4294901760
        %7070 = vmatmul.mubr.f32.gmra.mrb[0].mxu0 %v7069
        %v7071 = vpop.f32.mrb[0].mxu0
        %v7072 = vadd.f32 %v6994, %v7071
        %v7073 = vpop.f32.mrb[0].mxu0
        %7074 = vdwg.mxu0
        %s7075 = scalar_lea.vmem %s257, 96 [#allocation10]
        %7076 = vst [vmem:[%s7075] sm:$0xff] %v7066
        %7077 = vst [vmem:[%s7075 + $0x8] sm:$0xff] %v7072
        %s7078 = scalar_lea.vmem %s221, 56 [#allocation2]
        %v7079 = vld [vmem:[%s7078] sm:$0xff]
        %v7080 = vld [vmem:[#allocation5] sm:$0xff]
        %v7081 = vld [vmem:[#allocation5 + $0x8] sm:$0xff]
        %v7082 = vld [vmem:[#allocation7] sm:$0x1]
        %v7084 = vlaneseq
        %v7085 = vshrl.u32 %v7084, 7
        %v7086 = vsub.s32 0, %v7085
        %v7087 = vrot.slane %v7082, %v7086
        %v7090 = vsel %vm270, %v7079, 0
        %7092 = vmatprep.subr.mxu0 0.0
        %v7093 = vand.u32 %v7080, 4294901760
        %7094 = vmatpush1.msra.mxu0 %v7093
        %7095 = vmatprep.subr.mxu0 0.0
        %v7096 = vand.u32 %v7081, 4294901760
        %7097 = vmatpush1.msra.mxu0 %v7096
        %7098 = vmatprep.subr.mxu0 0.0
        %7099 = vmatpush1.msra.mxu0 0.0
        %7100 = vmatprep.subr.mxu0 0.0
        %7101 = vmatpush1.msra.mxu0 0.0
        %7102 = vmatprep.subr.mxu0 0.0
        %7103 = vmatpush1.msra.mxu0 0.0
        %7104 = vmatprep.subr.mxu0 0.0
        %7105 = vmatpush1.msra.mxu0 0.0
        %7106 = vmatprep.subr.mxu0 0.0
        %7107 = vmatpush1.msra.mxu0 0.0
        %7108 = vmatprep.subr.mxu0 0.0
        %7109 = vmatpush1.msra.mxu0 0.0
        %7110 = vmatprep.subr.mxu0 0.0
        %7111 = vmatpush1.msra.mxu0 0.0
        %7112 = vmatprep.subr.mxu0 0.0
        %7113 = vmatpush1.msra.mxu0 0.0
        %7114 = vmatprep.subr.mxu0 0.0
        %7115 = vmatpush1.msra.mxu0 0.0
        %7116 = vmatprep.subr.mxu0 0.0
        %7117 = vmatpush1.msra.mxu0 0.0
        %7118 = vmatprep.subr.mxu0 0.0
        %7119 = vmatpush1.msra.mxu0 0.0
        %7120 = vmatprep.subr.mxu0 0.0
        %7121 = vmatpush1.msra.mxu0 0.0
        %7122 = vmatprep.subr.mxu0 0.0
        %7123 = vmatpush1.msra.mxu0 0.0
        %7124 = vmatprep.subr.mxu0 0.0
        %7125 = vmatpush1.msra.mxu0 0.0
        %7126 = vmatprep.subr.mxu0 0.0
        %7127 = vmatpush1.msra.mxu0 0.0
        %7128 = vmatprep.subr.mxu0 0.0
        %7129 = vmatpush1.msra.mxu0 0.0
        %7130 = vmatprep.subr.mxu0 0.0
        %7131 = vmatpush1.msra.mxu0 0.0
        %7132 = vmatprep.subr.mxu0 0.0
        %7133 = vmatpush1.msra.mxu0 0.0
        %7134 = vmatprep.subr.mxu0 0.0
        %7135 = vmatpush1.msra.mxu0 0.0
        %7136 = vmatprep.subr.mxu0 0.0
        %7137 = vmatpush1.msra.mxu0 0.0
        %7138 = vmatprep.subr.mxu0 0.0
        %7139 = vmatpush1.msra.mxu0 0.0
        %7140 = vmatprep.subr.mxu0 0.0
        %7141 = vmatpush1.msra.mxu0 0.0
        %7142 = vmatprep.subr.mxu0 0.0
        %7143 = vmatpush1.msra.mxu0 0.0
        %7144 = vmatprep.subr.mxu0 0.0
        %7145 = vmatpush1.msra.mxu0 0.0
        %7146 = vmatprep.subr.mxu0 0.0
        %7147 = vmatpush1.msra.mxu0 0.0
        %7148 = vmatprep.subr.mxu0 0.0
        %7149 = vmatpush1.msra.mxu0 0.0
        %7150 = vmatprep.subr.mxu0 0.0
        %7151 = vmatpush1.msra.mxu0 0.0
        %7152 = vmatprep.subr.mxu0 0.0
        %7153 = vmatpush1.msra.mxu0 0.0
        %7154 = vmatprep.subr.mxu0 0.0
        %7155 = vmatpush1.msra.mxu0 0.0
        %7156 = vmatprep.subr.mxu0 0.0
        %7157 = vmatpush1.msra.mxu0 0.0
        %7158 = vmatprep.mubr.f32.mxu0 0.0
        %v7159 = vand.u32 %v7090, 4294901760
        %v7160 = vsub.f32 %v7090, %v7159
        %v7161 = vand.u32 %v7160, 4294901760
        %v7162 = vsub.f32 %v7160, %v7161
        %v7163 = vand.u32 %v7162, 4294901760
        %7164 = vmatmul.mubr.f32.gmra.mrb[0].mxu0 %v7163
        %v7165 = vpop.f32.mrb[0].mxu0
        %v7166 = vadd.f32 %v7087, %v7165
        %v7167 = vpop.f32.mrb[0].mxu0
        %7168 = vdwg.mxu0
        %7169 = vmatprep.subr.mxu0 0.0
        %v7170 = vand.u32 %v7080, 4294901760
        %v7171 = vsub.f32 %v7080, %v7170
        %v7172 = vand.u32 %v7171, 4294901760
        %v7173 = vsub.f32 %v7171, %v7172
        %v7174 = vand.u32 %v7173, 4294901760
        %7175 = vmatpush1.msra.mxu0 %v7174
        %7176 = vmatprep.subr.mxu0 0.0
        %v7177 = vand.u32 %v7081, 4294901760
        %v7178 = vsub.f32 %v7081, %v7177
        %v7179 = vand.u32 %v7178, 4294901760
        %v7180 = vsub.f32 %v7178, %v7179
        %v7181 = vand.u32 %v7180, 4294901760
        %7182 = vmatpush1.msra.mxu0 %v7181
        %7183 = vmatprep.subr.mxu0 0.0
        %7184 = vmatpush1.msra.mxu0 0.0
        %7185 = vmatprep.subr.mxu0 0.0
        %7186 = vmatpush1.msra.mxu0 0.0
        %7187 = vmatprep.subr.mxu0 0.0
        %7188 = vmatpush1.msra.mxu0 0.0
        %7189 = vmatprep.subr.mxu0 0.0
        %7190 = vmatpush1.msra.mxu0 0.0
        %7191 = vmatprep.subr.mxu0 0.0
        %7192 = vmatpush1.msra.mxu0 0.0
        %7193 = vmatprep.subr.mxu0 0.0
        %7194 = vmatpush1.msra.mxu0 0.0
        %7195 = vmatprep.subr.mxu0 0.0
        %7196 = vmatpush1.msra.mxu0 0.0
        %7197 = vmatprep.subr.mxu0 0.0
        %7198 = vmatpush1.msra.mxu0 0.0
        %7199 = vmatprep.subr.mxu0 0.0
        %7200 = vmatpush1.msra.mxu0 0.0
        %7201 = vmatprep.subr.mxu0 0.0
        %7202 = vmatpush1.msra.mxu0 0.0
        %7203 = vmatprep.subr.mxu0 0.0
        %7204 = vmatpush1.msra.mxu0 0.0
        %7205 = vmatprep.subr.mxu0 0.0
        %7206 = vmatpush1.msra.mxu0 0.0
        %7207 = vmatprep.subr.mxu0 0.0
        %7208 = vmatpush1.msra.mxu0 0.0
        %7209 = vmatprep.subr.mxu0 0.0
        %7210 = vmatpush1.msra.mxu0 0.0
        %7211 = vmatprep.subr.mxu0 0.0
        %7212 = vmatpush1.msra.mxu0 0.0
        %7213 = vmatprep.subr.mxu0 0.0
        %7214 = vmatpush1.msra.mxu0 0.0
        %7215 = vmatprep.subr.mxu0 0.0
        %7216 = vmatpush1.msra.mxu0 0.0
        %7217 = vmatprep.subr.mxu0 0.0
        %7218 = vmatpush1.msra.mxu0 0.0
        %7219 = vmatprep.subr.mxu0 0.0
        %7220 = vmatpush1.msra.mxu0 0.0
        %7221 = vmatprep.subr.mxu0 0.0
        %7222 = vmatpush1.msra.mxu0 0.0
        %7223 = vmatprep.subr.mxu0 0.0
        %7224 = vmatpush1.msra.mxu0 0.0
        %7225 = vmatprep.subr.mxu0 0.0
        %7226 = vmatpush1.msra.mxu0 0.0
        %7227 = vmatprep.subr.mxu0 0.0
        %7228 = vmatpush1.msra.mxu0 0.0
        %7229 = vmatprep.subr.mxu0 0.0
        %7230 = vmatpush1.msra.mxu0 0.0
        %7231 = vmatprep.subr.mxu0 0.0
        %7232 = vmatpush1.msra.mxu0 0.0
        %7233 = vmatprep.subr.mxu0 0.0
        %7234 = vmatpush1.msra.mxu0 0.0
        %7235 = vmatprep.subr.mxu0 0.0
        %7236 = vmatpush1.msra.mxu0 0.0
        %7237 = vmatprep.subr.mxu0 0.0
        %7238 = vmatpush1.msra.mxu0 0.0
        %7239 = vmatprep.subr.mxu0 0.0
        %7240 = vmatpush1.msra.mxu0 0.0
        %7241 = vmatprep.subr.mxu0 0.0
        %7242 = vmatpush1.msra.mxu0 0.0
        %7243 = vmatprep.mubr.f32.mxu0 0.0
        %v7244 = vand.u32 %v7090, 4294901760
        %7245 = vmatmul.mubr.f32.gmra.mrb[0].mxu0 %v7244
        %v7246 = vpop.f32.mrb[0].mxu0
        %v7247 = vadd.f32 %v7166, %v7246
        %v7248 = vpop.f32.mrb[0].mxu0
        %7249 = vdwg.mxu0
        %7250 = vmatprep.subr.mxu0 0.0
        %v7251 = vand.u32 %v7080, 4294901760
        %v7252 = vsub.f32 %v7080, %v7251
        %7253 = vmatpush1.msra.mxu0 %v7252
        %7254 = vmatprep.subr.mxu0 0.0
        %v7255 = vand.u32 %v7081, 4294901760
        %v7256 = vsub.f32 %v7081, %v7255
        %7257 = vmatpush1.msra.mxu0 %v7256
        %7258 = vmatprep.subr.mxu0 0.0
        %7259 = vmatpush1.msra.mxu0 0.0
        %7260 = vmatprep.subr.mxu0 0.0
        %7261 = vmatpush1.msra.mxu0 0.0
        %7262 = vmatprep.subr.mxu0 0.0
        %7263 = vmatpush1.msra.mxu0 0.0
        %7264 = vmatprep.subr.mxu0 0.0
        %7265 = vmatpush1.msra.mxu0 0.0
        %7266 = vmatprep.subr.mxu0 0.0
        %7267 = vmatpush1.msra.mxu0 0.0
        %7268 = vmatprep.subr.mxu0 0.0
        %7269 = vmatpush1.msra.mxu0 0.0
        %7270 = vmatprep.subr.mxu0 0.0
        %7271 = vmatpush1.msra.mxu0 0.0
        %7272 = vmatprep.subr.mxu0 0.0
        %7273 = vmatpush1.msra.mxu0 0.0
        %7274 = vmatprep.subr.mxu0 0.0
        %7275 = vmatpush1.msra.mxu0 0.0
        %7276 = vmatprep.subr.mxu0 0.0
        %7277 = vmatpush1.msra.mxu0 0.0
        %7278 = vmatprep.subr.mxu0 0.0
        %7279 = vmatpush1.msra.mxu0 0.0
        %7280 = vmatprep.subr.mxu0 0.0
        %7281 = vmatpush1.msra.mxu0 0.0
        %7282 = vmatprep.subr.mxu0 0.0
        %7283 = vmatpush1.msra.mxu0 0.0
        %7284 = vmatprep.subr.mxu0 0.0
        %7285 = vmatpush1.msra.mxu0 0.0
        %7286 = vmatprep.subr.mxu0 0.0
        %7287 = vmatpush1.msra.mxu0 0.0
        %7288 = vmatprep.subr.mxu0 0.0
        %7289 = vmatpush1.msra.mxu0 0.0
        %7290 = vmatprep.subr.mxu0 0.0
        %7291 = vmatpush1.msra.mxu0 0.0
        %7292 = vmatprep.subr.mxu0 0.0
        %7293 = vmatpush1.msra.mxu0 0.0
        %7294 = vmatprep.subr.mxu0 0.0
        %7295 = vmatpush1.msra.mxu0 0.0
        %7296 = vmatprep.subr.mxu0 0.0
        %7297 = vmatpush1.msra.mxu0 0.0
        %7298 = vmatprep.subr.mxu0 0.0
        %7299 = vmatpush1.msra.mxu0 0.0
        %7300 = vmatprep.subr.mxu0 0.0
        %7301 = vmatpush1.msra.mxu0 0.0
        %7302 = vmatprep.subr.mxu0 0.0
        %7303 = vmatpush1.msra.mxu0 0.0
        %7304 = vmatprep.subr.mxu0 0.0
        %7305 = vmatpush1.msra.mxu0 0.0
        %7306 = vmatprep.subr.mxu0 0.0
        %7307 = vmatpush1.msra.mxu0 0.0
        %7308 = vmatprep.subr.mxu0 0.0
        %7309 = vmatpush1.msra.mxu0 0.0
        %7310 = vmatprep.subr.mxu0 0.0
        %7311 = vmatpush1.msra.mxu0 0.0
        %7312 = vmatprep.subr.mxu0 0.0
        %7313 = vmatpush1.msra.mxu0 0.0
        %7314 = vmatprep.subr.mxu0 0.0
        %7315 = vmatpush1.msra.mxu0 0.0
        %7316 = vmatprep.subr.mxu0 0.0
        %7317 = vmatpush1.msra.mxu0 0.0
        %7318 = vmatprep.mubr.f32.mxu0 0.0
        %v7319 = vand.u32 %v7090, 4294901760
        %v7320 = vsub.f32 %v7090, %v7319
        %7321 = vmatmul.mubr.f32.gmra.mrb[0].mxu0 %v7320
        %v7322 = vpop.f32.mrb[0].mxu0
        %v7323 = vadd.f32 %v7247, %v7322
        %v7324 = vpop.f32.mrb[0].mxu0
        %7325 = vdwg.mxu0
        %7326 = vmatprep.subr.mxu0 0.0
        %v7327 = vand.u32 %v7080, 4294901760
        %7328 = vmatpush1.msra.mxu0 %v7327
        %7329 = vmatprep.subr.mxu0 0.0
        %v7330 = vand.u32 %v7081, 4294901760
        %7331 = vmatpush1.msra.mxu0 %v7330
        %7332 = vmatprep.subr.mxu0 0.0
        %7333 = vmatpush1.msra.mxu0 0.0
        %7334 = vmatprep.subr.mxu0 0.0
        %7335 = vmatpush1.msra.mxu0 0.0
        %7336 = vmatprep.subr.mxu0 0.0
        %7337 = vmatpush1.msra.mxu0 0.0
        %7338 = vmatprep.subr.mxu0 0.0
        %7339 = vmatpush1.msra.mxu0 0.0
        %7340 = vmatprep.subr.mxu0 0.0
        %7341 = vmatpush1.msra.mxu0 0.0
        %7342 = vmatprep.subr.mxu0 0.0
        %7343 = vmatpush1.msra.mxu0 0.0
        %7344 = vmatprep.subr.mxu0 0.0
        %7345 = vmatpush1.msra.mxu0 0.0
        %7346 = vmatprep.subr.mxu0 0.0
        %7347 = vmatpush1.msra.mxu0 0.0
        %7348 = vmatprep.subr.mxu0 0.0
        %7349 = vmatpush1.msra.mxu0 0.0
        %7350 = vmatprep.subr.mxu0 0.0
        %7351 = vmatpush1.msra.mxu0 0.0
        %7352 = vmatprep.subr.mxu0 0.0
        %7353 = vmatpush1.msra.mxu0 0.0
        %7354 = vmatprep.subr.mxu0 0.0
        %7355 = vmatpush1.msra.mxu0 0.0
        %7356 = vmatprep.subr.mxu0 0.0
        %7357 = vmatpush1.msra.mxu0 0.0
        %7358 = vmatprep.subr.mxu0 0.0
        %7359 = vmatpush1.msra.mxu0 0.0
        %7360 = vmatprep.subr.mxu0 0.0
        %7361 = vmatpush1.msra.mxu0 0.0
        %7362 = vmatprep.subr.mxu0 0.0
        %7363 = vmatpush1.msra.mxu0 0.0
        %7364 = vmatprep.subr.mxu0 0.0
        %7365 = vmatpush1.msra.mxu0 0.0
        %7366 = vmatprep.subr.mxu0 0.0
        %7367 = vmatpush1.msra.mxu0 0.0
        %7368 = vmatprep.subr.mxu0 0.0
        %7369 = vmatpush1.msra.mxu0 0.0
        %7370 = vmatprep.subr.mxu0 0.0
        %7371 = vmatpush1.msra.mxu0 0.0
        %7372 = vmatprep.subr.mxu0 0.0
        %7373 = vmatpush1.msra.mxu0 0.0
        %7374 = vmatprep.subr.mxu0 0.0
        %7375 = vmatpush1.msra.mxu0 0.0
        %7376 = vmatprep.subr.mxu0 0.0
        %7377 = vmatpush1.msra.mxu0 0.0
        %7378 = vmatprep.subr.mxu0 0.0
        %7379 = vmatpush1.msra.mxu0 0.0
        %7380 = vmatprep.subr.mxu0 0.0
        %7381 = vmatpush1.msra.mxu0 0.0
        %7382 = vmatprep.subr.mxu0 0.0
        %7383 = vmatpush1.msra.mxu0 0.0
        %7384 = vmatprep.subr.mxu0 0.0
        %7385 = vmatpush1.msra.mxu0 0.0
        %7386 = vmatprep.subr.mxu0 0.0
        %7387 = vmatpush1.msra.mxu0 0.0
        %7388 = vmatprep.subr.mxu0 0.0
        %7389 = vmatpush1.msra.mxu0 0.0
        %7390 = vmatprep.subr.mxu0 0.0
        %7391 = vmatpush1.msra.mxu0 0.0
        %7392 = vmatprep.mubr.f32.mxu0 0.0
        %v7393 = vand.u32 %v7090, 4294901760
        %v7394 = vsub.f32 %v7090, %v7393
        %v7395 = vand.u32 %v7394, 4294901760
        %7396 = vmatmul.mubr.f32.gmra.mrb[0].mxu0 %v7395
        %v7397 = vpop.f32.mrb[0].mxu0
        %v7398 = vadd.f32 %v7323, %v7397
        %v7399 = vpop.f32.mrb[0].mxu0
        %7400 = vdwg.mxu0
        %7401 = vmatprep.subr.mxu0 0.0
        %v7402 = vand.u32 %v7080, 4294901760
        %v7403 = vsub.f32 %v7080, %v7402
        %v7404 = vand.u32 %v7403, 4294901760
        %7405 = vmatpush1.msra.mxu0 %v7404
        %7406 = vmatprep.subr.mxu0 0.0
        %v7407 = vand.u32 %v7081, 4294901760
        %v7408 = vsub.f32 %v7081, %v7407
        %v7409 = vand.u32 %v7408, 4294901760
        %7410 = vmatpush1.msra.mxu0 %v7409
        %7411 = vmatprep.subr.mxu0 0.0
        %7412 = vmatpush1.msra.mxu0 0.0
        %7413 = vmatprep.subr.mxu0 0.0
        %7414 = vmatpush1.msra.mxu0 0.0
        %7415 = vmatprep.subr.mxu0 0.0
        %7416 = vmatpush1.msra.mxu0 0.0
        %7417 = vmatprep.subr.mxu0 0.0
        %7418 = vmatpush1.msra.mxu0 0.0
        %7419 = vmatprep.subr.mxu0 0.0
        %7420 = vmatpush1.msra.mxu0 0.0
        %7421 = vmatprep.subr.mxu0 0.0
        %7422 = vmatpush1.msra.mxu0 0.0
        %7423 = vmatprep.subr.mxu0 0.0
        %7424 = vmatpush1.msra.mxu0 0.0
        %7425 = vmatprep.subr.mxu0 0.0
        %7426 = vmatpush1.msra.mxu0 0.0
        %7427 = vmatprep.subr.mxu0 0.0
        %7428 = vmatpush1.msra.mxu0 0.0
        %7429 = vmatprep.subr.mxu0 0.0
        %7430 = vmatpush1.msra.mxu0 0.0
        %7431 = vmatprep.subr.mxu0 0.0
        %7432 = vmatpush1.msra.mxu0 0.0
        %7433 = vmatprep.subr.mxu0 0.0
        %7434 = vmatpush1.msra.mxu0 0.0
        %7435 = vmatprep.subr.mxu0 0.0
        %7436 = vmatpush1.msra.mxu0 0.0
        %7437 = vmatprep.subr.mxu0 0.0
        %7438 = vmatpush1.msra.mxu0 0.0
        %7439 = vmatprep.subr.mxu0 0.0
        %7440 = vmatpush1.msra.mxu0 0.0
        %7441 = vmatprep.subr.mxu0 0.0
        %7442 = vmatpush1.msra.mxu0 0.0
        %7443 = vmatprep.subr.mxu0 0.0
        %7444 = vmatpush1.msra.mxu0 0.0
        %7445 = vmatprep.subr.mxu0 0.0
        %7446 = vmatpush1.msra.mxu0 0.0
        %7447 = vmatprep.subr.mxu0 0.0
        %7448 = vmatpush1.msra.mxu0 0.0
        %7449 = vmatprep.subr.mxu0 0.0
        %7450 = vmatpush1.msra.mxu0 0.0
        %7451 = vmatprep.subr.mxu0 0.0
        %7452 = vmatpush1.msra.mxu0 0.0
        %7453 = vmatprep.subr.mxu0 0.0
        %7454 = vmatpush1.msra.mxu0 0.0
        %7455 = vmatprep.subr.mxu0 0.0
        %7456 = vmatpush1.msra.mxu0 0.0
        %7457 = vmatprep.subr.mxu0 0.0
        %7458 = vmatpush1.msra.mxu0 0.0
        %7459 = vmatprep.subr.mxu0 0.0
        %7460 = vmatpush1.msra.mxu0 0.0
        %7461 = vmatprep.subr.mxu0 0.0
        %7462 = vmatpush1.msra.mxu0 0.0
        %7463 = vmatprep.subr.mxu0 0.0
        %7464 = vmatpush1.msra.mxu0 0.0
        %7465 = vmatprep.subr.mxu0 0.0
        %7466 = vmatpush1.msra.mxu0 0.0
        %7467 = vmatprep.subr.mxu0 0.0
        %7468 = vmatpush1.msra.mxu0 0.0
        %7469 = vmatprep.subr.mxu0 0.0
        %7470 = vmatpush1.msra.mxu0 0.0
        %7471 = vmatprep.mubr.f32.mxu0 0.0
        %v7472 = vand.u32 %v7090, 4294901760
        %7473 = vmatmul.mubr.f32.gmra.mrb[0].mxu0 %v7472
        %v7474 = vpop.f32.mrb[0].mxu0
        %v7475 = vadd.f32 %v7398, %v7474
        %v7476 = vpop.f32.mrb[0].mxu0
        %7477 = vdwg.mxu0
        %7478 = vmatprep.subr.mxu0 0.0
        %v7479 = vand.u32 %v7080, 4294901760
        %7480 = vmatpush1.msra.mxu0 %v7479
        %7481 = vmatprep.subr.mxu0 0.0
        %v7482 = vand.u32 %v7081, 4294901760
        %7483 = vmatpush1.msra.mxu0 %v7482
        %7484 = vmatprep.subr.mxu0 0.0
        %7485 = vmatpush1.msra.mxu0 0.0
        %7486 = vmatprep.subr.mxu0 0.0
        %7487 = vmatpush1.msra.mxu0 0.0
        %7488 = vmatprep.subr.mxu0 0.0
        %7489 = vmatpush1.msra.mxu0 0.0
        %7490 = vmatprep.subr.mxu0 0.0
        %7491 = vmatpush1.msra.mxu0 0.0
        %7492 = vmatprep.subr.mxu0 0.0
        %7493 = vmatpush1.msra.mxu0 0.0
        %7494 = vmatprep.subr.mxu0 0.0
        %7495 = vmatpush1.msra.mxu0 0.0
        %7496 = vmatprep.subr.mxu0 0.0
        %7497 = vmatpush1.msra.mxu0 0.0
        %7498 = vmatprep.subr.mxu0 0.0
        %7499 = vmatpush1.msra.mxu0 0.0
        %7500 = vmatprep.subr.mxu0 0.0
        %7501 = vmatpush1.msra.mxu0 0.0
        %7502 = vmatprep.subr.mxu0 0.0
        %7503 = vmatpush1.msra.mxu0 0.0
        %7504 = vmatprep.subr.mxu0 0.0
        %7505 = vmatpush1.msra.mxu0 0.0
        %7506 = vmatprep.subr.mxu0 0.0
        %7507 = vmatpush1.msra.mxu0 0.0
        %7508 = vmatprep.subr.mxu0 0.0
        %7509 = vmatpush1.msra.mxu0 0.0
        %7510 = vmatprep.subr.mxu0 0.0
        %7511 = vmatpush1.msra.mxu0 0.0
        %7512 = vmatprep.subr.mxu0 0.0
        %7513 = vmatpush1.msra.mxu0 0.0
        %7514 = vmatprep.subr.mxu0 0.0
        %7515 = vmatpush1.msra.mxu0 0.0
        %7516 = vmatprep.subr.mxu0 0.0
        %7517 = vmatpush1.msra.mxu0 0.0
        %7518 = vmatprep.subr.mxu0 0.0
        %7519 = vmatpush1.msra.mxu0 0.0
        %7520 = vmatprep.subr.mxu0 0.0
        %7521 = vmatpush1.msra.mxu0 0.0
        %7522 = vmatprep.subr.mxu0 0.0
        %7523 = vmatpush1.msra.mxu0 0.0
        %7524 = vmatprep.subr.mxu0 0.0
        %7525 = vmatpush1.msra.mxu0 0.0
        %7526 = vmatprep.subr.mxu0 0.0
        %7527 = vmatpush1.msra.mxu0 0.0
        %7528 = vmatprep.subr.mxu0 0.0
        %7529 = vmatpush1.msra.mxu0 0.0
        %7530 = vmatprep.subr.mxu0 0.0
        %7531 = vmatpush1.msra.mxu0 0.0
        %7532 = vmatprep.subr.mxu0 0.0
        %7533 = vmatpush1.msra.mxu0 0.0
        %7534 = vmatprep.subr.mxu0 0.0
        %7535 = vmatpush1.msra.mxu0 0.0
        %7536 = vmatprep.subr.mxu0 0.0
        %7537 = vmatpush1.msra.mxu0 0.0
        %7538 = vmatprep.subr.mxu0 0.0
        %7539 = vmatpush1.msra.mxu0 0.0
        %7540 = vmatprep.subr.mxu0 0.0
        %7541 = vmatpush1.msra.mxu0 0.0
        %7542 = vmatprep.subr.mxu0 0.0
        %7543 = vmatpush1.msra.mxu0 0.0
        %7544 = vmatprep.mubr.f32.mxu0 0.0
        %v7545 = vand.u32 %v7090, 4294901760
        %7546 = vmatmul.mubr.f32.gmra.mrb[0].mxu0 %v7545
        %v7547 = vpop.f32.mrb[0].mxu0
        %v7548 = vadd.f32 %v7475, %v7547
        %v7549 = vpop.f32.mrb[0].mxu0
        %7550 = vdwg.mxu0
        %v7551 = vmax.f32 %v7548, 0.0
        %v7552 = vld [vmem:[#allocation8] sm:$0xff]
        %v7553 = vld [vmem:[#allocation8 + $0x8] sm:$0xff]
        %v7555 = vsel %vm736, %v7552, 0
        %v7558 = vsel %vm736, %v7553, 0
        %7560 = vmatprep.subr.mxu0 0.0
        %v7561 = vand.u32 %v7551, 4294901760
        %7562 = vmatpush1.msra.mxu0 %v7561
        %7563 = vmatprep.subr.mxu0 0.0
        %7564 = vmatpush1.msra.mxu0 0.0
        %7565 = vmatprep.subr.mxu0 0.0
        %7566 = vmatpush1.msra.mxu0 0.0
        %7567 = vmatprep.subr.mxu0 0.0
        %7568 = vmatpush1.msra.mxu0 0.0
        %7569 = vmatprep.subr.mxu0 0.0
        %7570 = vmatpush1.msra.mxu0 0.0
        %7571 = vmatprep.subr.mxu0 0.0
        %7572 = vmatpush1.msra.mxu0 0.0
        %7573 = vmatprep.subr.mxu0 0.0
        %7574 = vmatpush1.msra.mxu0 0.0
        %7575 = vmatprep.subr.mxu0 0.0
        %7576 = vmatpush1.msra.mxu0 0.0
        %7577 = vmatprep.subr.mxu0 0.0
        %7578 = vmatpush1.msra.mxu0 0.0
        %7579 = vmatprep.subr.mxu0 0.0
        %7580 = vmatpush1.msra.mxu0 0.0
        %7581 = vmatprep.subr.mxu0 0.0
        %7582 = vmatpush1.msra.mxu0 0.0
        %7583 = vmatprep.subr.mxu0 0.0
        %7584 = vmatpush1.msra.mxu0 0.0
        %7585 = vmatprep.subr.mxu0 0.0
        %7586 = vmatpush1.msra.mxu0 0.0
        %7587 = vmatprep.subr.mxu0 0.0
        %7588 = vmatpush1.msra.mxu0 0.0
        %7589 = vmatprep.subr.mxu0 0.0
        %7590 = vmatpush1.msra.mxu0 0.0
        %7591 = vmatprep.subr.mxu0 0.0
        %7592 = vmatpush1.msra.mxu0 0.0
        %7593 = vmatprep.subr.mxu0 0.0
        %7594 = vmatpush1.msra.mxu0 0.0
        %7595 = vmatprep.subr.mxu0 0.0
        %7596 = vmatpush1.msra.mxu0 0.0
        %7597 = vmatprep.subr.mxu0 0.0
        %7598 = vmatpush1.msra.mxu0 0.0
        %7599 = vmatprep.subr.mxu0 0.0
        %7600 = vmatpush1.msra.mxu0 0.0
        %7601 = vmatprep.subr.mxu0 0.0
        %7602 = vmatpush1.msra.mxu0 0.0
        %7603 = vmatprep.subr.mxu0 0.0
        %7604 = vmatpush1.msra.mxu0 0.0
        %7605 = vmatprep.subr.mxu0 0.0
        %7606 = vmatpush1.msra.mxu0 0.0
        %7607 = vmatprep.subr.mxu0 0.0
        %7608 = vmatpush1.msra.mxu0 0.0
        %7609 = vmatprep.subr.mxu0 0.0
        %7610 = vmatpush1.msra.mxu0 0.0
        %7611 = vmatprep.subr.mxu0 0.0
        %7612 = vmatpush1.msra.mxu0 0.0
        %7613 = vmatprep.subr.mxu0 0.0
        %7614 = vmatpush1.msra.mxu0 0.0
        %7615 = vmatprep.subr.mxu0 0.0
        %7616 = vmatpush1.msra.mxu0 0.0
        %7617 = vmatprep.subr.mxu0 0.0
        %7618 = vmatpush1.msra.mxu0 0.0
        %7619 = vmatprep.subr.mxu0 0.0
        %7620 = vmatpush1.msra.mxu0 0.0
        %7621 = vmatprep.subr.mxu0 0.0
        %7622 = vmatpush1.msra.mxu0 0.0
        %7623 = vmatprep.subr.mxu0 0.0
        %7624 = vmatpush1.msra.mxu0 0.0
        %7625 = vmatprep.mubr.f32.mxu0 0.0
        %v7626 = vand.u32 %v7555, 4294901760
        %v7627 = vsub.f32 %v7555, %v7626
        %v7628 = vand.u32 %v7627, 4294901760
        %v7629 = vsub.f32 %v7627, %v7628
        %v7630 = vand.u32 %v7629, 4294901760
        %7631 = vmatmul.mubr.f32.gmra.mrb[0].mxu0 %v7630
        %v7632 = vpop.f32.mrb[0].mxu0
        %v7633 = vadd.f32 0.0, %v7632
        %v7634 = vpop.f32.mrb[0].mxu0
        %7635 = vmatprep.mubr.f32.mxu0 0.0
        %v7636 = vand.u32 %v7558, 4294901760
        %v7637 = vsub.f32 %v7558, %v7636
        %v7638 = vand.u32 %v7637, 4294901760
        %v7639 = vsub.f32 %v7637, %v7638
        %v7640 = vand.u32 %v7639, 4294901760
        %7641 = vmatmul.mubr.f32.gmra.mrb[0].mxu0 %v7640
        %v7642 = vpop.f32.mrb[0].mxu0
        %v7643 = vadd.f32 0.0, %v7642
        %v7644 = vpop.f32.mrb[0].mxu0
        %7645 = vdwg.mxu0
        %7646 = vmatprep.subr.mxu0 0.0
        %v7647 = vand.u32 %v7551, 4294901760
        %v7648 = vsub.f32 %v7551, %v7647
        %v7649 = vand.u32 %v7648, 4294901760
        %v7650 = vsub.f32 %v7648, %v7649
        %v7651 = vand.u32 %v7650, 4294901760
        %7652 = vmatpush1.msra.mxu0 %v7651
        %7653 = vmatprep.subr.mxu0 0.0
        %7654 = vmatpush1.msra.mxu0 0.0
        %7655 = vmatprep.subr.mxu0 0.0
        %7656 = vmatpush1.msra.mxu0 0.0
        %7657 = vmatprep.subr.mxu0 0.0
        %7658 = vmatpush1.msra.mxu0 0.0
        %7659 = vmatprep.subr.mxu0 0.0
        %7660 = vmatpush1.msra.mxu0 0.0
        %7661 = vmatprep.subr.mxu0 0.0
        %7662 = vmatpush1.msra.mxu0 0.0
        %7663 = vmatprep.subr.mxu0 0.0
        %7664 = vmatpush1.msra.mxu0 0.0
        %7665 = vmatprep.subr.mxu0 0.0
        %7666 = vmatpush1.msra.mxu0 0.0
        %7667 = vmatprep.subr.mxu0 0.0
        %7668 = vmatpush1.msra.mxu0 0.0
        %7669 = vmatprep.subr.mxu0 0.0
        %7670 = vmatpush1.msra.mxu0 0.0
        %7671 = vmatprep.subr.mxu0 0.0
        %7672 = vmatpush1.msra.mxu0 0.0
        %7673 = vmatprep.subr.mxu0 0.0
        %7674 = vmatpush1.msra.mxu0 0.0
        %7675 = vmatprep.subr.mxu0 0.0
        %7676 = vmatpush1.msra.mxu0 0.0
        %7677 = vmatprep.subr.mxu0 0.0
        %7678 = vmatpush1.msra.mxu0 0.0
        %7679 = vmatprep.subr.mxu0 0.0
        %7680 = vmatpush1.msra.mxu0 0.0
        %7681 = vmatprep.subr.mxu0 0.0
        %7682 = vmatpush1.msra.mxu0 0.0
        %7683 = vmatprep.subr.mxu0 0.0
        %7684 = vmatpush1.msra.mxu0 0.0
        %7685 = vmatprep.subr.mxu0 0.0
        %7686 = vmatpush1.msra.mxu0 0.0
        %7687 = vmatprep.subr.mxu0 0.0
        %7688 = vmatpush1.msra.mxu0 0.0
        %7689 = vmatprep.subr.mxu0 0.0
        %7690 = vmatpush1.msra.mxu0 0.0
        %7691 = vmatprep.subr.mxu0 0.0
        %7692 = vmatpush1.msra.mxu0 0.0
        %7693 = vmatprep.subr.mxu0 0.0
        %7694 = vmatpush1.msra.mxu0 0.0
        %7695 = vmatprep.subr.mxu0 0.0
        %7696 = vmatpush1.msra.mxu0 0.0
        %7697 = vmatprep.subr.mxu0 0.0
        %7698 = vmatpush1.msra.mxu0 0.0
        %7699 = vmatprep.subr.mxu0 0.0
        %7700 = vmatpush1.msra.mxu0 0.0
        %7701 = vmatprep.subr.mxu0 0.0
        %7702 = vmatpush1.msra.mxu0 0.0
        %7703 = vmatprep.subr.mxu0 0.0
        %7704 = vmatpush1.msra.mxu0 0.0
        %7705 = vmatprep.subr.mxu0 0.0
        %7706 = vmatpush1.msra.mxu0 0.0
        %7707 = vmatprep.subr.mxu0 0.0
        %7708 = vmatpush1.msra.mxu0 0.0
        %7709 = vmatprep.subr.mxu0 0.0
        %7710 = vmatpush1.msra.mxu0 0.0
        %7711 = vmatprep.subr.mxu0 0.0
        %7712 = vmatpush1.msra.mxu0 0.0
        %7713 = vmatprep.subr.mxu0 0.0
        %7714 = vmatpush1.msra.mxu0 0.0
        %7715 = vmatprep.mubr.f32.mxu0 0.0
        %v7716 = vand.u32 %v7555, 4294901760
        %7717 = vmatmul.mubr.f32.gmra.mrb[0].mxu0 %v7716
        %v7718 = vpop.f32.mrb[0].mxu0
        %v7719 = vadd.f32 %v7633, %v7718
        %v7720 = vpop.f32.mrb[0].mxu0
        %7721 = vmatprep.mubr.f32.mxu0 0.0
        %v7722 = vand.u32 %v7558, 4294901760
        %7723 = vmatmul.mubr.f32.gmra.mrb[0].mxu0 %v7722
        %v7724 = vpop.f32.mrb[0].mxu0
        %v7725 = vadd.f32 %v7643, %v7724
        %v7726 = vpop.f32.mrb[0].mxu0
        %7727 = vdwg.mxu0
        %7728 = vmatprep.subr.mxu0 0.0
        %v7729 = vand.u32 %v7551, 4294901760
        %v7730 = vsub.f32 %v7551, %v7729
        %7731 = vmatpush1.msra.mxu0 %v7730
        %7732 = vmatprep.subr.mxu0 0.0
        %7733 = vmatpush1.msra.mxu0 0.0
        %7734 = vmatprep.subr.mxu0 0.0
        %7735 = vmatpush1.msra.mxu0 0.0
        %7736 = vmatprep.subr.mxu0 0.0
        %7737 = vmatpush1.msra.mxu0 0.0
        %7738 = vmatprep.subr.mxu0 0.0
        %7739 = vmatpush1.msra.mxu0 0.0
        %7740 = vmatprep.subr.mxu0 0.0
        %7741 = vmatpush1.msra.mxu0 0.0
        %7742 = vmatprep.subr.mxu0 0.0
        %7743 = vmatpush1.msra.mxu0 0.0
        %7744 = vmatprep.subr.mxu0 0.0
        %7745 = vmatpush1.msra.mxu0 0.0
        %7746 = vmatprep.subr.mxu0 0.0
        %7747 = vmatpush1.msra.mxu0 0.0
        %7748 = vmatprep.subr.mxu0 0.0
        %7749 = vmatpush1.msra.mxu0 0.0
        %7750 = vmatprep.subr.mxu0 0.0
        %7751 = vmatpush1.msra.mxu0 0.0
        %7752 = vmatprep.subr.mxu0 0.0
        %7753 = vmatpush1.msra.mxu0 0.0
        %7754 = vmatprep.subr.mxu0 0.0
        %7755 = vmatpush1.msra.mxu0 0.0
        %7756 = vmatprep.subr.mxu0 0.0
        %7757 = vmatpush1.msra.mxu0 0.0
        %7758 = vmatprep.subr.mxu0 0.0
        %7759 = vmatpush1.msra.mxu0 0.0
        %7760 = vmatprep.subr.mxu0 0.0
        %7761 = vmatpush1.msra.mxu0 0.0
        %7762 = vmatprep.subr.mxu0 0.0
        %7763 = vmatpush1.msra.mxu0 0.0
        %7764 = vmatprep.subr.mxu0 0.0
        %7765 = vmatpush1.msra.mxu0 0.0
        %7766 = vmatprep.subr.mxu0 0.0
        %7767 = vmatpush1.msra.mxu0 0.0
        %7768 = vmatprep.subr.mxu0 0.0
        %7769 = vmatpush1.msra.mxu0 0.0
        %7770 = vmatprep.subr.mxu0 0.0
        %7771 = vmatpush1.msra.mxu0 0.0
        %7772 = vmatprep.subr.mxu0 0.0
        %7773 = vmatpush1.msra.mxu0 0.0
        %7774 = vmatprep.subr.mxu0 0.0
        %7775 = vmatpush1.msra.mxu0 0.0
        %7776 = vmatprep.subr.mxu0 0.0
        %7777 = vmatpush1.msra.mxu0 0.0
        %7778 = vmatprep.subr.mxu0 0.0
        %7779 = vmatpush1.msra.mxu0 0.0
        %7780 = vmatprep.subr.mxu0 0.0
        %7781 = vmatpush1.msra.mxu0 0.0
        %7782 = vmatprep.subr.mxu0 0.0
        %7783 = vmatpush1.msra.mxu0 0.0
        %7784 = vmatprep.subr.mxu0 0.0
        %7785 = vmatpush1.msra.mxu0 0.0
        %7786 = vmatprep.subr.mxu0 0.0
        %7787 = vmatpush1.msra.mxu0 0.0
        %7788 = vmatprep.subr.mxu0 0.0
        %7789 = vmatpush1.msra.mxu0 0.0
        %7790 = vmatprep.subr.mxu0 0.0
        %7791 = vmatpush1.msra.mxu0 0.0
        %7792 = vmatprep.subr.mxu0 0.0
        %7793 = vmatpush1.msra.mxu0 0.0
        %7794 = vmatprep.mubr.f32.mxu0 0.0
        %v7795 = vand.u32 %v7555, 4294901760
        %v7796 = vsub.f32 %v7555, %v7795
        %7797 = vmatmul.mubr.f32.gmra.mrb[0].mxu0 %v7796
        %v7798 = vpop.f32.mrb[0].mxu0
        %v7799 = vadd.f32 %v7719, %v7798
        %v7800 = vpop.f32.mrb[0].mxu0
        %7801 = vmatprep.mubr.f32.mxu0 0.0
        %v7802 = vand.u32 %v7558, 4294901760
        %v7803 = vsub.f32 %v7558, %v7802
        %7804 = vmatmul.mubr.f32.gmra.mrb[0].mxu0 %v7803
        %v7805 = vpop.f32.mrb[0].mxu0
        %v7806 = vadd.f32 %v7725, %v7805
        %v7807 = vpop.f32.mrb[0].mxu0
        %7808 = vdwg.mxu0
        %7809 = vmatprep.subr.mxu0 0.0
        %v7810 = vand.u32 %v7551, 4294901760
        %7811 = vmatpush1.msra.mxu0 %v7810
        %7812 = vmatprep.subr.mxu0 0.0
        %7813 = vmatpush1.msra.mxu0 0.0
        %7814 = vmatprep.subr.mxu0 0.0
        %7815 = vmatpush1.msra.mxu0 0.0
        %7816 = vmatprep.subr.mxu0 0.0
        %7817 = vmatpush1.msra.mxu0 0.0
        %7818 = vmatprep.subr.mxu0 0.0
        %7819 = vmatpush1.msra.mxu0 0.0
        %7820 = vmatprep.subr.mxu0 0.0
        %7821 = vmatpush1.msra.mxu0 0.0
        %7822 = vmatprep.subr.mxu0 0.0
        %7823 = vmatpush1.msra.mxu0 0.0
        %7824 = vmatprep.subr.mxu0 0.0
        %7825 = vmatpush1.msra.mxu0 0.0
        %7826 = vmatprep.subr.mxu0 0.0
        %7827 = vmatpush1.msra.mxu0 0.0
        %7828 = vmatprep.subr.mxu0 0.0
        %7829 = vmatpush1.msra.mxu0 0.0
        %7830 = vmatprep.subr.mxu0 0.0
        %7831 = vmatpush1.msra.mxu0 0.0
        %7832 = vmatprep.subr.mxu0 0.0
        %7833 = vmatpush1.msra.mxu0 0.0
        %7834 = vmatprep.subr.mxu0 0.0
        %7835 = vmatpush1.msra.mxu0 0.0
        %7836 = vmatprep.subr.mxu0 0.0
        %7837 = vmatpush1.msra.mxu0 0.0
        %7838 = vmatprep.subr.mxu0 0.0
        %7839 = vmatpush1.msra.mxu0 0.0
        %7840 = vmatprep.subr.mxu0 0.0
        %7841 = vmatpush1.msra.mxu0 0.0
        %7842 = vmatprep.subr.mxu0 0.0
        %7843 = vmatpush1.msra.mxu0 0.0
        %7844 = vmatprep.subr.mxu0 0.0
        %7845 = vmatpush1.msra.mxu0 0.0
        %7846 = vmatprep.subr.mxu0 0.0
        %7847 = vmatpush1.msra.mxu0 0.0
        %7848 = vmatprep.subr.mxu0 0.0
        %7849 = vmatpush1.msra.mxu0 0.0
        %7850 = vmatprep.subr.mxu0 0.0
        %7851 = vmatpush1.msra.mxu0 0.0
        %7852 = vmatprep.subr.mxu0 0.0
        %7853 = vmatpush1.msra.mxu0 0.0
        %7854 = vmatprep.subr.mxu0 0.0
        %7855 = vmatpush1.msra.mxu0 0.0
        %7856 = vmatprep.subr.mxu0 0.0
        %7857 = vmatpush1.msra.mxu0 0.0
        %7858 = vmatprep.subr.mxu0 0.0
        %7859 = vmatpush1.msra.mxu0 0.0
        %7860 = vmatprep.subr.mxu0 0.0
        %7861 = vmatpush1.msra.mxu0 0.0
        %7862 = vmatprep.subr.mxu0 0.0
        %7863 = vmatpush1.msra.mxu0 0.0
        %7864 = vmatprep.subr.mxu0 0.0
        %7865 = vmatpush1.msra.mxu0 0.0
        %7866 = vmatprep.subr.mxu0 0.0
        %7867 = vmatpush1.msra.mxu0 0.0
        %7868 = vmatprep.subr.mxu0 0.0
        %7869 = vmatpush1.msra.mxu0 0.0
        %7870 = vmatprep.subr.mxu0 0.0
        %7871 = vmatpush1.msra.mxu0 0.0
        %7872 = vmatprep.subr.mxu0 0.0
        %7873 = vmatpush1.msra.mxu0 0.0
        %7874 = vmatprep.mubr.f32.mxu0 0.0
        %v7875 = vand.u32 %v7555, 4294901760
        %v7876 = vsub.f32 %v7555, %v7875
        %v7877 = vand.u32 %v7876, 4294901760
        %7878 = vmatmul.mubr.f32.gmra.mrb[0].mxu0 %v7877
        %v7879 = vpop.f32.mrb[0].mxu0
        %v7880 = vadd.f32 %v7799, %v7879
        %v7881 = vpop.f32.mrb[0].mxu0
        %7882 = vmatprep.mubr.f32.mxu0 0.0
        %v7883 = vand.u32 %v7558, 4294901760
        %v7884 = vsub.f32 %v7558, %v7883
        %v7885 = vand.u32 %v7884, 4294901760
        %7886 = vmatmul.mubr.f32.gmra.mrb[0].mxu0 %v7885
        %v7887 = vpop.f32.mrb[0].mxu0
        %v7888 = vadd.f32 %v7806, %v7887
        %v7889 = vpop.f32.mrb[0].mxu0
        %7890 = vdwg.mxu0
        %7891 = vmatprep.subr.mxu0 0.0
        %v7892 = vand.u32 %v7551, 4294901760
        %v7893 = vsub.f32 %v7551, %v7892
        %v7894 = vand.u32 %v7893, 4294901760
        %7895 = vmatpush1.msra.mxu0 %v7894
        %7896 = vmatprep.subr.mxu0 0.0
        %7897 = vmatpush1.msra.mxu0 0.0
        %7898 = vmatprep.subr.mxu0 0.0
        %7899 = vmatpush1.msra.mxu0 0.0
        %7900 = vmatprep.subr.mxu0 0.0
        %7901 = vmatpush1.msra.mxu0 0.0
        %7902 = vmatprep.subr.mxu0 0.0
        %7903 = vmatpush1.msra.mxu0 0.0
        %7904 = vmatprep.subr.mxu0 0.0
        %7905 = vmatpush1.msra.mxu0 0.0
        %7906 = vmatprep.subr.mxu0 0.0
        %7907 = vmatpush1.msra.mxu0 0.0
        %7908 = vmatprep.subr.mxu0 0.0
        %7909 = vmatpush1.msra.mxu0 0.0
        %7910 = vmatprep.subr.mxu0 0.0
        %7911 = vmatpush1.msra.mxu0 0.0
        %7912 = vmatprep.subr.mxu0 0.0
        %7913 = vmatpush1.msra.mxu0 0.0
        %7914 = vmatprep.subr.mxu0 0.0
        %7915 = vmatpush1.msra.mxu0 0.0
        %7916 = vmatprep.subr.mxu0 0.0
        %7917 = vmatpush1.msra.mxu0 0.0
        %7918 = vmatprep.subr.mxu0 0.0
        %7919 = vmatpush1.msra.mxu0 0.0
        %7920 = vmatprep.subr.mxu0 0.0
        %7921 = vmatpush1.msra.mxu0 0.0
        %7922 = vmatprep.subr.mxu0 0.0
        %7923 = vmatpush1.msra.mxu0 0.0
        %7924 = vmatprep.subr.mxu0 0.0
        %7925 = vmatpush1.msra.mxu0 0.0
        %7926 = vmatprep.subr.mxu0 0.0
        %7927 = vmatpush1.msra.mxu0 0.0
        %7928 = vmatprep.subr.mxu0 0.0
        %7929 = vmatpush1.msra.mxu0 0.0
        %7930 = vmatprep.subr.mxu0 0.0
        %7931 = vmatpush1.msra.mxu0 0.0
        %7932 = vmatprep.subr.mxu0 0.0
        %7933 = vmatpush1.msra.mxu0 0.0
        %7934 = vmatprep.subr.mxu0 0.0
        %7935 = vmatpush1.msra.mxu0 0.0
        %7936 = vmatprep.subr.mxu0 0.0
        %7937 = vmatpush1.msra.mxu0 0.0
        %7938 = vmatprep.subr.mxu0 0.0
        %7939 = vmatpush1.msra.mxu0 0.0
        %7940 = vmatprep.subr.mxu0 0.0
        %7941 = vmatpush1.msra.mxu0 0.0
        %7942 = vmatprep.subr.mxu0 0.0
        %7943 = vmatpush1.msra.mxu0 0.0
        %7944 = vmatprep.subr.mxu0 0.0
        %7945 = vmatpush1.msra.mxu0 0.0
        %7946 = vmatprep.subr.mxu0 0.0
        %7947 = vmatpush1.msra.mxu0 0.0
        %7948 = vmatprep.subr.mxu0 0.0
        %7949 = vmatpush1.msra.mxu0 0.0
        %7950 = vmatprep.subr.mxu0 0.0
        %7951 = vmatpush1.msra.mxu0 0.0
        %7952 = vmatprep.subr.mxu0 0.0
        %7953 = vmatpush1.msra.mxu0 0.0
        %7954 = vmatprep.subr.mxu0 0.0
        %7955 = vmatpush1.msra.mxu0 0.0
        %7956 = vmatprep.subr.mxu0 0.0
        %7957 = vmatpush1.msra.mxu0 0.0
        %7958 = vmatprep.mubr.f32.mxu0 0.0
        %v7959 = vand.u32 %v7555, 4294901760
        %7960 = vmatmul.mubr.f32.gmra.mrb[0].mxu0 %v7959
        %v7961 = vpop.f32.mrb[0].mxu0
        %v7962 = vadd.f32 %v7880, %v7961
        %v7963 = vpop.f32.mrb[0].mxu0
        %7964 = vmatprep.mubr.f32.mxu0 0.0
        %v7965 = vand.u32 %v7558, 4294901760
        %7966 = vmatmul.mubr.f32.gmra.mrb[0].mxu0 %v7965
        %v7967 = vpop.f32.mrb[0].mxu0
        %v7968 = vadd.f32 %v7888, %v7967
        %v7969 = vpop.f32.mrb[0].mxu0
        %7970 = vdwg.mxu0
        %7971 = vmatprep.subr.mxu0 0.0
        %v7972 = vand.u32 %v7551, 4294901760
        %7973 = vmatpush1.msra.mxu0 %v7972
        %7974 = vmatprep.subr.mxu0 0.0
        %7975 = vmatpush1.msra.mxu0 0.0
        %7976 = vmatprep.subr.mxu0 0.0
        %7977 = vmatpush1.msra.mxu0 0.0
        %7978 = vmatprep.subr.mxu0 0.0
        %7979 = vmatpush1.msra.mxu0 0.0
        %7980 = vmatprep.subr.mxu0 0.0
        %7981 = vmatpush1.msra.mxu0 0.0
        %7982 = vmatprep.subr.mxu0 0.0
        %7983 = vmatpush1.msra.mxu0 0.0
        %7984 = vmatprep.subr.mxu0 0.0
        %7985 = vmatpush1.msra.mxu0 0.0
        %7986 = vmatprep.subr.mxu0 0.0
        %7987 = vmatpush1.msra.mxu0 0.0
        %7988 = vmatprep.subr.mxu0 0.0
        %7989 = vmatpush1.msra.mxu0 0.0
        %7990 = vmatprep.subr.mxu0 0.0
        %7991 = vmatpush1.msra.mxu0 0.0
        %7992 = vmatprep.subr.mxu0 0.0
        %7993 = vmatpush1.msra.mxu0 0.0
        %7994 = vmatprep.subr.mxu0 0.0
        %7995 = vmatpush1.msra.mxu0 0.0
        %7996 = vmatprep.subr.mxu0 0.0
        %7997 = vmatpush1.msra.mxu0 0.0
        %7998 = vmatprep.subr.mxu0 0.0
        %7999 = vmatpush1.msra.mxu0 0.0
        %8000 = vmatprep.subr.mxu0 0.0
        %8001 = vmatpush1.msra.mxu0 0.0
        %8002 = vmatprep.subr.mxu0 0.0
        %8003 = vmatpush1.msra.mxu0 0.0
        %8004 = vmatprep.subr.mxu0 0.0
        %8005 = vmatpush1.msra.mxu0 0.0
        %8006 = vmatprep.subr.mxu0 0.0
        %8007 = vmatpush1.msra.mxu0 0.0
        %8008 = vmatprep.subr.mxu0 0.0
        %8009 = vmatpush1.msra.mxu0 0.0
        %8010 = vmatprep.subr.mxu0 0.0
        %8011 = vmatpush1.msra.mxu0 0.0
        %8012 = vmatprep.subr.mxu0 0.0
        %8013 = vmatpush1.msra.mxu0 0.0
        %8014 = vmatprep.subr.mxu0 0.0
        %8015 = vmatpush1.msra.mxu0 0.0
        %8016 = vmatprep.subr.mxu0 0.0
        %8017 = vmatpush1.msra.mxu0 0.0
        %8018 = vmatprep.subr.mxu0 0.0
        %8019 = vmatpush1.msra.mxu0 0.0
        %8020 = vmatprep.subr.mxu0 0.0
        %8021 = vmatpush1.msra.mxu0 0.0
        %8022 = vmatprep.subr.mxu0 0.0
        %8023 = vmatpush1.msra.mxu0 0.0
        %8024 = vmatprep.subr.mxu0 0.0
        %8025 = vmatpush1.msra.mxu0 0.0
        %8026 = vmatprep.subr.mxu0 0.0
        %8027 = vmatpush1.msra.mxu0 0.0
        %8028 = vmatprep.subr.mxu0 0.0
        %8029 = vmatpush1.msra.mxu0 0.0
        %8030 = vmatprep.subr.mxu0 0.0
        %8031 = vmatpush1.msra.mxu0 0.0
        %8032 = vmatprep.subr.mxu0 0.0
        %8033 = vmatpush1.msra.mxu0 0.0
        %8034 = vmatprep.subr.mxu0 0.0
        %8035 = vmatpush1.msra.mxu0 0.0
        %8036 = vmatprep.mubr.f32.mxu0 0.0
        %v8037 = vand.u32 %v7555, 4294901760
        %8038 = vmatmul.mubr.f32.gmra.mrb[0].mxu0 %v8037
        %v8039 = vpop.f32.mrb[0].mxu0
        %v8040 = vadd.f32 %v7962, %v8039
        %v8041 = vpop.f32.mrb[0].mxu0
        %8042 = vmatprep.mubr.f32.mxu0 0.0
        %v8043 = vand.u32 %v7558, 4294901760
        %8044 = vmatmul.mubr.f32.gmra.mrb[0].mxu0 %v8043
        %v8045 = vpop.f32.mrb[0].mxu0
        %v8046 = vadd.f32 %v7968, %v8045
        %v8047 = vpop.f32.mrb[0].mxu0
        %8048 = vdwg.mxu0
        %s8049 = scalar_lea.vmem %s257, 112 [#allocation10]
        %8050 = vst [vmem:[%s8049] sm:$0xff] %v8040
        %8051 = vst [vmem:[%s8049 + $0x8] sm:$0xff] %v8046
        %s8052 = sand.u32 %s120, 1
        %s8053 = scalar_lea.sflag [#allocation4], %s8052
        %s8054 = sand.u32 %s120, 1
        %s8055 = smul.addr %s8054, 128
        %s8056 = scalar_lea.vmem [#allocation10], %s8055
        // Predicated region
        $region53: #{tpu_custom_call.1} parent=35 // pred_check
          %p8057 = pneg %p130
        $region54: #{tpu_custom_call.1} parent=35 // pred_check_branch
          %8059 = sbr.rel (%p8057) target = $region56
        $region55: #{tpu_custom_call.1} parent=35 // pred_region
          %s8060 = smul.u32 8, %s23
          %s8062 = ssub.s32 2048, 2048
          %8063 = vsyncadd %s8053, %s8062
          %s8064 = smul.addr %s8060, 2
          %s8065 = smul.addr %s8064, 128
          %s8066 = scalar_lea.hbm %s4, %s8065
          %s8067 = sshll.u32 %s8056, 4
          %s8068 = int_to_ptr.vmem [resolvable:$true] %s8067
          %8073 = dma.vmem_to_hbm [thread:$0]  %s8068, 2048, %s8066, %s8053, 128, 128, 8
        $region56: #{tpu_custom_call.1} parent=35 // pred_fallthru
          _
      $region36: #{tpu_custom_call.1} parent=5 // pred_fallthru
        _
      %p8074 = scmp.le.s32.totalorder 2, %s18
      // Predicated region
      $region57: #{tpu_custom_call.1} parent=5 // pred_check
        %p8075 = pneg %p8074
      $region58: #{tpu_custom_call.1} parent=5 // pred_check_branch
        %8077 = sbr.rel (%p8075) target = $region60
      $region59: #{tpu_custom_call.1} parent=5 // pred_region
        %s8078 = ssub.s32 %s18, 2
        // Predicated region
        $region61: #{tpu_custom_call.1} parent=59 // pred_check
          %p8079 = pneg %p136
        $region62: #{tpu_custom_call.1} parent=59 // pred_check_branch
          %8081 = sbr.rel (%p8079) target = $region64
        $region63: #{tpu_custom_call.1} parent=59 // pred_region
          %s8082 = sand.u32 %s121, 1
          %s8083 = scalar_lea.sflag [#allocation4], %s8082
          %s8084 = sand.u32 %s121, 1
          %s8085 = smul.addr %s8084, 128
          %s8086 = scalar_lea.vmem [#allocation10], %s8085
          %8087 = dma.done %s8083, 2048
        $region64: #{tpu_custom_call.1} parent=59 // pred_fallthru
          _
      $region60: #{tpu_custom_call.1} parent=5 // pred_fallthru
        _
    $region6: #{tpu_custom_call.1} parent=1 // loop_footer
      %s22 = sadd.s32 1, %s18
    $region7: #{tpu_custom_call.1} parent=1 // loop_footer_branch
      %17 = sbr.rel target = $region3
    $region8: #{tpu_custom_call.1} parent=1 // loop_exit
      _
    %8088 = vsyncpa [#allocation3], 1
    %s8089 = scalar_lea.sflag [#allocation3], 1
    %8090 = vsyncpa %s8089, 1
    %8091 = vsyncpa [#allocation6], 1
    %8092 = vsyncpa [#allocation9], 1
    %8093 = vsyncpa [#allocation4], 1
    %s8094 = scalar_lea.sflag [#allocation4], 1
    %8095 = vsyncpa %s8094, 1

</llo_original>
